<compile_context>
chip_gen: v6e
topology: v6e:2x2x1
jax: 0.10.0
libtpu: 0.0.40
codegen_flags: <defaults>
</compile_context>

<pallas_src>
import jax
import jax.numpy as jnp
from jax import lax
from jax.experimental import pallas as pl
from jax.experimental.pallas import tpu as pltpu

NT = 128            # batch tile size = lane width
C1I, C1O = 3, 5     # conv1 in/out channels
C2I, C2O = 5, 7     # conv2
C3I, C3O = 7, 12    # conv3
H0 = 32             # input spatial size (required so fc sees 3*3*12 features)
W1C = 30            # conv1 output spatial
P1 = 15             # pool1 output spatial
W2C = 13            # conv2 output spatial
P2 = 6              # pool2 output spatial (floor mode drops row/col 12)
W3C = 4             # conv3 output spatial
KF = C3O * W3C * W3C  # 192 expanded FC features (raw 4x4 conv3 map / channel)


def net_kernel(x_ref, w1_ref, b1_ref, w2_ref, b2_ref, w3_ref, b3_ref,
               wfc_ref, bfc_ref, out_ref, p1_ref, p2_ref, g_ref, rbuf_ref):
    """Full forward pass for one batch tile (NT samples in the lane axis)."""

    def fused_conv_pool(src_ref, dst_ref, w_ref, b_ref, cin, cout, wout, pout):
        """3x3 VALID conv + bias + ReLU + 2x2/2 maxpool, fused per row pair."""

        def row_body(ph, carry):                      # ph: pooled output row
            def co_body(co, carry2):                  # co: output channel
                bv = b_ref[co]
                # two conv output rows (2*ph, 2*ph+1); each is (wout, 128)
                acc0 = jnp.full((wout, NT), bv, dtype=jnp.float32)
                acc1 = jnp.full((wout, NT), bv, dtype=jnp.float32)
                for ci in range(cin):
                    for kh in range(3):
                        for kw in range(3):
                            wv = w_ref[((co * cin + ci) * 3 + kh) * 3 + kw]
                            acc0 += src_ref[ci, 2 * ph + kh, pl.ds(kw, wout), :] * wv
                            acc1 += src_ref[ci, 2 * ph + 1 + kh, pl.ds(kw, wout), :] * wv
                # vertical 2-max + ReLU (max/relu commute), then horizontal 2-max
                r = jnp.maximum(jnp.maximum(acc0, acc1), 0.0)
                rbuf_ref[pl.ds(0, wout), :] = r
                dst_ref[co, ph, :, :] = jnp.maximum(
                    rbuf_ref[pl.ds(0, pout, 2), :],
                    rbuf_ref[pl.ds(1, pout, 2), :])
                return carry2
            return lax.fori_loop(0, cout, co_body, carry)

        lax.fori_loop(0, pout, row_body, 0)

    # conv1 + pool1: (3, 32, 32, N) -> (5, 15, 15, N)
    fused_conv_pool(x_ref, p1_ref, w1_ref, b1_ref, C1I, C1O, W1C, P1)
    # conv2 + pool2: (5, 15, 15, N) -> (7, 6, 6, N)
    fused_conv_pool(p1_ref, p2_ref, w2_ref, b2_ref, C2I, C2O, W2C, P2)

    # conv3 + ReLU: (7, 6, 6, N) -> per-channel (4, 4, N), stored as (16, N)
    def c3_body(co, carry):
        bv = b3_ref[co]
        acc = jnp.full((W3C, W3C, NT), bv, dtype=jnp.float32)
        for ci in range(C3I):
            for kh in range(3):
                for kw in range(3):
                    wv = w3_ref[((co * C3I + ci) * 3 + kh) * 3 + kw]
                    acc += p2_ref[ci, pl.ds(kh, W3C), pl.ds(kw, W3C), :] * wv
        acc = jnp.maximum(acc, 0.0)
        for h in range(W3C):
            g_ref[co, pl.ds(h * W3C, W3C), :] = acc[h]
        return carry
    lax.fori_loop(0, C3O, c3_body, 0)

    # The 2x2 avg-pool (padding=1, count_include_pad) is folded into the
    # expanded FC weight on the host, so the classifier is a single matmul on
    # the otherwise idle MXU, producing a lane-dense (10, 128) output block.
    gall = jnp.concatenate([g_ref[co] for co in range(C3O)], axis=0)        # (192, NT)
    fc = jnp.dot(wfc_ref[...], gall, preferred_element_type=jnp.float32)    # (10, NT)
    out_ref[...] = fc + bfc_ref[...]


def net_forward(x_nchw, params):
    (w1, b1), (w2, b2), (w3, b3), (wfc, bfc) = params
    f32 = jnp.float32
    n = x_nchw.shape[0]
    n_pad = ((n + NT - 1) // NT) * NT

    # NCHW -> (C, H, W, N): batch goes into the 128-wide lane axis.
    x = jnp.transpose(x_nchw.astype(f32), (1, 2, 3, 0))
    x = jnp.pad(x, ((0, 0), (0, 0), (0, 0), (0, n_pad - n)))

    # Flat conv weights/biases (PyTorch OIHW order kept; kernel indexes it).
    w1f, w2f, w3f = (w.astype(f32).reshape(-1) for w in (w1, w2, w3))
    b1f, b2f, b3f = (b.astype(f32).reshape(-1) for b in (b1, b2, b3))

    # Fold AvgPool2d(k=2, s=2, pad=1, count_include_pad) into the FC weight:
    # every conv3 cell (h3, w3) feeds exactly one gap cell with weight 0.25.
    gmap = jnp.array([0, 1, 1, 2], dtype=jnp.int32)           # conv3 pos -> gap pos
    cols = (jnp.arange(C3O, dtype=jnp.int32)[:, None, None] * 9
            + gmap[None, :, None] * 3 + gmap[None, None, :]).reshape(-1)    # (192,)
    wfc_exp = 0.25 * wfc.astype(f32)[:, cols]                 # (10, 192)
    bfc_c = bfc.astype(f32).reshape(10, 1)

    smem = pl.BlockSpec(memory_space=pltpu.MemorySpace.SMEM)

    flops = 2 * n_pad * (W1C * W1C * C1O * 9 * C1I
                         + W2C * W2C * C2O * 9 * C2I
                         + W3C * W3C * C3O * 9 * C3I
                         + KF * 10)
    bytes_accessed = 4 * (x.size + 10 * n_pad + w1f.size + w2f.size + w3f.size
                          + b1f.size + b2f.size + b3f.size + wfc_exp.size + 10)

    out = pl.pallas_call(
        net_kernel,
        out_shape=jax.ShapeDtypeStruct((10, n_pad), jnp.float32),
        grid=(n_pad // NT,),
        in_specs=[
            pl.BlockSpec((C1I, H0, H0, NT), lambda i: (0, 0, 0, i)),
            smem, smem, smem, smem, smem, smem,
            pl.BlockSpec((10, KF), lambda i: (0, 0)),
            pl.BlockSpec((10, 1), lambda i: (0, 0)),
        ],
        out_specs=pl.BlockSpec((10, NT), lambda i: (0, i)),
        scratch_shapes=[
            pltpu.VMEM((C1O, P1, P1, NT), jnp.float32),   # pooled conv1
            pltpu.VMEM((C2O, P2, P2, NT), jnp.float32),   # pooled conv2
            pltpu.VMEM((C3O, 16, NT), jnp.float32),       # conv3 (4x4 per channel)
            pltpu.VMEM((W1C, NT), jnp.float32),           # conv-row bounce for W-pool
        ],
        compiler_params=pltpu.CompilerParams(
            dimension_semantics=("parallel",)),
        cost_estimate=pl.CostEstimate(flops=flops, transcendentals=0,
                                      bytes_accessed=bytes_accessed),
    )(x, w1f, b1f, w2f, b2f, w3f, b3f, wfc_exp, bfc_c)

    return out[:, :n].T


def reference_forward(x, params):
    """Pure-JAX NCHW reference matching the PyTorch module exactly."""
    (w1, b1), (w2, b2), (w3, b3), (wfc, bfc) = params
    hp = jax.lax.Precision.HIGHEST

    def conv_relu(y, w, b):
        y = jax.lax.conv_general_dilated(
            y, w, window_strides=(1, 1), padding="VALID",
            dimension_numbers=("NCHW", "OIHW", "NCHW"), precision=hp)
        return jax.nn.relu(y + b[None, :, None, None])

    def maxpool(y):
        return jax.lax.reduce_window(y, -jnp.inf, jax.lax.max,
                                     (1, 1, 2, 2), (1, 1, 2, 2), "VALID")

    y = maxpool(conv_relu(x, w1, b1))
    y = maxpool(conv_relu(y, w2, b2))
    y = conv_relu(y, w3, b3)
    # AvgPool2d(2, stride=2, padding=1), count_include_pad=True -> divide by 4
    y = jax.lax.reduce_window(y, 0.0, jax.lax.add, (1, 1, 2, 2), (1, 1, 2, 2),
                              [(0, 0), (0, 0), (1, 1), (1, 1)]) / 4.0
    y = y.reshape(y.shape[0], -1)                    # (N, 108), (C, H, W) order
    return jnp.dot(y, wfc.T, precision=hp) + bfc


if __name__ == "__main__":
    key = jax.random.PRNGKey(0)
    ks = jax.random.split(key, 9)
    # 32x32 input is required so the gap output is 3x3 (fc expects 3*3*12=108)
    x = jax.random.normal(ks[0], (2, 3, 32, 32), dtype=jnp.float32)
    w1 = 0.1 * jax.random.normal(ks[1], (5, 3, 3, 3), dtype=jnp.float32)
    b1 = 0.1 * jax.random.normal(ks[2], (5,), dtype=jnp.float32)
    w2 = 0.1 * jax.random.normal(ks[3], (7, 5, 3, 3), dtype=jnp.float32)
    b2 = 0.1 * jax.random.normal(ks[4], (7,), dtype=jnp.float32)
    w3 = 0.1 * jax.random.normal(ks[5], (12, 7, 3, 3), dtype=jnp.float32)
    b3 = 0.1 * jax.random.normal(ks[6], (12,), dtype=jnp.float32)
    wfc = 0.1 * jax.random.normal(ks[7], (10, 108), dtype=jnp.float32)
    bfc = 0.1 * jax.random.normal(ks[8], (10,), dtype=jnp.float32)
    params = ((w1, b1), (w2, b2), (w3, b3), (wfc, bfc))

    out = jax.jit(net_forward)(x, params)
    out = jax.block_until_ready(out)
    assert out.shape == (2, 10), out.shape

    ref = reference_forward(x, params)
    if not jnp.allclose(out, ref, atol=2e-4, rtol=2e-4):
        raise AssertionError(
            f"mismatch vs reference, max abs err = {jnp.max(jnp.abs(out - ref))}")
    print("KERNEL_OK")
</pallas_src>

<mosaic_0001>
module attributes {stable_mosaic.version = 11 : i64} {
  func.func @net_kernel(%arg0: i32, %arg1: memref<3x32x32x128xf32, #tpu.memory_space<vmem>>, %arg2: memref<135xf32, #tpu.memory_space<smem>>, %arg3: memref<5xf32, #tpu.memory_space<smem>>, %arg4: memref<315xf32, #tpu.memory_space<smem>>, %arg5: memref<7xf32, #tpu.memory_space<smem>>, %arg6: memref<756xf32, #tpu.memory_space<smem>>, %arg7: memref<12xf32, #tpu.memory_space<smem>>, %arg8: memref<10x192xf32, #tpu.memory_space<vmem>>, %arg9: memref<10x1xf32, #tpu.memory_space<vmem>>, %arg10: memref<10x128xf32, #tpu.memory_space<vmem>>, %arg11: memref<5x15x15x128xf32, #tpu.memory_space<vmem>>, %arg12: memref<7x6x6x128xf32, #tpu.memory_space<vmem>>, %arg13: memref<12x16x128xf32, #tpu.memory_space<vmem>>, %arg14: memref<30x128xf32, #tpu.memory_space<vmem>>) attributes {dimension_semantics = [#tpu.dimension_semantics<parallel>], iteration_bounds = array<i64: 1>, scalar_prefetch = 0 : i64, scratch_operands = 4 : i64, tpu.core_type = #tpu.core_type<tc>, window_params = [{transform_indices = @transform_0, window_bounds = array<i64: 3, 32, 32, 128>}, {transform_indices = @transform_1, window_bounds = array<i64: 135>}, {transform_indices = @transform_2, window_bounds = array<i64: 5>}, {transform_indices = @transform_3, window_bounds = array<i64: 315>}, {transform_indices = @transform_4, window_bounds = array<i64: 7>}, {transform_indices = @transform_5, window_bounds = array<i64: 756>}, {transform_indices = @transform_6, window_bounds = array<i64: 12>}, {pipeline_mode = #tpu.pipeline_mode<synchronous>, transform_indices = @transform_7, window_bounds = array<i64: 10, 192>}, {pipeline_mode = #tpu.pipeline_mode<synchronous>, transform_indices = @transform_8, window_bounds = array<i64: 10, 1>}, {transform_indices = @transform_9, window_bounds = array<i64: 10, 128>}]} {
    %c0_i32 = arith.constant 0 : i32
    %c15_i32 = arith.constant 15 : i32
    %0 = arith.addi %c0_i32, %c15_i32 : i32
    %c1_i32 = arith.constant 1 : i32
    scf.for %arg15 = %c0_i32 to %0 step %c1_i32  : i32 {
      %c0_i32_37 = arith.constant 0 : i32
      %c5_i32 = arith.constant 5 : i32
      %34 = arith.addi %c0_i32_37, %c5_i32 : i32
      %c1_i32_38 = arith.constant 1 : i32
      scf.for %arg16 = %c0_i32_37 to %34 step %c1_i32_38  : i32 {
        %35 = arith.index_cast %arg16 : i32 to index
        %36 = memref.load %arg3[%35] : memref<5xf32, #tpu.memory_space<smem>>
        %37 = vector.broadcast %36 : f32 to vector<30x128xf32>
        %38 = vector.broadcast %36 : f32 to vector<30x128xf32>
        %c3_i32 = arith.constant 3 : i32
        %39 = arith.muli %arg16, %c3_i32 : i32
        %c0_i32_40 = arith.constant 0 : i32
        %40 = arith.addi %39, %c0_i32_40 : i32
        %c3_i32_41 = arith.constant 3 : i32
        %41 = arith.muli %40, %c3_i32_41 : i32
        %c0_i32_42 = arith.constant 0 : i32
        %42 = arith.addi %41, %c0_i32_42 : i32
        %c3_i32_43 = arith.constant 3 : i32
        %43 = arith.muli %42, %c3_i32_43 : i32
        %c0_i32_44 = arith.constant 0 : i32
        %44 = arith.addi %43, %c0_i32_44 : i32
        %45 = arith.index_cast %44 : i32 to index
        %46 = memref.load %arg2[%45] : memref<135xf32, #tpu.memory_space<smem>>
        %c2_i32 = arith.constant 2 : i32
        %47 = arith.muli %c2_i32, %arg15 : i32
        %c0_i32_45 = arith.constant 0 : i32
        %48 = arith.addi %47, %c0_i32_45 : i32
        %c0_46 = arith.constant 0 : index
        %49 = arith.index_cast %48 : i32 to index
        %c0_47 = arith.constant 0 : index
        %c0_48 = arith.constant 0 : index
        %50 = vector.load %arg1[%c0_46, %49, %c0_47, %c0_48] : memref<3x32x32x128xf32, #tpu.memory_space<vmem>>, vector<1x1x30x128xf32>
        %51 = vector.shape_cast %50 : vector<1x1x30x128xf32> to vector<30x128xf32>
        %52 = vector.broadcast %46 : f32 to vector<30x128xf32>
        %53 = arith.mulf %51, %52 : vector<30x128xf32>
        %54 = arith.addf %37, %53 : vector<30x128xf32>
        %c2_i32_49 = arith.constant 2 : i32
        %55 = arith.muli %c2_i32_49, %arg15 : i32
        %c1_i32_50 = arith.constant 1 : i32
        %56 = arith.addi %55, %c1_i32_50 : i32
        %c0_i32_51 = arith.constant 0 : i32
        %57 = arith.addi %56, %c0_i32_51 : i32
        %c0_52 = arith.constant 0 : index
        %58 = arith.index_cast %57 : i32 to index
        %c0_53 = arith.constant 0 : index
        %c0_54 = arith.constant 0 : index
        %59 = vector.load %arg1[%c0_52, %58, %c0_53, %c0_54] : memref<3x32x32x128xf32, #tpu.memory_space<vmem>>, vector<1x1x30x128xf32>
        %60 = vector.shape_cast %59 : vector<1x1x30x128xf32> to vector<30x128xf32>
        %61 = vector.broadcast %46 : f32 to vector<30x128xf32>
        %62 = arith.mulf %60, %61 : vector<30x128xf32>
        %63 = arith.addf %38, %62 : vector<30x128xf32>
        %c3_i32_55 = arith.constant 3 : i32
        %64 = arith.muli %arg16, %c3_i32_55 : i32
        %c0_i32_56 = arith.constant 0 : i32
        %65 = arith.addi %64, %c0_i32_56 : i32
        %c3_i32_57 = arith.constant 3 : i32
        %66 = arith.muli %65, %c3_i32_57 : i32
        %c0_i32_58 = arith.constant 0 : i32
        %67 = arith.addi %66, %c0_i32_58 : i32
        %c3_i32_59 = arith.constant 3 : i32
        %68 = arith.muli %67, %c3_i32_59 : i32
        %c1_i32_60 = arith.constant 1 : i32
        %69 = arith.addi %68, %c1_i32_60 : i32
        %70 = arith.index_cast %69 : i32 to index
        %71 = memref.load %arg2[%70] : memref<135xf32, #tpu.memory_space<smem>>
        %c2_i32_61 = arith.constant 2 : i32
        %72 = arith.muli %c2_i32_61, %arg15 : i32
        %c0_i32_62 = arith.constant 0 : i32
        %73 = arith.addi %72, %c0_i32_62 : i32
        %c0_63 = arith.constant 0 : index
        %74 = arith.index_cast %73 : i32 to index
        %c1_64 = arith.constant 1 : index
        %c0_65 = arith.constant 0 : index
        %75 = vector.load %arg1[%c0_63, %74, %c1_64, %c0_65] : memref<3x32x32x128xf32, #tpu.memory_space<vmem>>, vector<1x1x30x128xf32>
        %76 = vector.shape_cast %75 : vector<1x1x30x128xf32> to vector<30x128xf32>
        %77 = vector.broadcast %71 : f32 to vector<30x128xf32>
        %78 = arith.mulf %76, %77 : vector<30x128xf32>
        %79 = arith.addf %54, %78 : vector<30x128xf32>
        %c2_i32_66 = arith.constant 2 : i32
        %80 = arith.muli %c2_i32_66, %arg15 : i32
        %c1_i32_67 = arith.constant 1 : i32
        %81 = arith.addi %80, %c1_i32_67 : i32
        %c0_i32_68 = arith.constant 0 : i32
        %82 = arith.addi %81, %c0_i32_68 : i32
        %c0_69 = arith.constant 0 : index
        %83 = arith.index_cast %82 : i32 to index
        %c1_70 = arith.constant 1 : index
        %c0_71 = arith.constant 0 : index
        %84 = vector.load %arg1[%c0_69, %83, %c1_70, %c0_71] : memref<3x32x32x128xf32, #tpu.memory_space<vmem>>, vector<1x1x30x128xf32>
        %85 = vector.shape_cast %84 : vector<1x1x30x128xf32> to vector<30x128xf32>
        %86 = vector.broadcast %71 : f32 to vector<30x128xf32>
        %87 = arith.mulf %85, %86 : vector<30x128xf32>
        %88 = arith.addf %63, %87 : vector<30x128xf32>
        %c3_i32_72 = arith.constant 3 : i32
        %89 = arith.muli %arg16, %c3_i32_72 : i32
        %c0_i32_73 = arith.constant 0 : i32
        %90 = arith.addi %89, %c0_i32_73 : i32
        %c3_i32_74 = arith.constant 3 : i32
        %91 = arith.muli %90, %c3_i32_74 : i32
        %c0_i32_75 = arith.constant 0 : i32
        %92 = arith.addi %91, %c0_i32_75 : i32
        %c3_i32_76 = arith.constant 3 : i32
        %93 = arith.muli %92, %c3_i32_76 : i32
        %c2_i32_77 = arith.constant 2 : i32
        %94 = arith.addi %93, %c2_i32_77 : i32
        %95 = arith.index_cast %94 : i32 to index
        %96 = memref.load %arg2[%95] : memref<135xf32, #tpu.memory_space<smem>>
        %c2_i32_78 = arith.constant 2 : i32
        %97 = arith.muli %c2_i32_78, %arg15 : i32
        %c0_i32_79 = arith.constant 0 : i32
        %98 = arith.addi %97, %c0_i32_79 : i32
        %c0_80 = arith.constant 0 : index
        %99 = arith.index_cast %98 : i32 to index
        %c2_81 = arith.constant 2 : index
        %c0_82 = arith.constant 0 : index
        %100 = vector.load %arg1[%c0_80, %99, %c2_81, %c0_82] : memref<3x32x32x128xf32, #tpu.memory_space<vmem>>, vector<1x1x30x128xf32>
        %101 = vector.shape_cast %100 : vector<1x1x30x128xf32> to vector<30x128xf32>
        %102 = vector.broadcast %96 : f32 to vector<30x128xf32>
        %103 = arith.mulf %101, %102 : vector<30x128xf32>
        %104 = arith.addf %79, %103 : vector<30x128xf32>
        %c2_i32_83 = arith.constant 2 : i32
        %105 = arith.muli %c2_i32_83, %arg15 : i32
        %c1_i32_84 = arith.constant 1 : i32
        %106 = arith.addi %105, %c1_i32_84 : i32
        %c0_i32_85 = arith.constant 0 : i32
        %107 = arith.addi %106, %c0_i32_85 : i32
        %c0_86 = arith.constant 0 : index
        %108 = arith.index_cast %107 : i32 to index
        %c2_87 = arith.constant 2 : index
        %c0_88 = arith.constant 0 : index
        %109 = vector.load %arg1[%c0_86, %108, %c2_87, %c0_88] : memref<3x32x32x128xf32, #tpu.memory_space<vmem>>, vector<1x1x30x128xf32>
        %110 = vector.shape_cast %109 : vector<1x1x30x128xf32> to vector<30x128xf32>
        %111 = vector.broadcast %96 : f32 to vector<30x128xf32>
        %112 = arith.mulf %110, %111 : vector<30x128xf32>
        %113 = arith.addf %88, %112 : vector<30x128xf32>
        %c3_i32_89 = arith.constant 3 : i32
        %114 = arith.muli %arg16, %c3_i32_89 : i32
        %c0_i32_90 = arith.constant 0 : i32
        %115 = arith.addi %114, %c0_i32_90 : i32
        %c3_i32_91 = arith.constant 3 : i32
        %116 = arith.muli %115, %c3_i32_91 : i32
        %c1_i32_92 = arith.constant 1 : i32
        %117 = arith.addi %116, %c1_i32_92 : i32
        %c3_i32_93 = arith.constant 3 : i32
        %118 = arith.muli %117, %c3_i32_93 : i32
        %c0_i32_94 = arith.constant 0 : i32
        %119 = arith.addi %118, %c0_i32_94 : i32
        %120 = arith.index_cast %119 : i32 to index
        %121 = memref.load %arg2[%120] : memref<135xf32, #tpu.memory_space<smem>>
        %c2_i32_95 = arith.constant 2 : i32
        %122 = arith.muli %c2_i32_95, %arg15 : i32
        %c1_i32_96 = arith.constant 1 : i32
        %123 = arith.addi %122, %c1_i32_96 : i32
        %c0_97 = arith.constant 0 : index
        %124 = arith.index_cast %123 : i32 to index
        %c0_98 = arith.constant 0 : index
        %c0_99 = arith.constant 0 : index
        %125 = vector.load %arg1[%c0_97, %124, %c0_98, %c0_99] : memref<3x32x32x128xf32, #tpu.memory_space<vmem>>, vector<1x1x30x128xf32>
        %126 = vector.shape_cast %125 : vector<1x1x30x128xf32> to vector<30x128xf32>
        %127 = vector.broadcast %121 : f32 to vector<30x128xf32>
        %128 = arith.mulf %126, %127 : vector<30x128xf32>
        %129 = arith.addf %104, %128 : vector<30x128xf32>
        %c2_i32_100 = arith.constant 2 : i32
        %130 = arith.muli %c2_i32_100, %arg15 : i32
        %c1_i32_101 = arith.constant 1 : i32
        %131 = arith.addi %130, %c1_i32_101 : i32
        %c1_i32_102 = arith.constant 1 : i32
        %132 = arith.addi %131, %c1_i32_102 : i32
        %c0_103 = arith.constant 0 : index
        %133 = arith.index_cast %132 : i32 to index
        %c0_104 = arith.constant 0 : index
        %c0_105 = arith.constant 0 : index
        %134 = vector.load %arg1[%c0_103, %133, %c0_104, %c0_105] : memref<3x32x32x128xf32, #tpu.memory_space<vmem>>, vector<1x1x30x128xf32>
        %135 = vector.shape_cast %134 : vector<1x1x30x128xf32> to vector<30x128xf32>
        %136 = vector.broadcast %121 : f32 to vector<30x128xf32>
        %137 = arith.mulf %135, %136 : vector<30x128xf32>
        %138 = arith.addf %113, %137 : vector<30x128xf32>
        %c3_i32_106 = arith.constant 3 : i32
        %139 = arith.muli %arg16, %c3_i32_106 : i32
        %c0_i32_107 = arith.constant 0 : i32
        %140 = arith.addi %139, %c0_i32_107 : i32
        %c3_i32_108 = arith.constant 3 : i32
        %141 = arith.muli %140, %c3_i32_108 : i32
        %c1_i32_109 = arith.constant 1 : i32
        %142 = arith.addi %141, %c1_i32_109 : i32
        %c3_i32_110 = arith.constant 3 : i32
        %143 = arith.muli %142, %c3_i32_110 : i32
        %c1_i32_111 = arith.constant 1 : i32
        %144 = arith.addi %143, %c1_i32_111 : i32
        %145 = arith.index_cast %144 : i32 to index
        %146 = memref.load %arg2[%145] : memref<135xf32, #tpu.memory_space<smem>>
        %c2_i32_112 = arith.constant 2 : i32
        %147 = arith.muli %c2_i32_112, %arg15 : i32
        %c1_i32_113 = arith.constant 1 : i32
        %148 = arith.addi %147, %c1_i32_113 : i32
        %c0_114 = arith.constant 0 : index
        %149 = arith.index_cast %148 : i32 to index
        %c1_115 = arith.constant 1 : index
        %c0_116 = arith.constant 0 : index
        %150 = vector.load %arg1[%c0_114, %149, %c1_115, %c0_116] : memref<3x32x32x128xf32, #tpu.memory_space<vmem>>, vector<1x1x30x128xf32>
        %151 = vector.shape_cast %150 : vector<1x1x30x128xf32> to vector<30x128xf32>
        %152 = vector.broadcast %146 : f32 to vector<30x128xf32>
        %153 = arith.mulf %151, %152 : vector<30x128xf32>
        %154 = arith.addf %129, %153 : vector<30x128xf32>
        %c2_i32_117 = arith.constant 2 : i32
        %155 = arith.muli %c2_i32_117, %arg15 : i32
        %c1_i32_118 = arith.constant 1 : i32
        %156 = arith.addi %155, %c1_i32_118 : i32
        %c1_i32_119 = arith.constant 1 : i32
        %157 = arith.addi %156, %c1_i32_119 : i32
        %c0_120 = arith.constant 0 : index
        %158 = arith.index_cast %157 : i32 to index
        %c1_121 = arith.constant 1 : index
        %c0_122 = arith.constant 0 : index
        %159 = vector.load %arg1[%c0_120, %158, %c1_121, %c0_122] : memref<3x32x32x128xf32, #tpu.memory_space<vmem>>, vector<1x1x30x128xf32>
        %160 = vector.shape_cast %159 : vector<1x1x30x128xf32> to vector<30x128xf32>
        %161 = vector.broadcast %146 : f32 to vector<30x128xf32>
        %162 = arith.mulf %160, %161 : vector<30x128xf32>
        %163 = arith.addf %138, %162 : vector<30x128xf32>
        %c3_i32_123 = arith.constant 3 : i32
        %164 = arith.muli %arg16, %c3_i32_123 : i32
        %c0_i32_124 = arith.constant 0 : i32
        %165 = arith.addi %164, %c0_i32_124 : i32
        %c3_i32_125 = arith.constant 3 : i32
        %166 = arith.muli %165, %c3_i32_125 : i32
        %c1_i32_126 = arith.constant 1 : i32
        %167 = arith.addi %166, %c1_i32_126 : i32
        %c3_i32_127 = arith.constant 3 : i32
        %168 = arith.muli %167, %c3_i32_127 : i32
        %c2_i32_128 = arith.constant 2 : i32
        %169 = arith.addi %168, %c2_i32_128 : i32
        %170 = arith.index_cast %169 : i32 to index
        %171 = memref.load %arg2[%170] : memref<135xf32, #tpu.memory_space<smem>>
        %c2_i32_129 = arith.constant 2 : i32
        %172 = arith.muli %c2_i32_129, %arg15 : i32
        %c1_i32_130 = arith.constant 1 : i32
        %173 = arith.addi %172, %c1_i32_130 : i32
        %c0_131 = arith.constant 0 : index
        %174 = arith.index_cast %173 : i32 to index
        %c2_132 = arith.constant 2 : index
        %c0_133 = arith.constant 0 : index
        %175 = vector.load %arg1[%c0_131, %174, %c2_132, %c0_133] : memref<3x32x32x128xf32, #tpu.memory_space<vmem>>, vector<1x1x30x128xf32>
        %176 = vector.shape_cast %175 : vector<1x1x30x128xf32> to vector<30x128xf32>
        %177 = vector.broadcast %171 : f32 to vector<30x128xf32>
        %178 = arith.mulf %176, %177 : vector<30x128xf32>
        %179 = arith.addf %154, %178 : vector<30x128xf32>
        %c2_i32_134 = arith.constant 2 : i32
        %180 = arith.muli %c2_i32_134, %arg15 : i32
        %c1_i32_135 = arith.constant 1 : i32
        %181 = arith.addi %180, %c1_i32_135 : i32
        %c1_i32_136 = arith.constant 1 : i32
        %182 = arith.addi %181, %c1_i32_136 : i32
        %c0_137 = arith.constant 0 : index
        %183 = arith.index_cast %182 : i32 to index
        %c2_138 = arith.constant 2 : index
        %c0_139 = arith.constant 0 : index
        %184 = vector.load %arg1[%c0_137, %183, %c2_138, %c0_139] : memref<3x32x32x128xf32, #tpu.memory_space<vmem>>, vector<1x1x30x128xf32>
        %185 = vector.shape_cast %184 : vector<1x1x30x128xf32> to vector<30x128xf32>
        %186 = vector.broadcast %171 : f32 to vector<30x128xf32>
        %187 = arith.mulf %185, %186 : vector<30x128xf32>
        %188 = arith.addf %163, %187 : vector<30x128xf32>
        %c3_i32_140 = arith.constant 3 : i32
        %189 = arith.muli %arg16, %c3_i32_140 : i32
        %c0_i32_141 = arith.constant 0 : i32
        %190 = arith.addi %189, %c0_i32_141 : i32
        %c3_i32_142 = arith.constant 3 : i32
        %191 = arith.muli %190, %c3_i32_142 : i32
        %c2_i32_143 = arith.constant 2 : i32
        %192 = arith.addi %191, %c2_i32_143 : i32
        %c3_i32_144 = arith.constant 3 : i32
        %193 = arith.muli %192, %c3_i32_144 : i32
        %c0_i32_145 = arith.constant 0 : i32
        %194 = arith.addi %193, %c0_i32_145 : i32
        %195 = arith.index_cast %194 : i32 to index
        %196 = memref.load %arg2[%195] : memref<135xf32, #tpu.memory_space<smem>>
        %c2_i32_146 = arith.constant 2 : i32
        %197 = arith.muli %c2_i32_146, %arg15 : i32
        %c2_i32_147 = arith.constant 2 : i32
        %198 = arith.addi %197, %c2_i32_147 : i32
        %c0_148 = arith.constant 0 : index
        %199 = arith.index_cast %198 : i32 to index
        %c0_149 = arith.constant 0 : index
        %c0_150 = arith.constant 0 : index
        %200 = vector.load %arg1[%c0_148, %199, %c0_149, %c0_150] : memref<3x32x32x128xf32, #tpu.memory_space<vmem>>, vector<1x1x30x128xf32>
        %201 = vector.shape_cast %200 : vector<1x1x30x128xf32> to vector<30x128xf32>
        %202 = vector.broadcast %196 : f32 to vector<30x128xf32>
        %203 = arith.mulf %201, %202 : vector<30x128xf32>
        %204 = arith.addf %179, %203 : vector<30x128xf32>
        %c2_i32_151 = arith.constant 2 : i32
        %205 = arith.muli %c2_i32_151, %arg15 : i32
        %c1_i32_152 = arith.constant 1 : i32
        %206 = arith.addi %205, %c1_i32_152 : i32
        %c2_i32_153 = arith.constant 2 : i32
        %207 = arith.addi %206, %c2_i32_153 : i32
        %c0_154 = arith.constant 0 : index
        %208 = arith.index_cast %207 : i32 to index
        %c0_155 = arith.constant 0 : index
        %c0_156 = arith.constant 0 : index
        %209 = vector.load %arg1[%c0_154, %208, %c0_155, %c0_156] : memref<3x32x32x128xf32, #tpu.memory_space<vmem>>, vector<1x1x30x128xf32>
        %210 = vector.shape_cast %209 : vector<1x1x30x128xf32> to vector<30x128xf32>
        %211 = vector.broadcast %196 : f32 to vector<30x128xf32>
        %212 = arith.mulf %210, %211 : vector<30x128xf32>
        %213 = arith.addf %188, %212 : vector<30x128xf32>
        %c3_i32_157 = arith.constant 3 : i32
        %214 = arith.muli %arg16, %c3_i32_157 : i32
        %c0_i32_158 = arith.constant 0 : i32
        %215 = arith.addi %214, %c0_i32_158 : i32
        %c3_i32_159 = arith.constant 3 : i32
        %216 = arith.muli %215, %c3_i32_159 : i32
        %c2_i32_160 = arith.constant 2 : i32
        %217 = arith.addi %216, %c2_i32_160 : i32
        %c3_i32_161 = arith.constant 3 : i32
        %218 = arith.muli %217, %c3_i32_161 : i32
        %c1_i32_162 = arith.constant 1 : i32
        %219 = arith.addi %218, %c1_i32_162 : i32
        %220 = arith.index_cast %219 : i32 to index
        %221 = memref.load %arg2[%220] : memref<135xf32, #tpu.memory_space<smem>>
        %c2_i32_163 = arith.constant 2 : i32
        %222 = arith.muli %c2_i32_163, %arg15 : i32
        %c2_i32_164 = arith.constant 2 : i32
        %223 = arith.addi %222, %c2_i32_164 : i32
        %c0_165 = arith.constant 0 : index
        %224 = arith.index_cast %223 : i32 to index
        %c1_166 = arith.constant 1 : index
        %c0_167 = arith.constant 0 : index
        %225 = vector.load %arg1[%c0_165, %224, %c1_166, %c0_167] : memref<3x32x32x128xf32, #tpu.memory_space<vmem>>, vector<1x1x30x128xf32>
        %226 = vector.shape_cast %225 : vector<1x1x30x128xf32> to vector<30x128xf32>
        %227 = vector.broadcast %221 : f32 to vector<30x128xf32>
        %228 = arith.mulf %226, %227 : vector<30x128xf32>
        %229 = arith.addf %204, %228 : vector<30x128xf32>
        %c2_i32_168 = arith.constant 2 : i32
        %230 = arith.muli %c2_i32_168, %arg15 : i32
        %c1_i32_169 = arith.constant 1 : i32
        %231 = arith.addi %230, %c1_i32_169 : i32
        %c2_i32_170 = arith.constant 2 : i32
        %232 = arith.addi %231, %c2_i32_170 : i32
        %c0_171 = arith.constant 0 : index
        %233 = arith.index_cast %232 : i32 to index
        %c1_172 = arith.constant 1 : index
        %c0_173 = arith.constant 0 : index
        %234 = vector.load %arg1[%c0_171, %233, %c1_172, %c0_173] : memref<3x32x32x128xf32, #tpu.memory_space<vmem>>, vector<1x1x30x128xf32>
        %235 = vector.shape_cast %234 : vector<1x1x30x128xf32> to vector<30x128xf32>
        %236 = vector.broadcast %221 : f32 to vector<30x128xf32>
        %237 = arith.mulf %235, %236 : vector<30x128xf32>
        %238 = arith.addf %213, %237 : vector<30x128xf32>
        %c3_i32_174 = arith.constant 3 : i32
        %239 = arith.muli %arg16, %c3_i32_174 : i32
        %c0_i32_175 = arith.constant 0 : i32
        %240 = arith.addi %239, %c0_i32_175 : i32
        %c3_i32_176 = arith.constant 3 : i32
        %241 = arith.muli %240, %c3_i32_176 : i32
        %c2_i32_177 = arith.constant 2 : i32
        %242 = arith.addi %241, %c2_i32_177 : i32
        %c3_i32_178 = arith.constant 3 : i32
        %243 = arith.muli %242, %c3_i32_178 : i32
        %c2_i32_179 = arith.constant 2 : i32
        %244 = arith.addi %243, %c2_i32_179 : i32
        %245 = arith.index_cast %244 : i32 to index
        %246 = memref.load %arg2[%245] : memref<135xf32, #tpu.memory_space<smem>>
        %c2_i32_180 = arith.constant 2 : i32
        %247 = arith.muli %c2_i32_180, %arg15 : i32
        %c2_i32_181 = arith.constant 2 : i32
        %248 = arith.addi %247, %c2_i32_181 : i32
        %c0_182 = arith.constant 0 : index
        %249 = arith.index_cast %248 : i32 to index
        %c2_183 = arith.constant 2 : index
        %c0_184 = arith.constant 0 : index
        %250 = vector.load %arg1[%c0_182, %249, %c2_183, %c0_184] : memref<3x32x32x128xf32, #tpu.memory_space<vmem>>, vector<1x1x30x128xf32>
        %251 = vector.shape_cast %250 : vector<1x1x30x128xf32> to vector<30x128xf32>
        %252 = vector.broadcast %246 : f32 to vector<30x128xf32>
        %253 = arith.mulf %251, %252 : vector<30x128xf32>
        %254 = arith.addf %229, %253 : vector<30x128xf32>
        %c2_i32_185 = arith.constant 2 : i32
        %255 = arith.muli %c2_i32_185, %arg15 : i32
        %c1_i32_186 = arith.constant 1 : i32
        %256 = arith.addi %255, %c1_i32_186 : i32
        %c2_i32_187 = arith.constant 2 : i32
        %257 = arith.addi %256, %c2_i32_187 : i32
        %c0_188 = arith.constant 0 : index
        %258 = arith.index_cast %257 : i32 to index
        %c2_189 = arith.constant 2 : index
        %c0_190 = arith.constant 0 : index
        %259 = vector.load %arg1[%c0_188, %258, %c2_189, %c0_190] : memref<3x32x32x128xf32, #tpu.memory_space<vmem>>, vector<1x1x30x128xf32>
        %260 = vector.shape_cast %259 : vector<1x1x30x128xf32> to vector<30x128xf32>
        %261 = vector.broadcast %246 : f32 to vector<30x128xf32>
        %262 = arith.mulf %260, %261 : vector<30x128xf32>
        %263 = arith.addf %238, %262 : vector<30x128xf32>
        %c3_i32_191 = arith.constant 3 : i32
        %264 = arith.muli %arg16, %c3_i32_191 : i32
        %c1_i32_192 = arith.constant 1 : i32
        %265 = arith.addi %264, %c1_i32_192 : i32
        %c3_i32_193 = arith.constant 3 : i32
        %266 = arith.muli %265, %c3_i32_193 : i32
        %c0_i32_194 = arith.constant 0 : i32
        %267 = arith.addi %266, %c0_i32_194 : i32
        %c3_i32_195 = arith.constant 3 : i32
        %268 = arith.muli %267, %c3_i32_195 : i32
        %c0_i32_196 = arith.constant 0 : i32
        %269 = arith.addi %268, %c0_i32_196 : i32
        %270 = arith.index_cast %269 : i32 to index
        %271 = memref.load %arg2[%270] : memref<135xf32, #tpu.memory_space<smem>>
        %c2_i32_197 = arith.constant 2 : i32
        %272 = arith.muli %c2_i32_197, %arg15 : i32
        %c0_i32_198 = arith.constant 0 : i32
        %273 = arith.addi %272, %c0_i32_198 : i32
        %c1_199 = arith.constant 1 : index
        %274 = arith.index_cast %273 : i32 to index
        %c0_200 = arith.constant 0 : index
        %c0_201 = arith.constant 0 : index
        %275 = vector.load %arg1[%c1_199, %274, %c0_200, %c0_201] : memref<3x32x32x128xf32, #tpu.memory_space<vmem>>, vector<1x1x30x128xf32>
        %276 = vector.shape_cast %275 : vector<1x1x30x128xf32> to vector<30x128xf32>
        %277 = vector.broadcast %271 : f32 to vector<30x128xf32>
        %278 = arith.mulf %276, %277 : vector<30x128xf32>
        %279 = arith.addf %254, %278 : vector<30x128xf32>
        %c2_i32_202 = arith.constant 2 : i32
        %280 = arith.muli %c2_i32_202, %arg15 : i32
        %c1_i32_203 = arith.constant 1 : i32
        %281 = arith.addi %280, %c1_i32_203 : i32
        %c0_i32_204 = arith.constant 0 : i32
        %282 = arith.addi %281, %c0_i32_204 : i32
        %c1_205 = arith.constant 1 : index
        %283 = arith.index_cast %282 : i32 to index
        %c0_206 = arith.constant 0 : index
        %c0_207 = arith.constant 0 : index
        %284 = vector.load %arg1[%c1_205, %283, %c0_206, %c0_207] : memref<3x32x32x128xf32, #tpu.memory_space<vmem>>, vector<1x1x30x128xf32>
        %285 = vector.shape_cast %284 : vector<1x1x30x128xf32> to vector<30x128xf32>
        %286 = vector.broadcast %271 : f32 to vector<30x128xf32>
        %287 = arith.mulf %285, %286 : vector<30x128xf32>
        %288 = arith.addf %263, %287 : vector<30x128xf32>
        %c3_i32_208 = arith.constant 3 : i32
        %289 = arith.muli %arg16, %c3_i32_208 : i32
        %c1_i32_209 = arith.constant 1 : i32
        %290 = arith.addi %289, %c1_i32_209 : i32
        %c3_i32_210 = arith.constant 3 : i32
        %291 = arith.muli %290, %c3_i32_210 : i32
        %c0_i32_211 = arith.constant 0 : i32
        %292 = arith.addi %291, %c0_i32_211 : i32
        %c3_i32_212 = arith.constant 3 : i32
        %293 = arith.muli %292, %c3_i32_212 : i32
        %c1_i32_213 = arith.constant 1 : i32
        %294 = arith.addi %293, %c1_i32_213 : i32
        %295 = arith.index_cast %294 : i32 to index
        %296 = memref.load %arg2[%295] : memref<135xf32, #tpu.memory_space<smem>>
        %c2_i32_214 = arith.constant 2 : i32
        %297 = arith.muli %c2_i32_214, %arg15 : i32
        %c0_i32_215 = arith.constant 0 : i32
        %298 = arith.addi %297, %c0_i32_215 : i32
        %c1_216 = arith.constant 1 : index
        %299 = arith.index_cast %298 : i32 to index
        %c1_217 = arith.constant 1 : index
        %c0_218 = arith.constant 0 : index
        %300 = vector.load %arg1[%c1_216, %299, %c1_217, %c0_218] : memref<3x32x32x128xf32, #tpu.memory_space<vmem>>, vector<1x1x30x128xf32>
        %301 = vector.shape_cast %300 : vector<1x1x30x128xf32> to vector<30x128xf32>
        %302 = vector.broadcast %296 : f32 to vector<30x128xf32>
        %303 = arith.mulf %301, %302 : vector<30x128xf32>
        %304 = arith.addf %279, %303 : vector<30x128xf32>
        %c2_i32_219 = arith.constant 2 : i32
        %305 = arith.muli %c2_i32_219, %arg15 : i32
        %c1_i32_220 = arith.constant 1 : i32
        %306 = arith.addi %305, %c1_i32_220 : i32
        %c0_i32_221 = arith.constant 0 : i32
        %307 = arith.addi %306, %c0_i32_221 : i32
        %c1_222 = arith.constant 1 : index
        %308 = arith.index_cast %307 : i32 to index
        %c1_223 = arith.constant 1 : index
        %c0_224 = arith.constant 0 : index
        %309 = vector.load %arg1[%c1_222, %308, %c1_223, %c0_224] : memref<3x32x32x128xf32, #tpu.memory_space<vmem>>, vector<1x1x30x128xf32>
        %310 = vector.shape_cast %309 : vector<1x1x30x128xf32> to vector<30x128xf32>
        %311 = vector.broadcast %296 : f32 to vector<30x128xf32>
        %312 = arith.mulf %310, %311 : vector<30x128xf32>
        %313 = arith.addf %288, %312 : vector<30x128xf32>
        %c3_i32_225 = arith.constant 3 : i32
        %314 = arith.muli %arg16, %c3_i32_225 : i32
        %c1_i32_226 = arith.constant 1 : i32
        %315 = arith.addi %314, %c1_i32_226 : i32
        %c3_i32_227 = arith.constant 3 : i32
        %316 = arith.muli %315, %c3_i32_227 : i32
        %c0_i32_228 = arith.constant 0 : i32
        %317 = arith.addi %316, %c0_i32_228 : i32
        %c3_i32_229 = arith.constant 3 : i32
        %318 = arith.muli %317, %c3_i32_229 : i32
        %c2_i32_230 = arith.constant 2 : i32
        %319 = arith.addi %318, %c2_i32_230 : i32
        %320 = arith.index_cast %319 : i32 to index
        %321 = memref.load %arg2[%320] : memref<135xf32, #tpu.memory_space<smem>>
        %c2_i32_231 = arith.constant 2 : i32
        %322 = arith.muli %c2_i32_231, %arg15 : i32
        %c0_i32_232 = arith.constant 0 : i32
        %323 = arith.addi %322, %c0_i32_232 : i32
        %c1_233 = arith.constant 1 : index
        %324 = arith.index_cast %323 : i32 to index
        %c2_234 = arith.constant 2 : index
        %c0_235 = arith.constant 0 : index
        %325 = vector.load %arg1[%c1_233, %324, %c2_234, %c0_235] : memref<3x32x32x128xf32, #tpu.memory_space<vmem>>, vector<1x1x30x128xf32>
        %326 = vector.shape_cast %325 : vector<1x1x30x128xf32> to vector<30x128xf32>
        %327 = vector.broadcast %321 : f32 to vector<30x128xf32>
        %328 = arith.mulf %326, %327 : vector<30x128xf32>
        %329 = arith.addf %304, %328 : vector<30x128xf32>
        %c2_i32_236 = arith.constant 2 : i32
        %330 = arith.muli %c2_i32_236, %arg15 : i32
        %c1_i32_237 = arith.constant 1 : i32
        %331 = arith.addi %330, %c1_i32_237 : i32
        %c0_i32_238 = arith.constant 0 : i32
        %332 = arith.addi %331, %c0_i32_238 : i32
        %c1_239 = arith.constant 1 : index
        %333 = arith.index_cast %332 : i32 to index
        %c2_240 = arith.constant 2 : index
        %c0_241 = arith.constant 0 : index
        %334 = vector.load %arg1[%c1_239, %333, %c2_240, %c0_241] : memref<3x32x32x128xf32, #tpu.memory_space<vmem>>, vector<1x1x30x128xf32>
        %335 = vector.shape_cast %334 : vector<1x1x30x128xf32> to vector<30x128xf32>
        %336 = vector.broadcast %321 : f32 to vector<30x128xf32>
        %337 = arith.mulf %335, %336 : vector<30x128xf32>
        %338 = arith.addf %313, %337 : vector<30x128xf32>
        %c3_i32_242 = arith.constant 3 : i32
        %339 = arith.muli %arg16, %c3_i32_242 : i32
        %c1_i32_243 = arith.constant 1 : i32
        %340 = arith.addi %339, %c1_i32_243 : i32
        %c3_i32_244 = arith.constant 3 : i32
        %341 = arith.muli %340, %c3_i32_244 : i32
        %c1_i32_245 = arith.constant 1 : i32
        %342 = arith.addi %341, %c1_i32_245 : i32
        %c3_i32_246 = arith.constant 3 : i32
        %343 = arith.muli %342, %c3_i32_246 : i32
        %c0_i32_247 = arith.constant 0 : i32
        %344 = arith.addi %343, %c0_i32_247 : i32
        %345 = arith.index_cast %344 : i32 to index
        %346 = memref.load %arg2[%345] : memref<135xf32, #tpu.memory_space<smem>>
        %c2_i32_248 = arith.constant 2 : i32
        %347 = arith.muli %c2_i32_248, %arg15 : i32
        %c1_i32_249 = arith.constant 1 : i32
        %348 = arith.addi %347, %c1_i32_249 : i32
        %c1_250 = arith.constant 1 : index
        %349 = arith.index_cast %348 : i32 to index
        %c0_251 = arith.constant 0 : index
        %c0_252 = arith.constant 0 : index
        %350 = vector.load %arg1[%c1_250, %349, %c0_251, %c0_252] : memref<3x32x32x128xf32, #tpu.memory_space<vmem>>, vector<1x1x30x128xf32>
        %351 = vector.shape_cast %350 : vector<1x1x30x128xf32> to vector<30x128xf32>
        %352 = vector.broadcast %346 : f32 to vector<30x128xf32>
        %353 = arith.mulf %351, %352 : vector<30x128xf32>
        %354 = arith.addf %329, %353 : vector<30x128xf32>
        %c2_i32_253 = arith.constant 2 : i32
        %355 = arith.muli %c2_i32_253, %arg15 : i32
        %c1_i32_254 = arith.constant 1 : i32
        %356 = arith.addi %355, %c1_i32_254 : i32
        %c1_i32_255 = arith.constant 1 : i32
        %357 = arith.addi %356, %c1_i32_255 : i32
        %c1_256 = arith.constant 1 : index
        %358 = arith.index_cast %357 : i32 to index
        %c0_257 = arith.constant 0 : index
        %c0_258 = arith.constant 0 : index
        %359 = vector.load %arg1[%c1_256, %358, %c0_257, %c0_258] : memref<3x32x32x128xf32, #tpu.memory_space<vmem>>, vector<1x1x30x128xf32>
        %360 = vector.shape_cast %359 : vector<1x1x30x128xf32> to vector<30x128xf32>
        %361 = vector.broadcast %346 : f32 to vector<30x128xf32>
        %362 = arith.mulf %360, %361 : vector<30x128xf32>
        %363 = arith.addf %338, %362 : vector<30x128xf32>
        %c3_i32_259 = arith.constant 3 : i32
        %364 = arith.muli %arg16, %c3_i32_259 : i32
        %c1_i32_260 = arith.constant 1 : i32
        %365 = arith.addi %364, %c1_i32_260 : i32
        %c3_i32_261 = arith.constant 3 : i32
        %366 = arith.muli %365, %c3_i32_261 : i32
        %c1_i32_262 = arith.constant 1 : i32
        %367 = arith.addi %366, %c1_i32_262 : i32
        %c3_i32_263 = arith.constant 3 : i32
        %368 = arith.muli %367, %c3_i32_263 : i32
        %c1_i32_264 = arith.constant 1 : i32
        %369 = arith.addi %368, %c1_i32_264 : i32
        %370 = arith.index_cast %369 : i32 to index
        %371 = memref.load %arg2[%370] : memref<135xf32, #tpu.memory_space<smem>>
        %c2_i32_265 = arith.constant 2 : i32
        %372 = arith.muli %c2_i32_265, %arg15 : i32
        %c1_i32_266 = arith.constant 1 : i32
        %373 = arith.addi %372, %c1_i32_266 : i32
        %c1_267 = arith.constant 1 : index
        %374 = arith.index_cast %373 : i32 to index
        %c1_268 = arith.constant 1 : index
        %c0_269 = arith.constant 0 : index
        %375 = vector.load %arg1[%c1_267, %374, %c1_268, %c0_269] : memref<3x32x32x128xf32, #tpu.memory_space<vmem>>, vector<1x1x30x128xf32>
        %376 = vector.shape_cast %375 : vector<1x1x30x128xf32> to vector<30x128xf32>
        %377 = vector.broadcast %371 : f32 to vector<30x128xf32>
        %378 = arith.mulf %376, %377 : vector<30x128xf32>
        %379 = arith.addf %354, %378 : vector<30x128xf32>
        %c2_i32_270 = arith.constant 2 : i32
        %380 = arith.muli %c2_i32_270, %arg15 : i32
        %c1_i32_271 = arith.constant 1 : i32
        %381 = arith.addi %380, %c1_i32_271 : i32
        %c1_i32_272 = arith.constant 1 : i32
        %382 = arith.addi %381, %c1_i32_272 : i32
        %c1_273 = arith.constant 1 : index
        %383 = arith.index_cast %382 : i32 to index
        %c1_274 = arith.constant 1 : index
        %c0_275 = arith.constant 0 : index
        %384 = vector.load %arg1[%c1_273, %383, %c1_274, %c0_275] : memref<3x32x32x128xf32, #tpu.memory_space<vmem>>, vector<1x1x30x128xf32>
        %385 = vector.shape_cast %384 : vector<1x1x30x128xf32> to vector<30x128xf32>
        %386 = vector.broadcast %371 : f32 to vector<30x128xf32>
        %387 = arith.mulf %385, %386 : vector<30x128xf32>
        %388 = arith.addf %363, %387 : vector<30x128xf32>
        %c3_i32_276 = arith.constant 3 : i32
        %389 = arith.muli %arg16, %c3_i32_276 : i32
        %c1_i32_277 = arith.constant 1 : i32
        %390 = arith.addi %389, %c1_i32_277 : i32
        %c3_i32_278 = arith.constant 3 : i32
        %391 = arith.muli %390, %c3_i32_278 : i32
        %c1_i32_279 = arith.constant 1 : i32
        %392 = arith.addi %391, %c1_i32_279 : i32
        %c3_i32_280 = arith.constant 3 : i32
        %393 = arith.muli %392, %c3_i32_280 : i32
        %c2_i32_281 = arith.constant 2 : i32
        %394 = arith.addi %393, %c2_i32_281 : i32
        %395 = arith.index_cast %394 : i32 to index
        %396 = memref.load %arg2[%395] : memref<135xf32, #tpu.memory_space<smem>>
        %c2_i32_282 = arith.constant 2 : i32
        %397 = arith.muli %c2_i32_282, %arg15 : i32
        %c1_i32_283 = arith.constant 1 : i32
        %398 = arith.addi %397, %c1_i32_283 : i32
        %c1_284 = arith.constant 1 : index
        %399 = arith.index_cast %398 : i32 to index
        %c2_285 = arith.constant 2 : index
        %c0_286 = arith.constant 0 : index
        %400 = vector.load %arg1[%c1_284, %399, %c2_285, %c0_286] : memref<3x32x32x128xf32, #tpu.memory_space<vmem>>, vector<1x1x30x128xf32>
        %401 = vector.shape_cast %400 : vector<1x1x30x128xf32> to vector<30x128xf32>
        %402 = vector.broadcast %396 : f32 to vector<30x128xf32>
        %403 = arith.mulf %401, %402 : vector<30x128xf32>
        %404 = arith.addf %379, %403 : vector<30x128xf32>
        %c2_i32_287 = arith.constant 2 : i32
        %405 = arith.muli %c2_i32_287, %arg15 : i32
        %c1_i32_288 = arith.constant 1 : i32
        %406 = arith.addi %405, %c1_i32_288 : i32
        %c1_i32_289 = arith.constant 1 : i32
        %407 = arith.addi %406, %c1_i32_289 : i32
        %c1_290 = arith.constant 1 : index
        %408 = arith.index_cast %407 : i32 to index
        %c2_291 = arith.constant 2 : index
        %c0_292 = arith.constant 0 : index
        %409 = vector.load %arg1[%c1_290, %408, %c2_291, %c0_292] : memref<3x32x32x128xf32, #tpu.memory_space<vmem>>, vector<1x1x30x128xf32>
        %410 = vector.shape_cast %409 : vector<1x1x30x128xf32> to vector<30x128xf32>
        %411 = vector.broadcast %396 : f32 to vector<30x128xf32>
        %412 = arith.mulf %410, %411 : vector<30x128xf32>
        %413 = arith.addf %388, %412 : vector<30x128xf32>
        %c3_i32_293 = arith.constant 3 : i32
        %414 = arith.muli %arg16, %c3_i32_293 : i32
        %c1_i32_294 = arith.constant 1 : i32
        %415 = arith.addi %414, %c1_i32_294 : i32
        %c3_i32_295 = arith.constant 3 : i32
        %416 = arith.muli %415, %c3_i32_295 : i32
        %c2_i32_296 = arith.constant 2 : i32
        %417 = arith.addi %416, %c2_i32_296 : i32
        %c3_i32_297 = arith.constant 3 : i32
        %418 = arith.muli %417, %c3_i32_297 : i32
        %c0_i32_298 = arith.constant 0 : i32
        %419 = arith.addi %418, %c0_i32_298 : i32
        %420 = arith.index_cast %419 : i32 to index
        %421 = memref.load %arg2[%420] : memref<135xf32, #tpu.memory_space<smem>>
        %c2_i32_299 = arith.constant 2 : i32
        %422 = arith.muli %c2_i32_299, %arg15 : i32
        %c2_i32_300 = arith.constant 2 : i32
        %423 = arith.addi %422, %c2_i32_300 : i32
        %c1_301 = arith.constant 1 : index
        %424 = arith.index_cast %423 : i32 to index
        %c0_302 = arith.constant 0 : index
        %c0_303 = arith.constant 0 : index
        %425 = vector.load %arg1[%c1_301, %424, %c0_302, %c0_303] : memref<3x32x32x128xf32, #tpu.memory_space<vmem>>, vector<1x1x30x128xf32>
        %426 = vector.shape_cast %425 : vector<1x1x30x128xf32> to vector<30x128xf32>
        %427 = vector.broadcast %421 : f32 to vector<30x128xf32>
        %428 = arith.mulf %426, %427 : vector<30x128xf32>
        %429 = arith.addf %404, %428 : vector<30x128xf32>
        %c2_i32_304 = arith.constant 2 : i32
        %430 = arith.muli %c2_i32_304, %arg15 : i32
        %c1_i32_305 = arith.constant 1 : i32
        %431 = arith.addi %430, %c1_i32_305 : i32
        %c2_i32_306 = arith.constant 2 : i32
        %432 = arith.addi %431, %c2_i32_306 : i32
        %c1_307 = arith.constant 1 : index
        %433 = arith.index_cast %432 : i32 to index
        %c0_308 = arith.constant 0 : index
        %c0_309 = arith.constant 0 : index
        %434 = vector.load %arg1[%c1_307, %433, %c0_308, %c0_309] : memref<3x32x32x128xf32, #tpu.memory_space<vmem>>, vector<1x1x30x128xf32>
        %435 = vector.shape_cast %434 : vector<1x1x30x128xf32> to vector<30x128xf32>
        %436 = vector.broadcast %421 : f32 to vector<30x128xf32>
        %437 = arith.mulf %435, %436 : vector<30x128xf32>
        %438 = arith.addf %413, %437 : vector<30x128xf32>
        %c3_i32_310 = arith.constant 3 : i32
        %439 = arith.muli %arg16, %c3_i32_310 : i32
        %c1_i32_311 = arith.constant 1 : i32
        %440 = arith.addi %439, %c1_i32_311 : i32
        %c3_i32_312 = arith.constant 3 : i32
        %441 = arith.muli %440, %c3_i32_312 : i32
        %c2_i32_313 = arith.constant 2 : i32
        %442 = arith.addi %441, %c2_i32_313 : i32
        %c3_i32_314 = arith.constant 3 : i32
        %443 = arith.muli %442, %c3_i32_314 : i32
        %c1_i32_315 = arith.constant 1 : i32
        %444 = arith.addi %443, %c1_i32_315 : i32
        %445 = arith.index_cast %444 : i32 to index
        %446 = memref.load %arg2[%445] : memref<135xf32, #tpu.memory_space<smem>>
        %c2_i32_316 = arith.constant 2 : i32
        %447 = arith.muli %c2_i32_316, %arg15 : i32
        %c2_i32_317 = arith.constant 2 : i32
        %448 = arith.addi %447, %c2_i32_317 : i32
        %c1_318 = arith.constant 1 : index
        %449 = arith.index_cast %448 : i32 to index
        %c1_319 = arith.constant 1 : index
        %c0_320 = arith.constant 0 : index
        %450 = vector.load %arg1[%c1_318, %449, %c1_319, %c0_320] : memref<3x32x32x128xf32, #tpu.memory_space<vmem>>, vector<1x1x30x128xf32>
        %451 = vector.shape_cast %450 : vector<1x1x30x128xf32> to vector<30x128xf32>
        %452 = vector.broadcast %446 : f32 to vector<30x128xf32>
        %453 = arith.mulf %451, %452 : vector<30x128xf32>
        %454 = arith.addf %429, %453 : vector<30x128xf32>
        %c2_i32_321 = arith.constant 2 : i32
        %455 = arith.muli %c2_i32_321, %arg15 : i32
        %c1_i32_322 = arith.constant 1 : i32
        %456 = arith.addi %455, %c1_i32_322 : i32
        %c2_i32_323 = arith.constant 2 : i32
        %457 = arith.addi %456, %c2_i32_323 : i32
        %c1_324 = arith.constant 1 : index
        %458 = arith.index_cast %457 : i32 to index
        %c1_325 = arith.constant 1 : index
        %c0_326 = arith.constant 0 : index
        %459 = vector.load %arg1[%c1_324, %458, %c1_325, %c0_326] : memref<3x32x32x128xf32, #tpu.memory_space<vmem>>, vector<1x1x30x128xf32>
        %460 = vector.shape_cast %459 : vector<1x1x30x128xf32> to vector<30x128xf32>
        %461 = vector.broadcast %446 : f32 to vector<30x128xf32>
        %462 = arith.mulf %460, %461 : vector<30x128xf32>
        %463 = arith.addf %438, %462 : vector<30x128xf32>
        %c3_i32_327 = arith.constant 3 : i32
        %464 = arith.muli %arg16, %c3_i32_327 : i32
        %c1_i32_328 = arith.constant 1 : i32
        %465 = arith.addi %464, %c1_i32_328 : i32
        %c3_i32_329 = arith.constant 3 : i32
        %466 = arith.muli %465, %c3_i32_329 : i32
        %c2_i32_330 = arith.constant 2 : i32
        %467 = arith.addi %466, %c2_i32_330 : i32
        %c3_i32_331 = arith.constant 3 : i32
        %468 = arith.muli %467, %c3_i32_331 : i32
        %c2_i32_332 = arith.constant 2 : i32
        %469 = arith.addi %468, %c2_i32_332 : i32
        %470 = arith.index_cast %469 : i32 to index
        %471 = memref.load %arg2[%470] : memref<135xf32, #tpu.memory_space<smem>>
        %c2_i32_333 = arith.constant 2 : i32
        %472 = arith.muli %c2_i32_333, %arg15 : i32
        %c2_i32_334 = arith.constant 2 : i32
        %473 = arith.addi %472, %c2_i32_334 : i32
        %c1_335 = arith.constant 1 : index
        %474 = arith.index_cast %473 : i32 to index
        %c2_336 = arith.constant 2 : index
        %c0_337 = arith.constant 0 : index
        %475 = vector.load %arg1[%c1_335, %474, %c2_336, %c0_337] : memref<3x32x32x128xf32, #tpu.memory_space<vmem>>, vector<1x1x30x128xf32>
        %476 = vector.shape_cast %475 : vector<1x1x30x128xf32> to vector<30x128xf32>
        %477 = vector.broadcast %471 : f32 to vector<30x128xf32>
        %478 = arith.mulf %476, %477 : vector<30x128xf32>
        %479 = arith.addf %454, %478 : vector<30x128xf32>
        %c2_i32_338 = arith.constant 2 : i32
        %480 = arith.muli %c2_i32_338, %arg15 : i32
        %c1_i32_339 = arith.constant 1 : i32
        %481 = arith.addi %480, %c1_i32_339 : i32
        %c2_i32_340 = arith.constant 2 : i32
        %482 = arith.addi %481, %c2_i32_340 : i32
        %c1_341 = arith.constant 1 : index
        %483 = arith.index_cast %482 : i32 to index
        %c2_342 = arith.constant 2 : index
        %c0_343 = arith.constant 0 : index
        %484 = vector.load %arg1[%c1_341, %483, %c2_342, %c0_343] : memref<3x32x32x128xf32, #tpu.memory_space<vmem>>, vector<1x1x30x128xf32>
        %485 = vector.shape_cast %484 : vector<1x1x30x128xf32> to vector<30x128xf32>
        %486 = vector.broadcast %471 : f32 to vector<30x128xf32>
        %487 = arith.mulf %485, %486 : vector<30x128xf32>
        %488 = arith.addf %463, %487 : vector<30x128xf32>
        %c3_i32_344 = arith.constant 3 : i32
        %489 = arith.muli %arg16, %c3_i32_344 : i32
        %c2_i32_345 = arith.constant 2 : i32
        %490 = arith.addi %489, %c2_i32_345 : i32
        %c3_i32_346 = arith.constant 3 : i32
        %491 = arith.muli %490, %c3_i32_346 : i32
        %c0_i32_347 = arith.constant 0 : i32
        %492 = arith.addi %491, %c0_i32_347 : i32
        %c3_i32_348 = arith.constant 3 : i32
        %493 = arith.muli %492, %c3_i32_348 : i32
        %c0_i32_349 = arith.constant 0 : i32
        %494 = arith.addi %493, %c0_i32_349 : i32
        %495 = arith.index_cast %494 : i32 to index
        %496 = memref.load %arg2[%495] : memref<135xf32, #tpu.memory_space<smem>>
        %c2_i32_350 = arith.constant 2 : i32
        %497 = arith.muli %c2_i32_350, %arg15 : i32
        %c0_i32_351 = arith.constant 0 : i32
        %498 = arith.addi %497, %c0_i32_351 : i32
        %c2_352 = arith.constant 2 : index
        %499 = arith.index_cast %498 : i32 to index
        %c0_353 = arith.constant 0 : index
        %c0_354 = arith.constant 0 : index
        %500 = vector.load %arg1[%c2_352, %499, %c0_353, %c0_354] : memref<3x32x32x128xf32, #tpu.memory_space<vmem>>, vector<1x1x30x128xf32>
        %501 = vector.shape_cast %500 : vector<1x1x30x128xf32> to vector<30x128xf32>
        %502 = vector.broadcast %496 : f32 to vector<30x128xf32>
        %503 = arith.mulf %501, %502 : vector<30x128xf32>
        %504 = arith.addf %479, %503 : vector<30x128xf32>
        %c2_i32_355 = arith.constant 2 : i32
        %505 = arith.muli %c2_i32_355, %arg15 : i32
        %c1_i32_356 = arith.constant 1 : i32
        %506 = arith.addi %505, %c1_i32_356 : i32
        %c0_i32_357 = arith.constant 0 : i32
        %507 = arith.addi %506, %c0_i32_357 : i32
        %c2_358 = arith.constant 2 : index
        %508 = arith.index_cast %507 : i32 to index
        %c0_359 = arith.constant 0 : index
        %c0_360 = arith.constant 0 : index
        %509 = vector.load %arg1[%c2_358, %508, %c0_359, %c0_360] : memref<3x32x32x128xf32, #tpu.memory_space<vmem>>, vector<1x1x30x128xf32>
        %510 = vector.shape_cast %509 : vector<1x1x30x128xf32> to vector<30x128xf32>
        %511 = vector.broadcast %496 : f32 to vector<30x128xf32>
        %512 = arith.mulf %510, %511 : vector<30x128xf32>
        %513 = arith.addf %488, %512 : vector<30x128xf32>
        %c3_i32_361 = arith.constant 3 : i32
        %514 = arith.muli %arg16, %c3_i32_361 : i32
        %c2_i32_362 = arith.constant 2 : i32
        %515 = arith.addi %514, %c2_i32_362 : i32
        %c3_i32_363 = arith.constant 3 : i32
        %516 = arith.muli %515, %c3_i32_363 : i32
        %c0_i32_364 = arith.constant 0 : i32
        %517 = arith.addi %516, %c0_i32_364 : i32
        %c3_i32_365 = arith.constant 3 : i32
        %518 = arith.muli %517, %c3_i32_365 : i32
        %c1_i32_366 = arith.constant 1 : i32
        %519 = arith.addi %518, %c1_i32_366 : i32
        %520 = arith.index_cast %519 : i32 to index
        %521 = memref.load %arg2[%520] : memref<135xf32, #tpu.memory_space<smem>>
        %c2_i32_367 = arith.constant 2 : i32
        %522 = arith.muli %c2_i32_367, %arg15 : i32
        %c0_i32_368 = arith.constant 0 : i32
        %523 = arith.addi %522, %c0_i32_368 : i32
        %c2_369 = arith.constant 2 : index
        %524 = arith.index_cast %523 : i32 to index
        %c1_370 = arith.constant 1 : index
        %c0_371 = arith.constant 0 : index
        %525 = vector.load %arg1[%c2_369, %524, %c1_370, %c0_371] : memref<3x32x32x128xf32, #tpu.memory_space<vmem>>, vector<1x1x30x128xf32>
        %526 = vector.shape_cast %525 : vector<1x1x30x128xf32> to vector<30x128xf32>
        %527 = vector.broadcast %521 : f32 to vector<30x128xf32>
        %528 = arith.mulf %526, %527 : vector<30x128xf32>
        %529 = arith.addf %504, %528 : vector<30x128xf32>
        %c2_i32_372 = arith.constant 2 : i32
        %530 = arith.muli %c2_i32_372, %arg15 : i32
        %c1_i32_373 = arith.constant 1 : i32
        %531 = arith.addi %530, %c1_i32_373 : i32
        %c0_i32_374 = arith.constant 0 : i32
        %532 = arith.addi %531, %c0_i32_374 : i32
        %c2_375 = arith.constant 2 : index
        %533 = arith.index_cast %532 : i32 to index
        %c1_376 = arith.constant 1 : index
        %c0_377 = arith.constant 0 : index
        %534 = vector.load %arg1[%c2_375, %533, %c1_376, %c0_377] : memref<3x32x32x128xf32, #tpu.memory_space<vmem>>, vector<1x1x30x128xf32>
        %535 = vector.shape_cast %534 : vector<1x1x30x128xf32> to vector<30x128xf32>
        %536 = vector.broadcast %521 : f32 to vector<30x128xf32>
        %537 = arith.mulf %535, %536 : vector<30x128xf32>
        %538 = arith.addf %513, %537 : vector<30x128xf32>
        %c3_i32_378 = arith.constant 3 : i32
        %539 = arith.muli %arg16, %c3_i32_378 : i32
        %c2_i32_379 = arith.constant 2 : i32
        %540 = arith.addi %539, %c2_i32_379 : i32
        %c3_i32_380 = arith.constant 3 : i32
        %541 = arith.muli %540, %c3_i32_380 : i32
        %c0_i32_381 = arith.constant 0 : i32
        %542 = arith.addi %541, %c0_i32_381 : i32
        %c3_i32_382 = arith.constant 3 : i32
        %543 = arith.muli %542, %c3_i32_382 : i32
        %c2_i32_383 = arith.constant 2 : i32
        %544 = arith.addi %543, %c2_i32_383 : i32
        %545 = arith.index_cast %544 : i32 to index
        %546 = memref.load %arg2[%545] : memref<135xf32, #tpu.memory_space<smem>>
        %c2_i32_384 = arith.constant 2 : i32
        %547 = arith.muli %c2_i32_384, %arg15 : i32
        %c0_i32_385 = arith.constant 0 : i32
        %548 = arith.addi %547, %c0_i32_385 : i32
        %c2_386 = arith.constant 2 : index
        %549 = arith.index_cast %548 : i32 to index
        %c2_387 = arith.constant 2 : index
        %c0_388 = arith.constant 0 : index
        %550 = vector.load %arg1[%c2_386, %549, %c2_387, %c0_388] : memref<3x32x32x128xf32, #tpu.memory_space<vmem>>, vector<1x1x30x128xf32>
        %551 = vector.shape_cast %550 : vector<1x1x30x128xf32> to vector<30x128xf32>
        %552 = vector.broadcast %546 : f32 to vector<30x128xf32>
        %553 = arith.mulf %551, %552 : vector<30x128xf32>
        %554 = arith.addf %529, %553 : vector<30x128xf32>
        %c2_i32_389 = arith.constant 2 : i32
        %555 = arith.muli %c2_i32_389, %arg15 : i32
        %c1_i32_390 = arith.constant 1 : i32
        %556 = arith.addi %555, %c1_i32_390 : i32
        %c0_i32_391 = arith.constant 0 : i32
        %557 = arith.addi %556, %c0_i32_391 : i32
        %c2_392 = arith.constant 2 : index
        %558 = arith.index_cast %557 : i32 to index
        %c2_393 = arith.constant 2 : index
        %c0_394 = arith.constant 0 : index
        %559 = vector.load %arg1[%c2_392, %558, %c2_393, %c0_394] : memref<3x32x32x128xf32, #tpu.memory_space<vmem>>, vector<1x1x30x128xf32>
        %560 = vector.shape_cast %559 : vector<1x1x30x128xf32> to vector<30x128xf32>
        %561 = vector.broadcast %546 : f32 to vector<30x128xf32>
        %562 = arith.mulf %560, %561 : vector<30x128xf32>
        %563 = arith.addf %538, %562 : vector<30x128xf32>
        %c3_i32_395 = arith.constant 3 : i32
        %564 = arith.muli %arg16, %c3_i32_395 : i32
        %c2_i32_396 = arith.constant 2 : i32
        %565 = arith.addi %564, %c2_i32_396 : i32
        %c3_i32_397 = arith.constant 3 : i32
        %566 = arith.muli %565, %c3_i32_397 : i32
        %c1_i32_398 = arith.constant 1 : i32
        %567 = arith.addi %566, %c1_i32_398 : i32
        %c3_i32_399 = arith.constant 3 : i32
        %568 = arith.muli %567, %c3_i32_399 : i32
        %c0_i32_400 = arith.constant 0 : i32
        %569 = arith.addi %568, %c0_i32_400 : i32
        %570 = arith.index_cast %569 : i32 to index
        %571 = memref.load %arg2[%570] : memref<135xf32, #tpu.memory_space<smem>>
        %c2_i32_401 = arith.constant 2 : i32
        %572 = arith.muli %c2_i32_401, %arg15 : i32
        %c1_i32_402 = arith.constant 1 : i32
        %573 = arith.addi %572, %c1_i32_402 : i32
        %c2_403 = arith.constant 2 : index
        %574 = arith.index_cast %573 : i32 to index
        %c0_404 = arith.constant 0 : index
        %c0_405 = arith.constant 0 : index
        %575 = vector.load %arg1[%c2_403, %574, %c0_404, %c0_405] : memref<3x32x32x128xf32, #tpu.memory_space<vmem>>, vector<1x1x30x128xf32>
        %576 = vector.shape_cast %575 : vector<1x1x30x128xf32> to vector<30x128xf32>
        %577 = vector.broadcast %571 : f32 to vector<30x128xf32>
        %578 = arith.mulf %576, %577 : vector<30x128xf32>
        %579 = arith.addf %554, %578 : vector<30x128xf32>
        %c2_i32_406 = arith.constant 2 : i32
        %580 = arith.muli %c2_i32_406, %arg15 : i32
        %c1_i32_407 = arith.constant 1 : i32
        %581 = arith.addi %580, %c1_i32_407 : i32
        %c1_i32_408 = arith.constant 1 : i32
        %582 = arith.addi %581, %c1_i32_408 : i32
        %c2_409 = arith.constant 2 : index
        %583 = arith.index_cast %582 : i32 to index
        %c0_410 = arith.constant 0 : index
        %c0_411 = arith.constant 0 : index
        %584 = vector.load %arg1[%c2_409, %583, %c0_410, %c0_411] : memref<3x32x32x128xf32, #tpu.memory_space<vmem>>, vector<1x1x30x128xf32>
        %585 = vector.shape_cast %584 : vector<1x1x30x128xf32> to vector<30x128xf32>
        %586 = vector.broadcast %571 : f32 to vector<30x128xf32>
        %587 = arith.mulf %585, %586 : vector<30x128xf32>
        %588 = arith.addf %563, %587 : vector<30x128xf32>
        %c3_i32_412 = arith.constant 3 : i32
        %589 = arith.muli %arg16, %c3_i32_412 : i32
        %c2_i32_413 = arith.constant 2 : i32
        %590 = arith.addi %589, %c2_i32_413 : i32
        %c3_i32_414 = arith.constant 3 : i32
        %591 = arith.muli %590, %c3_i32_414 : i32
        %c1_i32_415 = arith.constant 1 : i32
        %592 = arith.addi %591, %c1_i32_415 : i32
        %c3_i32_416 = arith.constant 3 : i32
        %593 = arith.muli %592, %c3_i32_416 : i32
        %c1_i32_417 = arith.constant 1 : i32
        %594 = arith.addi %593, %c1_i32_417 : i32
        %595 = arith.index_cast %594 : i32 to index
        %596 = memref.load %arg2[%595] : memref<135xf32, #tpu.memory_space<smem>>
        %c2_i32_418 = arith.constant 2 : i32
        %597 = arith.muli %c2_i32_418, %arg15 : i32
        %c1_i32_419 = arith.constant 1 : i32
        %598 = arith.addi %597, %c1_i32_419 : i32
        %c2_420 = arith.constant 2 : index
        %599 = arith.index_cast %598 : i32 to index
        %c1_421 = arith.constant 1 : index
        %c0_422 = arith.constant 0 : index
        %600 = vector.load %arg1[%c2_420, %599, %c1_421, %c0_422] : memref<3x32x32x128xf32, #tpu.memory_space<vmem>>, vector<1x1x30x128xf32>
        %601 = vector.shape_cast %600 : vector<1x1x30x128xf32> to vector<30x128xf32>
        %602 = vector.broadcast %596 : f32 to vector<30x128xf32>
        %603 = arith.mulf %601, %602 : vector<30x128xf32>
        %604 = arith.addf %579, %603 : vector<30x128xf32>
        %c2_i32_423 = arith.constant 2 : i32
        %605 = arith.muli %c2_i32_423, %arg15 : i32
        %c1_i32_424 = arith.constant 1 : i32
        %606 = arith.addi %605, %c1_i32_424 : i32
        %c1_i32_425 = arith.constant 1 : i32
        %607 = arith.addi %606, %c1_i32_425 : i32
        %c2_426 = arith.constant 2 : index
        %608 = arith.index_cast %607 : i32 to index
        %c1_427 = arith.constant 1 : index
        %c0_428 = arith.constant 0 : index
        %609 = vector.load %arg1[%c2_426, %608, %c1_427, %c0_428] : memref<3x32x32x128xf32, #tpu.memory_space<vmem>>, vector<1x1x30x128xf32>
        %610 = vector.shape_cast %609 : vector<1x1x30x128xf32> to vector<30x128xf32>
        %611 = vector.broadcast %596 : f32 to vector<30x128xf32>
        %612 = arith.mulf %610, %611 : vector<30x128xf32>
        %613 = arith.addf %588, %612 : vector<30x128xf32>
        %c3_i32_429 = arith.constant 3 : i32
        %614 = arith.muli %arg16, %c3_i32_429 : i32
        %c2_i32_430 = arith.constant 2 : i32
        %615 = arith.addi %614, %c2_i32_430 : i32
        %c3_i32_431 = arith.constant 3 : i32
        %616 = arith.muli %615, %c3_i32_431 : i32
        %c1_i32_432 = arith.constant 1 : i32
        %617 = arith.addi %616, %c1_i32_432 : i32
        %c3_i32_433 = arith.constant 3 : i32
        %618 = arith.muli %617, %c3_i32_433 : i32
        %c2_i32_434 = arith.constant 2 : i32
        %619 = arith.addi %618, %c2_i32_434 : i32
        %620 = arith.index_cast %619 : i32 to index
        %621 = memref.load %arg2[%620] : memref<135xf32, #tpu.memory_space<smem>>
        %c2_i32_435 = arith.constant 2 : i32
        %622 = arith.muli %c2_i32_435, %arg15 : i32
        %c1_i32_436 = arith.constant 1 : i32
        %623 = arith.addi %622, %c1_i32_436 : i32
        %c2_437 = arith.constant 2 : index
        %624 = arith.index_cast %623 : i32 to index
        %c2_438 = arith.constant 2 : index
        %c0_439 = arith.constant 0 : index
        %625 = vector.load %arg1[%c2_437, %624, %c2_438, %c0_439] : memref<3x32x32x128xf32, #tpu.memory_space<vmem>>, vector<1x1x30x128xf32>
        %626 = vector.shape_cast %625 : vector<1x1x30x128xf32> to vector<30x128xf32>
        %627 = vector.broadcast %621 : f32 to vector<30x128xf32>
        %628 = arith.mulf %626, %627 : vector<30x128xf32>
        %629 = arith.addf %604, %628 : vector<30x128xf32>
        %c2_i32_440 = arith.constant 2 : i32
        %630 = arith.muli %c2_i32_440, %arg15 : i32
        %c1_i32_441 = arith.constant 1 : i32
        %631 = arith.addi %630, %c1_i32_441 : i32
        %c1_i32_442 = arith.constant 1 : i32
        %632 = arith.addi %631, %c1_i32_442 : i32
        %c2_443 = arith.constant 2 : index
        %633 = arith.index_cast %632 : i32 to index
        %c2_444 = arith.constant 2 : index
        %c0_445 = arith.constant 0 : index
        %634 = vector.load %arg1[%c2_443, %633, %c2_444, %c0_445] : memref<3x32x32x128xf32, #tpu.memory_space<vmem>>, vector<1x1x30x128xf32>
        %635 = vector.shape_cast %634 : vector<1x1x30x128xf32> to vector<30x128xf32>
        %636 = vector.broadcast %621 : f32 to vector<30x128xf32>
        %637 = arith.mulf %635, %636 : vector<30x128xf32>
        %638 = arith.addf %613, %637 : vector<30x128xf32>
        %c3_i32_446 = arith.constant 3 : i32
        %639 = arith.muli %arg16, %c3_i32_446 : i32
        %c2_i32_447 = arith.constant 2 : i32
        %640 = arith.addi %639, %c2_i32_447 : i32
        %c3_i32_448 = arith.constant 3 : i32
        %641 = arith.muli %640, %c3_i32_448 : i32
        %c2_i32_449 = arith.constant 2 : i32
        %642 = arith.addi %641, %c2_i32_449 : i32
        %c3_i32_450 = arith.constant 3 : i32
        %643 = arith.muli %642, %c3_i32_450 : i32
        %c0_i32_451 = arith.constant 0 : i32
        %644 = arith.addi %643, %c0_i32_451 : i32
        %645 = arith.index_cast %644 : i32 to index
        %646 = memref.load %arg2[%645] : memref<135xf32, #tpu.memory_space<smem>>
        %c2_i32_452 = arith.constant 2 : i32
        %647 = arith.muli %c2_i32_452, %arg15 : i32
        %c2_i32_453 = arith.constant 2 : i32
        %648 = arith.addi %647, %c2_i32_453 : i32
        %c2_454 = arith.constant 2 : index
        %649 = arith.index_cast %648 : i32 to index
        %c0_455 = arith.constant 0 : index
        %c0_456 = arith.constant 0 : index
        %650 = vector.load %arg1[%c2_454, %649, %c0_455, %c0_456] : memref<3x32x32x128xf32, #tpu.memory_space<vmem>>, vector<1x1x30x128xf32>
        %651 = vector.shape_cast %650 : vector<1x1x30x128xf32> to vector<30x128xf32>
        %652 = vector.broadcast %646 : f32 to vector<30x128xf32>
        %653 = arith.mulf %651, %652 : vector<30x128xf32>
        %654 = arith.addf %629, %653 : vector<30x128xf32>
        %c2_i32_457 = arith.constant 2 : i32
        %655 = arith.muli %c2_i32_457, %arg15 : i32
        %c1_i32_458 = arith.constant 1 : i32
        %656 = arith.addi %655, %c1_i32_458 : i32
        %c2_i32_459 = arith.constant 2 : i32
        %657 = arith.addi %656, %c2_i32_459 : i32
        %c2_460 = arith.constant 2 : index
        %658 = arith.index_cast %657 : i32 to index
        %c0_461 = arith.constant 0 : index
        %c0_462 = arith.constant 0 : index
        %659 = vector.load %arg1[%c2_460, %658, %c0_461, %c0_462] : memref<3x32x32x128xf32, #tpu.memory_space<vmem>>, vector<1x1x30x128xf32>
        %660 = vector.shape_cast %659 : vector<1x1x30x128xf32> to vector<30x128xf32>
        %661 = vector.broadcast %646 : f32 to vector<30x128xf32>
        %662 = arith.mulf %660, %661 : vector<30x128xf32>
        %663 = arith.addf %638, %662 : vector<30x128xf32>
        %c3_i32_463 = arith.constant 3 : i32
        %664 = arith.muli %arg16, %c3_i32_463 : i32
        %c2_i32_464 = arith.constant 2 : i32
        %665 = arith.addi %664, %c2_i32_464 : i32
        %c3_i32_465 = arith.constant 3 : i32
        %666 = arith.muli %665, %c3_i32_465 : i32
        %c2_i32_466 = arith.constant 2 : i32
        %667 = arith.addi %666, %c2_i32_466 : i32
        %c3_i32_467 = arith.constant 3 : i32
        %668 = arith.muli %667, %c3_i32_467 : i32
        %c1_i32_468 = arith.constant 1 : i32
        %669 = arith.addi %668, %c1_i32_468 : i32
        %670 = arith.index_cast %669 : i32 to index
        %671 = memref.load %arg2[%670] : memref<135xf32, #tpu.memory_space<smem>>
        %c2_i32_469 = arith.constant 2 : i32
        %672 = arith.muli %c2_i32_469, %arg15 : i32
        %c2_i32_470 = arith.constant 2 : i32
        %673 = arith.addi %672, %c2_i32_470 : i32
        %c2_471 = arith.constant 2 : index
        %674 = arith.index_cast %673 : i32 to index
        %c1_472 = arith.constant 1 : index
        %c0_473 = arith.constant 0 : index
        %675 = vector.load %arg1[%c2_471, %674, %c1_472, %c0_473] : memref<3x32x32x128xf32, #tpu.memory_space<vmem>>, vector<1x1x30x128xf32>
        %676 = vector.shape_cast %675 : vector<1x1x30x128xf32> to vector<30x128xf32>
        %677 = vector.broadcast %671 : f32 to vector<30x128xf32>
        %678 = arith.mulf %676, %677 : vector<30x128xf32>
        %679 = arith.addf %654, %678 : vector<30x128xf32>
        %c2_i32_474 = arith.constant 2 : i32
        %680 = arith.muli %c2_i32_474, %arg15 : i32
        %c1_i32_475 = arith.constant 1 : i32
        %681 = arith.addi %680, %c1_i32_475 : i32
        %c2_i32_476 = arith.constant 2 : i32
        %682 = arith.addi %681, %c2_i32_476 : i32
        %c2_477 = arith.constant 2 : index
        %683 = arith.index_cast %682 : i32 to index
        %c1_478 = arith.constant 1 : index
        %c0_479 = arith.constant 0 : index
        %684 = vector.load %arg1[%c2_477, %683, %c1_478, %c0_479] : memref<3x32x32x128xf32, #tpu.memory_space<vmem>>, vector<1x1x30x128xf32>
        %685 = vector.shape_cast %684 : vector<1x1x30x128xf32> to vector<30x128xf32>
        %686 = vector.broadcast %671 : f32 to vector<30x128xf32>
        %687 = arith.mulf %685, %686 : vector<30x128xf32>
        %688 = arith.addf %663, %687 : vector<30x128xf32>
        %c3_i32_480 = arith.constant 3 : i32
        %689 = arith.muli %arg16, %c3_i32_480 : i32
        %c2_i32_481 = arith.constant 2 : i32
        %690 = arith.addi %689, %c2_i32_481 : i32
        %c3_i32_482 = arith.constant 3 : i32
        %691 = arith.muli %690, %c3_i32_482 : i32
        %c2_i32_483 = arith.constant 2 : i32
        %692 = arith.addi %691, %c2_i32_483 : i32
        %c3_i32_484 = arith.constant 3 : i32
        %693 = arith.muli %692, %c3_i32_484 : i32
        %c2_i32_485 = arith.constant 2 : i32
        %694 = arith.addi %693, %c2_i32_485 : i32
        %695 = arith.index_cast %694 : i32 to index
        %696 = memref.load %arg2[%695] : memref<135xf32, #tpu.memory_space<smem>>
        %c2_i32_486 = arith.constant 2 : i32
        %697 = arith.muli %c2_i32_486, %arg15 : i32
        %c2_i32_487 = arith.constant 2 : i32
        %698 = arith.addi %697, %c2_i32_487 : i32
        %c2_488 = arith.constant 2 : index
        %699 = arith.index_cast %698 : i32 to index
        %c2_489 = arith.constant 2 : index
        %c0_490 = arith.constant 0 : index
        %700 = vector.load %arg1[%c2_488, %699, %c2_489, %c0_490] : memref<3x32x32x128xf32, #tpu.memory_space<vmem>>, vector<1x1x30x128xf32>
        %701 = vector.shape_cast %700 : vector<1x1x30x128xf32> to vector<30x128xf32>
        %702 = vector.broadcast %696 : f32 to vector<30x128xf32>
        %703 = arith.mulf %701, %702 : vector<30x128xf32>
        %704 = arith.addf %679, %703 : vector<30x128xf32>
        %c2_i32_491 = arith.constant 2 : i32
        %705 = arith.muli %c2_i32_491, %arg15 : i32
        %c1_i32_492 = arith.constant 1 : i32
        %706 = arith.addi %705, %c1_i32_492 : i32
        %c2_i32_493 = arith.constant 2 : i32
        %707 = arith.addi %706, %c2_i32_493 : i32
        %c2_494 = arith.constant 2 : index
        %708 = arith.index_cast %707 : i32 to index
        %c2_495 = arith.constant 2 : index
        %c0_496 = arith.constant 0 : index
        %709 = vector.load %arg1[%c2_494, %708, %c2_495, %c0_496] : memref<3x32x32x128xf32, #tpu.memory_space<vmem>>, vector<1x1x30x128xf32>
        %710 = vector.shape_cast %709 : vector<1x1x30x128xf32> to vector<30x128xf32>
        %711 = vector.broadcast %696 : f32 to vector<30x128xf32>
        %712 = arith.mulf %710, %711 : vector<30x128xf32>
        %713 = arith.addf %688, %712 : vector<30x128xf32>
        %714 = arith.maximumf %704, %713 : vector<30x128xf32>
        %cst_497 = arith.constant 0.000000e+00 : f32
        %715 = vector.broadcast %cst_497 : f32 to vector<30x128xf32>
        %716 = arith.maximumf %714, %715 : vector<30x128xf32>
        %c0_498 = arith.constant 0 : index
        %c0_499 = arith.constant 0 : index
        %717 = vector.load %arg14[%c0_498, %c0_499] : memref<30x128xf32, #tpu.memory_space<vmem>>, vector<30x128xf32>
        tpu.vector_store %arg14[%c0_498, %c0_499], %716 {strides = array<i32>} : memref<30x128xf32, #tpu.memory_space<vmem>>, vector<30x128xf32>,
        %c0_500 = arith.constant 0 : index
        %c0_501 = arith.constant 0 : index
        %718 = tpu.strided_load %arg14[%c0_500, %c0_501] {strides = array<i32: 2, 1>} : memref<30x128xf32, #tpu.memory_space<vmem>>, vector<15x128xf32>
        %c1_502 = arith.constant 1 : index
        %c0_503 = arith.constant 0 : index
        %719 = tpu.strided_load %arg14[%c1_502, %c0_503] {strides = array<i32: 2, 1>} : memref<30x128xf32, #tpu.memory_space<vmem>>, vector<15x128xf32>
        %720 = arith.maximumf %718, %719 : vector<15x128xf32>
        %721 = arith.index_cast %arg16 : i32 to index
        %722 = arith.index_cast %arg15 : i32 to index
        %c0_504 = arith.constant 0 : index
        %c0_505 = arith.constant 0 : index
        %723 = vector.load %arg11[%721, %722, %c0_504, %c0_505] : memref<5x15x15x128xf32, #tpu.memory_space<vmem>>, vector<1x1x15x128xf32>
        %724 = vector.shape_cast %723 : vector<1x1x15x128xf32> to vector<15x128xf32>
        %725 = vector.shape_cast %720 : vector<15x128xf32> to vector<1x1x15x128xf32>
        tpu.vector_store %arg11[%721, %722, %c0_504, %c0_505], %725 {strides = array<i32>} : memref<5x15x15x128xf32, #tpu.memory_space<vmem>>, vector<1x1x15x128xf32>,
      }
      %c5_i32_39 = arith.constant 5 : i32
    }
    %c15_i32_0 = arith.constant 15 : i32
    %c0_i32_1 = arith.constant 0 : i32
    %c6_i32 = arith.constant 6 : i32
    %1 = arith.addi %c0_i32_1, %c6_i32 : i32
    %c1_i32_2 = arith.constant 1 : i32
    scf.for %arg15 = %c0_i32_1 to %1 step %c1_i32_2  : i32 {
      %c0_i32_37 = arith.constant 0 : i32
      %c7_i32 = arith.constant 7 : i32
      %34 = arith.addi %c0_i32_37, %c7_i32 : i32
      %c1_i32_38 = arith.constant 1 : i32
      scf.for %arg16 = %c0_i32_37 to %34 step %c1_i32_38  : i32 {
        %35 = arith.index_cast %arg16 : i32 to index
        %36 = memref.load %arg5[%35] : memref<7xf32, #tpu.memory_space<smem>>
        %37 = vector.broadcast %36 : f32 to vector<13x128xf32>
        %38 = vector.broadcast %36 : f32 to vector<13x128xf32>
        %c5_i32 = arith.constant 5 : i32
        %39 = arith.muli %arg16, %c5_i32 : i32
        %c0_i32_40 = arith.constant 0 : i32
        %40 = arith.addi %39, %c0_i32_40 : i32
        %c3_i32 = arith.constant 3 : i32
        %41 = arith.muli %40, %c3_i32 : i32
        %c0_i32_41 = arith.constant 0 : i32
        %42 = arith.addi %41, %c0_i32_41 : i32
        %c3_i32_42 = arith.constant 3 : i32
        %43 = arith.muli %42, %c3_i32_42 : i32
        %c0_i32_43 = arith.constant 0 : i32
        %44 = arith.addi %43, %c0_i32_43 : i32
        %45 = arith.index_cast %44 : i32 to index
        %46 = memref.load %arg4[%45] : memref<315xf32, #tpu.memory_space<smem>>
        %c2_i32 = arith.constant 2 : i32
        %47 = arith.muli %c2_i32, %arg15 : i32
        %c0_i32_44 = arith.constant 0 : i32
        %48 = arith.addi %47, %c0_i32_44 : i32
        %c0_45 = arith.constant 0 : index
        %49 = arith.index_cast %48 : i32 to index
        %c0_46 = arith.constant 0 : index
        %c0_47 = arith.constant 0 : index
        %50 = vector.load %arg11[%c0_45, %49, %c0_46, %c0_47] : memref<5x15x15x128xf32, #tpu.memory_space<vmem>>, vector<1x1x13x128xf32>
        %51 = vector.shape_cast %50 : vector<1x1x13x128xf32> to vector<13x128xf32>
        %52 = vector.broadcast %46 : f32 to vector<13x128xf32>
        %53 = arith.mulf %51, %52 : vector<13x128xf32>
        %54 = arith.addf %37, %53 : vector<13x128xf32>
        %c2_i32_48 = arith.constant 2 : i32
        %55 = arith.muli %c2_i32_48, %arg15 : i32
        %c1_i32_49 = arith.constant 1 : i32
        %56 = arith.addi %55, %c1_i32_49 : i32
        %c0_i32_50 = arith.constant 0 : i32
        %57 = arith.addi %56, %c0_i32_50 : i32
        %c0_51 = arith.constant 0 : index
        %58 = arith.index_cast %57 : i32 to index
        %c0_52 = arith.constant 0 : index
        %c0_53 = arith.constant 0 : index
        %59 = vector.load %arg11[%c0_51, %58, %c0_52, %c0_53] : memref<5x15x15x128xf32, #tpu.memory_space<vmem>>, vector<1x1x13x128xf32>
        %60 = vector.shape_cast %59 : vector<1x1x13x128xf32> to vector<13x128xf32>
        %61 = vector.broadcast %46 : f32 to vector<13x128xf32>
        %62 = arith.mulf %60, %61 : vector<13x128xf32>
        %63 = arith.addf %38, %62 : vector<13x128xf32>
        %c5_i32_54 = arith.constant 5 : i32
        %64 = arith.muli %arg16, %c5_i32_54 : i32
        %c0_i32_55 = arith.constant 0 : i32
        %65 = arith.addi %64, %c0_i32_55 : i32
        %c3_i32_56 = arith.constant 3 : i32
        %66 = arith.muli %65, %c3_i32_56 : i32
        %c0_i32_57 = arith.constant 0 : i32
        %67 = arith.addi %66, %c0_i32_57 : i32
        %c3_i32_58 = arith.constant 3 : i32
        %68 = arith.muli %67, %c3_i32_58 : i32
        %c1_i32_59 = arith.constant 1 : i32
        %69 = arith.addi %68, %c1_i32_59 : i32
        %70 = arith.index_cast %69 : i32 to index
        %71 = memref.load %arg4[%70] : memref<315xf32, #tpu.memory_space<smem>>
        %c2_i32_60 = arith.constant 2 : i32
        %72 = arith.muli %c2_i32_60, %arg15 : i32
        %c0_i32_61 = arith.constant 0 : i32
        %73 = arith.addi %72, %c0_i32_61 : i32
        %c0_62 = arith.constant 0 : index
        %74 = arith.index_cast %73 : i32 to index
        %c1_63 = arith.constant 1 : index
        %c0_64 = arith.constant 0 : index
        %75 = vector.load %arg11[%c0_62, %74, %c1_63, %c0_64] : memref<5x15x15x128xf32, #tpu.memory_space<vmem>>, vector<1x1x13x128xf32>
        %76 = vector.shape_cast %75 : vector<1x1x13x128xf32> to vector<13x128xf32>
        %77 = vector.broadcast %71 : f32 to vector<13x128xf32>
        %78 = arith.mulf %76, %77 : vector<13x128xf32>
        %79 = arith.addf %54, %78 : vector<13x128xf32>
        %c2_i32_65 = arith.constant 2 : i32
        %80 = arith.muli %c2_i32_65, %arg15 : i32
        %c1_i32_66 = arith.constant 1 : i32
        %81 = arith.addi %80, %c1_i32_66 : i32
        %c0_i32_67 = arith.constant 0 : i32
        %82 = arith.addi %81, %c0_i32_67 : i32
        %c0_68 = arith.constant 0 : index
        %83 = arith.index_cast %82 : i32 to index
        %c1_69 = arith.constant 1 : index
        %c0_70 = arith.constant 0 : index
        %84 = vector.load %arg11[%c0_68, %83, %c1_69, %c0_70] : memref<5x15x15x128xf32, #tpu.memory_space<vmem>>, vector<1x1x13x128xf32>
        %85 = vector.shape_cast %84 : vector<1x1x13x128xf32> to vector<13x128xf32>
        %86 = vector.broadcast %71 : f32 to vector<13x128xf32>
        %87 = arith.mulf %85, %86 : vector<13x128xf32>
        %88 = arith.addf %63, %87 : vector<13x128xf32>
        %c5_i32_71 = arith.constant 5 : i32
        %89 = arith.muli %arg16, %c5_i32_71 : i32
        %c0_i32_72 = arith.constant 0 : i32
        %90 = arith.addi %89, %c0_i32_72 : i32
        %c3_i32_73 = arith.constant 3 : i32
        %91 = arith.muli %90, %c3_i32_73 : i32
        %c0_i32_74 = arith.constant 0 : i32
        %92 = arith.addi %91, %c0_i32_74 : i32
        %c3_i32_75 = arith.constant 3 : i32
        %93 = arith.muli %92, %c3_i32_75 : i32
        %c2_i32_76 = arith.constant 2 : i32
        %94 = arith.addi %93, %c2_i32_76 : i32
        %95 = arith.index_cast %94 : i32 to index
        %96 = memref.load %arg4[%95] : memref<315xf32, #tpu.memory_space<smem>>
        %c2_i32_77 = arith.constant 2 : i32
        %97 = arith.muli %c2_i32_77, %arg15 : i32
        %c0_i32_78 = arith.constant 0 : i32
        %98 = arith.addi %97, %c0_i32_78 : i32
        %c0_79 = arith.constant 0 : index
        %99 = arith.index_cast %98 : i32 to index
        %c2_80 = arith.constant 2 : index
        %c0_81 = arith.constant 0 : index
        %100 = vector.load %arg11[%c0_79, %99, %c2_80, %c0_81] : memref<5x15x15x128xf32, #tpu.memory_space<vmem>>, vector<1x1x13x128xf32>
        %101 = vector.shape_cast %100 : vector<1x1x13x128xf32> to vector<13x128xf32>
        %102 = vector.broadcast %96 : f32 to vector<13x128xf32>
        %103 = arith.mulf %101, %102 : vector<13x128xf32>
        %104 = arith.addf %79, %103 : vector<13x128xf32>
        %c2_i32_82 = arith.constant 2 : i32
        %105 = arith.muli %c2_i32_82, %arg15 : i32
        %c1_i32_83 = arith.constant 1 : i32
        %106 = arith.addi %105, %c1_i32_83 : i32
        %c0_i32_84 = arith.constant 0 : i32
        %107 = arith.addi %106, %c0_i32_84 : i32
        %c0_85 = arith.constant 0 : index
        %108 = arith.index_cast %107 : i32 to index
        %c2_86 = arith.constant 2 : index
        %c0_87 = arith.constant 0 : index
        %109 = vector.load %arg11[%c0_85, %108, %c2_86, %c0_87] : memref<5x15x15x128xf32, #tpu.memory_space<vmem>>, vector<1x1x13x128xf32>
        %110 = vector.shape_cast %109 : vector<1x1x13x128xf32> to vector<13x128xf32>
        %111 = vector.broadcast %96 : f32 to vector<13x128xf32>
        %112 = arith.mulf %110, %111 : vector<13x128xf32>
        %113 = arith.addf %88, %112 : vector<13x128xf32>
        %c5_i32_88 = arith.constant 5 : i32
        %114 = arith.muli %arg16, %c5_i32_88 : i32
        %c0_i32_89 = arith.constant 0 : i32
        %115 = arith.addi %114, %c0_i32_89 : i32
        %c3_i32_90 = arith.constant 3 : i32
        %116 = arith.muli %115, %c3_i32_90 : i32
        %c1_i32_91 = arith.constant 1 : i32
        %117 = arith.addi %116, %c1_i32_91 : i32
        %c3_i32_92 = arith.constant 3 : i32
        %118 = arith.muli %117, %c3_i32_92 : i32
        %c0_i32_93 = arith.constant 0 : i32
        %119 = arith.addi %118, %c0_i32_93 : i32
        %120 = arith.index_cast %119 : i32 to index
        %121 = memref.load %arg4[%120] : memref<315xf32, #tpu.memory_space<smem>>
        %c2_i32_94 = arith.constant 2 : i32
        %122 = arith.muli %c2_i32_94, %arg15 : i32
        %c1_i32_95 = arith.constant 1 : i32
        %123 = arith.addi %122, %c1_i32_95 : i32
        %c0_96 = arith.constant 0 : index
        %124 = arith.index_cast %123 : i32 to index
        %c0_97 = arith.constant 0 : index
        %c0_98 = arith.constant 0 : index
        %125 = vector.load %arg11[%c0_96, %124, %c0_97, %c0_98] : memref<5x15x15x128xf32, #tpu.memory_space<vmem>>, vector<1x1x13x128xf32>
        %126 = vector.shape_cast %125 : vector<1x1x13x128xf32> to vector<13x128xf32>
        %127 = vector.broadcast %121 : f32 to vector<13x128xf32>
        %128 = arith.mulf %126, %127 : vector<13x128xf32>
        %129 = arith.addf %104, %128 : vector<13x128xf32>
        %c2_i32_99 = arith.constant 2 : i32
        %130 = arith.muli %c2_i32_99, %arg15 : i32
        %c1_i32_100 = arith.constant 1 : i32
        %131 = arith.addi %130, %c1_i32_100 : i32
        %c1_i32_101 = arith.constant 1 : i32
        %132 = arith.addi %131, %c1_i32_101 : i32
        %c0_102 = arith.constant 0 : index
        %133 = arith.index_cast %132 : i32 to index
        %c0_103 = arith.constant 0 : index
        %c0_104 = arith.constant 0 : index
        %134 = vector.load %arg11[%c0_102, %133, %c0_103, %c0_104] : memref<5x15x15x128xf32, #tpu.memory_space<vmem>>, vector<1x1x13x128xf32>
        %135 = vector.shape_cast %134 : vector<1x1x13x128xf32> to vector<13x128xf32>
        %136 = vector.broadcast %121 : f32 to vector<13x128xf32>
        %137 = arith.mulf %135, %136 : vector<13x128xf32>
        %138 = arith.addf %113, %137 : vector<13x128xf32>
        %c5_i32_105 = arith.constant 5 : i32
        %139 = arith.muli %arg16, %c5_i32_105 : i32
        %c0_i32_106 = arith.constant 0 : i32
        %140 = arith.addi %139, %c0_i32_106 : i32
        %c3_i32_107 = arith.constant 3 : i32
        %141 = arith.muli %140, %c3_i32_107 : i32
        %c1_i32_108 = arith.constant 1 : i32
        %142 = arith.addi %141, %c1_i32_108 : i32
        %c3_i32_109 = arith.constant 3 : i32
        %143 = arith.muli %142, %c3_i32_109 : i32
        %c1_i32_110 = arith.constant 1 : i32
        %144 = arith.addi %143, %c1_i32_110 : i32
        %145 = arith.index_cast %144 : i32 to index
        %146 = memref.load %arg4[%145] : memref<315xf32, #tpu.memory_space<smem>>
        %c2_i32_111 = arith.constant 2 : i32
        %147 = arith.muli %c2_i32_111, %arg15 : i32
        %c1_i32_112 = arith.constant 1 : i32
        %148 = arith.addi %147, %c1_i32_112 : i32
        %c0_113 = arith.constant 0 : index
        %149 = arith.index_cast %148 : i32 to index
        %c1_114 = arith.constant 1 : index
        %c0_115 = arith.constant 0 : index
        %150 = vector.load %arg11[%c0_113, %149, %c1_114, %c0_115] : memref<5x15x15x128xf32, #tpu.memory_space<vmem>>, vector<1x1x13x128xf32>
        %151 = vector.shape_cast %150 : vector<1x1x13x128xf32> to vector<13x128xf32>
        %152 = vector.broadcast %146 : f32 to vector<13x128xf32>
        %153 = arith.mulf %151, %152 : vector<13x128xf32>
        %154 = arith.addf %129, %153 : vector<13x128xf32>
        %c2_i32_116 = arith.constant 2 : i32
        %155 = arith.muli %c2_i32_116, %arg15 : i32
        %c1_i32_117 = arith.constant 1 : i32
        %156 = arith.addi %155, %c1_i32_117 : i32
        %c1_i32_118 = arith.constant 1 : i32
        %157 = arith.addi %156, %c1_i32_118 : i32
        %c0_119 = arith.constant 0 : index
        %158 = arith.index_cast %157 : i32 to index
        %c1_120 = arith.constant 1 : index
        %c0_121 = arith.constant 0 : index
        %159 = vector.load %arg11[%c0_119, %158, %c1_120, %c0_121] : memref<5x15x15x128xf32, #tpu.memory_space<vmem>>, vector<1x1x13x128xf32>
        %160 = vector.shape_cast %159 : vector<1x1x13x128xf32> to vector<13x128xf32>
        %161 = vector.broadcast %146 : f32 to vector<13x128xf32>
        %162 = arith.mulf %160, %161 : vector<13x128xf32>
        %163 = arith.addf %138, %162 : vector<13x128xf32>
        %c5_i32_122 = arith.constant 5 : i32
        %164 = arith.muli %arg16, %c5_i32_122 : i32
        %c0_i32_123 = arith.constant 0 : i32
        %165 = arith.addi %164, %c0_i32_123 : i32
        %c3_i32_124 = arith.constant 3 : i32
        %166 = arith.muli %165, %c3_i32_124 : i32
        %c1_i32_125 = arith.constant 1 : i32
        %167 = arith.addi %166, %c1_i32_125 : i32
        %c3_i32_126 = arith.constant 3 : i32
        %168 = arith.muli %167, %c3_i32_126 : i32
        %c2_i32_127 = arith.constant 2 : i32
        %169 = arith.addi %168, %c2_i32_127 : i32
        %170 = arith.index_cast %169 : i32 to index
        %171 = memref.load %arg4[%170] : memref<315xf32, #tpu.memory_space<smem>>
        %c2_i32_128 = arith.constant 2 : i32
        %172 = arith.muli %c2_i32_128, %arg15 : i32
        %c1_i32_129 = arith.constant 1 : i32
        %173 = arith.addi %172, %c1_i32_129 : i32
        %c0_130 = arith.constant 0 : index
        %174 = arith.index_cast %173 : i32 to index
        %c2_131 = arith.constant 2 : index
        %c0_132 = arith.constant 0 : index
        %175 = vector.load %arg11[%c0_130, %174, %c2_131, %c0_132] : memref<5x15x15x128xf32, #tpu.memory_space<vmem>>, vector<1x1x13x128xf32>
        %176 = vector.shape_cast %175 : vector<1x1x13x128xf32> to vector<13x128xf32>
        %177 = vector.broadcast %171 : f32 to vector<13x128xf32>
        %178 = arith.mulf %176, %177 : vector<13x128xf32>
        %179 = arith.addf %154, %178 : vector<13x128xf32>
        %c2_i32_133 = arith.constant 2 : i32
        %180 = arith.muli %c2_i32_133, %arg15 : i32
        %c1_i32_134 = arith.constant 1 : i32
        %181 = arith.addi %180, %c1_i32_134 : i32
        %c1_i32_135 = arith.constant 1 : i32
        %182 = arith.addi %181, %c1_i32_135 : i32
        %c0_136 = arith.constant 0 : index
        %183 = arith.index_cast %182 : i32 to index
        %c2_137 = arith.constant 2 : index
        %c0_138 = arith.constant 0 : index
        %184 = vector.load %arg11[%c0_136, %183, %c2_137, %c0_138] : memref<5x15x15x128xf32, #tpu.memory_space<vmem>>, vector<1x1x13x128xf32>
        %185 = vector.shape_cast %184 : vector<1x1x13x128xf32> to vector<13x128xf32>
        %186 = vector.broadcast %171 : f32 to vector<13x128xf32>
        %187 = arith.mulf %185, %186 : vector<13x128xf32>
        %188 = arith.addf %163, %187 : vector<13x128xf32>
        %c5_i32_139 = arith.constant 5 : i32
        %189 = arith.muli %arg16, %c5_i32_139 : i32
        %c0_i32_140 = arith.constant 0 : i32
        %190 = arith.addi %189, %c0_i32_140 : i32
        %c3_i32_141 = arith.constant 3 : i32
        %191 = arith.muli %190, %c3_i32_141 : i32
        %c2_i32_142 = arith.constant 2 : i32
        %192 = arith.addi %191, %c2_i32_142 : i32
        %c3_i32_143 = arith.constant 3 : i32
        %193 = arith.muli %192, %c3_i32_143 : i32
        %c0_i32_144 = arith.constant 0 : i32
        %194 = arith.addi %193, %c0_i32_144 : i32
        %195 = arith.index_cast %194 : i32 to index
        %196 = memref.load %arg4[%195] : memref<315xf32, #tpu.memory_space<smem>>
        %c2_i32_145 = arith.constant 2 : i32
        %197 = arith.muli %c2_i32_145, %arg15 : i32
        %c2_i32_146 = arith.constant 2 : i32
        %198 = arith.addi %197, %c2_i32_146 : i32
        %c0_147 = arith.constant 0 : index
        %199 = arith.index_cast %198 : i32 to index
        %c0_148 = arith.constant 0 : index
        %c0_149 = arith.constant 0 : index
        %200 = vector.load %arg11[%c0_147, %199, %c0_148, %c0_149] : memref<5x15x15x128xf32, #tpu.memory_space<vmem>>, vector<1x1x13x128xf32>
        %201 = vector.shape_cast %200 : vector<1x1x13x128xf32> to vector<13x128xf32>
        %202 = vector.broadcast %196 : f32 to vector<13x128xf32>
        %203 = arith.mulf %201, %202 : vector<13x128xf32>
        %204 = arith.addf %179, %203 : vector<13x128xf32>
        %c2_i32_150 = arith.constant 2 : i32
        %205 = arith.muli %c2_i32_150, %arg15 : i32
        %c1_i32_151 = arith.constant 1 : i32
        %206 = arith.addi %205, %c1_i32_151 : i32
        %c2_i32_152 = arith.constant 2 : i32
        %207 = arith.addi %206, %c2_i32_152 : i32
        %c0_153 = arith.constant 0 : index
        %208 = arith.index_cast %207 : i32 to index
        %c0_154 = arith.constant 0 : index
        %c0_155 = arith.constant 0 : index
        %209 = vector.load %arg11[%c0_153, %208, %c0_154, %c0_155] : memref<5x15x15x128xf32, #tpu.memory_space<vmem>>, vector<1x1x13x128xf32>
        %210 = vector.shape_cast %209 : vector<1x1x13x128xf32> to vector<13x128xf32>
        %211 = vector.broadcast %196 : f32 to vector<13x128xf32>
        %212 = arith.mulf %210, %211 : vector<13x128xf32>
        %213 = arith.addf %188, %212 : vector<13x128xf32>
        %c5_i32_156 = arith.constant 5 : i32
        %214 = arith.muli %arg16, %c5_i32_156 : i32
        %c0_i32_157 = arith.constant 0 : i32
        %215 = arith.addi %214, %c0_i32_157 : i32
        %c3_i32_158 = arith.constant 3 : i32
        %216 = arith.muli %215, %c3_i32_158 : i32
        %c2_i32_159 = arith.constant 2 : i32
        %217 = arith.addi %216, %c2_i32_159 : i32
        %c3_i32_160 = arith.constant 3 : i32
        %218 = arith.muli %217, %c3_i32_160 : i32
        %c1_i32_161 = arith.constant 1 : i32
        %219 = arith.addi %218, %c1_i32_161 : i32
        %220 = arith.index_cast %219 : i32 to index
        %221 = memref.load %arg4[%220] : memref<315xf32, #tpu.memory_space<smem>>
        %c2_i32_162 = arith.constant 2 : i32
        %222 = arith.muli %c2_i32_162, %arg15 : i32
        %c2_i32_163 = arith.constant 2 : i32
        %223 = arith.addi %222, %c2_i32_163 : i32
        %c0_164 = arith.constant 0 : index
        %224 = arith.index_cast %223 : i32 to index
        %c1_165 = arith.constant 1 : index
        %c0_166 = arith.constant 0 : index
        %225 = vector.load %arg11[%c0_164, %224, %c1_165, %c0_166] : memref<5x15x15x128xf32, #tpu.memory_space<vmem>>, vector<1x1x13x128xf32>
        %226 = vector.shape_cast %225 : vector<1x1x13x128xf32> to vector<13x128xf32>
        %227 = vector.broadcast %221 : f32 to vector<13x128xf32>
        %228 = arith.mulf %226, %227 : vector<13x128xf32>
        %229 = arith.addf %204, %228 : vector<13x128xf32>
        %c2_i32_167 = arith.constant 2 : i32
        %230 = arith.muli %c2_i32_167, %arg15 : i32
        %c1_i32_168 = arith.constant 1 : i32
        %231 = arith.addi %230, %c1_i32_168 : i32
        %c2_i32_169 = arith.constant 2 : i32
        %232 = arith.addi %231, %c2_i32_169 : i32
        %c0_170 = arith.constant 0 : index
        %233 = arith.index_cast %232 : i32 to index
        %c1_171 = arith.constant 1 : index
        %c0_172 = arith.constant 0 : index
        %234 = vector.load %arg11[%c0_170, %233, %c1_171, %c0_172] : memref<5x15x15x128xf32, #tpu.memory_space<vmem>>, vector<1x1x13x128xf32>
        %235 = vector.shape_cast %234 : vector<1x1x13x128xf32> to vector<13x128xf32>
        %236 = vector.broadcast %221 : f32 to vector<13x128xf32>
        %237 = arith.mulf %235, %236 : vector<13x128xf32>
        %238 = arith.addf %213, %237 : vector<13x128xf32>
        %c5_i32_173 = arith.constant 5 : i32
        %239 = arith.muli %arg16, %c5_i32_173 : i32
        %c0_i32_174 = arith.constant 0 : i32
        %240 = arith.addi %239, %c0_i32_174 : i32
        %c3_i32_175 = arith.constant 3 : i32
        %241 = arith.muli %240, %c3_i32_175 : i32
        %c2_i32_176 = arith.constant 2 : i32
        %242 = arith.addi %241, %c2_i32_176 : i32
        %c3_i32_177 = arith.constant 3 : i32
        %243 = arith.muli %242, %c3_i32_177 : i32
        %c2_i32_178 = arith.constant 2 : i32
        %244 = arith.addi %243, %c2_i32_178 : i32
        %245 = arith.index_cast %244 : i32 to index
        %246 = memref.load %arg4[%245] : memref<315xf32, #tpu.memory_space<smem>>
        %c2_i32_179 = arith.constant 2 : i32
        %247 = arith.muli %c2_i32_179, %arg15 : i32
        %c2_i32_180 = arith.constant 2 : i32
        %248 = arith.addi %247, %c2_i32_180 : i32
        %c0_181 = arith.constant 0 : index
        %249 = arith.index_cast %248 : i32 to index
        %c2_182 = arith.constant 2 : index
        %c0_183 = arith.constant 0 : index
        %250 = vector.load %arg11[%c0_181, %249, %c2_182, %c0_183] : memref<5x15x15x128xf32, #tpu.memory_space<vmem>>, vector<1x1x13x128xf32>
        %251 = vector.shape_cast %250 : vector<1x1x13x128xf32> to vector<13x128xf32>
        %252 = vector.broadcast %246 : f32 to vector<13x128xf32>
        %253 = arith.mulf %251, %252 : vector<13x128xf32>
        %254 = arith.addf %229, %253 : vector<13x128xf32>
        %c2_i32_184 = arith.constant 2 : i32
        %255 = arith.muli %c2_i32_184, %arg15 : i32
        %c1_i32_185 = arith.constant 1 : i32
        %256 = arith.addi %255, %c1_i32_185 : i32
        %c2_i32_186 = arith.constant 2 : i32
        %257 = arith.addi %256, %c2_i32_186 : i32
        %c0_187 = arith.constant 0 : index
        %258 = arith.index_cast %257 : i32 to index
        %c2_188 = arith.constant 2 : index
        %c0_189 = arith.constant 0 : index
        %259 = vector.load %arg11[%c0_187, %258, %c2_188, %c0_189] : memref<5x15x15x128xf32, #tpu.memory_space<vmem>>, vector<1x1x13x128xf32>
        %260 = vector.shape_cast %259 : vector<1x1x13x128xf32> to vector<13x128xf32>
        %261 = vector.broadcast %246 : f32 to vector<13x128xf32>
        %262 = arith.mulf %260, %261 : vector<13x128xf32>
        %263 = arith.addf %238, %262 : vector<13x128xf32>
        %c5_i32_190 = arith.constant 5 : i32
        %264 = arith.muli %arg16, %c5_i32_190 : i32
        %c1_i32_191 = arith.constant 1 : i32
        %265 = arith.addi %264, %c1_i32_191 : i32
        %c3_i32_192 = arith.constant 3 : i32
        %266 = arith.muli %265, %c3_i32_192 : i32
        %c0_i32_193 = arith.constant 0 : i32
        %267 = arith.addi %266, %c0_i32_193 : i32
        %c3_i32_194 = arith.constant 3 : i32
        %268 = arith.muli %267, %c3_i32_194 : i32
        %c0_i32_195 = arith.constant 0 : i32
        %269 = arith.addi %268, %c0_i32_195 : i32
        %270 = arith.index_cast %269 : i32 to index
        %271 = memref.load %arg4[%270] : memref<315xf32, #tpu.memory_space<smem>>
        %c2_i32_196 = arith.constant 2 : i32
        %272 = arith.muli %c2_i32_196, %arg15 : i32
        %c0_i32_197 = arith.constant 0 : i32
        %273 = arith.addi %272, %c0_i32_197 : i32
        %c1_198 = arith.constant 1 : index
        %274 = arith.index_cast %273 : i32 to index
        %c0_199 = arith.constant 0 : index
        %c0_200 = arith.constant 0 : index
        %275 = vector.load %arg11[%c1_198, %274, %c0_199, %c0_200] : memref<5x15x15x128xf32, #tpu.memory_space<vmem>>, vector<1x1x13x128xf32>
        %276 = vector.shape_cast %275 : vector<1x1x13x128xf32> to vector<13x128xf32>
        %277 = vector.broadcast %271 : f32 to vector<13x128xf32>
        %278 = arith.mulf %276, %277 : vector<13x128xf32>
        %279 = arith.addf %254, %278 : vector<13x128xf32>
        %c2_i32_201 = arith.constant 2 : i32
        %280 = arith.muli %c2_i32_201, %arg15 : i32
        %c1_i32_202 = arith.constant 1 : i32
        %281 = arith.addi %280, %c1_i32_202 : i32
        %c0_i32_203 = arith.constant 0 : i32
        %282 = arith.addi %281, %c0_i32_203 : i32
        %c1_204 = arith.constant 1 : index
        %283 = arith.index_cast %282 : i32 to index
        %c0_205 = arith.constant 0 : index
        %c0_206 = arith.constant 0 : index
        %284 = vector.load %arg11[%c1_204, %283, %c0_205, %c0_206] : memref<5x15x15x128xf32, #tpu.memory_space<vmem>>, vector<1x1x13x128xf32>
        %285 = vector.shape_cast %284 : vector<1x1x13x128xf32> to vector<13x128xf32>
        %286 = vector.broadcast %271 : f32 to vector<13x128xf32>
        %287 = arith.mulf %285, %286 : vector<13x128xf32>
        %288 = arith.addf %263, %287 : vector<13x128xf32>
        %c5_i32_207 = arith.constant 5 : i32
        %289 = arith.muli %arg16, %c5_i32_207 : i32
        %c1_i32_208 = arith.constant 1 : i32
        %290 = arith.addi %289, %c1_i32_208 : i32
        %c3_i32_209 = arith.constant 3 : i32
        %291 = arith.muli %290, %c3_i32_209 : i32
        %c0_i32_210 = arith.constant 0 : i32
        %292 = arith.addi %291, %c0_i32_210 : i32
        %c3_i32_211 = arith.constant 3 : i32
        %293 = arith.muli %292, %c3_i32_211 : i32
        %c1_i32_212 = arith.constant 1 : i32
        %294 = arith.addi %293, %c1_i32_212 : i32
        %295 = arith.index_cast %294 : i32 to index
        %296 = memref.load %arg4[%295] : memref<315xf32, #tpu.memory_space<smem>>
        %c2_i32_213 = arith.constant 2 : i32
        %297 = arith.muli %c2_i32_213, %arg15 : i32
        %c0_i32_214 = arith.constant 0 : i32
        %298 = arith.addi %297, %c0_i32_214 : i32
        %c1_215 = arith.constant 1 : index
        %299 = arith.index_cast %298 : i32 to index
        %c1_216 = arith.constant 1 : index
        %c0_217 = arith.constant 0 : index
        %300 = vector.load %arg11[%c1_215, %299, %c1_216, %c0_217] : memref<5x15x15x128xf32, #tpu.memory_space<vmem>>, vector<1x1x13x128xf32>
        %301 = vector.shape_cast %300 : vector<1x1x13x128xf32> to vector<13x128xf32>
        %302 = vector.broadcast %296 : f32 to vector<13x128xf32>
        %303 = arith.mulf %301, %302 : vector<13x128xf32>
        %304 = arith.addf %279, %303 : vector<13x128xf32>
        %c2_i32_218 = arith.constant 2 : i32
        %305 = arith.muli %c2_i32_218, %arg15 : i32
        %c1_i32_219 = arith.constant 1 : i32
        %306 = arith.addi %305, %c1_i32_219 : i32
        %c0_i32_220 = arith.constant 0 : i32
        %307 = arith.addi %306, %c0_i32_220 : i32
        %c1_221 = arith.constant 1 : index
        %308 = arith.index_cast %307 : i32 to index
        %c1_222 = arith.constant 1 : index
        %c0_223 = arith.constant 0 : index
        %309 = vector.load %arg11[%c1_221, %308, %c1_222, %c0_223] : memref<5x15x15x128xf32, #tpu.memory_space<vmem>>, vector<1x1x13x128xf32>
        %310 = vector.shape_cast %309 : vector<1x1x13x128xf32> to vector<13x128xf32>
        %311 = vector.broadcast %296 : f32 to vector<13x128xf32>
        %312 = arith.mulf %310, %311 : vector<13x128xf32>
        %313 = arith.addf %288, %312 : vector<13x128xf32>
        %c5_i32_224 = arith.constant 5 : i32
        %314 = arith.muli %arg16, %c5_i32_224 : i32
        %c1_i32_225 = arith.constant 1 : i32
        %315 = arith.addi %314, %c1_i32_225 : i32
        %c3_i32_226 = arith.constant 3 : i32
        %316 = arith.muli %315, %c3_i32_226 : i32
        %c0_i32_227 = arith.constant 0 : i32
        %317 = arith.addi %316, %c0_i32_227 : i32
        %c3_i32_228 = arith.constant 3 : i32
        %318 = arith.muli %317, %c3_i32_228 : i32
        %c2_i32_229 = arith.constant 2 : i32
        %319 = arith.addi %318, %c2_i32_229 : i32
        %320 = arith.index_cast %319 : i32 to index
        %321 = memref.load %arg4[%320] : memref<315xf32, #tpu.memory_space<smem>>
        %c2_i32_230 = arith.constant 2 : i32
        %322 = arith.muli %c2_i32_230, %arg15 : i32
        %c0_i32_231 = arith.constant 0 : i32
        %323 = arith.addi %322, %c0_i32_231 : i32
        %c1_232 = arith.constant 1 : index
        %324 = arith.index_cast %323 : i32 to index
        %c2_233 = arith.constant 2 : index
        %c0_234 = arith.constant 0 : index
        %325 = vector.load %arg11[%c1_232, %324, %c2_233, %c0_234] : memref<5x15x15x128xf32, #tpu.memory_space<vmem>>, vector<1x1x13x128xf32>
        %326 = vector.shape_cast %325 : vector<1x1x13x128xf32> to vector<13x128xf32>
        %327 = vector.broadcast %321 : f32 to vector<13x128xf32>
        %328 = arith.mulf %326, %327 : vector<13x128xf32>
        %329 = arith.addf %304, %328 : vector<13x128xf32>
        %c2_i32_235 = arith.constant 2 : i32
        %330 = arith.muli %c2_i32_235, %arg15 : i32
        %c1_i32_236 = arith.constant 1 : i32
        %331 = arith.addi %330, %c1_i32_236 : i32
        %c0_i32_237 = arith.constant 0 : i32
        %332 = arith.addi %331, %c0_i32_237 : i32
        %c1_238 = arith.constant 1 : index
        %333 = arith.index_cast %332 : i32 to index
        %c2_239 = arith.constant 2 : index
        %c0_240 = arith.constant 0 : index
        %334 = vector.load %arg11[%c1_238, %333, %c2_239, %c0_240] : memref<5x15x15x128xf32, #tpu.memory_space<vmem>>, vector<1x1x13x128xf32>
        %335 = vector.shape_cast %334 : vector<1x1x13x128xf32> to vector<13x128xf32>
        %336 = vector.broadcast %321 : f32 to vector<13x128xf32>
        %337 = arith.mulf %335, %336 : vector<13x128xf32>
        %338 = arith.addf %313, %337 : vector<13x128xf32>
        %c5_i32_241 = arith.constant 5 : i32
        %339 = arith.muli %arg16, %c5_i32_241 : i32
        %c1_i32_242 = arith.constant 1 : i32
        %340 = arith.addi %339, %c1_i32_242 : i32
        %c3_i32_243 = arith.constant 3 : i32
        %341 = arith.muli %340, %c3_i32_243 : i32
        %c1_i32_244 = arith.constant 1 : i32
        %342 = arith.addi %341, %c1_i32_244 : i32
        %c3_i32_245 = arith.constant 3 : i32
        %343 = arith.muli %342, %c3_i32_245 : i32
        %c0_i32_246 = arith.constant 0 : i32
        %344 = arith.addi %343, %c0_i32_246 : i32
        %345 = arith.index_cast %344 : i32 to index
        %346 = memref.load %arg4[%345] : memref<315xf32, #tpu.memory_space<smem>>
        %c2_i32_247 = arith.constant 2 : i32
        %347 = arith.muli %c2_i32_247, %arg15 : i32
        %c1_i32_248 = arith.constant 1 : i32
        %348 = arith.addi %347, %c1_i32_248 : i32
        %c1_249 = arith.constant 1 : index
        %349 = arith.index_cast %348 : i32 to index
        %c0_250 = arith.constant 0 : index
        %c0_251 = arith.constant 0 : index
        %350 = vector.load %arg11[%c1_249, %349, %c0_250, %c0_251] : memref<5x15x15x128xf32, #tpu.memory_space<vmem>>, vector<1x1x13x128xf32>
        %351 = vector.shape_cast %350 : vector<1x1x13x128xf32> to vector<13x128xf32>
        %352 = vector.broadcast %346 : f32 to vector<13x128xf32>
        %353 = arith.mulf %351, %352 : vector<13x128xf32>
        %354 = arith.addf %329, %353 : vector<13x128xf32>
        %c2_i32_252 = arith.constant 2 : i32
        %355 = arith.muli %c2_i32_252, %arg15 : i32
        %c1_i32_253 = arith.constant 1 : i32
        %356 = arith.addi %355, %c1_i32_253 : i32
        %c1_i32_254 = arith.constant 1 : i32
        %357 = arith.addi %356, %c1_i32_254 : i32
        %c1_255 = arith.constant 1 : index
        %358 = arith.index_cast %357 : i32 to index
        %c0_256 = arith.constant 0 : index
        %c0_257 = arith.constant 0 : index
        %359 = vector.load %arg11[%c1_255, %358, %c0_256, %c0_257] : memref<5x15x15x128xf32, #tpu.memory_space<vmem>>, vector<1x1x13x128xf32>
        %360 = vector.shape_cast %359 : vector<1x1x13x128xf32> to vector<13x128xf32>
        %361 = vector.broadcast %346 : f32 to vector<13x128xf32>
        %362 = arith.mulf %360, %361 : vector<13x128xf32>
        %363 = arith.addf %338, %362 : vector<13x128xf32>
        %c5_i32_258 = arith.constant 5 : i32
        %364 = arith.muli %arg16, %c5_i32_258 : i32
        %c1_i32_259 = arith.constant 1 : i32
        %365 = arith.addi %364, %c1_i32_259 : i32
        %c3_i32_260 = arith.constant 3 : i32
        %366 = arith.muli %365, %c3_i32_260 : i32
        %c1_i32_261 = arith.constant 1 : i32
        %367 = arith.addi %366, %c1_i32_261 : i32
        %c3_i32_262 = arith.constant 3 : i32
        %368 = arith.muli %367, %c3_i32_262 : i32
        %c1_i32_263 = arith.constant 1 : i32
        %369 = arith.addi %368, %c1_i32_263 : i32
        %370 = arith.index_cast %369 : i32 to index
        %371 = memref.load %arg4[%370] : memref<315xf32, #tpu.memory_space<smem>>
        %c2_i32_264 = arith.constant 2 : i32
        %372 = arith.muli %c2_i32_264, %arg15 : i32
        %c1_i32_265 = arith.constant 1 : i32
        %373 = arith.addi %372, %c1_i32_265 : i32
        %c1_266 = arith.constant 1 : index
        %374 = arith.index_cast %373 : i32 to index
        %c1_267 = arith.constant 1 : index
        %c0_268 = arith.constant 0 : index
        %375 = vector.load %arg11[%c1_266, %374, %c1_267, %c0_268] : memref<5x15x15x128xf32, #tpu.memory_space<vmem>>, vector<1x1x13x128xf32>
        %376 = vector.shape_cast %375 : vector<1x1x13x128xf32> to vector<13x128xf32>
        %377 = vector.broadcast %371 : f32 to vector<13x128xf32>
        %378 = arith.mulf %376, %377 : vector<13x128xf32>
        %379 = arith.addf %354, %378 : vector<13x128xf32>
        %c2_i32_269 = arith.constant 2 : i32
        %380 = arith.muli %c2_i32_269, %arg15 : i32
        %c1_i32_270 = arith.constant 1 : i32
        %381 = arith.addi %380, %c1_i32_270 : i32
        %c1_i32_271 = arith.constant 1 : i32
        %382 = arith.addi %381, %c1_i32_271 : i32
        %c1_272 = arith.constant 1 : index
        %383 = arith.index_cast %382 : i32 to index
        %c1_273 = arith.constant 1 : index
        %c0_274 = arith.constant 0 : index
        %384 = vector.load %arg11[%c1_272, %383, %c1_273, %c0_274] : memref<5x15x15x128xf32, #tpu.memory_space<vmem>>, vector<1x1x13x128xf32>
        %385 = vector.shape_cast %384 : vector<1x1x13x128xf32> to vector<13x128xf32>
        %386 = vector.broadcast %371 : f32 to vector<13x128xf32>
        %387 = arith.mulf %385, %386 : vector<13x128xf32>
        %388 = arith.addf %363, %387 : vector<13x128xf32>
        %c5_i32_275 = arith.constant 5 : i32
        %389 = arith.muli %arg16, %c5_i32_275 : i32
        %c1_i32_276 = arith.constant 1 : i32
        %390 = arith.addi %389, %c1_i32_276 : i32
        %c3_i32_277 = arith.constant 3 : i32
        %391 = arith.muli %390, %c3_i32_277 : i32
        %c1_i32_278 = arith.constant 1 : i32
        %392 = arith.addi %391, %c1_i32_278 : i32
        %c3_i32_279 = arith.constant 3 : i32
        %393 = arith.muli %392, %c3_i32_279 : i32
        %c2_i32_280 = arith.constant 2 : i32
        %394 = arith.addi %393, %c2_i32_280 : i32
        %395 = arith.index_cast %394 : i32 to index
        %396 = memref.load %arg4[%395] : memref<315xf32, #tpu.memory_space<smem>>
        %c2_i32_281 = arith.constant 2 : i32
        %397 = arith.muli %c2_i32_281, %arg15 : i32
        %c1_i32_282 = arith.constant 1 : i32
        %398 = arith.addi %397, %c1_i32_282 : i32
        %c1_283 = arith.constant 1 : index
        %399 = arith.index_cast %398 : i32 to index
        %c2_284 = arith.constant 2 : index
        %c0_285 = arith.constant 0 : index
        %400 = vector.load %arg11[%c1_283, %399, %c2_284, %c0_285] : memref<5x15x15x128xf32, #tpu.memory_space<vmem>>, vector<1x1x13x128xf32>
        %401 = vector.shape_cast %400 : vector<1x1x13x128xf32> to vector<13x128xf32>
        %402 = vector.broadcast %396 : f32 to vector<13x128xf32>
        %403 = arith.mulf %401, %402 : vector<13x128xf32>
        %404 = arith.addf %379, %403 : vector<13x128xf32>
        %c2_i32_286 = arith.constant 2 : i32
        %405 = arith.muli %c2_i32_286, %arg15 : i32
        %c1_i32_287 = arith.constant 1 : i32
        %406 = arith.addi %405, %c1_i32_287 : i32
        %c1_i32_288 = arith.constant 1 : i32
        %407 = arith.addi %406, %c1_i32_288 : i32
        %c1_289 = arith.constant 1 : index
        %408 = arith.index_cast %407 : i32 to index
        %c2_290 = arith.constant 2 : index
        %c0_291 = arith.constant 0 : index
        %409 = vector.load %arg11[%c1_289, %408, %c2_290, %c0_291] : memref<5x15x15x128xf32, #tpu.memory_space<vmem>>, vector<1x1x13x128xf32>
        %410 = vector.shape_cast %409 : vector<1x1x13x128xf32> to vector<13x128xf32>
        %411 = vector.broadcast %396 : f32 to vector<13x128xf32>
        %412 = arith.mulf %410, %411 : vector<13x128xf32>
        %413 = arith.addf %388, %412 : vector<13x128xf32>
        %c5_i32_292 = arith.constant 5 : i32
        %414 = arith.muli %arg16, %c5_i32_292 : i32
        %c1_i32_293 = arith.constant 1 : i32
        %415 = arith.addi %414, %c1_i32_293 : i32
        %c3_i32_294 = arith.constant 3 : i32
        %416 = arith.muli %415, %c3_i32_294 : i32
        %c2_i32_295 = arith.constant 2 : i32
        %417 = arith.addi %416, %c2_i32_295 : i32
        %c3_i32_296 = arith.constant 3 : i32
        %418 = arith.muli %417, %c3_i32_296 : i32
        %c0_i32_297 = arith.constant 0 : i32
        %419 = arith.addi %418, %c0_i32_297 : i32
        %420 = arith.index_cast %419 : i32 to index
        %421 = memref.load %arg4[%420] : memref<315xf32, #tpu.memory_space<smem>>
        %c2_i32_298 = arith.constant 2 : i32
        %422 = arith.muli %c2_i32_298, %arg15 : i32
        %c2_i32_299 = arith.constant 2 : i32
        %423 = arith.addi %422, %c2_i32_299 : i32
        %c1_300 = arith.constant 1 : index
        %424 = arith.index_cast %423 : i32 to index
        %c0_301 = arith.constant 0 : index
        %c0_302 = arith.constant 0 : index
        %425 = vector.load %arg11[%c1_300, %424, %c0_301, %c0_302] : memref<5x15x15x128xf32, #tpu.memory_space<vmem>>, vector<1x1x13x128xf32>
        %426 = vector.shape_cast %425 : vector<1x1x13x128xf32> to vector<13x128xf32>
        %427 = vector.broadcast %421 : f32 to vector<13x128xf32>
        %428 = arith.mulf %426, %427 : vector<13x128xf32>
        %429 = arith.addf %404, %428 : vector<13x128xf32>
        %c2_i32_303 = arith.constant 2 : i32
        %430 = arith.muli %c2_i32_303, %arg15 : i32
        %c1_i32_304 = arith.constant 1 : i32
        %431 = arith.addi %430, %c1_i32_304 : i32
        %c2_i32_305 = arith.constant 2 : i32
        %432 = arith.addi %431, %c2_i32_305 : i32
        %c1_306 = arith.constant 1 : index
        %433 = arith.index_cast %432 : i32 to index
        %c0_307 = arith.constant 0 : index
        %c0_308 = arith.constant 0 : index
        %434 = vector.load %arg11[%c1_306, %433, %c0_307, %c0_308] : memref<5x15x15x128xf32, #tpu.memory_space<vmem>>, vector<1x1x13x128xf32>
        %435 = vector.shape_cast %434 : vector<1x1x13x128xf32> to vector<13x128xf32>
        %436 = vector.broadcast %421 : f32 to vector<13x128xf32>
        %437 = arith.mulf %435, %436 : vector<13x128xf32>
        %438 = arith.addf %413, %437 : vector<13x128xf32>
        %c5_i32_309 = arith.constant 5 : i32
        %439 = arith.muli %arg16, %c5_i32_309 : i32
        %c1_i32_310 = arith.constant 1 : i32
        %440 = arith.addi %439, %c1_i32_310 : i32
        %c3_i32_311 = arith.constant 3 : i32
        %441 = arith.muli %440, %c3_i32_311 : i32
        %c2_i32_312 = arith.constant 2 : i32
        %442 = arith.addi %441, %c2_i32_312 : i32
        %c3_i32_313 = arith.constant 3 : i32
        %443 = arith.muli %442, %c3_i32_313 : i32
        %c1_i32_314 = arith.constant 1 : i32
        %444 = arith.addi %443, %c1_i32_314 : i32
        %445 = arith.index_cast %444 : i32 to index
        %446 = memref.load %arg4[%445] : memref<315xf32, #tpu.memory_space<smem>>
        %c2_i32_315 = arith.constant 2 : i32
        %447 = arith.muli %c2_i32_315, %arg15 : i32
        %c2_i32_316 = arith.constant 2 : i32
        %448 = arith.addi %447, %c2_i32_316 : i32
        %c1_317 = arith.constant 1 : index
        %449 = arith.index_cast %448 : i32 to index
        %c1_318 = arith.constant 1 : index
        %c0_319 = arith.constant 0 : index
        %450 = vector.load %arg11[%c1_317, %449, %c1_318, %c0_319] : memref<5x15x15x128xf32, #tpu.memory_space<vmem>>, vector<1x1x13x128xf32>
        %451 = vector.shape_cast %450 : vector<1x1x13x128xf32> to vector<13x128xf32>
        %452 = vector.broadcast %446 : f32 to vector<13x128xf32>
        %453 = arith.mulf %451, %452 : vector<13x128xf32>
        %454 = arith.addf %429, %453 : vector<13x128xf32>
        %c2_i32_320 = arith.constant 2 : i32
        %455 = arith.muli %c2_i32_320, %arg15 : i32
        %c1_i32_321 = arith.constant 1 : i32
        %456 = arith.addi %455, %c1_i32_321 : i32
        %c2_i32_322 = arith.constant 2 : i32
        %457 = arith.addi %456, %c2_i32_322 : i32
        %c1_323 = arith.constant 1 : index
        %458 = arith.index_cast %457 : i32 to index
        %c1_324 = arith.constant 1 : index
        %c0_325 = arith.constant 0 : index
        %459 = vector.load %arg11[%c1_323, %458, %c1_324, %c0_325] : memref<5x15x15x128xf32, #tpu.memory_space<vmem>>, vector<1x1x13x128xf32>
        %460 = vector.shape_cast %459 : vector<1x1x13x128xf32> to vector<13x128xf32>
        %461 = vector.broadcast %446 : f32 to vector<13x128xf32>
        %462 = arith.mulf %460, %461 : vector<13x128xf32>
        %463 = arith.addf %438, %462 : vector<13x128xf32>
        %c5_i32_326 = arith.constant 5 : i32
        %464 = arith.muli %arg16, %c5_i32_326 : i32
        %c1_i32_327 = arith.constant 1 : i32
        %465 = arith.addi %464, %c1_i32_327 : i32
        %c3_i32_328 = arith.constant 3 : i32
        %466 = arith.muli %465, %c3_i32_328 : i32
        %c2_i32_329 = arith.constant 2 : i32
        %467 = arith.addi %466, %c2_i32_329 : i32
        %c3_i32_330 = arith.constant 3 : i32
        %468 = arith.muli %467, %c3_i32_330 : i32
        %c2_i32_331 = arith.constant 2 : i32
        %469 = arith.addi %468, %c2_i32_331 : i32
        %470 = arith.index_cast %469 : i32 to index
        %471 = memref.load %arg4[%470] : memref<315xf32, #tpu.memory_space<smem>>
        %c2_i32_332 = arith.constant 2 : i32
        %472 = arith.muli %c2_i32_332, %arg15 : i32
        %c2_i32_333 = arith.constant 2 : i32
        %473 = arith.addi %472, %c2_i32_333 : i32
        %c1_334 = arith.constant 1 : index
        %474 = arith.index_cast %473 : i32 to index
        %c2_335 = arith.constant 2 : index
        %c0_336 = arith.constant 0 : index
        %475 = vector.load %arg11[%c1_334, %474, %c2_335, %c0_336] : memref<5x15x15x128xf32, #tpu.memory_space<vmem>>, vector<1x1x13x128xf32>
        %476 = vector.shape_cast %475 : vector<1x1x13x128xf32> to vector<13x128xf32>
        %477 = vector.broadcast %471 : f32 to vector<13x128xf32>
        %478 = arith.mulf %476, %477 : vector<13x128xf32>
        %479 = arith.addf %454, %478 : vector<13x128xf32>
        %c2_i32_337 = arith.constant 2 : i32
        %480 = arith.muli %c2_i32_337, %arg15 : i32
        %c1_i32_338 = arith.constant 1 : i32
        %481 = arith.addi %480, %c1_i32_338 : i32
        %c2_i32_339 = arith.constant 2 : i32
        %482 = arith.addi %481, %c2_i32_339 : i32
        %c1_340 = arith.constant 1 : index
        %483 = arith.index_cast %482 : i32 to index
        %c2_341 = arith.constant 2 : index
        %c0_342 = arith.constant 0 : index
        %484 = vector.load %arg11[%c1_340, %483, %c2_341, %c0_342] : memref<5x15x15x128xf32, #tpu.memory_space<vmem>>, vector<1x1x13x128xf32>
        %485 = vector.shape_cast %484 : vector<1x1x13x128xf32> to vector<13x128xf32>
        %486 = vector.broadcast %471 : f32 to vector<13x128xf32>
        %487 = arith.mulf %485, %486 : vector<13x128xf32>
        %488 = arith.addf %463, %487 : vector<13x128xf32>
        %c5_i32_343 = arith.constant 5 : i32
        %489 = arith.muli %arg16, %c5_i32_343 : i32
        %c2_i32_344 = arith.constant 2 : i32
        %490 = arith.addi %489, %c2_i32_344 : i32
        %c3_i32_345 = arith.constant 3 : i32
        %491 = arith.muli %490, %c3_i32_345 : i32
        %c0_i32_346 = arith.constant 0 : i32
        %492 = arith.addi %491, %c0_i32_346 : i32
        %c3_i32_347 = arith.constant 3 : i32
        %493 = arith.muli %492, %c3_i32_347 : i32
        %c0_i32_348 = arith.constant 0 : i32
        %494 = arith.addi %493, %c0_i32_348 : i32
        %495 = arith.index_cast %494 : i32 to index
        %496 = memref.load %arg4[%495] : memref<315xf32, #tpu.memory_space<smem>>
        %c2_i32_349 = arith.constant 2 : i32
        %497 = arith.muli %c2_i32_349, %arg15 : i32
        %c0_i32_350 = arith.constant 0 : i32
        %498 = arith.addi %497, %c0_i32_350 : i32
        %c2_351 = arith.constant 2 : index
        %499 = arith.index_cast %498 : i32 to index
        %c0_352 = arith.constant 0 : index
        %c0_353 = arith.constant 0 : index
        %500 = vector.load %arg11[%c2_351, %499, %c0_352, %c0_353] : memref<5x15x15x128xf32, #tpu.memory_space<vmem>>, vector<1x1x13x128xf32>
        %501 = vector.shape_cast %500 : vector<1x1x13x128xf32> to vector<13x128xf32>
        %502 = vector.broadcast %496 : f32 to vector<13x128xf32>
        %503 = arith.mulf %501, %502 : vector<13x128xf32>
        %504 = arith.addf %479, %503 : vector<13x128xf32>
        %c2_i32_354 = arith.constant 2 : i32
        %505 = arith.muli %c2_i32_354, %arg15 : i32
        %c1_i32_355 = arith.constant 1 : i32
        %506 = arith.addi %505, %c1_i32_355 : i32
        %c0_i32_356 = arith.constant 0 : i32
        %507 = arith.addi %506, %c0_i32_356 : i32
        %c2_357 = arith.constant 2 : index
        %508 = arith.index_cast %507 : i32 to index
        %c0_358 = arith.constant 0 : index
        %c0_359 = arith.constant 0 : index
        %509 = vector.load %arg11[%c2_357, %508, %c0_358, %c0_359] : memref<5x15x15x128xf32, #tpu.memory_space<vmem>>, vector<1x1x13x128xf32>
        %510 = vector.shape_cast %509 : vector<1x1x13x128xf32> to vector<13x128xf32>
        %511 = vector.broadcast %496 : f32 to vector<13x128xf32>
        %512 = arith.mulf %510, %511 : vector<13x128xf32>
        %513 = arith.addf %488, %512 : vector<13x128xf32>
        %c5_i32_360 = arith.constant 5 : i32
        %514 = arith.muli %arg16, %c5_i32_360 : i32
        %c2_i32_361 = arith.constant 2 : i32
        %515 = arith.addi %514, %c2_i32_361 : i32
        %c3_i32_362 = arith.constant 3 : i32
        %516 = arith.muli %515, %c3_i32_362 : i32
        %c0_i32_363 = arith.constant 0 : i32
        %517 = arith.addi %516, %c0_i32_363 : i32
        %c3_i32_364 = arith.constant 3 : i32
        %518 = arith.muli %517, %c3_i32_364 : i32
        %c1_i32_365 = arith.constant 1 : i32
        %519 = arith.addi %518, %c1_i32_365 : i32
        %520 = arith.index_cast %519 : i32 to index
        %521 = memref.load %arg4[%520] : memref<315xf32, #tpu.memory_space<smem>>
        %c2_i32_366 = arith.constant 2 : i32
        %522 = arith.muli %c2_i32_366, %arg15 : i32
        %c0_i32_367 = arith.constant 0 : i32
        %523 = arith.addi %522, %c0_i32_367 : i32
        %c2_368 = arith.constant 2 : index
        %524 = arith.index_cast %523 : i32 to index
        %c1_369 = arith.constant 1 : index
        %c0_370 = arith.constant 0 : index
        %525 = vector.load %arg11[%c2_368, %524, %c1_369, %c0_370] : memref<5x15x15x128xf32, #tpu.memory_space<vmem>>, vector<1x1x13x128xf32>
        %526 = vector.shape_cast %525 : vector<1x1x13x128xf32> to vector<13x128xf32>
        %527 = vector.broadcast %521 : f32 to vector<13x128xf32>
        %528 = arith.mulf %526, %527 : vector<13x128xf32>
        %529 = arith.addf %504, %528 : vector<13x128xf32>
        %c2_i32_371 = arith.constant 2 : i32
        %530 = arith.muli %c2_i32_371, %arg15 : i32
        %c1_i32_372 = arith.constant 1 : i32
        %531 = arith.addi %530, %c1_i32_372 : i32
        %c0_i32_373 = arith.constant 0 : i32
        %532 = arith.addi %531, %c0_i32_373 : i32
        %c2_374 = arith.constant 2 : index
        %533 = arith.index_cast %532 : i32 to index
        %c1_375 = arith.constant 1 : index
        %c0_376 = arith.constant 0 : index
        %534 = vector.load %arg11[%c2_374, %533, %c1_375, %c0_376] : memref<5x15x15x128xf32, #tpu.memory_space<vmem>>, vector<1x1x13x128xf32>
        %535 = vector.shape_cast %534 : vector<1x1x13x128xf32> to vector<13x128xf32>
        %536 = vector.broadcast %521 : f32 to vector<13x128xf32>
        %537 = arith.mulf %535, %536 : vector<13x128xf32>
        %538 = arith.addf %513, %537 : vector<13x128xf32>
        %c5_i32_377 = arith.constant 5 : i32
        %539 = arith.muli %arg16, %c5_i32_377 : i32
        %c2_i32_378 = arith.constant 2 : i32
        %540 = arith.addi %539, %c2_i32_378 : i32
        %c3_i32_379 = arith.constant 3 : i32
        %541 = arith.muli %540, %c3_i32_379 : i32
        %c0_i32_380 = arith.constant 0 : i32
        %542 = arith.addi %541, %c0_i32_380 : i32
        %c3_i32_381 = arith.constant 3 : i32
        %543 = arith.muli %542, %c3_i32_381 : i32
        %c2_i32_382 = arith.constant 2 : i32
        %544 = arith.addi %543, %c2_i32_382 : i32
        %545 = arith.index_cast %544 : i32 to index
        %546 = memref.load %arg4[%545] : memref<315xf32, #tpu.memory_space<smem>>
        %c2_i32_383 = arith.constant 2 : i32
        %547 = arith.muli %c2_i32_383, %arg15 : i32
        %c0_i32_384 = arith.constant 0 : i32
        %548 = arith.addi %547, %c0_i32_384 : i32
        %c2_385 = arith.constant 2 : index
        %549 = arith.index_cast %548 : i32 to index
        %c2_386 = arith.constant 2 : index
        %c0_387 = arith.constant 0 : index
        %550 = vector.load %arg11[%c2_385, %549, %c2_386, %c0_387] : memref<5x15x15x128xf32, #tpu.memory_space<vmem>>, vector<1x1x13x128xf32>
        %551 = vector.shape_cast %550 : vector<1x1x13x128xf32> to vector<13x128xf32>
        %552 = vector.broadcast %546 : f32 to vector<13x128xf32>
        %553 = arith.mulf %551, %552 : vector<13x128xf32>
        %554 = arith.addf %529, %553 : vector<13x128xf32>
        %c2_i32_388 = arith.constant 2 : i32
        %555 = arith.muli %c2_i32_388, %arg15 : i32
        %c1_i32_389 = arith.constant 1 : i32
        %556 = arith.addi %555, %c1_i32_389 : i32
        %c0_i32_390 = arith.constant 0 : i32
        %557 = arith.addi %556, %c0_i32_390 : i32
        %c2_391 = arith.constant 2 : index
        %558 = arith.index_cast %557 : i32 to index
        %c2_392 = arith.constant 2 : index
        %c0_393 = arith.constant 0 : index
        %559 = vector.load %arg11[%c2_391, %558, %c2_392, %c0_393] : memref<5x15x15x128xf32, #tpu.memory_space<vmem>>, vector<1x1x13x128xf32>
        %560 = vector.shape_cast %559 : vector<1x1x13x128xf32> to vector<13x128xf32>
        %561 = vector.broadcast %546 : f32 to vector<13x128xf32>
        %562 = arith.mulf %560, %561 : vector<13x128xf32>
        %563 = arith.addf %538, %562 : vector<13x128xf32>
        %c5_i32_394 = arith.constant 5 : i32
        %564 = arith.muli %arg16, %c5_i32_394 : i32
        %c2_i32_395 = arith.constant 2 : i32
        %565 = arith.addi %564, %c2_i32_395 : i32
        %c3_i32_396 = arith.constant 3 : i32
        %566 = arith.muli %565, %c3_i32_396 : i32
        %c1_i32_397 = arith.constant 1 : i32
        %567 = arith.addi %566, %c1_i32_397 : i32
        %c3_i32_398 = arith.constant 3 : i32
        %568 = arith.muli %567, %c3_i32_398 : i32
        %c0_i32_399 = arith.constant 0 : i32
        %569 = arith.addi %568, %c0_i32_399 : i32
        %570 = arith.index_cast %569 : i32 to index
        %571 = memref.load %arg4[%570] : memref<315xf32, #tpu.memory_space<smem>>
        %c2_i32_400 = arith.constant 2 : i32
        %572 = arith.muli %c2_i32_400, %arg15 : i32
        %c1_i32_401 = arith.constant 1 : i32
        %573 = arith.addi %572, %c1_i32_401 : i32
        %c2_402 = arith.constant 2 : index
        %574 = arith.index_cast %573 : i32 to index
        %c0_403 = arith.constant 0 : index
        %c0_404 = arith.constant 0 : index
        %575 = vector.load %arg11[%c2_402, %574, %c0_403, %c0_404] : memref<5x15x15x128xf32, #tpu.memory_space<vmem>>, vector<1x1x13x128xf32>
        %576 = vector.shape_cast %575 : vector<1x1x13x128xf32> to vector<13x128xf32>
        %577 = vector.broadcast %571 : f32 to vector<13x128xf32>
        %578 = arith.mulf %576, %577 : vector<13x128xf32>
        %579 = arith.addf %554, %578 : vector<13x128xf32>
        %c2_i32_405 = arith.constant 2 : i32
        %580 = arith.muli %c2_i32_405, %arg15 : i32
        %c1_i32_406 = arith.constant 1 : i32
        %581 = arith.addi %580, %c1_i32_406 : i32
        %c1_i32_407 = arith.constant 1 : i32
        %582 = arith.addi %581, %c1_i32_407 : i32
        %c2_408 = arith.constant 2 : index
        %583 = arith.index_cast %582 : i32 to index
        %c0_409 = arith.constant 0 : index
        %c0_410 = arith.constant 0 : index
        %584 = vector.load %arg11[%c2_408, %583, %c0_409, %c0_410] : memref<5x15x15x128xf32, #tpu.memory_space<vmem>>, vector<1x1x13x128xf32>
        %585 = vector.shape_cast %584 : vector<1x1x13x128xf32> to vector<13x128xf32>
        %586 = vector.broadcast %571 : f32 to vector<13x128xf32>
        %587 = arith.mulf %585, %586 : vector<13x128xf32>
        %588 = arith.addf %563, %587 : vector<13x128xf32>
        %c5_i32_411 = arith.constant 5 : i32
        %589 = arith.muli %arg16, %c5_i32_411 : i32
        %c2_i32_412 = arith.constant 2 : i32
        %590 = arith.addi %589, %c2_i32_412 : i32
        %c3_i32_413 = arith.constant 3 : i32
        %591 = arith.muli %590, %c3_i32_413 : i32
        %c1_i32_414 = arith.constant 1 : i32
        %592 = arith.addi %591, %c1_i32_414 : i32
        %c3_i32_415 = arith.constant 3 : i32
        %593 = arith.muli %592, %c3_i32_415 : i32
        %c1_i32_416 = arith.constant 1 : i32
        %594 = arith.addi %593, %c1_i32_416 : i32
        %595 = arith.index_cast %594 : i32 to index
        %596 = memref.load %arg4[%595] : memref<315xf32, #tpu.memory_space<smem>>
        %c2_i32_417 = arith.constant 2 : i32
        %597 = arith.muli %c2_i32_417, %arg15 : i32
        %c1_i32_418 = arith.constant 1 : i32
        %598 = arith.addi %597, %c1_i32_418 : i32
        %c2_419 = arith.constant 2 : index
        %599 = arith.index_cast %598 : i32 to index
        %c1_420 = arith.constant 1 : index
        %c0_421 = arith.constant 0 : index
        %600 = vector.load %arg11[%c2_419, %599, %c1_420, %c0_421] : memref<5x15x15x128xf32, #tpu.memory_space<vmem>>, vector<1x1x13x128xf32>
        %601 = vector.shape_cast %600 : vector<1x1x13x128xf32> to vector<13x128xf32>
        %602 = vector.broadcast %596 : f32 to vector<13x128xf32>
        %603 = arith.mulf %601, %602 : vector<13x128xf32>
        %604 = arith.addf %579, %603 : vector<13x128xf32>
        %c2_i32_422 = arith.constant 2 : i32
        %605 = arith.muli %c2_i32_422, %arg15 : i32
        %c1_i32_423 = arith.constant 1 : i32
        %606 = arith.addi %605, %c1_i32_423 : i32
        %c1_i32_424 = arith.constant 1 : i32
        %607 = arith.addi %606, %c1_i32_424 : i32
        %c2_425 = arith.constant 2 : index
        %608 = arith.index_cast %607 : i32 to index
        %c1_426 = arith.constant 1 : index
        %c0_427 = arith.constant 0 : index
        %609 = vector.load %arg11[%c2_425, %608, %c1_426, %c0_427] : memref<5x15x15x128xf32, #tpu.memory_space<vmem>>, vector<1x1x13x128xf32>
        %610 = vector.shape_cast %609 : vector<1x1x13x128xf32> to vector<13x128xf32>
        %611 = vector.broadcast %596 : f32 to vector<13x128xf32>
        %612 = arith.mulf %610, %611 : vector<13x128xf32>
        %613 = arith.addf %588, %612 : vector<13x128xf32>
        %c5_i32_428 = arith.constant 5 : i32
        %614 = arith.muli %arg16, %c5_i32_428 : i32
        %c2_i32_429 = arith.constant 2 : i32
        %615 = arith.addi %614, %c2_i32_429 : i32
        %c3_i32_430 = arith.constant 3 : i32
        %616 = arith.muli %615, %c3_i32_430 : i32
        %c1_i32_431 = arith.constant 1 : i32
        %617 = arith.addi %616, %c1_i32_431 : i32
        %c3_i32_432 = arith.constant 3 : i32
        %618 = arith.muli %617, %c3_i32_432 : i32
        %c2_i32_433 = arith.constant 2 : i32
        %619 = arith.addi %618, %c2_i32_433 : i32
        %620 = arith.index_cast %619 : i32 to index
        %621 = memref.load %arg4[%620] : memref<315xf32, #tpu.memory_space<smem>>
        %c2_i32_434 = arith.constant 2 : i32
        %622 = arith.muli %c2_i32_434, %arg15 : i32
        %c1_i32_435 = arith.constant 1 : i32
        %623 = arith.addi %622, %c1_i32_435 : i32
        %c2_436 = arith.constant 2 : index
        %624 = arith.index_cast %623 : i32 to index
        %c2_437 = arith.constant 2 : index
        %c0_438 = arith.constant 0 : index
        %625 = vector.load %arg11[%c2_436, %624, %c2_437, %c0_438] : memref<5x15x15x128xf32, #tpu.memory_space<vmem>>, vector<1x1x13x128xf32>
        %626 = vector.shape_cast %625 : vector<1x1x13x128xf32> to vector<13x128xf32>
        %627 = vector.broadcast %621 : f32 to vector<13x128xf32>
        %628 = arith.mulf %626, %627 : vector<13x128xf32>
        %629 = arith.addf %604, %628 : vector<13x128xf32>
        %c2_i32_439 = arith.constant 2 : i32
        %630 = arith.muli %c2_i32_439, %arg15 : i32
        %c1_i32_440 = arith.constant 1 : i32
        %631 = arith.addi %630, %c1_i32_440 : i32
        %c1_i32_441 = arith.constant 1 : i32
        %632 = arith.addi %631, %c1_i32_441 : i32
        %c2_442 = arith.constant 2 : index
        %633 = arith.index_cast %632 : i32 to index
        %c2_443 = arith.constant 2 : index
        %c0_444 = arith.constant 0 : index
        %634 = vector.load %arg11[%c2_442, %633, %c2_443, %c0_444] : memref<5x15x15x128xf32, #tpu.memory_space<vmem>>, vector<1x1x13x128xf32>
        %635 = vector.shape_cast %634 : vector<1x1x13x128xf32> to vector<13x128xf32>
        %636 = vector.broadcast %621 : f32 to vector<13x128xf32>
        %637 = arith.mulf %635, %636 : vector<13x128xf32>
        %638 = arith.addf %613, %637 : vector<13x128xf32>
        %c5_i32_445 = arith.constant 5 : i32
        %639 = arith.muli %arg16, %c5_i32_445 : i32
        %c2_i32_446 = arith.constant 2 : i32
        %640 = arith.addi %639, %c2_i32_446 : i32
        %c3_i32_447 = arith.constant 3 : i32
        %641 = arith.muli %640, %c3_i32_447 : i32
        %c2_i32_448 = arith.constant 2 : i32
        %642 = arith.addi %641, %c2_i32_448 : i32
        %c3_i32_449 = arith.constant 3 : i32
        %643 = arith.muli %642, %c3_i32_449 : i32
        %c0_i32_450 = arith.constant 0 : i32
        %644 = arith.addi %643, %c0_i32_450 : i32
        %645 = arith.index_cast %644 : i32 to index
        %646 = memref.load %arg4[%645] : memref<315xf32, #tpu.memory_space<smem>>
        %c2_i32_451 = arith.constant 2 : i32
        %647 = arith.muli %c2_i32_451, %arg15 : i32
        %c2_i32_452 = arith.constant 2 : i32
        %648 = arith.addi %647, %c2_i32_452 : i32
        %c2_453 = arith.constant 2 : index
        %649 = arith.index_cast %648 : i32 to index
        %c0_454 = arith.constant 0 : index
        %c0_455 = arith.constant 0 : index
        %650 = vector.load %arg11[%c2_453, %649, %c0_454, %c0_455] : memref<5x15x15x128xf32, #tpu.memory_space<vmem>>, vector<1x1x13x128xf32>
        %651 = vector.shape_cast %650 : vector<1x1x13x128xf32> to vector<13x128xf32>
        %652 = vector.broadcast %646 : f32 to vector<13x128xf32>
        %653 = arith.mulf %651, %652 : vector<13x128xf32>
        %654 = arith.addf %629, %653 : vector<13x128xf32>
        %c2_i32_456 = arith.constant 2 : i32
        %655 = arith.muli %c2_i32_456, %arg15 : i32
        %c1_i32_457 = arith.constant 1 : i32
        %656 = arith.addi %655, %c1_i32_457 : i32
        %c2_i32_458 = arith.constant 2 : i32
        %657 = arith.addi %656, %c2_i32_458 : i32
        %c2_459 = arith.constant 2 : index
        %658 = arith.index_cast %657 : i32 to index
        %c0_460 = arith.constant 0 : index
        %c0_461 = arith.constant 0 : index
        %659 = vector.load %arg11[%c2_459, %658, %c0_460, %c0_461] : memref<5x15x15x128xf32, #tpu.memory_space<vmem>>, vector<1x1x13x128xf32>
        %660 = vector.shape_cast %659 : vector<1x1x13x128xf32> to vector<13x128xf32>
        %661 = vector.broadcast %646 : f32 to vector<13x128xf32>
        %662 = arith.mulf %660, %661 : vector<13x128xf32>
        %663 = arith.addf %638, %662 : vector<13x128xf32>
        %c5_i32_462 = arith.constant 5 : i32
        %664 = arith.muli %arg16, %c5_i32_462 : i32
        %c2_i32_463 = arith.constant 2 : i32
        %665 = arith.addi %664, %c2_i32_463 : i32
        %c3_i32_464 = arith.constant 3 : i32
        %666 = arith.muli %665, %c3_i32_464 : i32
        %c2_i32_465 = arith.constant 2 : i32
        %667 = arith.addi %666, %c2_i32_465 : i32
        %c3_i32_466 = arith.constant 3 : i32
        %668 = arith.muli %667, %c3_i32_466 : i32
        %c1_i32_467 = arith.constant 1 : i32
        %669 = arith.addi %668, %c1_i32_467 : i32
        %670 = arith.index_cast %669 : i32 to index
        %671 = memref.load %arg4[%670] : memref<315xf32, #tpu.memory_space<smem>>
        %c2_i32_468 = arith.constant 2 : i32
        %672 = arith.muli %c2_i32_468, %arg15 : i32
        %c2_i32_469 = arith.constant 2 : i32
        %673 = arith.addi %672, %c2_i32_469 : i32
        %c2_470 = arith.constant 2 : index
        %674 = arith.index_cast %673 : i32 to index
        %c1_471 = arith.constant 1 : index
        %c0_472 = arith.constant 0 : index
        %675 = vector.load %arg11[%c2_470, %674, %c1_471, %c0_472] : memref<5x15x15x128xf32, #tpu.memory_space<vmem>>, vector<1x1x13x128xf32>
        %676 = vector.shape_cast %675 : vector<1x1x13x128xf32> to vector<13x128xf32>
        %677 = vector.broadcast %671 : f32 to vector<13x128xf32>
        %678 = arith.mulf %676, %677 : vector<13x128xf32>
        %679 = arith.addf %654, %678 : vector<13x128xf32>
        %c2_i32_473 = arith.constant 2 : i32
        %680 = arith.muli %c2_i32_473, %arg15 : i32
        %c1_i32_474 = arith.constant 1 : i32
        %681 = arith.addi %680, %c1_i32_474 : i32
        %c2_i32_475 = arith.constant 2 : i32
        %682 = arith.addi %681, %c2_i32_475 : i32
        %c2_476 = arith.constant 2 : index
        %683 = arith.index_cast %682 : i32 to index
        %c1_477 = arith.constant 1 : index
        %c0_478 = arith.constant 0 : index
        %684 = vector.load %arg11[%c2_476, %683, %c1_477, %c0_478] : memref<5x15x15x128xf32, #tpu.memory_space<vmem>>, vector<1x1x13x128xf32>
        %685 = vector.shape_cast %684 : vector<1x1x13x128xf32> to vector<13x128xf32>
        %686 = vector.broadcast %671 : f32 to vector<13x128xf32>
        %687 = arith.mulf %685, %686 : vector<13x128xf32>
        %688 = arith.addf %663, %687 : vector<13x128xf32>
        %c5_i32_479 = arith.constant 5 : i32
        %689 = arith.muli %arg16, %c5_i32_479 : i32
        %c2_i32_480 = arith.constant 2 : i32
        %690 = arith.addi %689, %c2_i32_480 : i32
        %c3_i32_481 = arith.constant 3 : i32
        %691 = arith.muli %690, %c3_i32_481 : i32
        %c2_i32_482 = arith.constant 2 : i32
        %692 = arith.addi %691, %c2_i32_482 : i32
        %c3_i32_483 = arith.constant 3 : i32
        %693 = arith.muli %692, %c3_i32_483 : i32
        %c2_i32_484 = arith.constant 2 : i32
        %694 = arith.addi %693, %c2_i32_484 : i32
        %695 = arith.index_cast %694 : i32 to index
        %696 = memref.load %arg4[%695] : memref<315xf32, #tpu.memory_space<smem>>
        %c2_i32_485 = arith.constant 2 : i32
        %697 = arith.muli %c2_i32_485, %arg15 : i32
        %c2_i32_486 = arith.constant 2 : i32
        %698 = arith.addi %697, %c2_i32_486 : i32
        %c2_487 = arith.constant 2 : index
        %699 = arith.index_cast %698 : i32 to index
        %c2_488 = arith.constant 2 : index
        %c0_489 = arith.constant 0 : index
        %700 = vector.load %arg11[%c2_487, %699, %c2_488, %c0_489] : memref<5x15x15x128xf32, #tpu.memory_space<vmem>>, vector<1x1x13x128xf32>
        %701 = vector.shape_cast %700 : vector<1x1x13x128xf32> to vector<13x128xf32>
        %702 = vector.broadcast %696 : f32 to vector<13x128xf32>
        %703 = arith.mulf %701, %702 : vector<13x128xf32>
        %704 = arith.addf %679, %703 : vector<13x128xf32>
        %c2_i32_490 = arith.constant 2 : i32
        %705 = arith.muli %c2_i32_490, %arg15 : i32
        %c1_i32_491 = arith.constant 1 : i32
        %706 = arith.addi %705, %c1_i32_491 : i32
        %c2_i32_492 = arith.constant 2 : i32
        %707 = arith.addi %706, %c2_i32_492 : i32
        %c2_493 = arith.constant 2 : index
        %708 = arith.index_cast %707 : i32 to index
        %c2_494 = arith.constant 2 : index
        %c0_495 = arith.constant 0 : index
        %709 = vector.load %arg11[%c2_493, %708, %c2_494, %c0_495] : memref<5x15x15x128xf32, #tpu.memory_space<vmem>>, vector<1x1x13x128xf32>
        %710 = vector.shape_cast %709 : vector<1x1x13x128xf32> to vector<13x128xf32>
        %711 = vector.broadcast %696 : f32 to vector<13x128xf32>
        %712 = arith.mulf %710, %711 : vector<13x128xf32>
        %713 = arith.addf %688, %712 : vector<13x128xf32>
        %c5_i32_496 = arith.constant 5 : i32
        %714 = arith.muli %arg16, %c5_i32_496 : i32
        %c3_i32_497 = arith.constant 3 : i32
        %715 = arith.addi %714, %c3_i32_497 : i32
        %c3_i32_498 = arith.constant 3 : i32
        %716 = arith.muli %715, %c3_i32_498 : i32
        %c0_i32_499 = arith.constant 0 : i32
        %717 = arith.addi %716, %c0_i32_499 : i32
        %c3_i32_500 = arith.constant 3 : i32
        %718 = arith.muli %717, %c3_i32_500 : i32
        %c0_i32_501 = arith.constant 0 : i32
        %719 = arith.addi %718, %c0_i32_501 : i32
        %720 = arith.index_cast %719 : i32 to index
        %721 = memref.load %arg4[%720] : memref<315xf32, #tpu.memory_space<smem>>
        %c2_i32_502 = arith.constant 2 : i32
        %722 = arith.muli %c2_i32_502, %arg15 : i32
        %c0_i32_503 = arith.constant 0 : i32
        %723 = arith.addi %722, %c0_i32_503 : i32
        %c3_504 = arith.constant 3 : index
        %724 = arith.index_cast %723 : i32 to index
        %c0_505 = arith.constant 0 : index
        %c0_506 = arith.constant 0 : index
        %725 = vector.load %arg11[%c3_504, %724, %c0_505, %c0_506] : memref<5x15x15x128xf32, #tpu.memory_space<vmem>>, vector<1x1x13x128xf32>
        %726 = vector.shape_cast %725 : vector<1x1x13x128xf32> to vector<13x128xf32>
        %727 = vector.broadcast %721 : f32 to vector<13x128xf32>
        %728 = arith.mulf %726, %727 : vector<13x128xf32>
        %729 = arith.addf %704, %728 : vector<13x128xf32>
        %c2_i32_507 = arith.constant 2 : i32
        %730 = arith.muli %c2_i32_507, %arg15 : i32
        %c1_i32_508 = arith.constant 1 : i32
        %731 = arith.addi %730, %c1_i32_508 : i32
        %c0_i32_509 = arith.constant 0 : i32
        %732 = arith.addi %731, %c0_i32_509 : i32
        %c3_510 = arith.constant 3 : index
        %733 = arith.index_cast %732 : i32 to index
        %c0_511 = arith.constant 0 : index
        %c0_512 = arith.constant 0 : index
        %734 = vector.load %arg11[%c3_510, %733, %c0_511, %c0_512] : memref<5x15x15x128xf32, #tpu.memory_space<vmem>>, vector<1x1x13x128xf32>
        %735 = vector.shape_cast %734 : vector<1x1x13x128xf32> to vector<13x128xf32>
        %736 = vector.broadcast %721 : f32 to vector<13x128xf32>
        %737 = arith.mulf %735, %736 : vector<13x128xf32>
        %738 = arith.addf %713, %737 : vector<13x128xf32>
        %c5_i32_513 = arith.constant 5 : i32
        %739 = arith.muli %arg16, %c5_i32_513 : i32
        %c3_i32_514 = arith.constant 3 : i32
        %740 = arith.addi %739, %c3_i32_514 : i32
        %c3_i32_515 = arith.constant 3 : i32
        %741 = arith.muli %740, %c3_i32_515 : i32
        %c0_i32_516 = arith.constant 0 : i32
        %742 = arith.addi %741, %c0_i32_516 : i32
        %c3_i32_517 = arith.constant 3 : i32
        %743 = arith.muli %742, %c3_i32_517 : i32
        %c1_i32_518 = arith.constant 1 : i32
        %744 = arith.addi %743, %c1_i32_518 : i32
        %745 = arith.index_cast %744 : i32 to index
        %746 = memref.load %arg4[%745] : memref<315xf32, #tpu.memory_space<smem>>
        %c2_i32_519 = arith.constant 2 : i32
        %747 = arith.muli %c2_i32_519, %arg15 : i32
        %c0_i32_520 = arith.constant 0 : i32
        %748 = arith.addi %747, %c0_i32_520 : i32
        %c3_521 = arith.constant 3 : index
        %749 = arith.index_cast %748 : i32 to index
        %c1_522 = arith.constant 1 : index
        %c0_523 = arith.constant 0 : index
        %750 = vector.load %arg11[%c3_521, %749, %c1_522, %c0_523] : memref<5x15x15x128xf32, #tpu.memory_space<vmem>>, vector<1x1x13x128xf32>
        %751 = vector.shape_cast %750 : vector<1x1x13x128xf32> to vector<13x128xf32>
        %752 = vector.broadcast %746 : f32 to vector<13x128xf32>
        %753 = arith.mulf %751, %752 : vector<13x128xf32>
        %754 = arith.addf %729, %753 : vector<13x128xf32>
        %c2_i32_524 = arith.constant 2 : i32
        %755 = arith.muli %c2_i32_524, %arg15 : i32
        %c1_i32_525 = arith.constant 1 : i32
        %756 = arith.addi %755, %c1_i32_525 : i32
        %c0_i32_526 = arith.constant 0 : i32
        %757 = arith.addi %756, %c0_i32_526 : i32
        %c3_527 = arith.constant 3 : index
        %758 = arith.index_cast %757 : i32 to index
        %c1_528 = arith.constant 1 : index
        %c0_529 = arith.constant 0 : index
        %759 = vector.load %arg11[%c3_527, %758, %c1_528, %c0_529] : memref<5x15x15x128xf32, #tpu.memory_space<vmem>>, vector<1x1x13x128xf32>
        %760 = vector.shape_cast %759 : vector<1x1x13x128xf32> to vector<13x128xf32>
        %761 = vector.broadcast %746 : f32 to vector<13x128xf32>
        %762 = arith.mulf %760, %761 : vector<13x128xf32>
        %763 = arith.addf %738, %762 : vector<13x128xf32>
        %c5_i32_530 = arith.constant 5 : i32
        %764 = arith.muli %arg16, %c5_i32_530 : i32
        %c3_i32_531 = arith.constant 3 : i32
        %765 = arith.addi %764, %c3_i32_531 : i32
        %c3_i32_532 = arith.constant 3 : i32
        %766 = arith.muli %765, %c3_i32_532 : i32
        %c0_i32_533 = arith.constant 0 : i32
        %767 = arith.addi %766, %c0_i32_533 : i32
        %c3_i32_534 = arith.constant 3 : i32
        %768 = arith.muli %767, %c3_i32_534 : i32
        %c2_i32_535 = arith.constant 2 : i32
        %769 = arith.addi %768, %c2_i32_535 : i32
        %770 = arith.index_cast %769 : i32 to index
        %771 = memref.load %arg4[%770] : memref<315xf32, #tpu.memory_space<smem>>
        %c2_i32_536 = arith.constant 2 : i32
        %772 = arith.muli %c2_i32_536, %arg15 : i32
        %c0_i32_537 = arith.constant 0 : i32
        %773 = arith.addi %772, %c0_i32_537 : i32
        %c3_538 = arith.constant 3 : index
        %774 = arith.index_cast %773 : i32 to index
        %c2_539 = arith.constant 2 : index
        %c0_540 = arith.constant 0 : index
        %775 = vector.load %arg11[%c3_538, %774, %c2_539, %c0_540] : memref<5x15x15x128xf32, #tpu.memory_space<vmem>>, vector<1x1x13x128xf32>
        %776 = vector.shape_cast %775 : vector<1x1x13x128xf32> to vector<13x128xf32>
        %777 = vector.broadcast %771 : f32 to vector<13x128xf32>
        %778 = arith.mulf %776, %777 : vector<13x128xf32>
        %779 = arith.addf %754, %778 : vector<13x128xf32>
        %c2_i32_541 = arith.constant 2 : i32
        %780 = arith.muli %c2_i32_541, %arg15 : i32
        %c1_i32_542 = arith.constant 1 : i32
        %781 = arith.addi %780, %c1_i32_542 : i32
        %c0_i32_543 = arith.constant 0 : i32
        %782 = arith.addi %781, %c0_i32_543 : i32
        %c3_544 = arith.constant 3 : index
        %783 = arith.index_cast %782 : i32 to index
        %c2_545 = arith.constant 2 : index
        %c0_546 = arith.constant 0 : index
        %784 = vector.load %arg11[%c3_544, %783, %c2_545, %c0_546] : memref<5x15x15x128xf32, #tpu.memory_space<vmem>>, vector<1x1x13x128xf32>
        %785 = vector.shape_cast %784 : vector<1x1x13x128xf32> to vector<13x128xf32>
        %786 = vector.broadcast %771 : f32 to vector<13x128xf32>
        %787 = arith.mulf %785, %786 : vector<13x128xf32>
        %788 = arith.addf %763, %787 : vector<13x128xf32>
        %c5_i32_547 = arith.constant 5 : i32
        %789 = arith.muli %arg16, %c5_i32_547 : i32
        %c3_i32_548 = arith.constant 3 : i32
        %790 = arith.addi %789, %c3_i32_548 : i32
        %c3_i32_549 = arith.constant 3 : i32
        %791 = arith.muli %790, %c3_i32_549 : i32
        %c1_i32_550 = arith.constant 1 : i32
        %792 = arith.addi %791, %c1_i32_550 : i32
        %c3_i32_551 = arith.constant 3 : i32
        %793 = arith.muli %792, %c3_i32_551 : i32
        %c0_i32_552 = arith.constant 0 : i32
        %794 = arith.addi %793, %c0_i32_552 : i32
        %795 = arith.index_cast %794 : i32 to index
        %796 = memref.load %arg4[%795] : memref<315xf32, #tpu.memory_space<smem>>
        %c2_i32_553 = arith.constant 2 : i32
        %797 = arith.muli %c2_i32_553, %arg15 : i32
        %c1_i32_554 = arith.constant 1 : i32
        %798 = arith.addi %797, %c1_i32_554 : i32
        %c3_555 = arith.constant 3 : index
        %799 = arith.index_cast %798 : i32 to index
        %c0_556 = arith.constant 0 : index
        %c0_557 = arith.constant 0 : index
        %800 = vector.load %arg11[%c3_555, %799, %c0_556, %c0_557] : memref<5x15x15x128xf32, #tpu.memory_space<vmem>>, vector<1x1x13x128xf32>
        %801 = vector.shape_cast %800 : vector<1x1x13x128xf32> to vector<13x128xf32>
        %802 = vector.broadcast %796 : f32 to vector<13x128xf32>
        %803 = arith.mulf %801, %802 : vector<13x128xf32>
        %804 = arith.addf %779, %803 : vector<13x128xf32>
        %c2_i32_558 = arith.constant 2 : i32
        %805 = arith.muli %c2_i32_558, %arg15 : i32
        %c1_i32_559 = arith.constant 1 : i32
        %806 = arith.addi %805, %c1_i32_559 : i32
        %c1_i32_560 = arith.constant 1 : i32
        %807 = arith.addi %806, %c1_i32_560 : i32
        %c3_561 = arith.constant 3 : index
        %808 = arith.index_cast %807 : i32 to index
        %c0_562 = arith.constant 0 : index
        %c0_563 = arith.constant 0 : index
        %809 = vector.load %arg11[%c3_561, %808, %c0_562, %c0_563] : memref<5x15x15x128xf32, #tpu.memory_space<vmem>>, vector<1x1x13x128xf32>
        %810 = vector.shape_cast %809 : vector<1x1x13x128xf32> to vector<13x128xf32>
        %811 = vector.broadcast %796 : f32 to vector<13x128xf32>
        %812 = arith.mulf %810, %811 : vector<13x128xf32>
        %813 = arith.addf %788, %812 : vector<13x128xf32>
        %c5_i32_564 = arith.constant 5 : i32
        %814 = arith.muli %arg16, %c5_i32_564 : i32
        %c3_i32_565 = arith.constant 3 : i32
        %815 = arith.addi %814, %c3_i32_565 : i32
        %c3_i32_566 = arith.constant 3 : i32
        %816 = arith.muli %815, %c3_i32_566 : i32
        %c1_i32_567 = arith.constant 1 : i32
        %817 = arith.addi %816, %c1_i32_567 : i32
        %c3_i32_568 = arith.constant 3 : i32
        %818 = arith.muli %817, %c3_i32_568 : i32
        %c1_i32_569 = arith.constant 1 : i32
        %819 = arith.addi %818, %c1_i32_569 : i32
        %820 = arith.index_cast %819 : i32 to index
        %821 = memref.load %arg4[%820] : memref<315xf32, #tpu.memory_space<smem>>
        %c2_i32_570 = arith.constant 2 : i32
        %822 = arith.muli %c2_i32_570, %arg15 : i32
        %c1_i32_571 = arith.constant 1 : i32
        %823 = arith.addi %822, %c1_i32_571 : i32
        %c3_572 = arith.constant 3 : index
        %824 = arith.index_cast %823 : i32 to index
        %c1_573 = arith.constant 1 : index
        %c0_574 = arith.constant 0 : index
        %825 = vector.load %arg11[%c3_572, %824, %c1_573, %c0_574] : memref<5x15x15x128xf32, #tpu.memory_space<vmem>>, vector<1x1x13x128xf32>
        %826 = vector.shape_cast %825 : vector<1x1x13x128xf32> to vector<13x128xf32>
        %827 = vector.broadcast %821 : f32 to vector<13x128xf32>
        %828 = arith.mulf %826, %827 : vector<13x128xf32>
        %829 = arith.addf %804, %828 : vector<13x128xf32>
        %c2_i32_575 = arith.constant 2 : i32
        %830 = arith.muli %c2_i32_575, %arg15 : i32
        %c1_i32_576 = arith.constant 1 : i32
        %831 = arith.addi %830, %c1_i32_576 : i32
        %c1_i32_577 = arith.constant 1 : i32
        %832 = arith.addi %831, %c1_i32_577 : i32
        %c3_578 = arith.constant 3 : index
        %833 = arith.index_cast %832 : i32 to index
        %c1_579 = arith.constant 1 : index
        %c0_580 = arith.constant 0 : index
        %834 = vector.load %arg11[%c3_578, %833, %c1_579, %c0_580] : memref<5x15x15x128xf32, #tpu.memory_space<vmem>>, vector<1x1x13x128xf32>
        %835 = vector.shape_cast %834 : vector<1x1x13x128xf32> to vector<13x128xf32>
        %836 = vector.broadcast %821 : f32 to vector<13x128xf32>
        %837 = arith.mulf %835, %836 : vector<13x128xf32>
        %838 = arith.addf %813, %837 : vector<13x128xf32>
        %c5_i32_581 = arith.constant 5 : i32
        %839 = arith.muli %arg16, %c5_i32_581 : i32
        %c3_i32_582 = arith.constant 3 : i32
        %840 = arith.addi %839, %c3_i32_582 : i32
        %c3_i32_583 = arith.constant 3 : i32
        %841 = arith.muli %840, %c3_i32_583 : i32
        %c1_i32_584 = arith.constant 1 : i32
        %842 = arith.addi %841, %c1_i32_584 : i32
        %c3_i32_585 = arith.constant 3 : i32
        %843 = arith.muli %842, %c3_i32_585 : i32
        %c2_i32_586 = arith.constant 2 : i32
        %844 = arith.addi %843, %c2_i32_586 : i32
        %845 = arith.index_cast %844 : i32 to index
        %846 = memref.load %arg4[%845] : memref<315xf32, #tpu.memory_space<smem>>
        %c2_i32_587 = arith.constant 2 : i32
        %847 = arith.muli %c2_i32_587, %arg15 : i32
        %c1_i32_588 = arith.constant 1 : i32
        %848 = arith.addi %847, %c1_i32_588 : i32
        %c3_589 = arith.constant 3 : index
        %849 = arith.index_cast %848 : i32 to index
        %c2_590 = arith.constant 2 : index
        %c0_591 = arith.constant 0 : index
        %850 = vector.load %arg11[%c3_589, %849, %c2_590, %c0_591] : memref<5x15x15x128xf32, #tpu.memory_space<vmem>>, vector<1x1x13x128xf32>
        %851 = vector.shape_cast %850 : vector<1x1x13x128xf32> to vector<13x128xf32>
        %852 = vector.broadcast %846 : f32 to vector<13x128xf32>
        %853 = arith.mulf %851, %852 : vector<13x128xf32>
        %854 = arith.addf %829, %853 : vector<13x128xf32>
        %c2_i32_592 = arith.constant 2 : i32
        %855 = arith.muli %c2_i32_592, %arg15 : i32
        %c1_i32_593 = arith.constant 1 : i32
        %856 = arith.addi %855, %c1_i32_593 : i32
        %c1_i32_594 = arith.constant 1 : i32
        %857 = arith.addi %856, %c1_i32_594 : i32
        %c3_595 = arith.constant 3 : index
        %858 = arith.index_cast %857 : i32 to index
        %c2_596 = arith.constant 2 : index
        %c0_597 = arith.constant 0 : index
        %859 = vector.load %arg11[%c3_595, %858, %c2_596, %c0_597] : memref<5x15x15x128xf32, #tpu.memory_space<vmem>>, vector<1x1x13x128xf32>
        %860 = vector.shape_cast %859 : vector<1x1x13x128xf32> to vector<13x128xf32>
        %861 = vector.broadcast %846 : f32 to vector<13x128xf32>
        %862 = arith.mulf %860, %861 : vector<13x128xf32>
        %863 = arith.addf %838, %862 : vector<13x128xf32>
        %c5_i32_598 = arith.constant 5 : i32
        %864 = arith.muli %arg16, %c5_i32_598 : i32
        %c3_i32_599 = arith.constant 3 : i32
        %865 = arith.addi %864, %c3_i32_599 : i32
        %c3_i32_600 = arith.constant 3 : i32
        %866 = arith.muli %865, %c3_i32_600 : i32
        %c2_i32_601 = arith.constant 2 : i32
        %867 = arith.addi %866, %c2_i32_601 : i32
        %c3_i32_602 = arith.constant 3 : i32
        %868 = arith.muli %867, %c3_i32_602 : i32
        %c0_i32_603 = arith.constant 0 : i32
        %869 = arith.addi %868, %c0_i32_603 : i32
        %870 = arith.index_cast %869 : i32 to index
        %871 = memref.load %arg4[%870] : memref<315xf32, #tpu.memory_space<smem>>
        %c2_i32_604 = arith.constant 2 : i32
        %872 = arith.muli %c2_i32_604, %arg15 : i32
        %c2_i32_605 = arith.constant 2 : i32
        %873 = arith.addi %872, %c2_i32_605 : i32
        %c3_606 = arith.constant 3 : index
        %874 = arith.index_cast %873 : i32 to index
        %c0_607 = arith.constant 0 : index
        %c0_608 = arith.constant 0 : index
        %875 = vector.load %arg11[%c3_606, %874, %c0_607, %c0_608] : memref<5x15x15x128xf32, #tpu.memory_space<vmem>>, vector<1x1x13x128xf32>
        %876 = vector.shape_cast %875 : vector<1x1x13x128xf32> to vector<13x128xf32>
        %877 = vector.broadcast %871 : f32 to vector<13x128xf32>
        %878 = arith.mulf %876, %877 : vector<13x128xf32>
        %879 = arith.addf %854, %878 : vector<13x128xf32>
        %c2_i32_609 = arith.constant 2 : i32
        %880 = arith.muli %c2_i32_609, %arg15 : i32
        %c1_i32_610 = arith.constant 1 : i32
        %881 = arith.addi %880, %c1_i32_610 : i32
        %c2_i32_611 = arith.constant 2 : i32
        %882 = arith.addi %881, %c2_i32_611 : i32
        %c3_612 = arith.constant 3 : index
        %883 = arith.index_cast %882 : i32 to index
        %c0_613 = arith.constant 0 : index
        %c0_614 = arith.constant 0 : index
        %884 = vector.load %arg11[%c3_612, %883, %c0_613, %c0_614] : memref<5x15x15x128xf32, #tpu.memory_space<vmem>>, vector<1x1x13x128xf32>
        %885 = vector.shape_cast %884 : vector<1x1x13x128xf32> to vector<13x128xf32>
        %886 = vector.broadcast %871 : f32 to vector<13x128xf32>
        %887 = arith.mulf %885, %886 : vector<13x128xf32>
        %888 = arith.addf %863, %887 : vector<13x128xf32>
        %c5_i32_615 = arith.constant 5 : i32
        %889 = arith.muli %arg16, %c5_i32_615 : i32
        %c3_i32_616 = arith.constant 3 : i32
        %890 = arith.addi %889, %c3_i32_616 : i32
        %c3_i32_617 = arith.constant 3 : i32
        %891 = arith.muli %890, %c3_i32_617 : i32
        %c2_i32_618 = arith.constant 2 : i32
        %892 = arith.addi %891, %c2_i32_618 : i32
        %c3_i32_619 = arith.constant 3 : i32
        %893 = arith.muli %892, %c3_i32_619 : i32
        %c1_i32_620 = arith.constant 1 : i32
        %894 = arith.addi %893, %c1_i32_620 : i32
        %895 = arith.index_cast %894 : i32 to index
        %896 = memref.load %arg4[%895] : memref<315xf32, #tpu.memory_space<smem>>
        %c2_i32_621 = arith.constant 2 : i32
        %897 = arith.muli %c2_i32_621, %arg15 : i32
        %c2_i32_622 = arith.constant 2 : i32
        %898 = arith.addi %897, %c2_i32_622 : i32
        %c3_623 = arith.constant 3 : index
        %899 = arith.index_cast %898 : i32 to index
        %c1_624 = arith.constant 1 : index
        %c0_625 = arith.constant 0 : index
        %900 = vector.load %arg11[%c3_623, %899, %c1_624, %c0_625] : memref<5x15x15x128xf32, #tpu.memory_space<vmem>>, vector<1x1x13x128xf32>
        %901 = vector.shape_cast %900 : vector<1x1x13x128xf32> to vector<13x128xf32>
        %902 = vector.broadcast %896 : f32 to vector<13x128xf32>
        %903 = arith.mulf %901, %902 : vector<13x128xf32>
        %904 = arith.addf %879, %903 : vector<13x128xf32>
        %c2_i32_626 = arith.constant 2 : i32
        %905 = arith.muli %c2_i32_626, %arg15 : i32
        %c1_i32_627 = arith.constant 1 : i32
        %906 = arith.addi %905, %c1_i32_627 : i32
        %c2_i32_628 = arith.constant 2 : i32
        %907 = arith.addi %906, %c2_i32_628 : i32
        %c3_629 = arith.constant 3 : index
        %908 = arith.index_cast %907 : i32 to index
        %c1_630 = arith.constant 1 : index
        %c0_631 = arith.constant 0 : index
        %909 = vector.load %arg11[%c3_629, %908, %c1_630, %c0_631] : memref<5x15x15x128xf32, #tpu.memory_space<vmem>>, vector<1x1x13x128xf32>
        %910 = vector.shape_cast %909 : vector<1x1x13x128xf32> to vector<13x128xf32>
        %911 = vector.broadcast %896 : f32 to vector<13x128xf32>
        %912 = arith.mulf %910, %911 : vector<13x128xf32>
        %913 = arith.addf %888, %912 : vector<13x128xf32>
        %c5_i32_632 = arith.constant 5 : i32
        %914 = arith.muli %arg16, %c5_i32_632 : i32
        %c3_i32_633 = arith.constant 3 : i32
        %915 = arith.addi %914, %c3_i32_633 : i32
        %c3_i32_634 = arith.constant 3 : i32
        %916 = arith.muli %915, %c3_i32_634 : i32
        %c2_i32_635 = arith.constant 2 : i32
        %917 = arith.addi %916, %c2_i32_635 : i32
        %c3_i32_636 = arith.constant 3 : i32
        %918 = arith.muli %917, %c3_i32_636 : i32
        %c2_i32_637 = arith.constant 2 : i32
        %919 = arith.addi %918, %c2_i32_637 : i32
        %920 = arith.index_cast %919 : i32 to index
        %921 = memref.load %arg4[%920] : memref<315xf32, #tpu.memory_space<smem>>
        %c2_i32_638 = arith.constant 2 : i32
        %922 = arith.muli %c2_i32_638, %arg15 : i32
        %c2_i32_639 = arith.constant 2 : i32
        %923 = arith.addi %922, %c2_i32_639 : i32
        %c3_640 = arith.constant 3 : index
        %924 = arith.index_cast %923 : i32 to index
        %c2_641 = arith.constant 2 : index
        %c0_642 = arith.constant 0 : index
        %925 = vector.load %arg11[%c3_640, %924, %c2_641, %c0_642] : memref<5x15x15x128xf32, #tpu.memory_space<vmem>>, vector<1x1x13x128xf32>
        %926 = vector.shape_cast %925 : vector<1x1x13x128xf32> to vector<13x128xf32>
        %927 = vector.broadcast %921 : f32 to vector<13x128xf32>
        %928 = arith.mulf %926, %927 : vector<13x128xf32>
        %929 = arith.addf %904, %928 : vector<13x128xf32>
        %c2_i32_643 = arith.constant 2 : i32
        %930 = arith.muli %c2_i32_643, %arg15 : i32
        %c1_i32_644 = arith.constant 1 : i32
        %931 = arith.addi %930, %c1_i32_644 : i32
        %c2_i32_645 = arith.constant 2 : i32
        %932 = arith.addi %931, %c2_i32_645 : i32
        %c3_646 = arith.constant 3 : index
        %933 = arith.index_cast %932 : i32 to index
        %c2_647 = arith.constant 2 : index
        %c0_648 = arith.constant 0 : index
        %934 = vector.load %arg11[%c3_646, %933, %c2_647, %c0_648] : memref<5x15x15x128xf32, #tpu.memory_space<vmem>>, vector<1x1x13x128xf32>
        %935 = vector.shape_cast %934 : vector<1x1x13x128xf32> to vector<13x128xf32>
        %936 = vector.broadcast %921 : f32 to vector<13x128xf32>
        %937 = arith.mulf %935, %936 : vector<13x128xf32>
        %938 = arith.addf %913, %937 : vector<13x128xf32>
        %c5_i32_649 = arith.constant 5 : i32
        %939 = arith.muli %arg16, %c5_i32_649 : i32
        %c4_i32 = arith.constant 4 : i32
        %940 = arith.addi %939, %c4_i32 : i32
        %c3_i32_650 = arith.constant 3 : i32
        %941 = arith.muli %940, %c3_i32_650 : i32
        %c0_i32_651 = arith.constant 0 : i32
        %942 = arith.addi %941, %c0_i32_651 : i32
        %c3_i32_652 = arith.constant 3 : i32
        %943 = arith.muli %942, %c3_i32_652 : i32
        %c0_i32_653 = arith.constant 0 : i32
        %944 = arith.addi %943, %c0_i32_653 : i32
        %945 = arith.index_cast %944 : i32 to index
        %946 = memref.load %arg4[%945] : memref<315xf32, #tpu.memory_space<smem>>
        %c2_i32_654 = arith.constant 2 : i32
        %947 = arith.muli %c2_i32_654, %arg15 : i32
        %c0_i32_655 = arith.constant 0 : i32
        %948 = arith.addi %947, %c0_i32_655 : i32
        %c4_656 = arith.constant 4 : index
        %949 = arith.index_cast %948 : i32 to index
        %c0_657 = arith.constant 0 : index
        %c0_658 = arith.constant 0 : index
        %950 = vector.load %arg11[%c4_656, %949, %c0_657, %c0_658] : memref<5x15x15x128xf32, #tpu.memory_space<vmem>>, vector<1x1x13x128xf32>
        %951 = vector.shape_cast %950 : vector<1x1x13x128xf32> to vector<13x128xf32>
        %952 = vector.broadcast %946 : f32 to vector<13x128xf32>
        %953 = arith.mulf %951, %952 : vector<13x128xf32>
        %954 = arith.addf %929, %953 : vector<13x128xf32>
        %c2_i32_659 = arith.constant 2 : i32
        %955 = arith.muli %c2_i32_659, %arg15 : i32
        %c1_i32_660 = arith.constant 1 : i32
        %956 = arith.addi %955, %c1_i32_660 : i32
        %c0_i32_661 = arith.constant 0 : i32
        %957 = arith.addi %956, %c0_i32_661 : i32
        %c4_662 = arith.constant 4 : index
        %958 = arith.index_cast %957 : i32 to index
        %c0_663 = arith.constant 0 : index
        %c0_664 = arith.constant 0 : index
        %959 = vector.load %arg11[%c4_662, %958, %c0_663, %c0_664] : memref<5x15x15x128xf32, #tpu.memory_space<vmem>>, vector<1x1x13x128xf32>
        %960 = vector.shape_cast %959 : vector<1x1x13x128xf32> to vector<13x128xf32>
        %961 = vector.broadcast %946 : f32 to vector<13x128xf32>
        %962 = arith.mulf %960, %961 : vector<13x128xf32>
        %963 = arith.addf %938, %962 : vector<13x128xf32>
        %c5_i32_665 = arith.constant 5 : i32
        %964 = arith.muli %arg16, %c5_i32_665 : i32
        %c4_i32_666 = arith.constant 4 : i32
        %965 = arith.addi %964, %c4_i32_666 : i32
        %c3_i32_667 = arith.constant 3 : i32
        %966 = arith.muli %965, %c3_i32_667 : i32
        %c0_i32_668 = arith.constant 0 : i32
        %967 = arith.addi %966, %c0_i32_668 : i32
        %c3_i32_669 = arith.constant 3 : i32
        %968 = arith.muli %967, %c3_i32_669 : i32
        %c1_i32_670 = arith.constant 1 : i32
        %969 = arith.addi %968, %c1_i32_670 : i32
        %970 = arith.index_cast %969 : i32 to index
        %971 = memref.load %arg4[%970] : memref<315xf32, #tpu.memory_space<smem>>
        %c2_i32_671 = arith.constant 2 : i32
        %972 = arith.muli %c2_i32_671, %arg15 : i32
        %c0_i32_672 = arith.constant 0 : i32
        %973 = arith.addi %972, %c0_i32_672 : i32
        %c4_673 = arith.constant 4 : index
        %974 = arith.index_cast %973 : i32 to index
        %c1_674 = arith.constant 1 : index
        %c0_675 = arith.constant 0 : index
        %975 = vector.load %arg11[%c4_673, %974, %c1_674, %c0_675] : memref<5x15x15x128xf32, #tpu.memory_space<vmem>>, vector<1x1x13x128xf32>
        %976 = vector.shape_cast %975 : vector<1x1x13x128xf32> to vector<13x128xf32>
        %977 = vector.broadcast %971 : f32 to vector<13x128xf32>
        %978 = arith.mulf %976, %977 : vector<13x128xf32>
        %979 = arith.addf %954, %978 : vector<13x128xf32>
        %c2_i32_676 = arith.constant 2 : i32
        %980 = arith.muli %c2_i32_676, %arg15 : i32
        %c1_i32_677 = arith.constant 1 : i32
        %981 = arith.addi %980, %c1_i32_677 : i32
        %c0_i32_678 = arith.constant 0 : i32
        %982 = arith.addi %981, %c0_i32_678 : i32
        %c4_679 = arith.constant 4 : index
        %983 = arith.index_cast %982 : i32 to index
        %c1_680 = arith.constant 1 : index
        %c0_681 = arith.constant 0 : index
        %984 = vector.load %arg11[%c4_679, %983, %c1_680, %c0_681] : memref<5x15x15x128xf32, #tpu.memory_space<vmem>>, vector<1x1x13x128xf32>
        %985 = vector.shape_cast %984 : vector<1x1x13x128xf32> to vector<13x128xf32>
        %986 = vector.broadcast %971 : f32 to vector<13x128xf32>
        %987 = arith.mulf %985, %986 : vector<13x128xf32>
        %988 = arith.addf %963, %987 : vector<13x128xf32>
        %c5_i32_682 = arith.constant 5 : i32
        %989 = arith.muli %arg16, %c5_i32_682 : i32
        %c4_i32_683 = arith.constant 4 : i32
        %990 = arith.addi %989, %c4_i32_683 : i32
        %c3_i32_684 = arith.constant 3 : i32
        %991 = arith.muli %990, %c3_i32_684 : i32
        %c0_i32_685 = arith.constant 0 : i32
        %992 = arith.addi %991, %c0_i32_685 : i32
        %c3_i32_686 = arith.constant 3 : i32
        %993 = arith.muli %992, %c3_i32_686 : i32
        %c2_i32_687 = arith.constant 2 : i32
        %994 = arith.addi %993, %c2_i32_687 : i32
        %995 = arith.index_cast %994 : i32 to index
        %996 = memref.load %arg4[%995] : memref<315xf32, #tpu.memory_space<smem>>
        %c2_i32_688 = arith.constant 2 : i32
        %997 = arith.muli %c2_i32_688, %arg15 : i32
        %c0_i32_689 = arith.constant 0 : i32
        %998 = arith.addi %997, %c0_i32_689 : i32
        %c4_690 = arith.constant 4 : index
        %999 = arith.index_cast %998 : i32 to index
        %c2_691 = arith.constant 2 : index
        %c0_692 = arith.constant 0 : index
        %1000 = vector.load %arg11[%c4_690, %999, %c2_691, %c0_692] : memref<5x15x15x128xf32, #tpu.memory_space<vmem>>, vector<1x1x13x128xf32>
        %1001 = vector.shape_cast %1000 : vector<1x1x13x128xf32> to vector<13x128xf32>
        %1002 = vector.broadcast %996 : f32 to vector<13x128xf32>
        %1003 = arith.mulf %1001, %1002 : vector<13x128xf32>
        %1004 = arith.addf %979, %1003 : vector<13x128xf32>
        %c2_i32_693 = arith.constant 2 : i32
        %1005 = arith.muli %c2_i32_693, %arg15 : i32
        %c1_i32_694 = arith.constant 1 : i32
        %1006 = arith.addi %1005, %c1_i32_694 : i32
        %c0_i32_695 = arith.constant 0 : i32
        %1007 = arith.addi %1006, %c0_i32_695 : i32
        %c4_696 = arith.constant 4 : index
        %1008 = arith.index_cast %1007 : i32 to index
        %c2_697 = arith.constant 2 : index
        %c0_698 = arith.constant 0 : index
        %1009 = vector.load %arg11[%c4_696, %1008, %c2_697, %c0_698] : memref<5x15x15x128xf32, #tpu.memory_space<vmem>>, vector<1x1x13x128xf32>
        %1010 = vector.shape_cast %1009 : vector<1x1x13x128xf32> to vector<13x128xf32>
        %1011 = vector.broadcast %996 : f32 to vector<13x128xf32>
        %1012 = arith.mulf %1010, %1011 : vector<13x128xf32>
        %1013 = arith.addf %988, %1012 : vector<13x128xf32>
        %c5_i32_699 = arith.constant 5 : i32
        %1014 = arith.muli %arg16, %c5_i32_699 : i32
        %c4_i32_700 = arith.constant 4 : i32
        %1015 = arith.addi %1014, %c4_i32_700 : i32
        %c3_i32_701 = arith.constant 3 : i32
        %1016 = arith.muli %1015, %c3_i32_701 : i32
        %c1_i32_702 = arith.constant 1 : i32
        %1017 = arith.addi %1016, %c1_i32_702 : i32
        %c3_i32_703 = arith.constant 3 : i32
        %1018 = arith.muli %1017, %c3_i32_703 : i32
        %c0_i32_704 = arith.constant 0 : i32
        %1019 = arith.addi %1018, %c0_i32_704 : i32
        %1020 = arith.index_cast %1019 : i32 to index
        %1021 = memref.load %arg4[%1020] : memref<315xf32, #tpu.memory_space<smem>>
        %c2_i32_705 = arith.constant 2 : i32
        %1022 = arith.muli %c2_i32_705, %arg15 : i32
        %c1_i32_706 = arith.constant 1 : i32
        %1023 = arith.addi %1022, %c1_i32_706 : i32
        %c4_707 = arith.constant 4 : index
        %1024 = arith.index_cast %1023 : i32 to index
        %c0_708 = arith.constant 0 : index
        %c0_709 = arith.constant 0 : index
        %1025 = vector.load %arg11[%c4_707, %1024, %c0_708, %c0_709] : memref<5x15x15x128xf32, #tpu.memory_space<vmem>>, vector<1x1x13x128xf32>
        %1026 = vector.shape_cast %1025 : vector<1x1x13x128xf32> to vector<13x128xf32>
        %1027 = vector.broadcast %1021 : f32 to vector<13x128xf32>
        %1028 = arith.mulf %1026, %1027 : vector<13x128xf32>
        %1029 = arith.addf %1004, %1028 : vector<13x128xf32>
        %c2_i32_710 = arith.constant 2 : i32
        %1030 = arith.muli %c2_i32_710, %arg15 : i32
        %c1_i32_711 = arith.constant 1 : i32
        %1031 = arith.addi %1030, %c1_i32_711 : i32
        %c1_i32_712 = arith.constant 1 : i32
        %1032 = arith.addi %1031, %c1_i32_712 : i32
        %c4_713 = arith.constant 4 : index
        %1033 = arith.index_cast %1032 : i32 to index
        %c0_714 = arith.constant 0 : index
        %c0_715 = arith.constant 0 : index
        %1034 = vector.load %arg11[%c4_713, %1033, %c0_714, %c0_715] : memref<5x15x15x128xf32, #tpu.memory_space<vmem>>, vector<1x1x13x128xf32>
        %1035 = vector.shape_cast %1034 : vector<1x1x13x128xf32> to vector<13x128xf32>
        %1036 = vector.broadcast %1021 : f32 to vector<13x128xf32>
        %1037 = arith.mulf %1035, %1036 : vector<13x128xf32>
        %1038 = arith.addf %1013, %1037 : vector<13x128xf32>
        %c5_i32_716 = arith.constant 5 : i32
        %1039 = arith.muli %arg16, %c5_i32_716 : i32
        %c4_i32_717 = arith.constant 4 : i32
        %1040 = arith.addi %1039, %c4_i32_717 : i32
        %c3_i32_718 = arith.constant 3 : i32
        %1041 = arith.muli %1040, %c3_i32_718 : i32
        %c1_i32_719 = arith.constant 1 : i32
        %1042 = arith.addi %1041, %c1_i32_719 : i32
        %c3_i32_720 = arith.constant 3 : i32
        %1043 = arith.muli %1042, %c3_i32_720 : i32
        %c1_i32_721 = arith.constant 1 : i32
        %1044 = arith.addi %1043, %c1_i32_721 : i32
        %1045 = arith.index_cast %1044 : i32 to index
        %1046 = memref.load %arg4[%1045] : memref<315xf32, #tpu.memory_space<smem>>
        %c2_i32_722 = arith.constant 2 : i32
        %1047 = arith.muli %c2_i32_722, %arg15 : i32
        %c1_i32_723 = arith.constant 1 : i32
        %1048 = arith.addi %1047, %c1_i32_723 : i32
        %c4_724 = arith.constant 4 : index
        %1049 = arith.index_cast %1048 : i32 to index
        %c1_725 = arith.constant 1 : index
        %c0_726 = arith.constant 0 : index
        %1050 = vector.load %arg11[%c4_724, %1049, %c1_725, %c0_726] : memref<5x15x15x128xf32, #tpu.memory_space<vmem>>, vector<1x1x13x128xf32>
        %1051 = vector.shape_cast %1050 : vector<1x1x13x128xf32> to vector<13x128xf32>
        %1052 = vector.broadcast %1046 : f32 to vector<13x128xf32>
        %1053 = arith.mulf %1051, %1052 : vector<13x128xf32>
        %1054 = arith.addf %1029, %1053 : vector<13x128xf32>
        %c2_i32_727 = arith.constant 2 : i32
        %1055 = arith.muli %c2_i32_727, %arg15 : i32
        %c1_i32_728 = arith.constant 1 : i32
        %1056 = arith.addi %1055, %c1_i32_728 : i32
        %c1_i32_729 = arith.constant 1 : i32
        %1057 = arith.addi %1056, %c1_i32_729 : i32
        %c4_730 = arith.constant 4 : index
        %1058 = arith.index_cast %1057 : i32 to index
        %c1_731 = arith.constant 1 : index
        %c0_732 = arith.constant 0 : index
        %1059 = vector.load %arg11[%c4_730, %1058, %c1_731, %c0_732] : memref<5x15x15x128xf32, #tpu.memory_space<vmem>>, vector<1x1x13x128xf32>
        %1060 = vector.shape_cast %1059 : vector<1x1x13x128xf32> to vector<13x128xf32>
        %1061 = vector.broadcast %1046 : f32 to vector<13x128xf32>
        %1062 = arith.mulf %1060, %1061 : vector<13x128xf32>
        %1063 = arith.addf %1038, %1062 : vector<13x128xf32>
        %c5_i32_733 = arith.constant 5 : i32
        %1064 = arith.muli %arg16, %c5_i32_733 : i32
        %c4_i32_734 = arith.constant 4 : i32
        %1065 = arith.addi %1064, %c4_i32_734 : i32
        %c3_i32_735 = arith.constant 3 : i32
        %1066 = arith.muli %1065, %c3_i32_735 : i32
        %c1_i32_736 = arith.constant 1 : i32
        %1067 = arith.addi %1066, %c1_i32_736 : i32
        %c3_i32_737 = arith.constant 3 : i32
        %1068 = arith.muli %1067, %c3_i32_737 : i32
        %c2_i32_738 = arith.constant 2 : i32
        %1069 = arith.addi %1068, %c2_i32_738 : i32
        %1070 = arith.index_cast %1069 : i32 to index
        %1071 = memref.load %arg4[%1070] : memref<315xf32, #tpu.memory_space<smem>>
        %c2_i32_739 = arith.constant 2 : i32
        %1072 = arith.muli %c2_i32_739, %arg15 : i32
        %c1_i32_740 = arith.constant 1 : i32
        %1073 = arith.addi %1072, %c1_i32_740 : i32
        %c4_741 = arith.constant 4 : index
        %1074 = arith.index_cast %1073 : i32 to index
        %c2_742 = arith.constant 2 : index
        %c0_743 = arith.constant 0 : index
        %1075 = vector.load %arg11[%c4_741, %1074, %c2_742, %c0_743] : memref<5x15x15x128xf32, #tpu.memory_space<vmem>>, vector<1x1x13x128xf32>
        %1076 = vector.shape_cast %1075 : vector<1x1x13x128xf32> to vector<13x128xf32>
        %1077 = vector.broadcast %1071 : f32 to vector<13x128xf32>
        %1078 = arith.mulf %1076, %1077 : vector<13x128xf32>
        %1079 = arith.addf %1054, %1078 : vector<13x128xf32>
        %c2_i32_744 = arith.constant 2 : i32
        %1080 = arith.muli %c2_i32_744, %arg15 : i32
        %c1_i32_745 = arith.constant 1 : i32
        %1081 = arith.addi %1080, %c1_i32_745 : i32
        %c1_i32_746 = arith.constant 1 : i32
        %1082 = arith.addi %1081, %c1_i32_746 : i32
        %c4_747 = arith.constant 4 : index
        %1083 = arith.index_cast %1082 : i32 to index
        %c2_748 = arith.constant 2 : index
        %c0_749 = arith.constant 0 : index
        %1084 = vector.load %arg11[%c4_747, %1083, %c2_748, %c0_749] : memref<5x15x15x128xf32, #tpu.memory_space<vmem>>, vector<1x1x13x128xf32>
        %1085 = vector.shape_cast %1084 : vector<1x1x13x128xf32> to vector<13x128xf32>
        %1086 = vector.broadcast %1071 : f32 to vector<13x128xf32>
        %1087 = arith.mulf %1085, %1086 : vector<13x128xf32>
        %1088 = arith.addf %1063, %1087 : vector<13x128xf32>
        %c5_i32_750 = arith.constant 5 : i32
        %1089 = arith.muli %arg16, %c5_i32_750 : i32
        %c4_i32_751 = arith.constant 4 : i32
        %1090 = arith.addi %1089, %c4_i32_751 : i32
        %c3_i32_752 = arith.constant 3 : i32
        %1091 = arith.muli %1090, %c3_i32_752 : i32
        %c2_i32_753 = arith.constant 2 : i32
        %1092 = arith.addi %1091, %c2_i32_753 : i32
        %c3_i32_754 = arith.constant 3 : i32
        %1093 = arith.muli %1092, %c3_i32_754 : i32
        %c0_i32_755 = arith.constant 0 : i32
        %1094 = arith.addi %1093, %c0_i32_755 : i32
        %1095 = arith.index_cast %1094 : i32 to index
        %1096 = memref.load %arg4[%1095] : memref<315xf32, #tpu.memory_space<smem>>
        %c2_i32_756 = arith.constant 2 : i32
        %1097 = arith.muli %c2_i32_756, %arg15 : i32
        %c2_i32_757 = arith.constant 2 : i32
        %1098 = arith.addi %1097, %c2_i32_757 : i32
        %c4_758 = arith.constant 4 : index
        %1099 = arith.index_cast %1098 : i32 to index
        %c0_759 = arith.constant 0 : index
        %c0_760 = arith.constant 0 : index
        %1100 = vector.load %arg11[%c4_758, %1099, %c0_759, %c0_760] : memref<5x15x15x128xf32, #tpu.memory_space<vmem>>, vector<1x1x13x128xf32>
        %1101 = vector.shape_cast %1100 : vector<1x1x13x128xf32> to vector<13x128xf32>
        %1102 = vector.broadcast %1096 : f32 to vector<13x128xf32>
        %1103 = arith.mulf %1101, %1102 : vector<13x128xf32>
        %1104 = arith.addf %1079, %1103 : vector<13x128xf32>
        %c2_i32_761 = arith.constant 2 : i32
        %1105 = arith.muli %c2_i32_761, %arg15 : i32
        %c1_i32_762 = arith.constant 1 : i32
        %1106 = arith.addi %1105, %c1_i32_762 : i32
        %c2_i32_763 = arith.constant 2 : i32
        %1107 = arith.addi %1106, %c2_i32_763 : i32
        %c4_764 = arith.constant 4 : index
        %1108 = arith.index_cast %1107 : i32 to index
        %c0_765 = arith.constant 0 : index
        %c0_766 = arith.constant 0 : index
        %1109 = vector.load %arg11[%c4_764, %1108, %c0_765, %c0_766] : memref<5x15x15x128xf32, #tpu.memory_space<vmem>>, vector<1x1x13x128xf32>
        %1110 = vector.shape_cast %1109 : vector<1x1x13x128xf32> to vector<13x128xf32>
        %1111 = vector.broadcast %1096 : f32 to vector<13x128xf32>
        %1112 = arith.mulf %1110, %1111 : vector<13x128xf32>
        %1113 = arith.addf %1088, %1112 : vector<13x128xf32>
        %c5_i32_767 = arith.constant 5 : i32
        %1114 = arith.muli %arg16, %c5_i32_767 : i32
        %c4_i32_768 = arith.constant 4 : i32
        %1115 = arith.addi %1114, %c4_i32_768 : i32
        %c3_i32_769 = arith.constant 3 : i32
        %1116 = arith.muli %1115, %c3_i32_769 : i32
        %c2_i32_770 = arith.constant 2 : i32
        %1117 = arith.addi %1116, %c2_i32_770 : i32
        %c3_i32_771 = arith.constant 3 : i32
        %1118 = arith.muli %1117, %c3_i32_771 : i32
        %c1_i32_772 = arith.constant 1 : i32
        %1119 = arith.addi %1118, %c1_i32_772 : i32
        %1120 = arith.index_cast %1119 : i32 to index
        %1121 = memref.load %arg4[%1120] : memref<315xf32, #tpu.memory_space<smem>>
        %c2_i32_773 = arith.constant 2 : i32
        %1122 = arith.muli %c2_i32_773, %arg15 : i32
        %c2_i32_774 = arith.constant 2 : i32
        %1123 = arith.addi %1122, %c2_i32_774 : i32
        %c4_775 = arith.constant 4 : index
        %1124 = arith.index_cast %1123 : i32 to index
        %c1_776 = arith.constant 1 : index
        %c0_777 = arith.constant 0 : index
        %1125 = vector.load %arg11[%c4_775, %1124, %c1_776, %c0_777] : memref<5x15x15x128xf32, #tpu.memory_space<vmem>>, vector<1x1x13x128xf32>
        %1126 = vector.shape_cast %1125 : vector<1x1x13x128xf32> to vector<13x128xf32>
        %1127 = vector.broadcast %1121 : f32 to vector<13x128xf32>
        %1128 = arith.mulf %1126, %1127 : vector<13x128xf32>
        %1129 = arith.addf %1104, %1128 : vector<13x128xf32>
        %c2_i32_778 = arith.constant 2 : i32
        %1130 = arith.muli %c2_i32_778, %arg15 : i32
        %c1_i32_779 = arith.constant 1 : i32
        %1131 = arith.addi %1130, %c1_i32_779 : i32
        %c2_i32_780 = arith.constant 2 : i32
        %1132 = arith.addi %1131, %c2_i32_780 : i32
        %c4_781 = arith.constant 4 : index
        %1133 = arith.index_cast %1132 : i32 to index
        %c1_782 = arith.constant 1 : index
        %c0_783 = arith.constant 0 : index
        %1134 = vector.load %arg11[%c4_781, %1133, %c1_782, %c0_783] : memref<5x15x15x128xf32, #tpu.memory_space<vmem>>, vector<1x1x13x128xf32>
        %1135 = vector.shape_cast %1134 : vector<1x1x13x128xf32> to vector<13x128xf32>
        %1136 = vector.broadcast %1121 : f32 to vector<13x128xf32>
        %1137 = arith.mulf %1135, %1136 : vector<13x128xf32>
        %1138 = arith.addf %1113, %1137 : vector<13x128xf32>
        %c5_i32_784 = arith.constant 5 : i32
        %1139 = arith.muli %arg16, %c5_i32_784 : i32
        %c4_i32_785 = arith.constant 4 : i32
        %1140 = arith.addi %1139, %c4_i32_785 : i32
        %c3_i32_786 = arith.constant 3 : i32
        %1141 = arith.muli %1140, %c3_i32_786 : i32
        %c2_i32_787 = arith.constant 2 : i32
        %1142 = arith.addi %1141, %c2_i32_787 : i32
        %c3_i32_788 = arith.constant 3 : i32
        %1143 = arith.muli %1142, %c3_i32_788 : i32
        %c2_i32_789 = arith.constant 2 : i32
        %1144 = arith.addi %1143, %c2_i32_789 : i32
        %1145 = arith.index_cast %1144 : i32 to index
        %1146 = memref.load %arg4[%1145] : memref<315xf32, #tpu.memory_space<smem>>
        %c2_i32_790 = arith.constant 2 : i32
        %1147 = arith.muli %c2_i32_790, %arg15 : i32
        %c2_i32_791 = arith.constant 2 : i32
        %1148 = arith.addi %1147, %c2_i32_791 : i32
        %c4_792 = arith.constant 4 : index
        %1149 = arith.index_cast %1148 : i32 to index
        %c2_793 = arith.constant 2 : index
        %c0_794 = arith.constant 0 : index
        %1150 = vector.load %arg11[%c4_792, %1149, %c2_793, %c0_794] : memref<5x15x15x128xf32, #tpu.memory_space<vmem>>, vector<1x1x13x128xf32>
        %1151 = vector.shape_cast %1150 : vector<1x1x13x128xf32> to vector<13x128xf32>
        %1152 = vector.broadcast %1146 : f32 to vector<13x128xf32>
        %1153 = arith.mulf %1151, %1152 : vector<13x128xf32>
        %1154 = arith.addf %1129, %1153 : vector<13x128xf32>
        %c2_i32_795 = arith.constant 2 : i32
        %1155 = arith.muli %c2_i32_795, %arg15 : i32
        %c1_i32_796 = arith.constant 1 : i32
        %1156 = arith.addi %1155, %c1_i32_796 : i32
        %c2_i32_797 = arith.constant 2 : i32
        %1157 = arith.addi %1156, %c2_i32_797 : i32
        %c4_798 = arith.constant 4 : index
        %1158 = arith.index_cast %1157 : i32 to index
        %c2_799 = arith.constant 2 : index
        %c0_800 = arith.constant 0 : index
        %1159 = vector.load %arg11[%c4_798, %1158, %c2_799, %c0_800] : memref<5x15x15x128xf32, #tpu.memory_space<vmem>>, vector<1x1x13x128xf32>
        %1160 = vector.shape_cast %1159 : vector<1x1x13x128xf32> to vector<13x128xf32>
        %1161 = vector.broadcast %1146 : f32 to vector<13x128xf32>
        %1162 = arith.mulf %1160, %1161 : vector<13x128xf32>
        %1163 = arith.addf %1138, %1162 : vector<13x128xf32>
        %1164 = arith.maximumf %1154, %1163 : vector<13x128xf32>
        %cst_801 = arith.constant 0.000000e+00 : f32
        %1165 = vector.broadcast %cst_801 : f32 to vector<13x128xf32>
        %1166 = arith.maximumf %1164, %1165 : vector<13x128xf32>
        %c0_802 = arith.constant 0 : index
        %c0_803 = arith.constant 0 : index
        %1167 = vector.load %arg14[%c0_802, %c0_803] : memref<30x128xf32, #tpu.memory_space<vmem>>, vector<13x128xf32>
        tpu.vector_store %arg14[%c0_802, %c0_803], %1166 {strides = array<i32>} : memref<30x128xf32, #tpu.memory_space<vmem>>, vector<13x128xf32>,
        %c0_804 = arith.constant 0 : index
        %c0_805 = arith.constant 0 : index
        %1168 = tpu.strided_load %arg14[%c0_804, %c0_805] {strides = array<i32: 2, 1>} : memref<30x128xf32, #tpu.memory_space<vmem>>, vector<6x128xf32>
        %c1_806 = arith.constant 1 : index
        %c0_807 = arith.constant 0 : index
        %1169 = tpu.strided_load %arg14[%c1_806, %c0_807] {strides = array<i32: 2, 1>} : memref<30x128xf32, #tpu.memory_space<vmem>>, vector<6x128xf32>
        %1170 = arith.maximumf %1168, %1169 : vector<6x128xf32>
        %1171 = arith.index_cast %arg16 : i32 to index
        %1172 = arith.index_cast %arg15 : i32 to index
        %c0_808 = arith.constant 0 : index
        %c0_809 = arith.constant 0 : index
        %1173 = vector.load %arg12[%1171, %1172, %c0_808, %c0_809] : memref<7x6x6x128xf32, #tpu.memory_space<vmem>>, vector<1x1x6x128xf32>
        %1174 = vector.shape_cast %1173 : vector<1x1x6x128xf32> to vector<6x128xf32>
        %1175 = vector.shape_cast %1170 : vector<6x128xf32> to vector<1x1x6x128xf32>
        tpu.vector_store %arg12[%1171, %1172, %c0_808, %c0_809], %1175 {strides = array<i32>} : memref<7x6x6x128xf32, #tpu.memory_space<vmem>>, vector<1x1x6x128xf32>,
      }
      %c7_i32_39 = arith.constant 7 : i32
    }
    %c6_i32_3 = arith.constant 6 : i32
    %c0_i32_4 = arith.constant 0 : i32
    %c12_i32 = arith.constant 12 : i32
    %2 = arith.addi %c0_i32_4, %c12_i32 : i32
    %c1_i32_5 = arith.constant 1 : i32
    scf.for %arg15 = %c0_i32_4 to %2 step %c1_i32_5  : i32 {
      %34 = arith.index_cast %arg15 : i32 to index
      %35 = memref.load %arg7[%34] : memref<12xf32, #tpu.memory_space<smem>>
      %36 = vector.broadcast %35 : f32 to vector<4x4x128xf32>
      %c7_i32 = arith.constant 7 : i32
      %37 = arith.muli %arg15, %c7_i32 : i32
      %c0_i32_37 = arith.constant 0 : i32
      %38 = arith.addi %37, %c0_i32_37 : i32
      %c3_i32 = arith.constant 3 : i32
      %39 = arith.muli %38, %c3_i32 : i32
      %c0_i32_38 = arith.constant 0 : i32
      %40 = arith.addi %39, %c0_i32_38 : i32
      %c3_i32_39 = arith.constant 3 : i32
      %41 = arith.muli %40, %c3_i32_39 : i32
      %c0_i32_40 = arith.constant 0 : i32
      %42 = arith.addi %41, %c0_i32_40 : i32
      %43 = arith.index_cast %42 : i32 to index
      %44 = memref.load %arg6[%43] : memref<756xf32, #tpu.memory_space<smem>>
      %c0_41 = arith.constant 0 : index
      %c0_42 = arith.constant 0 : index
      %c0_43 = arith.constant 0 : index
      %c0_44 = arith.constant 0 : index
      %45 = vector.load %arg12[%c0_41, %c0_42, %c0_43, %c0_44] : memref<7x6x6x128xf32, #tpu.memory_space<vmem>>, vector<1x4x4x128xf32>
      %46 = vector.shape_cast %45 : vector<1x4x4x128xf32> to vector<4x4x128xf32>
      %47 = vector.broadcast %44 : f32 to vector<4x4x128xf32>
      %48 = arith.mulf %46, %47 : vector<4x4x128xf32>
      %49 = arith.addf %36, %48 : vector<4x4x128xf32>
      %c7_i32_45 = arith.constant 7 : i32
      %50 = arith.muli %arg15, %c7_i32_45 : i32
      %c0_i32_46 = arith.constant 0 : i32
      %51 = arith.addi %50, %c0_i32_46 : i32
      %c3_i32_47 = arith.constant 3 : i32
      %52 = arith.muli %51, %c3_i32_47 : i32
      %c0_i32_48 = arith.constant 0 : i32
      %53 = arith.addi %52, %c0_i32_48 : i32
      %c3_i32_49 = arith.constant 3 : i32
      %54 = arith.muli %53, %c3_i32_49 : i32
      %c1_i32_50 = arith.constant 1 : i32
      %55 = arith.addi %54, %c1_i32_50 : i32
      %56 = arith.index_cast %55 : i32 to index
      %57 = memref.load %arg6[%56] : memref<756xf32, #tpu.memory_space<smem>>
      %c0_51 = arith.constant 0 : index
      %c0_52 = arith.constant 0 : index
      %c1_53 = arith.constant 1 : index
      %c0_54 = arith.constant 0 : index
      %58 = vector.load %arg12[%c0_51, %c0_52, %c1_53, %c0_54] : memref<7x6x6x128xf32, #tpu.memory_space<vmem>>, vector<1x4x4x128xf32>
      %59 = vector.shape_cast %58 : vector<1x4x4x128xf32> to vector<4x4x128xf32>
      %60 = vector.broadcast %57 : f32 to vector<4x4x128xf32>
      %61 = arith.mulf %59, %60 : vector<4x4x128xf32>
      %62 = arith.addf %49, %61 : vector<4x4x128xf32>
      %c7_i32_55 = arith.constant 7 : i32
      %63 = arith.muli %arg15, %c7_i32_55 : i32
      %c0_i32_56 = arith.constant 0 : i32
      %64 = arith.addi %63, %c0_i32_56 : i32
      %c3_i32_57 = arith.constant 3 : i32
      %65 = arith.muli %64, %c3_i32_57 : i32
      %c0_i32_58 = arith.constant 0 : i32
      %66 = arith.addi %65, %c0_i32_58 : i32
      %c3_i32_59 = arith.constant 3 : i32
      %67 = arith.muli %66, %c3_i32_59 : i32
      %c2_i32 = arith.constant 2 : i32
      %68 = arith.addi %67, %c2_i32 : i32
      %69 = arith.index_cast %68 : i32 to index
      %70 = memref.load %arg6[%69] : memref<756xf32, #tpu.memory_space<smem>>
      %c0_60 = arith.constant 0 : index
      %c0_61 = arith.constant 0 : index
      %c2_62 = arith.constant 2 : index
      %c0_63 = arith.constant 0 : index
      %71 = vector.load %arg12[%c0_60, %c0_61, %c2_62, %c0_63] : memref<7x6x6x128xf32, #tpu.memory_space<vmem>>, vector<1x4x4x128xf32>
      %72 = vector.shape_cast %71 : vector<1x4x4x128xf32> to vector<4x4x128xf32>
      %73 = vector.broadcast %70 : f32 to vector<4x4x128xf32>
      %74 = arith.mulf %72, %73 : vector<4x4x128xf32>
      %75 = arith.addf %62, %74 : vector<4x4x128xf32>
      %c7_i32_64 = arith.constant 7 : i32
      %76 = arith.muli %arg15, %c7_i32_64 : i32
      %c0_i32_65 = arith.constant 0 : i32
      %77 = arith.addi %76, %c0_i32_65 : i32
      %c3_i32_66 = arith.constant 3 : i32
      %78 = arith.muli %77, %c3_i32_66 : i32
      %c1_i32_67 = arith.constant 1 : i32
      %79 = arith.addi %78, %c1_i32_67 : i32
      %c3_i32_68 = arith.constant 3 : i32
      %80 = arith.muli %79, %c3_i32_68 : i32
      %c0_i32_69 = arith.constant 0 : i32
      %81 = arith.addi %80, %c0_i32_69 : i32
      %82 = arith.index_cast %81 : i32 to index
      %83 = memref.load %arg6[%82] : memref<756xf32, #tpu.memory_space<smem>>
      %c0_70 = arith.constant 0 : index
      %c1_71 = arith.constant 1 : index
      %c0_72 = arith.constant 0 : index
      %c0_73 = arith.constant 0 : index
      %84 = vector.load %arg12[%c0_70, %c1_71, %c0_72, %c0_73] : memref<7x6x6x128xf32, #tpu.memory_space<vmem>>, vector<1x4x4x128xf32>
      %85 = vector.shape_cast %84 : vector<1x4x4x128xf32> to vector<4x4x128xf32>
      %86 = vector.broadcast %83 : f32 to vector<4x4x128xf32>
      %87 = arith.mulf %85, %86 : vector<4x4x128xf32>
      %88 = arith.addf %75, %87 : vector<4x4x128xf32>
      %c7_i32_74 = arith.constant 7 : i32
      %89 = arith.muli %arg15, %c7_i32_74 : i32
      %c0_i32_75 = arith.constant 0 : i32
      %90 = arith.addi %89, %c0_i32_75 : i32
      %c3_i32_76 = arith.constant 3 : i32
      %91 = arith.muli %90, %c3_i32_76 : i32
      %c1_i32_77 = arith.constant 1 : i32
      %92 = arith.addi %91, %c1_i32_77 : i32
      %c3_i32_78 = arith.constant 3 : i32
      %93 = arith.muli %92, %c3_i32_78 : i32
      %c1_i32_79 = arith.constant 1 : i32
      %94 = arith.addi %93, %c1_i32_79 : i32
      %95 = arith.index_cast %94 : i32 to index
      %96 = memref.load %arg6[%95] : memref<756xf32, #tpu.memory_space<smem>>
      %c0_80 = arith.constant 0 : index
      %c1_81 = arith.constant 1 : index
      %c1_82 = arith.constant 1 : index
      %c0_83 = arith.constant 0 : index
      %97 = vector.load %arg12[%c0_80, %c1_81, %c1_82, %c0_83] : memref<7x6x6x128xf32, #tpu.memory_space<vmem>>, vector<1x4x4x128xf32>
      %98 = vector.shape_cast %97 : vector<1x4x4x128xf32> to vector<4x4x128xf32>
      %99 = vector.broadcast %96 : f32 to vector<4x4x128xf32>
      %100 = arith.mulf %98, %99 : vector<4x4x128xf32>
      %101 = arith.addf %88, %100 : vector<4x4x128xf32>
      %c7_i32_84 = arith.constant 7 : i32
      %102 = arith.muli %arg15, %c7_i32_84 : i32
      %c0_i32_85 = arith.constant 0 : i32
      %103 = arith.addi %102, %c0_i32_85 : i32
      %c3_i32_86 = arith.constant 3 : i32
      %104 = arith.muli %103, %c3_i32_86 : i32
      %c1_i32_87 = arith.constant 1 : i32
      %105 = arith.addi %104, %c1_i32_87 : i32
      %c3_i32_88 = arith.constant 3 : i32
      %106 = arith.muli %105, %c3_i32_88 : i32
      %c2_i32_89 = arith.constant 2 : i32
      %107 = arith.addi %106, %c2_i32_89 : i32
      %108 = arith.index_cast %107 : i32 to index
      %109 = memref.load %arg6[%108] : memref<756xf32, #tpu.memory_space<smem>>
      %c0_90 = arith.constant 0 : index
      %c1_91 = arith.constant 1 : index
      %c2_92 = arith.constant 2 : index
      %c0_93 = arith.constant 0 : index
      %110 = vector.load %arg12[%c0_90, %c1_91, %c2_92, %c0_93] : memref<7x6x6x128xf32, #tpu.memory_space<vmem>>, vector<1x4x4x128xf32>
      %111 = vector.shape_cast %110 : vector<1x4x4x128xf32> to vector<4x4x128xf32>
      %112 = vector.broadcast %109 : f32 to vector<4x4x128xf32>
      %113 = arith.mulf %111, %112 : vector<4x4x128xf32>
      %114 = arith.addf %101, %113 : vector<4x4x128xf32>
      %c7_i32_94 = arith.constant 7 : i32
      %115 = arith.muli %arg15, %c7_i32_94 : i32
      %c0_i32_95 = arith.constant 0 : i32
      %116 = arith.addi %115, %c0_i32_95 : i32
      %c3_i32_96 = arith.constant 3 : i32
      %117 = arith.muli %116, %c3_i32_96 : i32
      %c2_i32_97 = arith.constant 2 : i32
      %118 = arith.addi %117, %c2_i32_97 : i32
      %c3_i32_98 = arith.constant 3 : i32
      %119 = arith.muli %118, %c3_i32_98 : i32
      %c0_i32_99 = arith.constant 0 : i32
      %120 = arith.addi %119, %c0_i32_99 : i32
      %121 = arith.index_cast %120 : i32 to index
      %122 = memref.load %arg6[%121] : memref<756xf32, #tpu.memory_space<smem>>
      %c0_100 = arith.constant 0 : index
      %c2_101 = arith.constant 2 : index
      %c0_102 = arith.constant 0 : index
      %c0_103 = arith.constant 0 : index
      %123 = vector.load %arg12[%c0_100, %c2_101, %c0_102, %c0_103] : memref<7x6x6x128xf32, #tpu.memory_space<vmem>>, vector<1x4x4x128xf32>
      %124 = vector.shape_cast %123 : vector<1x4x4x128xf32> to vector<4x4x128xf32>
      %125 = vector.broadcast %122 : f32 to vector<4x4x128xf32>
      %126 = arith.mulf %124, %125 : vector<4x4x128xf32>
      %127 = arith.addf %114, %126 : vector<4x4x128xf32>
      %c7_i32_104 = arith.constant 7 : i32
      %128 = arith.muli %arg15, %c7_i32_104 : i32
      %c0_i32_105 = arith.constant 0 : i32
      %129 = arith.addi %128, %c0_i32_105 : i32
      %c3_i32_106 = arith.constant 3 : i32
      %130 = arith.muli %129, %c3_i32_106 : i32
      %c2_i32_107 = arith.constant 2 : i32
      %131 = arith.addi %130, %c2_i32_107 : i32
      %c3_i32_108 = arith.constant 3 : i32
      %132 = arith.muli %131, %c3_i32_108 : i32
      %c1_i32_109 = arith.constant 1 : i32
      %133 = arith.addi %132, %c1_i32_109 : i32
      %134 = arith.index_cast %133 : i32 to index
      %135 = memref.load %arg6[%134] : memref<756xf32, #tpu.memory_space<smem>>
      %c0_110 = arith.constant 0 : index
      %c2_111 = arith.constant 2 : index
      %c1_112 = arith.constant 1 : index
      %c0_113 = arith.constant 0 : index
      %136 = vector.load %arg12[%c0_110, %c2_111, %c1_112, %c0_113] : memref<7x6x6x128xf32, #tpu.memory_space<vmem>>, vector<1x4x4x128xf32>
      %137 = vector.shape_cast %136 : vector<1x4x4x128xf32> to vector<4x4x128xf32>
      %138 = vector.broadcast %135 : f32 to vector<4x4x128xf32>
      %139 = arith.mulf %137, %138 : vector<4x4x128xf32>
      %140 = arith.addf %127, %139 : vector<4x4x128xf32>
      %c7_i32_114 = arith.constant 7 : i32
      %141 = arith.muli %arg15, %c7_i32_114 : i32
      %c0_i32_115 = arith.constant 0 : i32
      %142 = arith.addi %141, %c0_i32_115 : i32
      %c3_i32_116 = arith.constant 3 : i32
      %143 = arith.muli %142, %c3_i32_116 : i32
      %c2_i32_117 = arith.constant 2 : i32
      %144 = arith.addi %143, %c2_i32_117 : i32
      %c3_i32_118 = arith.constant 3 : i32
      %145 = arith.muli %144, %c3_i32_118 : i32
      %c2_i32_119 = arith.constant 2 : i32
      %146 = arith.addi %145, %c2_i32_119 : i32
      %147 = arith.index_cast %146 : i32 to index
      %148 = memref.load %arg6[%147] : memref<756xf32, #tpu.memory_space<smem>>
      %c0_120 = arith.constant 0 : index
      %c2_121 = arith.constant 2 : index
      %c2_122 = arith.constant 2 : index
      %c0_123 = arith.constant 0 : index
      %149 = vector.load %arg12[%c0_120, %c2_121, %c2_122, %c0_123] : memref<7x6x6x128xf32, #tpu.memory_space<vmem>>, vector<1x4x4x128xf32>
      %150 = vector.shape_cast %149 : vector<1x4x4x128xf32> to vector<4x4x128xf32>
      %151 = vector.broadcast %148 : f32 to vector<4x4x128xf32>
      %152 = arith.mulf %150, %151 : vector<4x4x128xf32>
      %153 = arith.addf %140, %152 : vector<4x4x128xf32>
      %c7_i32_124 = arith.constant 7 : i32
      %154 = arith.muli %arg15, %c7_i32_124 : i32
      %c1_i32_125 = arith.constant 1 : i32
      %155 = arith.addi %154, %c1_i32_125 : i32
      %c3_i32_126 = arith.constant 3 : i32
      %156 = arith.muli %155, %c3_i32_126 : i32
      %c0_i32_127 = arith.constant 0 : i32
      %157 = arith.addi %156, %c0_i32_127 : i32
      %c3_i32_128 = arith.constant 3 : i32
      %158 = arith.muli %157, %c3_i32_128 : i32
      %c0_i32_129 = arith.constant 0 : i32
      %159 = arith.addi %158, %c0_i32_129 : i32
      %160 = arith.index_cast %159 : i32 to index
      %161 = memref.load %arg6[%160] : memref<756xf32, #tpu.memory_space<smem>>
      %c1_130 = arith.constant 1 : index
      %c0_131 = arith.constant 0 : index
      %c0_132 = arith.constant 0 : index
      %c0_133 = arith.constant 0 : index
      %162 = vector.load %arg12[%c1_130, %c0_131, %c0_132, %c0_133] : memref<7x6x6x128xf32, #tpu.memory_space<vmem>>, vector<1x4x4x128xf32>
      %163 = vector.shape_cast %162 : vector<1x4x4x128xf32> to vector<4x4x128xf32>
      %164 = vector.broadcast %161 : f32 to vector<4x4x128xf32>
      %165 = arith.mulf %163, %164 : vector<4x4x128xf32>
      %166 = arith.addf %153, %165 : vector<4x4x128xf32>
      %c7_i32_134 = arith.constant 7 : i32
      %167 = arith.muli %arg15, %c7_i32_134 : i32
      %c1_i32_135 = arith.constant 1 : i32
      %168 = arith.addi %167, %c1_i32_135 : i32
      %c3_i32_136 = arith.constant 3 : i32
      %169 = arith.muli %168, %c3_i32_136 : i32
      %c0_i32_137 = arith.constant 0 : i32
      %170 = arith.addi %169, %c0_i32_137 : i32
      %c3_i32_138 = arith.constant 3 : i32
      %171 = arith.muli %170, %c3_i32_138 : i32
      %c1_i32_139 = arith.constant 1 : i32
      %172 = arith.addi %171, %c1_i32_139 : i32
      %173 = arith.index_cast %172 : i32 to index
      %174 = memref.load %arg6[%173] : memref<756xf32, #tpu.memory_space<smem>>
      %c1_140 = arith.constant 1 : index
      %c0_141 = arith.constant 0 : index
      %c1_142 = arith.constant 1 : index
      %c0_143 = arith.constant 0 : index
      %175 = vector.load %arg12[%c1_140, %c0_141, %c1_142, %c0_143] : memref<7x6x6x128xf32, #tpu.memory_space<vmem>>, vector<1x4x4x128xf32>
      %176 = vector.shape_cast %175 : vector<1x4x4x128xf32> to vector<4x4x128xf32>
      %177 = vector.broadcast %174 : f32 to vector<4x4x128xf32>
      %178 = arith.mulf %176, %177 : vector<4x4x128xf32>
      %179 = arith.addf %166, %178 : vector<4x4x128xf32>
      %c7_i32_144 = arith.constant 7 : i32
      %180 = arith.muli %arg15, %c7_i32_144 : i32
      %c1_i32_145 = arith.constant 1 : i32
      %181 = arith.addi %180, %c1_i32_145 : i32
      %c3_i32_146 = arith.constant 3 : i32
      %182 = arith.muli %181, %c3_i32_146 : i32
      %c0_i32_147 = arith.constant 0 : i32
      %183 = arith.addi %182, %c0_i32_147 : i32
      %c3_i32_148 = arith.constant 3 : i32
      %184 = arith.muli %183, %c3_i32_148 : i32
      %c2_i32_149 = arith.constant 2 : i32
      %185 = arith.addi %184, %c2_i32_149 : i32
      %186 = arith.index_cast %185 : i32 to index
      %187 = memref.load %arg6[%186] : memref<756xf32, #tpu.memory_space<smem>>
      %c1_150 = arith.constant 1 : index
      %c0_151 = arith.constant 0 : index
      %c2_152 = arith.constant 2 : index
      %c0_153 = arith.constant 0 : index
      %188 = vector.load %arg12[%c1_150, %c0_151, %c2_152, %c0_153] : memref<7x6x6x128xf32, #tpu.memory_space<vmem>>, vector<1x4x4x128xf32>
      %189 = vector.shape_cast %188 : vector<1x4x4x128xf32> to vector<4x4x128xf32>
      %190 = vector.broadcast %187 : f32 to vector<4x4x128xf32>
      %191 = arith.mulf %189, %190 : vector<4x4x128xf32>
      %192 = arith.addf %179, %191 : vector<4x4x128xf32>
      %c7_i32_154 = arith.constant 7 : i32
      %193 = arith.muli %arg15, %c7_i32_154 : i32
      %c1_i32_155 = arith.constant 1 : i32
      %194 = arith.addi %193, %c1_i32_155 : i32
      %c3_i32_156 = arith.constant 3 : i32
      %195 = arith.muli %194, %c3_i32_156 : i32
      %c1_i32_157 = arith.constant 1 : i32
      %196 = arith.addi %195, %c1_i32_157 : i32
      %c3_i32_158 = arith.constant 3 : i32
      %197 = arith.muli %196, %c3_i32_158 : i32
      %c0_i32_159 = arith.constant 0 : i32
      %198 = arith.addi %197, %c0_i32_159 : i32
      %199 = arith.index_cast %198 : i32 to index
      %200 = memref.load %arg6[%199] : memref<756xf32, #tpu.memory_space<smem>>
      %c1_160 = arith.constant 1 : index
      %c1_161 = arith.constant 1 : index
      %c0_162 = arith.constant 0 : index
      %c0_163 = arith.constant 0 : index
      %201 = vector.load %arg12[%c1_160, %c1_161, %c0_162, %c0_163] : memref<7x6x6x128xf32, #tpu.memory_space<vmem>>, vector<1x4x4x128xf32>
      %202 = vector.shape_cast %201 : vector<1x4x4x128xf32> to vector<4x4x128xf32>
      %203 = vector.broadcast %200 : f32 to vector<4x4x128xf32>
      %204 = arith.mulf %202, %203 : vector<4x4x128xf32>
      %205 = arith.addf %192, %204 : vector<4x4x128xf32>
      %c7_i32_164 = arith.constant 7 : i32
      %206 = arith.muli %arg15, %c7_i32_164 : i32
      %c1_i32_165 = arith.constant 1 : i32
      %207 = arith.addi %206, %c1_i32_165 : i32
      %c3_i32_166 = arith.constant 3 : i32
      %208 = arith.muli %207, %c3_i32_166 : i32
      %c1_i32_167 = arith.constant 1 : i32
      %209 = arith.addi %208, %c1_i32_167 : i32
      %c3_i32_168 = arith.constant 3 : i32
      %210 = arith.muli %209, %c3_i32_168 : i32
      %c1_i32_169 = arith.constant 1 : i32
      %211 = arith.addi %210, %c1_i32_169 : i32
      %212 = arith.index_cast %211 : i32 to index
      %213 = memref.load %arg6[%212] : memref<756xf32, #tpu.memory_space<smem>>
      %c1_170 = arith.constant 1 : index
      %c1_171 = arith.constant 1 : index
      %c1_172 = arith.constant 1 : index
      %c0_173 = arith.constant 0 : index
      %214 = vector.load %arg12[%c1_170, %c1_171, %c1_172, %c0_173] : memref<7x6x6x128xf32, #tpu.memory_space<vmem>>, vector<1x4x4x128xf32>
      %215 = vector.shape_cast %214 : vector<1x4x4x128xf32> to vector<4x4x128xf32>
      %216 = vector.broadcast %213 : f32 to vector<4x4x128xf32>
      %217 = arith.mulf %215, %216 : vector<4x4x128xf32>
      %218 = arith.addf %205, %217 : vector<4x4x128xf32>
      %c7_i32_174 = arith.constant 7 : i32
      %219 = arith.muli %arg15, %c7_i32_174 : i32
      %c1_i32_175 = arith.constant 1 : i32
      %220 = arith.addi %219, %c1_i32_175 : i32
      %c3_i32_176 = arith.constant 3 : i32
      %221 = arith.muli %220, %c3_i32_176 : i32
      %c1_i32_177 = arith.constant 1 : i32
      %222 = arith.addi %221, %c1_i32_177 : i32
      %c3_i32_178 = arith.constant 3 : i32
      %223 = arith.muli %222, %c3_i32_178 : i32
      %c2_i32_179 = arith.constant 2 : i32
      %224 = arith.addi %223, %c2_i32_179 : i32
      %225 = arith.index_cast %224 : i32 to index
      %226 = memref.load %arg6[%225] : memref<756xf32, #tpu.memory_space<smem>>
      %c1_180 = arith.constant 1 : index
      %c1_181 = arith.constant 1 : index
      %c2_182 = arith.constant 2 : index
      %c0_183 = arith.constant 0 : index
      %227 = vector.load %arg12[%c1_180, %c1_181, %c2_182, %c0_183] : memref<7x6x6x128xf32, #tpu.memory_space<vmem>>, vector<1x4x4x128xf32>
      %228 = vector.shape_cast %227 : vector<1x4x4x128xf32> to vector<4x4x128xf32>
      %229 = vector.broadcast %226 : f32 to vector<4x4x128xf32>
      %230 = arith.mulf %228, %229 : vector<4x4x128xf32>
      %231 = arith.addf %218, %230 : vector<4x4x128xf32>
      %c7_i32_184 = arith.constant 7 : i32
      %232 = arith.muli %arg15, %c7_i32_184 : i32
      %c1_i32_185 = arith.constant 1 : i32
      %233 = arith.addi %232, %c1_i32_185 : i32
      %c3_i32_186 = arith.constant 3 : i32
      %234 = arith.muli %233, %c3_i32_186 : i32
      %c2_i32_187 = arith.constant 2 : i32
      %235 = arith.addi %234, %c2_i32_187 : i32
      %c3_i32_188 = arith.constant 3 : i32
      %236 = arith.muli %235, %c3_i32_188 : i32
      %c0_i32_189 = arith.constant 0 : i32
      %237 = arith.addi %236, %c0_i32_189 : i32
      %238 = arith.index_cast %237 : i32 to index
      %239 = memref.load %arg6[%238] : memref<756xf32, #tpu.memory_space<smem>>
      %c1_190 = arith.constant 1 : index
      %c2_191 = arith.constant 2 : index
      %c0_192 = arith.constant 0 : index
      %c0_193 = arith.constant 0 : index
      %240 = vector.load %arg12[%c1_190, %c2_191, %c0_192, %c0_193] : memref<7x6x6x128xf32, #tpu.memory_space<vmem>>, vector<1x4x4x128xf32>
      %241 = vector.shape_cast %240 : vector<1x4x4x128xf32> to vector<4x4x128xf32>
      %242 = vector.broadcast %239 : f32 to vector<4x4x128xf32>
      %243 = arith.mulf %241, %242 : vector<4x4x128xf32>
      %244 = arith.addf %231, %243 : vector<4x4x128xf32>
      %c7_i32_194 = arith.constant 7 : i32
      %245 = arith.muli %arg15, %c7_i32_194 : i32
      %c1_i32_195 = arith.constant 1 : i32
      %246 = arith.addi %245, %c1_i32_195 : i32
      %c3_i32_196 = arith.constant 3 : i32
      %247 = arith.muli %246, %c3_i32_196 : i32
      %c2_i32_197 = arith.constant 2 : i32
      %248 = arith.addi %247, %c2_i32_197 : i32
      %c3_i32_198 = arith.constant 3 : i32
      %249 = arith.muli %248, %c3_i32_198 : i32
      %c1_i32_199 = arith.constant 1 : i32
      %250 = arith.addi %249, %c1_i32_199 : i32
      %251 = arith.index_cast %250 : i32 to index
      %252 = memref.load %arg6[%251] : memref<756xf32, #tpu.memory_space<smem>>
      %c1_200 = arith.constant 1 : index
      %c2_201 = arith.constant 2 : index
      %c1_202 = arith.constant 1 : index
      %c0_203 = arith.constant 0 : index
      %253 = vector.load %arg12[%c1_200, %c2_201, %c1_202, %c0_203] : memref<7x6x6x128xf32, #tpu.memory_space<vmem>>, vector<1x4x4x128xf32>
      %254 = vector.shape_cast %253 : vector<1x4x4x128xf32> to vector<4x4x128xf32>
      %255 = vector.broadcast %252 : f32 to vector<4x4x128xf32>
      %256 = arith.mulf %254, %255 : vector<4x4x128xf32>
      %257 = arith.addf %244, %256 : vector<4x4x128xf32>
      %c7_i32_204 = arith.constant 7 : i32
      %258 = arith.muli %arg15, %c7_i32_204 : i32
      %c1_i32_205 = arith.constant 1 : i32
      %259 = arith.addi %258, %c1_i32_205 : i32
      %c3_i32_206 = arith.constant 3 : i32
      %260 = arith.muli %259, %c3_i32_206 : i32
      %c2_i32_207 = arith.constant 2 : i32
      %261 = arith.addi %260, %c2_i32_207 : i32
      %c3_i32_208 = arith.constant 3 : i32
      %262 = arith.muli %261, %c3_i32_208 : i32
      %c2_i32_209 = arith.constant 2 : i32
      %263 = arith.addi %262, %c2_i32_209 : i32
      %264 = arith.index_cast %263 : i32 to index
      %265 = memref.load %arg6[%264] : memref<756xf32, #tpu.memory_space<smem>>
      %c1_210 = arith.constant 1 : index
      %c2_211 = arith.constant 2 : index
      %c2_212 = arith.constant 2 : index
      %c0_213 = arith.constant 0 : index
      %266 = vector.load %arg12[%c1_210, %c2_211, %c2_212, %c0_213] : memref<7x6x6x128xf32, #tpu.memory_space<vmem>>, vector<1x4x4x128xf32>
      %267 = vector.shape_cast %266 : vector<1x4x4x128xf32> to vector<4x4x128xf32>
      %268 = vector.broadcast %265 : f32 to vector<4x4x128xf32>
      %269 = arith.mulf %267, %268 : vector<4x4x128xf32>
      %270 = arith.addf %257, %269 : vector<4x4x128xf32>
      %c7_i32_214 = arith.constant 7 : i32
      %271 = arith.muli %arg15, %c7_i32_214 : i32
      %c2_i32_215 = arith.constant 2 : i32
      %272 = arith.addi %271, %c2_i32_215 : i32
      %c3_i32_216 = arith.constant 3 : i32
      %273 = arith.muli %272, %c3_i32_216 : i32
      %c0_i32_217 = arith.constant 0 : i32
      %274 = arith.addi %273, %c0_i32_217 : i32
      %c3_i32_218 = arith.constant 3 : i32
      %275 = arith.muli %274, %c3_i32_218 : i32
      %c0_i32_219 = arith.constant 0 : i32
      %276 = arith.addi %275, %c0_i32_219 : i32
      %277 = arith.index_cast %276 : i32 to index
      %278 = memref.load %arg6[%277] : memref<756xf32, #tpu.memory_space<smem>>
      %c2_220 = arith.constant 2 : index
      %c0_221 = arith.constant 0 : index
      %c0_222 = arith.constant 0 : index
      %c0_223 = arith.constant 0 : index
      %279 = vector.load %arg12[%c2_220, %c0_221, %c0_222, %c0_223] : memref<7x6x6x128xf32, #tpu.memory_space<vmem>>, vector<1x4x4x128xf32>
      %280 = vector.shape_cast %279 : vector<1x4x4x128xf32> to vector<4x4x128xf32>
      %281 = vector.broadcast %278 : f32 to vector<4x4x128xf32>
      %282 = arith.mulf %280, %281 : vector<4x4x128xf32>
      %283 = arith.addf %270, %282 : vector<4x4x128xf32>
      %c7_i32_224 = arith.constant 7 : i32
      %284 = arith.muli %arg15, %c7_i32_224 : i32
      %c2_i32_225 = arith.constant 2 : i32
      %285 = arith.addi %284, %c2_i32_225 : i32
      %c3_i32_226 = arith.constant 3 : i32
      %286 = arith.muli %285, %c3_i32_226 : i32
      %c0_i32_227 = arith.constant 0 : i32
      %287 = arith.addi %286, %c0_i32_227 : i32
      %c3_i32_228 = arith.constant 3 : i32
      %288 = arith.muli %287, %c3_i32_228 : i32
      %c1_i32_229 = arith.constant 1 : i32
      %289 = arith.addi %288, %c1_i32_229 : i32
      %290 = arith.index_cast %289 : i32 to index
      %291 = memref.load %arg6[%290] : memref<756xf32, #tpu.memory_space<smem>>
      %c2_230 = arith.constant 2 : index
      %c0_231 = arith.constant 0 : index
      %c1_232 = arith.constant 1 : index
      %c0_233 = arith.constant 0 : index
      %292 = vector.load %arg12[%c2_230, %c0_231, %c1_232, %c0_233] : memref<7x6x6x128xf32, #tpu.memory_space<vmem>>, vector<1x4x4x128xf32>
      %293 = vector.shape_cast %292 : vector<1x4x4x128xf32> to vector<4x4x128xf32>
      %294 = vector.broadcast %291 : f32 to vector<4x4x128xf32>
      %295 = arith.mulf %293, %294 : vector<4x4x128xf32>
      %296 = arith.addf %283, %295 : vector<4x4x128xf32>
      %c7_i32_234 = arith.constant 7 : i32
      %297 = arith.muli %arg15, %c7_i32_234 : i32
      %c2_i32_235 = arith.constant 2 : i32
      %298 = arith.addi %297, %c2_i32_235 : i32
      %c3_i32_236 = arith.constant 3 : i32
      %299 = arith.muli %298, %c3_i32_236 : i32
      %c0_i32_237 = arith.constant 0 : i32
      %300 = arith.addi %299, %c0_i32_237 : i32
      %c3_i32_238 = arith.constant 3 : i32
      %301 = arith.muli %300, %c3_i32_238 : i32
      %c2_i32_239 = arith.constant 2 : i32
      %302 = arith.addi %301, %c2_i32_239 : i32
      %303 = arith.index_cast %302 : i32 to index
      %304 = memref.load %arg6[%303] : memref<756xf32, #tpu.memory_space<smem>>
      %c2_240 = arith.constant 2 : index
      %c0_241 = arith.constant 0 : index
      %c2_242 = arith.constant 2 : index
      %c0_243 = arith.constant 0 : index
      %305 = vector.load %arg12[%c2_240, %c0_241, %c2_242, %c0_243] : memref<7x6x6x128xf32, #tpu.memory_space<vmem>>, vector<1x4x4x128xf32>
      %306 = vector.shape_cast %305 : vector<1x4x4x128xf32> to vector<4x4x128xf32>
      %307 = vector.broadcast %304 : f32 to vector<4x4x128xf32>
      %308 = arith.mulf %306, %307 : vector<4x4x128xf32>
      %309 = arith.addf %296, %308 : vector<4x4x128xf32>
      %c7_i32_244 = arith.constant 7 : i32
      %310 = arith.muli %arg15, %c7_i32_244 : i32
      %c2_i32_245 = arith.constant 2 : i32
      %311 = arith.addi %310, %c2_i32_245 : i32
      %c3_i32_246 = arith.constant 3 : i32
      %312 = arith.muli %311, %c3_i32_246 : i32
      %c1_i32_247 = arith.constant 1 : i32
      %313 = arith.addi %312, %c1_i32_247 : i32
      %c3_i32_248 = arith.constant 3 : i32
      %314 = arith.muli %313, %c3_i32_248 : i32
      %c0_i32_249 = arith.constant 0 : i32
      %315 = arith.addi %314, %c0_i32_249 : i32
      %316 = arith.index_cast %315 : i32 to index
      %317 = memref.load %arg6[%316] : memref<756xf32, #tpu.memory_space<smem>>
      %c2_250 = arith.constant 2 : index
      %c1_251 = arith.constant 1 : index
      %c0_252 = arith.constant 0 : index
      %c0_253 = arith.constant 0 : index
      %318 = vector.load %arg12[%c2_250, %c1_251, %c0_252, %c0_253] : memref<7x6x6x128xf32, #tpu.memory_space<vmem>>, vector<1x4x4x128xf32>
      %319 = vector.shape_cast %318 : vector<1x4x4x128xf32> to vector<4x4x128xf32>
      %320 = vector.broadcast %317 : f32 to vector<4x4x128xf32>
      %321 = arith.mulf %319, %320 : vector<4x4x128xf32>
      %322 = arith.addf %309, %321 : vector<4x4x128xf32>
      %c7_i32_254 = arith.constant 7 : i32
      %323 = arith.muli %arg15, %c7_i32_254 : i32
      %c2_i32_255 = arith.constant 2 : i32
      %324 = arith.addi %323, %c2_i32_255 : i32
      %c3_i32_256 = arith.constant 3 : i32
      %325 = arith.muli %324, %c3_i32_256 : i32
      %c1_i32_257 = arith.constant 1 : i32
      %326 = arith.addi %325, %c1_i32_257 : i32
      %c3_i32_258 = arith.constant 3 : i32
      %327 = arith.muli %326, %c3_i32_258 : i32
      %c1_i32_259 = arith.constant 1 : i32
      %328 = arith.addi %327, %c1_i32_259 : i32
      %329 = arith.index_cast %328 : i32 to index
      %330 = memref.load %arg6[%329] : memref<756xf32, #tpu.memory_space<smem>>
      %c2_260 = arith.constant 2 : index
      %c1_261 = arith.constant 1 : index
      %c1_262 = arith.constant 1 : index
      %c0_263 = arith.constant 0 : index
      %331 = vector.load %arg12[%c2_260, %c1_261, %c1_262, %c0_263] : memref<7x6x6x128xf32, #tpu.memory_space<vmem>>, vector<1x4x4x128xf32>
      %332 = vector.shape_cast %331 : vector<1x4x4x128xf32> to vector<4x4x128xf32>
      %333 = vector.broadcast %330 : f32 to vector<4x4x128xf32>
      %334 = arith.mulf %332, %333 : vector<4x4x128xf32>
      %335 = arith.addf %322, %334 : vector<4x4x128xf32>
      %c7_i32_264 = arith.constant 7 : i32
      %336 = arith.muli %arg15, %c7_i32_264 : i32
      %c2_i32_265 = arith.constant 2 : i32
      %337 = arith.addi %336, %c2_i32_265 : i32
      %c3_i32_266 = arith.constant 3 : i32
      %338 = arith.muli %337, %c3_i32_266 : i32
      %c1_i32_267 = arith.constant 1 : i32
      %339 = arith.addi %338, %c1_i32_267 : i32
      %c3_i32_268 = arith.constant 3 : i32
      %340 = arith.muli %339, %c3_i32_268 : i32
      %c2_i32_269 = arith.constant 2 : i32
      %341 = arith.addi %340, %c2_i32_269 : i32
      %342 = arith.index_cast %341 : i32 to index
      %343 = memref.load %arg6[%342] : memref<756xf32, #tpu.memory_space<smem>>
      %c2_270 = arith.constant 2 : index
      %c1_271 = arith.constant 1 : index
      %c2_272 = arith.constant 2 : index
      %c0_273 = arith.constant 0 : index
      %344 = vector.load %arg12[%c2_270, %c1_271, %c2_272, %c0_273] : memref<7x6x6x128xf32, #tpu.memory_space<vmem>>, vector<1x4x4x128xf32>
      %345 = vector.shape_cast %344 : vector<1x4x4x128xf32> to vector<4x4x128xf32>
      %346 = vector.broadcast %343 : f32 to vector<4x4x128xf32>
      %347 = arith.mulf %345, %346 : vector<4x4x128xf32>
      %348 = arith.addf %335, %347 : vector<4x4x128xf32>
      %c7_i32_274 = arith.constant 7 : i32
      %349 = arith.muli %arg15, %c7_i32_274 : i32
      %c2_i32_275 = arith.constant 2 : i32
      %350 = arith.addi %349, %c2_i32_275 : i32
      %c3_i32_276 = arith.constant 3 : i32
      %351 = arith.muli %350, %c3_i32_276 : i32
      %c2_i32_277 = arith.constant 2 : i32
      %352 = arith.addi %351, %c2_i32_277 : i32
      %c3_i32_278 = arith.constant 3 : i32
      %353 = arith.muli %352, %c3_i32_278 : i32
      %c0_i32_279 = arith.constant 0 : i32
      %354 = arith.addi %353, %c0_i32_279 : i32
      %355 = arith.index_cast %354 : i32 to index
      %356 = memref.load %arg6[%355] : memref<756xf32, #tpu.memory_space<smem>>
      %c2_280 = arith.constant 2 : index
      %c2_281 = arith.constant 2 : index
      %c0_282 = arith.constant 0 : index
      %c0_283 = arith.constant 0 : index
      %357 = vector.load %arg12[%c2_280, %c2_281, %c0_282, %c0_283] : memref<7x6x6x128xf32, #tpu.memory_space<vmem>>, vector<1x4x4x128xf32>
      %358 = vector.shape_cast %357 : vector<1x4x4x128xf32> to vector<4x4x128xf32>
      %359 = vector.broadcast %356 : f32 to vector<4x4x128xf32>
      %360 = arith.mulf %358, %359 : vector<4x4x128xf32>
      %361 = arith.addf %348, %360 : vector<4x4x128xf32>
      %c7_i32_284 = arith.constant 7 : i32
      %362 = arith.muli %arg15, %c7_i32_284 : i32
      %c2_i32_285 = arith.constant 2 : i32
      %363 = arith.addi %362, %c2_i32_285 : i32
      %c3_i32_286 = arith.constant 3 : i32
      %364 = arith.muli %363, %c3_i32_286 : i32
      %c2_i32_287 = arith.constant 2 : i32
      %365 = arith.addi %364, %c2_i32_287 : i32
      %c3_i32_288 = arith.constant 3 : i32
      %366 = arith.muli %365, %c3_i32_288 : i32
      %c1_i32_289 = arith.constant 1 : i32
      %367 = arith.addi %366, %c1_i32_289 : i32
      %368 = arith.index_cast %367 : i32 to index
      %369 = memref.load %arg6[%368] : memref<756xf32, #tpu.memory_space<smem>>
      %c2_290 = arith.constant 2 : index
      %c2_291 = arith.constant 2 : index
      %c1_292 = arith.constant 1 : index
      %c0_293 = arith.constant 0 : index
      %370 = vector.load %arg12[%c2_290, %c2_291, %c1_292, %c0_293] : memref<7x6x6x128xf32, #tpu.memory_space<vmem>>, vector<1x4x4x128xf32>
      %371 = vector.shape_cast %370 : vector<1x4x4x128xf32> to vector<4x4x128xf32>
      %372 = vector.broadcast %369 : f32 to vector<4x4x128xf32>
      %373 = arith.mulf %371, %372 : vector<4x4x128xf32>
      %374 = arith.addf %361, %373 : vector<4x4x128xf32>
      %c7_i32_294 = arith.constant 7 : i32
      %375 = arith.muli %arg15, %c7_i32_294 : i32
      %c2_i32_295 = arith.constant 2 : i32
      %376 = arith.addi %375, %c2_i32_295 : i32
      %c3_i32_296 = arith.constant 3 : i32
      %377 = arith.muli %376, %c3_i32_296 : i32
      %c2_i32_297 = arith.constant 2 : i32
      %378 = arith.addi %377, %c2_i32_297 : i32
      %c3_i32_298 = arith.constant 3 : i32
      %379 = arith.muli %378, %c3_i32_298 : i32
      %c2_i32_299 = arith.constant 2 : i32
      %380 = arith.addi %379, %c2_i32_299 : i32
      %381 = arith.index_cast %380 : i32 to index
      %382 = memref.load %arg6[%381] : memref<756xf32, #tpu.memory_space<smem>>
      %c2_300 = arith.constant 2 : index
      %c2_301 = arith.constant 2 : index
      %c2_302 = arith.constant 2 : index
      %c0_303 = arith.constant 0 : index
      %383 = vector.load %arg12[%c2_300, %c2_301, %c2_302, %c0_303] : memref<7x6x6x128xf32, #tpu.memory_space<vmem>>, vector<1x4x4x128xf32>
      %384 = vector.shape_cast %383 : vector<1x4x4x128xf32> to vector<4x4x128xf32>
      %385 = vector.broadcast %382 : f32 to vector<4x4x128xf32>
      %386 = arith.mulf %384, %385 : vector<4x4x128xf32>
      %387 = arith.addf %374, %386 : vector<4x4x128xf32>
      %c7_i32_304 = arith.constant 7 : i32
      %388 = arith.muli %arg15, %c7_i32_304 : i32
      %c3_i32_305 = arith.constant 3 : i32
      %389 = arith.addi %388, %c3_i32_305 : i32
      %c3_i32_306 = arith.constant 3 : i32
      %390 = arith.muli %389, %c3_i32_306 : i32
      %c0_i32_307 = arith.constant 0 : i32
      %391 = arith.addi %390, %c0_i32_307 : i32
      %c3_i32_308 = arith.constant 3 : i32
      %392 = arith.muli %391, %c3_i32_308 : i32
      %c0_i32_309 = arith.constant 0 : i32
      %393 = arith.addi %392, %c0_i32_309 : i32
      %394 = arith.index_cast %393 : i32 to index
      %395 = memref.load %arg6[%394] : memref<756xf32, #tpu.memory_space<smem>>
      %c3_310 = arith.constant 3 : index
      %c0_311 = arith.constant 0 : index
      %c0_312 = arith.constant 0 : index
      %c0_313 = arith.constant 0 : index
      %396 = vector.load %arg12[%c3_310, %c0_311, %c0_312, %c0_313] : memref<7x6x6x128xf32, #tpu.memory_space<vmem>>, vector<1x4x4x128xf32>
      %397 = vector.shape_cast %396 : vector<1x4x4x128xf32> to vector<4x4x128xf32>
      %398 = vector.broadcast %395 : f32 to vector<4x4x128xf32>
      %399 = arith.mulf %397, %398 : vector<4x4x128xf32>
      %400 = arith.addf %387, %399 : vector<4x4x128xf32>
      %c7_i32_314 = arith.constant 7 : i32
      %401 = arith.muli %arg15, %c7_i32_314 : i32
      %c3_i32_315 = arith.constant 3 : i32
      %402 = arith.addi %401, %c3_i32_315 : i32
      %c3_i32_316 = arith.constant 3 : i32
      %403 = arith.muli %402, %c3_i32_316 : i32
      %c0_i32_317 = arith.constant 0 : i32
      %404 = arith.addi %403, %c0_i32_317 : i32
      %c3_i32_318 = arith.constant 3 : i32
      %405 = arith.muli %404, %c3_i32_318 : i32
      %c1_i32_319 = arith.constant 1 : i32
      %406 = arith.addi %405, %c1_i32_319 : i32
      %407 = arith.index_cast %406 : i32 to index
      %408 = memref.load %arg6[%407] : memref<756xf32, #tpu.memory_space<smem>>
      %c3_320 = arith.constant 3 : index
      %c0_321 = arith.constant 0 : index
      %c1_322 = arith.constant 1 : index
      %c0_323 = arith.constant 0 : index
      %409 = vector.load %arg12[%c3_320, %c0_321, %c1_322, %c0_323] : memref<7x6x6x128xf32, #tpu.memory_space<vmem>>, vector<1x4x4x128xf32>
      %410 = vector.shape_cast %409 : vector<1x4x4x128xf32> to vector<4x4x128xf32>
      %411 = vector.broadcast %408 : f32 to vector<4x4x128xf32>
      %412 = arith.mulf %410, %411 : vector<4x4x128xf32>
      %413 = arith.addf %400, %412 : vector<4x4x128xf32>
      %c7_i32_324 = arith.constant 7 : i32
      %414 = arith.muli %arg15, %c7_i32_324 : i32
      %c3_i32_325 = arith.constant 3 : i32
      %415 = arith.addi %414, %c3_i32_325 : i32
      %c3_i32_326 = arith.constant 3 : i32
      %416 = arith.muli %415, %c3_i32_326 : i32
      %c0_i32_327 = arith.constant 0 : i32
      %417 = arith.addi %416, %c0_i32_327 : i32
      %c3_i32_328 = arith.constant 3 : i32
      %418 = arith.muli %417, %c3_i32_328 : i32
      %c2_i32_329 = arith.constant 2 : i32
      %419 = arith.addi %418, %c2_i32_329 : i32
      %420 = arith.index_cast %419 : i32 to index
      %421 = memref.load %arg6[%420] : memref<756xf32, #tpu.memory_space<smem>>
      %c3_330 = arith.constant 3 : index
      %c0_331 = arith.constant 0 : index
      %c2_332 = arith.constant 2 : index
      %c0_333 = arith.constant 0 : index
      %422 = vector.load %arg12[%c3_330, %c0_331, %c2_332, %c0_333] : memref<7x6x6x128xf32, #tpu.memory_space<vmem>>, vector<1x4x4x128xf32>
      %423 = vector.shape_cast %422 : vector<1x4x4x128xf32> to vector<4x4x128xf32>
      %424 = vector.broadcast %421 : f32 to vector<4x4x128xf32>
      %425 = arith.mulf %423, %424 : vector<4x4x128xf32>
      %426 = arith.addf %413, %425 : vector<4x4x128xf32>
      %c7_i32_334 = arith.constant 7 : i32
      %427 = arith.muli %arg15, %c7_i32_334 : i32
      %c3_i32_335 = arith.constant 3 : i32
      %428 = arith.addi %427, %c3_i32_335 : i32
      %c3_i32_336 = arith.constant 3 : i32
      %429 = arith.muli %428, %c3_i32_336 : i32
      %c1_i32_337 = arith.constant 1 : i32
      %430 = arith.addi %429, %c1_i32_337 : i32
      %c3_i32_338 = arith.constant 3 : i32
      %431 = arith.muli %430, %c3_i32_338 : i32
      %c0_i32_339 = arith.constant 0 : i32
      %432 = arith.addi %431, %c0_i32_339 : i32
      %433 = arith.index_cast %432 : i32 to index
      %434 = memref.load %arg6[%433] : memref<756xf32, #tpu.memory_space<smem>>
      %c3_340 = arith.constant 3 : index
      %c1_341 = arith.constant 1 : index
      %c0_342 = arith.constant 0 : index
      %c0_343 = arith.constant 0 : index
      %435 = vector.load %arg12[%c3_340, %c1_341, %c0_342, %c0_343] : memref<7x6x6x128xf32, #tpu.memory_space<vmem>>, vector<1x4x4x128xf32>
      %436 = vector.shape_cast %435 : vector<1x4x4x128xf32> to vector<4x4x128xf32>
      %437 = vector.broadcast %434 : f32 to vector<4x4x128xf32>
      %438 = arith.mulf %436, %437 : vector<4x4x128xf32>
      %439 = arith.addf %426, %438 : vector<4x4x128xf32>
      %c7_i32_344 = arith.constant 7 : i32
      %440 = arith.muli %arg15, %c7_i32_344 : i32
      %c3_i32_345 = arith.constant 3 : i32
      %441 = arith.addi %440, %c3_i32_345 : i32
      %c3_i32_346 = arith.constant 3 : i32
      %442 = arith.muli %441, %c3_i32_346 : i32
      %c1_i32_347 = arith.constant 1 : i32
      %443 = arith.addi %442, %c1_i32_347 : i32
      %c3_i32_348 = arith.constant 3 : i32
      %444 = arith.muli %443, %c3_i32_348 : i32
      %c1_i32_349 = arith.constant 1 : i32
      %445 = arith.addi %444, %c1_i32_349 : i32
      %446 = arith.index_cast %445 : i32 to index
      %447 = memref.load %arg6[%446] : memref<756xf32, #tpu.memory_space<smem>>
      %c3_350 = arith.constant 3 : index
      %c1_351 = arith.constant 1 : index
      %c1_352 = arith.constant 1 : index
      %c0_353 = arith.constant 0 : index
      %448 = vector.load %arg12[%c3_350, %c1_351, %c1_352, %c0_353] : memref<7x6x6x128xf32, #tpu.memory_space<vmem>>, vector<1x4x4x128xf32>
      %449 = vector.shape_cast %448 : vector<1x4x4x128xf32> to vector<4x4x128xf32>
      %450 = vector.broadcast %447 : f32 to vector<4x4x128xf32>
      %451 = arith.mulf %449, %450 : vector<4x4x128xf32>
      %452 = arith.addf %439, %451 : vector<4x4x128xf32>
      %c7_i32_354 = arith.constant 7 : i32
      %453 = arith.muli %arg15, %c7_i32_354 : i32
      %c3_i32_355 = arith.constant 3 : i32
      %454 = arith.addi %453, %c3_i32_355 : i32
      %c3_i32_356 = arith.constant 3 : i32
      %455 = arith.muli %454, %c3_i32_356 : i32
      %c1_i32_357 = arith.constant 1 : i32
      %456 = arith.addi %455, %c1_i32_357 : i32
      %c3_i32_358 = arith.constant 3 : i32
      %457 = arith.muli %456, %c3_i32_358 : i32
      %c2_i32_359 = arith.constant 2 : i32
      %458 = arith.addi %457, %c2_i32_359 : i32
      %459 = arith.index_cast %458 : i32 to index
      %460 = memref.load %arg6[%459] : memref<756xf32, #tpu.memory_space<smem>>
      %c3_360 = arith.constant 3 : index
      %c1_361 = arith.constant 1 : index
      %c2_362 = arith.constant 2 : index
      %c0_363 = arith.constant 0 : index
      %461 = vector.load %arg12[%c3_360, %c1_361, %c2_362, %c0_363] : memref<7x6x6x128xf32, #tpu.memory_space<vmem>>, vector<1x4x4x128xf32>
      %462 = vector.shape_cast %461 : vector<1x4x4x128xf32> to vector<4x4x128xf32>
      %463 = vector.broadcast %460 : f32 to vector<4x4x128xf32>
      %464 = arith.mulf %462, %463 : vector<4x4x128xf32>
      %465 = arith.addf %452, %464 : vector<4x4x128xf32>
      %c7_i32_364 = arith.constant 7 : i32
      %466 = arith.muli %arg15, %c7_i32_364 : i32
      %c3_i32_365 = arith.constant 3 : i32
      %467 = arith.addi %466, %c3_i32_365 : i32
      %c3_i32_366 = arith.constant 3 : i32
      %468 = arith.muli %467, %c3_i32_366 : i32
      %c2_i32_367 = arith.constant 2 : i32
      %469 = arith.addi %468, %c2_i32_367 : i32
      %c3_i32_368 = arith.constant 3 : i32
      %470 = arith.muli %469, %c3_i32_368 : i32
      %c0_i32_369 = arith.constant 0 : i32
      %471 = arith.addi %470, %c0_i32_369 : i32
      %472 = arith.index_cast %471 : i32 to index
      %473 = memref.load %arg6[%472] : memref<756xf32, #tpu.memory_space<smem>>
      %c3_370 = arith.constant 3 : index
      %c2_371 = arith.constant 2 : index
      %c0_372 = arith.constant 0 : index
      %c0_373 = arith.constant 0 : index
      %474 = vector.load %arg12[%c3_370, %c2_371, %c0_372, %c0_373] : memref<7x6x6x128xf32, #tpu.memory_space<vmem>>, vector<1x4x4x128xf32>
      %475 = vector.shape_cast %474 : vector<1x4x4x128xf32> to vector<4x4x128xf32>
      %476 = vector.broadcast %473 : f32 to vector<4x4x128xf32>
      %477 = arith.mulf %475, %476 : vector<4x4x128xf32>
      %478 = arith.addf %465, %477 : vector<4x4x128xf32>
      %c7_i32_374 = arith.constant 7 : i32
      %479 = arith.muli %arg15, %c7_i32_374 : i32
      %c3_i32_375 = arith.constant 3 : i32
      %480 = arith.addi %479, %c3_i32_375 : i32
      %c3_i32_376 = arith.constant 3 : i32
      %481 = arith.muli %480, %c3_i32_376 : i32
      %c2_i32_377 = arith.constant 2 : i32
      %482 = arith.addi %481, %c2_i32_377 : i32
      %c3_i32_378 = arith.constant 3 : i32
      %483 = arith.muli %482, %c3_i32_378 : i32
      %c1_i32_379 = arith.constant 1 : i32
      %484 = arith.addi %483, %c1_i32_379 : i32
      %485 = arith.index_cast %484 : i32 to index
      %486 = memref.load %arg6[%485] : memref<756xf32, #tpu.memory_space<smem>>
      %c3_380 = arith.constant 3 : index
      %c2_381 = arith.constant 2 : index
      %c1_382 = arith.constant 1 : index
      %c0_383 = arith.constant 0 : index
      %487 = vector.load %arg12[%c3_380, %c2_381, %c1_382, %c0_383] : memref<7x6x6x128xf32, #tpu.memory_space<vmem>>, vector<1x4x4x128xf32>
      %488 = vector.shape_cast %487 : vector<1x4x4x128xf32> to vector<4x4x128xf32>
      %489 = vector.broadcast %486 : f32 to vector<4x4x128xf32>
      %490 = arith.mulf %488, %489 : vector<4x4x128xf32>
      %491 = arith.addf %478, %490 : vector<4x4x128xf32>
      %c7_i32_384 = arith.constant 7 : i32
      %492 = arith.muli %arg15, %c7_i32_384 : i32
      %c3_i32_385 = arith.constant 3 : i32
      %493 = arith.addi %492, %c3_i32_385 : i32
      %c3_i32_386 = arith.constant 3 : i32
      %494 = arith.muli %493, %c3_i32_386 : i32
      %c2_i32_387 = arith.constant 2 : i32
      %495 = arith.addi %494, %c2_i32_387 : i32
      %c3_i32_388 = arith.constant 3 : i32
      %496 = arith.muli %495, %c3_i32_388 : i32
      %c2_i32_389 = arith.constant 2 : i32
      %497 = arith.addi %496, %c2_i32_389 : i32
      %498 = arith.index_cast %497 : i32 to index
      %499 = memref.load %arg6[%498] : memref<756xf32, #tpu.memory_space<smem>>
      %c3_390 = arith.constant 3 : index
      %c2_391 = arith.constant 2 : index
      %c2_392 = arith.constant 2 : index
      %c0_393 = arith.constant 0 : index
      %500 = vector.load %arg12[%c3_390, %c2_391, %c2_392, %c0_393] : memref<7x6x6x128xf32, #tpu.memory_space<vmem>>, vector<1x4x4x128xf32>
      %501 = vector.shape_cast %500 : vector<1x4x4x128xf32> to vector<4x4x128xf32>
      %502 = vector.broadcast %499 : f32 to vector<4x4x128xf32>
      %503 = arith.mulf %501, %502 : vector<4x4x128xf32>
      %504 = arith.addf %491, %503 : vector<4x4x128xf32>
      %c7_i32_394 = arith.constant 7 : i32
      %505 = arith.muli %arg15, %c7_i32_394 : i32
      %c4_i32 = arith.constant 4 : i32
      %506 = arith.addi %505, %c4_i32 : i32
      %c3_i32_395 = arith.constant 3 : i32
      %507 = arith.muli %506, %c3_i32_395 : i32
      %c0_i32_396 = arith.constant 0 : i32
      %508 = arith.addi %507, %c0_i32_396 : i32
      %c3_i32_397 = arith.constant 3 : i32
      %509 = arith.muli %508, %c3_i32_397 : i32
      %c0_i32_398 = arith.constant 0 : i32
      %510 = arith.addi %509, %c0_i32_398 : i32
      %511 = arith.index_cast %510 : i32 to index
      %512 = memref.load %arg6[%511] : memref<756xf32, #tpu.memory_space<smem>>
      %c4_399 = arith.constant 4 : index
      %c0_400 = arith.constant 0 : index
      %c0_401 = arith.constant 0 : index
      %c0_402 = arith.constant 0 : index
      %513 = vector.load %arg12[%c4_399, %c0_400, %c0_401, %c0_402] : memref<7x6x6x128xf32, #tpu.memory_space<vmem>>, vector<1x4x4x128xf32>
      %514 = vector.shape_cast %513 : vector<1x4x4x128xf32> to vector<4x4x128xf32>
      %515 = vector.broadcast %512 : f32 to vector<4x4x128xf32>
      %516 = arith.mulf %514, %515 : vector<4x4x128xf32>
      %517 = arith.addf %504, %516 : vector<4x4x128xf32>
      %c7_i32_403 = arith.constant 7 : i32
      %518 = arith.muli %arg15, %c7_i32_403 : i32
      %c4_i32_404 = arith.constant 4 : i32
      %519 = arith.addi %518, %c4_i32_404 : i32
      %c3_i32_405 = arith.constant 3 : i32
      %520 = arith.muli %519, %c3_i32_405 : i32
      %c0_i32_406 = arith.constant 0 : i32
      %521 = arith.addi %520, %c0_i32_406 : i32
      %c3_i32_407 = arith.constant 3 : i32
      %522 = arith.muli %521, %c3_i32_407 : i32
      %c1_i32_408 = arith.constant 1 : i32
      %523 = arith.addi %522, %c1_i32_408 : i32
      %524 = arith.index_cast %523 : i32 to index
      %525 = memref.load %arg6[%524] : memref<756xf32, #tpu.memory_space<smem>>
      %c4_409 = arith.constant 4 : index
      %c0_410 = arith.constant 0 : index
      %c1_411 = arith.constant 1 : index
      %c0_412 = arith.constant 0 : index
      %526 = vector.load %arg12[%c4_409, %c0_410, %c1_411, %c0_412] : memref<7x6x6x128xf32, #tpu.memory_space<vmem>>, vector<1x4x4x128xf32>
      %527 = vector.shape_cast %526 : vector<1x4x4x128xf32> to vector<4x4x128xf32>
      %528 = vector.broadcast %525 : f32 to vector<4x4x128xf32>
      %529 = arith.mulf %527, %528 : vector<4x4x128xf32>
      %530 = arith.addf %517, %529 : vector<4x4x128xf32>
      %c7_i32_413 = arith.constant 7 : i32
      %531 = arith.muli %arg15, %c7_i32_413 : i32
      %c4_i32_414 = arith.constant 4 : i32
      %532 = arith.addi %531, %c4_i32_414 : i32
      %c3_i32_415 = arith.constant 3 : i32
      %533 = arith.muli %532, %c3_i32_415 : i32
      %c0_i32_416 = arith.constant 0 : i32
      %534 = arith.addi %533, %c0_i32_416 : i32
      %c3_i32_417 = arith.constant 3 : i32
      %535 = arith.muli %534, %c3_i32_417 : i32
      %c2_i32_418 = arith.constant 2 : i32
      %536 = arith.addi %535, %c2_i32_418 : i32
      %537 = arith.index_cast %536 : i32 to index
      %538 = memref.load %arg6[%537] : memref<756xf32, #tpu.memory_space<smem>>
      %c4_419 = arith.constant 4 : index
      %c0_420 = arith.constant 0 : index
      %c2_421 = arith.constant 2 : index
      %c0_422 = arith.constant 0 : index
      %539 = vector.load %arg12[%c4_419, %c0_420, %c2_421, %c0_422] : memref<7x6x6x128xf32, #tpu.memory_space<vmem>>, vector<1x4x4x128xf32>
      %540 = vector.shape_cast %539 : vector<1x4x4x128xf32> to vector<4x4x128xf32>
      %541 = vector.broadcast %538 : f32 to vector<4x4x128xf32>
      %542 = arith.mulf %540, %541 : vector<4x4x128xf32>
      %543 = arith.addf %530, %542 : vector<4x4x128xf32>
      %c7_i32_423 = arith.constant 7 : i32
      %544 = arith.muli %arg15, %c7_i32_423 : i32
      %c4_i32_424 = arith.constant 4 : i32
      %545 = arith.addi %544, %c4_i32_424 : i32
      %c3_i32_425 = arith.constant 3 : i32
      %546 = arith.muli %545, %c3_i32_425 : i32
      %c1_i32_426 = arith.constant 1 : i32
      %547 = arith.addi %546, %c1_i32_426 : i32
      %c3_i32_427 = arith.constant 3 : i32
      %548 = arith.muli %547, %c3_i32_427 : i32
      %c0_i32_428 = arith.constant 0 : i32
      %549 = arith.addi %548, %c0_i32_428 : i32
      %550 = arith.index_cast %549 : i32 to index
      %551 = memref.load %arg6[%550] : memref<756xf32, #tpu.memory_space<smem>>
      %c4_429 = arith.constant 4 : index
      %c1_430 = arith.constant 1 : index
      %c0_431 = arith.constant 0 : index
      %c0_432 = arith.constant 0 : index
      %552 = vector.load %arg12[%c4_429, %c1_430, %c0_431, %c0_432] : memref<7x6x6x128xf32, #tpu.memory_space<vmem>>, vector<1x4x4x128xf32>
      %553 = vector.shape_cast %552 : vector<1x4x4x128xf32> to vector<4x4x128xf32>
      %554 = vector.broadcast %551 : f32 to vector<4x4x128xf32>
      %555 = arith.mulf %553, %554 : vector<4x4x128xf32>
      %556 = arith.addf %543, %555 : vector<4x4x128xf32>
      %c7_i32_433 = arith.constant 7 : i32
      %557 = arith.muli %arg15, %c7_i32_433 : i32
      %c4_i32_434 = arith.constant 4 : i32
      %558 = arith.addi %557, %c4_i32_434 : i32
      %c3_i32_435 = arith.constant 3 : i32
      %559 = arith.muli %558, %c3_i32_435 : i32
      %c1_i32_436 = arith.constant 1 : i32
      %560 = arith.addi %559, %c1_i32_436 : i32
      %c3_i32_437 = arith.constant 3 : i32
      %561 = arith.muli %560, %c3_i32_437 : i32
      %c1_i32_438 = arith.constant 1 : i32
      %562 = arith.addi %561, %c1_i32_438 : i32
      %563 = arith.index_cast %562 : i32 to index
      %564 = memref.load %arg6[%563] : memref<756xf32, #tpu.memory_space<smem>>
      %c4_439 = arith.constant 4 : index
      %c1_440 = arith.constant 1 : index
      %c1_441 = arith.constant 1 : index
      %c0_442 = arith.constant 0 : index
      %565 = vector.load %arg12[%c4_439, %c1_440, %c1_441, %c0_442] : memref<7x6x6x128xf32, #tpu.memory_space<vmem>>, vector<1x4x4x128xf32>
      %566 = vector.shape_cast %565 : vector<1x4x4x128xf32> to vector<4x4x128xf32>
      %567 = vector.broadcast %564 : f32 to vector<4x4x128xf32>
      %568 = arith.mulf %566, %567 : vector<4x4x128xf32>
      %569 = arith.addf %556, %568 : vector<4x4x128xf32>
      %c7_i32_443 = arith.constant 7 : i32
      %570 = arith.muli %arg15, %c7_i32_443 : i32
      %c4_i32_444 = arith.constant 4 : i32
      %571 = arith.addi %570, %c4_i32_444 : i32
      %c3_i32_445 = arith.constant 3 : i32
      %572 = arith.muli %571, %c3_i32_445 : i32
      %c1_i32_446 = arith.constant 1 : i32
      %573 = arith.addi %572, %c1_i32_446 : i32
      %c3_i32_447 = arith.constant 3 : i32
      %574 = arith.muli %573, %c3_i32_447 : i32
      %c2_i32_448 = arith.constant 2 : i32
      %575 = arith.addi %574, %c2_i32_448 : i32
      %576 = arith.index_cast %575 : i32 to index
      %577 = memref.load %arg6[%576] : memref<756xf32, #tpu.memory_space<smem>>
      %c4_449 = arith.constant 4 : index
      %c1_450 = arith.constant 1 : index
      %c2_451 = arith.constant 2 : index
      %c0_452 = arith.constant 0 : index
      %578 = vector.load %arg12[%c4_449, %c1_450, %c2_451, %c0_452] : memref<7x6x6x128xf32, #tpu.memory_space<vmem>>, vector<1x4x4x128xf32>
      %579 = vector.shape_cast %578 : vector<1x4x4x128xf32> to vector<4x4x128xf32>
      %580 = vector.broadcast %577 : f32 to vector<4x4x128xf32>
      %581 = arith.mulf %579, %580 : vector<4x4x128xf32>
      %582 = arith.addf %569, %581 : vector<4x4x128xf32>
      %c7_i32_453 = arith.constant 7 : i32
      %583 = arith.muli %arg15, %c7_i32_453 : i32
      %c4_i32_454 = arith.constant 4 : i32
      %584 = arith.addi %583, %c4_i32_454 : i32
      %c3_i32_455 = arith.constant 3 : i32
      %585 = arith.muli %584, %c3_i32_455 : i32
      %c2_i32_456 = arith.constant 2 : i32
      %586 = arith.addi %585, %c2_i32_456 : i32
      %c3_i32_457 = arith.constant 3 : i32
      %587 = arith.muli %586, %c3_i32_457 : i32
      %c0_i32_458 = arith.constant 0 : i32
      %588 = arith.addi %587, %c0_i32_458 : i32
      %589 = arith.index_cast %588 : i32 to index
      %590 = memref.load %arg6[%589] : memref<756xf32, #tpu.memory_space<smem>>
      %c4_459 = arith.constant 4 : index
      %c2_460 = arith.constant 2 : index
      %c0_461 = arith.constant 0 : index
      %c0_462 = arith.constant 0 : index
      %591 = vector.load %arg12[%c4_459, %c2_460, %c0_461, %c0_462] : memref<7x6x6x128xf32, #tpu.memory_space<vmem>>, vector<1x4x4x128xf32>
      %592 = vector.shape_cast %591 : vector<1x4x4x128xf32> to vector<4x4x128xf32>
      %593 = vector.broadcast %590 : f32 to vector<4x4x128xf32>
      %594 = arith.mulf %592, %593 : vector<4x4x128xf32>
      %595 = arith.addf %582, %594 : vector<4x4x128xf32>
      %c7_i32_463 = arith.constant 7 : i32
      %596 = arith.muli %arg15, %c7_i32_463 : i32
      %c4_i32_464 = arith.constant 4 : i32
      %597 = arith.addi %596, %c4_i32_464 : i32
      %c3_i32_465 = arith.constant 3 : i32
      %598 = arith.muli %597, %c3_i32_465 : i32
      %c2_i32_466 = arith.constant 2 : i32
      %599 = arith.addi %598, %c2_i32_466 : i32
      %c3_i32_467 = arith.constant 3 : i32
      %600 = arith.muli %599, %c3_i32_467 : i32
      %c1_i32_468 = arith.constant 1 : i32
      %601 = arith.addi %600, %c1_i32_468 : i32
      %602 = arith.index_cast %601 : i32 to index
      %603 = memref.load %arg6[%602] : memref<756xf32, #tpu.memory_space<smem>>
      %c4_469 = arith.constant 4 : index
      %c2_470 = arith.constant 2 : index
      %c1_471 = arith.constant 1 : index
      %c0_472 = arith.constant 0 : index
      %604 = vector.load %arg12[%c4_469, %c2_470, %c1_471, %c0_472] : memref<7x6x6x128xf32, #tpu.memory_space<vmem>>, vector<1x4x4x128xf32>
      %605 = vector.shape_cast %604 : vector<1x4x4x128xf32> to vector<4x4x128xf32>
      %606 = vector.broadcast %603 : f32 to vector<4x4x128xf32>
      %607 = arith.mulf %605, %606 : vector<4x4x128xf32>
      %608 = arith.addf %595, %607 : vector<4x4x128xf32>
      %c7_i32_473 = arith.constant 7 : i32
      %609 = arith.muli %arg15, %c7_i32_473 : i32
      %c4_i32_474 = arith.constant 4 : i32
      %610 = arith.addi %609, %c4_i32_474 : i32
      %c3_i32_475 = arith.constant 3 : i32
      %611 = arith.muli %610, %c3_i32_475 : i32
      %c2_i32_476 = arith.constant 2 : i32
      %612 = arith.addi %611, %c2_i32_476 : i32
      %c3_i32_477 = arith.constant 3 : i32
      %613 = arith.muli %612, %c3_i32_477 : i32
      %c2_i32_478 = arith.constant 2 : i32
      %614 = arith.addi %613, %c2_i32_478 : i32
      %615 = arith.index_cast %614 : i32 to index
      %616 = memref.load %arg6[%615] : memref<756xf32, #tpu.memory_space<smem>>
      %c4_479 = arith.constant 4 : index
      %c2_480 = arith.constant 2 : index
      %c2_481 = arith.constant 2 : index
      %c0_482 = arith.constant 0 : index
      %617 = vector.load %arg12[%c4_479, %c2_480, %c2_481, %c0_482] : memref<7x6x6x128xf32, #tpu.memory_space<vmem>>, vector<1x4x4x128xf32>
      %618 = vector.shape_cast %617 : vector<1x4x4x128xf32> to vector<4x4x128xf32>
      %619 = vector.broadcast %616 : f32 to vector<4x4x128xf32>
      %620 = arith.mulf %618, %619 : vector<4x4x128xf32>
      %621 = arith.addf %608, %620 : vector<4x4x128xf32>
      %c7_i32_483 = arith.constant 7 : i32
      %622 = arith.muli %arg15, %c7_i32_483 : i32
      %c5_i32 = arith.constant 5 : i32
      %623 = arith.addi %622, %c5_i32 : i32
      %c3_i32_484 = arith.constant 3 : i32
      %624 = arith.muli %623, %c3_i32_484 : i32
      %c0_i32_485 = arith.constant 0 : i32
      %625 = arith.addi %624, %c0_i32_485 : i32
      %c3_i32_486 = arith.constant 3 : i32
      %626 = arith.muli %625, %c3_i32_486 : i32
      %c0_i32_487 = arith.constant 0 : i32
      %627 = arith.addi %626, %c0_i32_487 : i32
      %628 = arith.index_cast %627 : i32 to index
      %629 = memref.load %arg6[%628] : memref<756xf32, #tpu.memory_space<smem>>
      %c5_488 = arith.constant 5 : index
      %c0_489 = arith.constant 0 : index
      %c0_490 = arith.constant 0 : index
      %c0_491 = arith.constant 0 : index
      %630 = vector.load %arg12[%c5_488, %c0_489, %c0_490, %c0_491] : memref<7x6x6x128xf32, #tpu.memory_space<vmem>>, vector<1x4x4x128xf32>
      %631 = vector.shape_cast %630 : vector<1x4x4x128xf32> to vector<4x4x128xf32>
      %632 = vector.broadcast %629 : f32 to vector<4x4x128xf32>
      %633 = arith.mulf %631, %632 : vector<4x4x128xf32>
      %634 = arith.addf %621, %633 : vector<4x4x128xf32>
      %c7_i32_492 = arith.constant 7 : i32
      %635 = arith.muli %arg15, %c7_i32_492 : i32
      %c5_i32_493 = arith.constant 5 : i32
      %636 = arith.addi %635, %c5_i32_493 : i32
      %c3_i32_494 = arith.constant 3 : i32
      %637 = arith.muli %636, %c3_i32_494 : i32
      %c0_i32_495 = arith.constant 0 : i32
      %638 = arith.addi %637, %c0_i32_495 : i32
      %c3_i32_496 = arith.constant 3 : i32
      %639 = arith.muli %638, %c3_i32_496 : i32
      %c1_i32_497 = arith.constant 1 : i32
      %640 = arith.addi %639, %c1_i32_497 : i32
      %641 = arith.index_cast %640 : i32 to index
      %642 = memref.load %arg6[%641] : memref<756xf32, #tpu.memory_space<smem>>
      %c5_498 = arith.constant 5 : index
      %c0_499 = arith.constant 0 : index
      %c1_500 = arith.constant 1 : index
      %c0_501 = arith.constant 0 : index
      %643 = vector.load %arg12[%c5_498, %c0_499, %c1_500, %c0_501] : memref<7x6x6x128xf32, #tpu.memory_space<vmem>>, vector<1x4x4x128xf32>
      %644 = vector.shape_cast %643 : vector<1x4x4x128xf32> to vector<4x4x128xf32>
      %645 = vector.broadcast %642 : f32 to vector<4x4x128xf32>
      %646 = arith.mulf %644, %645 : vector<4x4x128xf32>
      %647 = arith.addf %634, %646 : vector<4x4x128xf32>
      %c7_i32_502 = arith.constant 7 : i32
      %648 = arith.muli %arg15, %c7_i32_502 : i32
      %c5_i32_503 = arith.constant 5 : i32
      %649 = arith.addi %648, %c5_i32_503 : i32
      %c3_i32_504 = arith.constant 3 : i32
      %650 = arith.muli %649, %c3_i32_504 : i32
      %c0_i32_505 = arith.constant 0 : i32
      %651 = arith.addi %650, %c0_i32_505 : i32
      %c3_i32_506 = arith.constant 3 : i32
      %652 = arith.muli %651, %c3_i32_506 : i32
      %c2_i32_507 = arith.constant 2 : i32
      %653 = arith.addi %652, %c2_i32_507 : i32
      %654 = arith.index_cast %653 : i32 to index
      %655 = memref.load %arg6[%654] : memref<756xf32, #tpu.memory_space<smem>>
      %c5_508 = arith.constant 5 : index
      %c0_509 = arith.constant 0 : index
      %c2_510 = arith.constant 2 : index
      %c0_511 = arith.constant 0 : index
      %656 = vector.load %arg12[%c5_508, %c0_509, %c2_510, %c0_511] : memref<7x6x6x128xf32, #tpu.memory_space<vmem>>, vector<1x4x4x128xf32>
      %657 = vector.shape_cast %656 : vector<1x4x4x128xf32> to vector<4x4x128xf32>
      %658 = vector.broadcast %655 : f32 to vector<4x4x128xf32>
      %659 = arith.mulf %657, %658 : vector<4x4x128xf32>
      %660 = arith.addf %647, %659 : vector<4x4x128xf32>
      %c7_i32_512 = arith.constant 7 : i32
      %661 = arith.muli %arg15, %c7_i32_512 : i32
      %c5_i32_513 = arith.constant 5 : i32
      %662 = arith.addi %661, %c5_i32_513 : i32
      %c3_i32_514 = arith.constant 3 : i32
      %663 = arith.muli %662, %c3_i32_514 : i32
      %c1_i32_515 = arith.constant 1 : i32
      %664 = arith.addi %663, %c1_i32_515 : i32
      %c3_i32_516 = arith.constant 3 : i32
      %665 = arith.muli %664, %c3_i32_516 : i32
      %c0_i32_517 = arith.constant 0 : i32
      %666 = arith.addi %665, %c0_i32_517 : i32
      %667 = arith.index_cast %666 : i32 to index
      %668 = memref.load %arg6[%667] : memref<756xf32, #tpu.memory_space<smem>>
      %c5_518 = arith.constant 5 : index
      %c1_519 = arith.constant 1 : index
      %c0_520 = arith.constant 0 : index
      %c0_521 = arith.constant 0 : index
      %669 = vector.load %arg12[%c5_518, %c1_519, %c0_520, %c0_521] : memref<7x6x6x128xf32, #tpu.memory_space<vmem>>, vector<1x4x4x128xf32>
      %670 = vector.shape_cast %669 : vector<1x4x4x128xf32> to vector<4x4x128xf32>
      %671 = vector.broadcast %668 : f32 to vector<4x4x128xf32>
      %672 = arith.mulf %670, %671 : vector<4x4x128xf32>
      %673 = arith.addf %660, %672 : vector<4x4x128xf32>
      %c7_i32_522 = arith.constant 7 : i32
      %674 = arith.muli %arg15, %c7_i32_522 : i32
      %c5_i32_523 = arith.constant 5 : i32
      %675 = arith.addi %674, %c5_i32_523 : i32
      %c3_i32_524 = arith.constant 3 : i32
      %676 = arith.muli %675, %c3_i32_524 : i32
      %c1_i32_525 = arith.constant 1 : i32
      %677 = arith.addi %676, %c1_i32_525 : i32
      %c3_i32_526 = arith.constant 3 : i32
      %678 = arith.muli %677, %c3_i32_526 : i32
      %c1_i32_527 = arith.constant 1 : i32
      %679 = arith.addi %678, %c1_i32_527 : i32
      %680 = arith.index_cast %679 : i32 to index
      %681 = memref.load %arg6[%680] : memref<756xf32, #tpu.memory_space<smem>>
      %c5_528 = arith.constant 5 : index
      %c1_529 = arith.constant 1 : index
      %c1_530 = arith.constant 1 : index
      %c0_531 = arith.constant 0 : index
      %682 = vector.load %arg12[%c5_528, %c1_529, %c1_530, %c0_531] : memref<7x6x6x128xf32, #tpu.memory_space<vmem>>, vector<1x4x4x128xf32>
      %683 = vector.shape_cast %682 : vector<1x4x4x128xf32> to vector<4x4x128xf32>
      %684 = vector.broadcast %681 : f32 to vector<4x4x128xf32>
      %685 = arith.mulf %683, %684 : vector<4x4x128xf32>
      %686 = arith.addf %673, %685 : vector<4x4x128xf32>
      %c7_i32_532 = arith.constant 7 : i32
      %687 = arith.muli %arg15, %c7_i32_532 : i32
      %c5_i32_533 = arith.constant 5 : i32
      %688 = arith.addi %687, %c5_i32_533 : i32
      %c3_i32_534 = arith.constant 3 : i32
      %689 = arith.muli %688, %c3_i32_534 : i32
      %c1_i32_535 = arith.constant 1 : i32
      %690 = arith.addi %689, %c1_i32_535 : i32
      %c3_i32_536 = arith.constant 3 : i32
      %691 = arith.muli %690, %c3_i32_536 : i32
      %c2_i32_537 = arith.constant 2 : i32
      %692 = arith.addi %691, %c2_i32_537 : i32
      %693 = arith.index_cast %692 : i32 to index
      %694 = memref.load %arg6[%693] : memref<756xf32, #tpu.memory_space<smem>>
      %c5_538 = arith.constant 5 : index
      %c1_539 = arith.constant 1 : index
      %c2_540 = arith.constant 2 : index
      %c0_541 = arith.constant 0 : index
      %695 = vector.load %arg12[%c5_538, %c1_539, %c2_540, %c0_541] : memref<7x6x6x128xf32, #tpu.memory_space<vmem>>, vector<1x4x4x128xf32>
      %696 = vector.shape_cast %695 : vector<1x4x4x128xf32> to vector<4x4x128xf32>
      %697 = vector.broadcast %694 : f32 to vector<4x4x128xf32>
      %698 = arith.mulf %696, %697 : vector<4x4x128xf32>
      %699 = arith.addf %686, %698 : vector<4x4x128xf32>
      %c7_i32_542 = arith.constant 7 : i32
      %700 = arith.muli %arg15, %c7_i32_542 : i32
      %c5_i32_543 = arith.constant 5 : i32
      %701 = arith.addi %700, %c5_i32_543 : i32
      %c3_i32_544 = arith.constant 3 : i32
      %702 = arith.muli %701, %c3_i32_544 : i32
      %c2_i32_545 = arith.constant 2 : i32
      %703 = arith.addi %702, %c2_i32_545 : i32
      %c3_i32_546 = arith.constant 3 : i32
      %704 = arith.muli %703, %c3_i32_546 : i32
      %c0_i32_547 = arith.constant 0 : i32
      %705 = arith.addi %704, %c0_i32_547 : i32
      %706 = arith.index_cast %705 : i32 to index
      %707 = memref.load %arg6[%706] : memref<756xf32, #tpu.memory_space<smem>>
      %c5_548 = arith.constant 5 : index
      %c2_549 = arith.constant 2 : index
      %c0_550 = arith.constant 0 : index
      %c0_551 = arith.constant 0 : index
      %708 = vector.load %arg12[%c5_548, %c2_549, %c0_550, %c0_551] : memref<7x6x6x128xf32, #tpu.memory_space<vmem>>, vector<1x4x4x128xf32>
      %709 = vector.shape_cast %708 : vector<1x4x4x128xf32> to vector<4x4x128xf32>
      %710 = vector.broadcast %707 : f32 to vector<4x4x128xf32>
      %711 = arith.mulf %709, %710 : vector<4x4x128xf32>
      %712 = arith.addf %699, %711 : vector<4x4x128xf32>
      %c7_i32_552 = arith.constant 7 : i32
      %713 = arith.muli %arg15, %c7_i32_552 : i32
      %c5_i32_553 = arith.constant 5 : i32
      %714 = arith.addi %713, %c5_i32_553 : i32
      %c3_i32_554 = arith.constant 3 : i32
      %715 = arith.muli %714, %c3_i32_554 : i32
      %c2_i32_555 = arith.constant 2 : i32
      %716 = arith.addi %715, %c2_i32_555 : i32
      %c3_i32_556 = arith.constant 3 : i32
      %717 = arith.muli %716, %c3_i32_556 : i32
      %c1_i32_557 = arith.constant 1 : i32
      %718 = arith.addi %717, %c1_i32_557 : i32
      %719 = arith.index_cast %718 : i32 to index
      %720 = memref.load %arg6[%719] : memref<756xf32, #tpu.memory_space<smem>>
      %c5_558 = arith.constant 5 : index
      %c2_559 = arith.constant 2 : index
      %c1_560 = arith.constant 1 : index
      %c0_561 = arith.constant 0 : index
      %721 = vector.load %arg12[%c5_558, %c2_559, %c1_560, %c0_561] : memref<7x6x6x128xf32, #tpu.memory_space<vmem>>, vector<1x4x4x128xf32>
      %722 = vector.shape_cast %721 : vector<1x4x4x128xf32> to vector<4x4x128xf32>
      %723 = vector.broadcast %720 : f32 to vector<4x4x128xf32>
      %724 = arith.mulf %722, %723 : vector<4x4x128xf32>
      %725 = arith.addf %712, %724 : vector<4x4x128xf32>
      %c7_i32_562 = arith.constant 7 : i32
      %726 = arith.muli %arg15, %c7_i32_562 : i32
      %c5_i32_563 = arith.constant 5 : i32
      %727 = arith.addi %726, %c5_i32_563 : i32
      %c3_i32_564 = arith.constant 3 : i32
      %728 = arith.muli %727, %c3_i32_564 : i32
      %c2_i32_565 = arith.constant 2 : i32
      %729 = arith.addi %728, %c2_i32_565 : i32
      %c3_i32_566 = arith.constant 3 : i32
      %730 = arith.muli %729, %c3_i32_566 : i32
      %c2_i32_567 = arith.constant 2 : i32
      %731 = arith.addi %730, %c2_i32_567 : i32
      %732 = arith.index_cast %731 : i32 to index
      %733 = memref.load %arg6[%732] : memref<756xf32, #tpu.memory_space<smem>>
      %c5_568 = arith.constant 5 : index
      %c2_569 = arith.constant 2 : index
      %c2_570 = arith.constant 2 : index
      %c0_571 = arith.constant 0 : index
      %734 = vector.load %arg12[%c5_568, %c2_569, %c2_570, %c0_571] : memref<7x6x6x128xf32, #tpu.memory_space<vmem>>, vector<1x4x4x128xf32>
      %735 = vector.shape_cast %734 : vector<1x4x4x128xf32> to vector<4x4x128xf32>
      %736 = vector.broadcast %733 : f32 to vector<4x4x128xf32>
      %737 = arith.mulf %735, %736 : vector<4x4x128xf32>
      %738 = arith.addf %725, %737 : vector<4x4x128xf32>
      %c7_i32_572 = arith.constant 7 : i32
      %739 = arith.muli %arg15, %c7_i32_572 : i32
      %c6_i32_573 = arith.constant 6 : i32
      %740 = arith.addi %739, %c6_i32_573 : i32
      %c3_i32_574 = arith.constant 3 : i32
      %741 = arith.muli %740, %c3_i32_574 : i32
      %c0_i32_575 = arith.constant 0 : i32
      %742 = arith.addi %741, %c0_i32_575 : i32
      %c3_i32_576 = arith.constant 3 : i32
      %743 = arith.muli %742, %c3_i32_576 : i32
      %c0_i32_577 = arith.constant 0 : i32
      %744 = arith.addi %743, %c0_i32_577 : i32
      %745 = arith.index_cast %744 : i32 to index
      %746 = memref.load %arg6[%745] : memref<756xf32, #tpu.memory_space<smem>>
      %c6_578 = arith.constant 6 : index
      %c0_579 = arith.constant 0 : index
      %c0_580 = arith.constant 0 : index
      %c0_581 = arith.constant 0 : index
      %747 = vector.load %arg12[%c6_578, %c0_579, %c0_580, %c0_581] : memref<7x6x6x128xf32, #tpu.memory_space<vmem>>, vector<1x4x4x128xf32>
      %748 = vector.shape_cast %747 : vector<1x4x4x128xf32> to vector<4x4x128xf32>
      %749 = vector.broadcast %746 : f32 to vector<4x4x128xf32>
      %750 = arith.mulf %748, %749 : vector<4x4x128xf32>
      %751 = arith.addf %738, %750 : vector<4x4x128xf32>
      %c7_i32_582 = arith.constant 7 : i32
      %752 = arith.muli %arg15, %c7_i32_582 : i32
      %c6_i32_583 = arith.constant 6 : i32
      %753 = arith.addi %752, %c6_i32_583 : i32
      %c3_i32_584 = arith.constant 3 : i32
      %754 = arith.muli %753, %c3_i32_584 : i32
      %c0_i32_585 = arith.constant 0 : i32
      %755 = arith.addi %754, %c0_i32_585 : i32
      %c3_i32_586 = arith.constant 3 : i32
      %756 = arith.muli %755, %c3_i32_586 : i32
      %c1_i32_587 = arith.constant 1 : i32
      %757 = arith.addi %756, %c1_i32_587 : i32
      %758 = arith.index_cast %757 : i32 to index
      %759 = memref.load %arg6[%758] : memref<756xf32, #tpu.memory_space<smem>>
      %c6_588 = arith.constant 6 : index
      %c0_589 = arith.constant 0 : index
      %c1_590 = arith.constant 1 : index
      %c0_591 = arith.constant 0 : index
      %760 = vector.load %arg12[%c6_588, %c0_589, %c1_590, %c0_591] : memref<7x6x6x128xf32, #tpu.memory_space<vmem>>, vector<1x4x4x128xf32>
      %761 = vector.shape_cast %760 : vector<1x4x4x128xf32> to vector<4x4x128xf32>
      %762 = vector.broadcast %759 : f32 to vector<4x4x128xf32>
      %763 = arith.mulf %761, %762 : vector<4x4x128xf32>
      %764 = arith.addf %751, %763 : vector<4x4x128xf32>
      %c7_i32_592 = arith.constant 7 : i32
      %765 = arith.muli %arg15, %c7_i32_592 : i32
      %c6_i32_593 = arith.constant 6 : i32
      %766 = arith.addi %765, %c6_i32_593 : i32
      %c3_i32_594 = arith.constant 3 : i32
      %767 = arith.muli %766, %c3_i32_594 : i32
      %c0_i32_595 = arith.constant 0 : i32
      %768 = arith.addi %767, %c0_i32_595 : i32
      %c3_i32_596 = arith.constant 3 : i32
      %769 = arith.muli %768, %c3_i32_596 : i32
      %c2_i32_597 = arith.constant 2 : i32
      %770 = arith.addi %769, %c2_i32_597 : i32
      %771 = arith.index_cast %770 : i32 to index
      %772 = memref.load %arg6[%771] : memref<756xf32, #tpu.memory_space<smem>>
      %c6_598 = arith.constant 6 : index
      %c0_599 = arith.constant 0 : index
      %c2_600 = arith.constant 2 : index
      %c0_601 = arith.constant 0 : index
      %773 = vector.load %arg12[%c6_598, %c0_599, %c2_600, %c0_601] : memref<7x6x6x128xf32, #tpu.memory_space<vmem>>, vector<1x4x4x128xf32>
      %774 = vector.shape_cast %773 : vector<1x4x4x128xf32> to vector<4x4x128xf32>
      %775 = vector.broadcast %772 : f32 to vector<4x4x128xf32>
      %776 = arith.mulf %774, %775 : vector<4x4x128xf32>
      %777 = arith.addf %764, %776 : vector<4x4x128xf32>
      %c7_i32_602 = arith.constant 7 : i32
      %778 = arith.muli %arg15, %c7_i32_602 : i32
      %c6_i32_603 = arith.constant 6 : i32
      %779 = arith.addi %778, %c6_i32_603 : i32
      %c3_i32_604 = arith.constant 3 : i32
      %780 = arith.muli %779, %c3_i32_604 : i32
      %c1_i32_605 = arith.constant 1 : i32
      %781 = arith.addi %780, %c1_i32_605 : i32
      %c3_i32_606 = arith.constant 3 : i32
      %782 = arith.muli %781, %c3_i32_606 : i32
      %c0_i32_607 = arith.constant 0 : i32
      %783 = arith.addi %782, %c0_i32_607 : i32
      %784 = arith.index_cast %783 : i32 to index
      %785 = memref.load %arg6[%784] : memref<756xf32, #tpu.memory_space<smem>>
      %c6_608 = arith.constant 6 : index
      %c1_609 = arith.constant 1 : index
      %c0_610 = arith.constant 0 : index
      %c0_611 = arith.constant 0 : index
      %786 = vector.load %arg12[%c6_608, %c1_609, %c0_610, %c0_611] : memref<7x6x6x128xf32, #tpu.memory_space<vmem>>, vector<1x4x4x128xf32>
      %787 = vector.shape_cast %786 : vector<1x4x4x128xf32> to vector<4x4x128xf32>
      %788 = vector.broadcast %785 : f32 to vector<4x4x128xf32>
      %789 = arith.mulf %787, %788 : vector<4x4x128xf32>
      %790 = arith.addf %777, %789 : vector<4x4x128xf32>
      %c7_i32_612 = arith.constant 7 : i32
      %791 = arith.muli %arg15, %c7_i32_612 : i32
      %c6_i32_613 = arith.constant 6 : i32
      %792 = arith.addi %791, %c6_i32_613 : i32
      %c3_i32_614 = arith.constant 3 : i32
      %793 = arith.muli %792, %c3_i32_614 : i32
      %c1_i32_615 = arith.constant 1 : i32
      %794 = arith.addi %793, %c1_i32_615 : i32
      %c3_i32_616 = arith.constant 3 : i32
      %795 = arith.muli %794, %c3_i32_616 : i32
      %c1_i32_617 = arith.constant 1 : i32
      %796 = arith.addi %795, %c1_i32_617 : i32
      %797 = arith.index_cast %796 : i32 to index
      %798 = memref.load %arg6[%797] : memref<756xf32, #tpu.memory_space<smem>>
      %c6_618 = arith.constant 6 : index
      %c1_619 = arith.constant 1 : index
      %c1_620 = arith.constant 1 : index
      %c0_621 = arith.constant 0 : index
      %799 = vector.load %arg12[%c6_618, %c1_619, %c1_620, %c0_621] : memref<7x6x6x128xf32, #tpu.memory_space<vmem>>, vector<1x4x4x128xf32>
      %800 = vector.shape_cast %799 : vector<1x4x4x128xf32> to vector<4x4x128xf32>
      %801 = vector.broadcast %798 : f32 to vector<4x4x128xf32>
      %802 = arith.mulf %800, %801 : vector<4x4x128xf32>
      %803 = arith.addf %790, %802 : vector<4x4x128xf32>
      %c7_i32_622 = arith.constant 7 : i32
      %804 = arith.muli %arg15, %c7_i32_622 : i32
      %c6_i32_623 = arith.constant 6 : i32
      %805 = arith.addi %804, %c6_i32_623 : i32
      %c3_i32_624 = arith.constant 3 : i32
      %806 = arith.muli %805, %c3_i32_624 : i32
      %c1_i32_625 = arith.constant 1 : i32
      %807 = arith.addi %806, %c1_i32_625 : i32
      %c3_i32_626 = arith.constant 3 : i32
      %808 = arith.muli %807, %c3_i32_626 : i32
      %c2_i32_627 = arith.constant 2 : i32
      %809 = arith.addi %808, %c2_i32_627 : i32
      %810 = arith.index_cast %809 : i32 to index
      %811 = memref.load %arg6[%810] : memref<756xf32, #tpu.memory_space<smem>>
      %c6_628 = arith.constant 6 : index
      %c1_629 = arith.constant 1 : index
      %c2_630 = arith.constant 2 : index
      %c0_631 = arith.constant 0 : index
      %812 = vector.load %arg12[%c6_628, %c1_629, %c2_630, %c0_631] : memref<7x6x6x128xf32, #tpu.memory_space<vmem>>, vector<1x4x4x128xf32>
      %813 = vector.shape_cast %812 : vector<1x4x4x128xf32> to vector<4x4x128xf32>
      %814 = vector.broadcast %811 : f32 to vector<4x4x128xf32>
      %815 = arith.mulf %813, %814 : vector<4x4x128xf32>
      %816 = arith.addf %803, %815 : vector<4x4x128xf32>
      %c7_i32_632 = arith.constant 7 : i32
      %817 = arith.muli %arg15, %c7_i32_632 : i32
      %c6_i32_633 = arith.constant 6 : i32
      %818 = arith.addi %817, %c6_i32_633 : i32
      %c3_i32_634 = arith.constant 3 : i32
      %819 = arith.muli %818, %c3_i32_634 : i32
      %c2_i32_635 = arith.constant 2 : i32
      %820 = arith.addi %819, %c2_i32_635 : i32
      %c3_i32_636 = arith.constant 3 : i32
      %821 = arith.muli %820, %c3_i32_636 : i32
      %c0_i32_637 = arith.constant 0 : i32
      %822 = arith.addi %821, %c0_i32_637 : i32
      %823 = arith.index_cast %822 : i32 to index
      %824 = memref.load %arg6[%823] : memref<756xf32, #tpu.memory_space<smem>>
      %c6_638 = arith.constant 6 : index
      %c2_639 = arith.constant 2 : index
      %c0_640 = arith.constant 0 : index
      %c0_641 = arith.constant 0 : index
      %825 = vector.load %arg12[%c6_638, %c2_639, %c0_640, %c0_641] : memref<7x6x6x128xf32, #tpu.memory_space<vmem>>, vector<1x4x4x128xf32>
      %826 = vector.shape_cast %825 : vector<1x4x4x128xf32> to vector<4x4x128xf32>
      %827 = vector.broadcast %824 : f32 to vector<4x4x128xf32>
      %828 = arith.mulf %826, %827 : vector<4x4x128xf32>
      %829 = arith.addf %816, %828 : vector<4x4x128xf32>
      %c7_i32_642 = arith.constant 7 : i32
      %830 = arith.muli %arg15, %c7_i32_642 : i32
      %c6_i32_643 = arith.constant 6 : i32
      %831 = arith.addi %830, %c6_i32_643 : i32
      %c3_i32_644 = arith.constant 3 : i32
      %832 = arith.muli %831, %c3_i32_644 : i32
      %c2_i32_645 = arith.constant 2 : i32
      %833 = arith.addi %832, %c2_i32_645 : i32
      %c3_i32_646 = arith.constant 3 : i32
      %834 = arith.muli %833, %c3_i32_646 : i32
      %c1_i32_647 = arith.constant 1 : i32
      %835 = arith.addi %834, %c1_i32_647 : i32
      %836 = arith.index_cast %835 : i32 to index
      %837 = memref.load %arg6[%836] : memref<756xf32, #tpu.memory_space<smem>>
      %c6_648 = arith.constant 6 : index
      %c2_649 = arith.constant 2 : index
      %c1_650 = arith.constant 1 : index
      %c0_651 = arith.constant 0 : index
      %838 = vector.load %arg12[%c6_648, %c2_649, %c1_650, %c0_651] : memref<7x6x6x128xf32, #tpu.memory_space<vmem>>, vector<1x4x4x128xf32>
      %839 = vector.shape_cast %838 : vector<1x4x4x128xf32> to vector<4x4x128xf32>
      %840 = vector.broadcast %837 : f32 to vector<4x4x128xf32>
      %841 = arith.mulf %839, %840 : vector<4x4x128xf32>
      %842 = arith.addf %829, %841 : vector<4x4x128xf32>
      %c7_i32_652 = arith.constant 7 : i32
      %843 = arith.muli %arg15, %c7_i32_652 : i32
      %c6_i32_653 = arith.constant 6 : i32
      %844 = arith.addi %843, %c6_i32_653 : i32
      %c3_i32_654 = arith.constant 3 : i32
      %845 = arith.muli %844, %c3_i32_654 : i32
      %c2_i32_655 = arith.constant 2 : i32
      %846 = arith.addi %845, %c2_i32_655 : i32
      %c3_i32_656 = arith.constant 3 : i32
      %847 = arith.muli %846, %c3_i32_656 : i32
      %c2_i32_657 = arith.constant 2 : i32
      %848 = arith.addi %847, %c2_i32_657 : i32
      %849 = arith.index_cast %848 : i32 to index
      %850 = memref.load %arg6[%849] : memref<756xf32, #tpu.memory_space<smem>>
      %c6_658 = arith.constant 6 : index
      %c2_659 = arith.constant 2 : index
      %c2_660 = arith.constant 2 : index
      %c0_661 = arith.constant 0 : index
      %851 = vector.load %arg12[%c6_658, %c2_659, %c2_660, %c0_661] : memref<7x6x6x128xf32, #tpu.memory_space<vmem>>, vector<1x4x4x128xf32>
      %852 = vector.shape_cast %851 : vector<1x4x4x128xf32> to vector<4x4x128xf32>
      %853 = vector.broadcast %850 : f32 to vector<4x4x128xf32>
      %854 = arith.mulf %852, %853 : vector<4x4x128xf32>
      %855 = arith.addf %842, %854 : vector<4x4x128xf32>
      %cst_662 = arith.constant 0.000000e+00 : f32
      %856 = vector.broadcast %cst_662 : f32 to vector<4x4x128xf32>
      %857 = arith.maximumf %855, %856 : vector<4x4x128xf32>
      %858 = vector.extract_strided_slice %857 {offsets = [0, 0, 0], sizes = [1, 4, 128], strides = [1, 1, 1]} : vector<4x4x128xf32> to vector<1x4x128xf32>
      %859 = vector.shape_cast %858 : vector<1x4x128xf32> to vector<4x128xf32>
      %860 = arith.index_cast %arg15 : i32 to index
      %c0_663 = arith.constant 0 : index
      %c0_664 = arith.constant 0 : index
      %861 = vector.load %arg13[%860, %c0_663, %c0_664] : memref<12x16x128xf32, #tpu.memory_space<vmem>>, vector<1x4x128xf32>
      %862 = vector.shape_cast %861 : vector<1x4x128xf32> to vector<4x128xf32>
      %863 = vector.shape_cast %859 : vector<4x128xf32> to vector<1x4x128xf32>
      tpu.vector_store %arg13[%860, %c0_663, %c0_664], %863 {strides = array<i32>} : memref<12x16x128xf32, #tpu.memory_space<vmem>>, vector<1x4x128xf32>,
      %864 = vector.extract_strided_slice %857 {offsets = [1, 0, 0], sizes = [1, 4, 128], strides = [1, 1, 1]} : vector<4x4x128xf32> to vector<1x4x128xf32>
      %865 = vector.shape_cast %864 : vector<1x4x128xf32> to vector<4x128xf32>
      %866 = arith.index_cast %arg15 : i32 to index
      %c4_665 = arith.constant 4 : index
      %c0_666 = arith.constant 0 : index
      %867 = vector.load %arg13[%866, %c4_665, %c0_666] : memref<12x16x128xf32, #tpu.memory_space<vmem>>, vector<1x4x128xf32>
      %868 = vector.shape_cast %867 : vector<1x4x128xf32> to vector<4x128xf32>
      %869 = vector.shape_cast %865 : vector<4x128xf32> to vector<1x4x128xf32>
      tpu.vector_store %arg13[%866, %c4_665, %c0_666], %869 {strides = array<i32>} : memref<12x16x128xf32, #tpu.memory_space<vmem>>, vector<1x4x128xf32>,
      %870 = vector.extract_strided_slice %857 {offsets = [2, 0, 0], sizes = [1, 4, 128], strides = [1, 1, 1]} : vector<4x4x128xf32> to vector<1x4x128xf32>
      %871 = vector.shape_cast %870 : vector<1x4x128xf32> to vector<4x128xf32>
      %872 = arith.index_cast %arg15 : i32 to index
      %c8_667 = arith.constant 8 : index
      %c0_668 = arith.constant 0 : index
      %873 = vector.load %arg13[%872, %c8_667, %c0_668] : memref<12x16x128xf32, #tpu.memory_space<vmem>>, vector<1x4x128xf32>
      %874 = vector.shape_cast %873 : vector<1x4x128xf32> to vector<4x128xf32>
      %875 = vector.shape_cast %871 : vector<4x128xf32> to vector<1x4x128xf32>
      tpu.vector_store %arg13[%872, %c8_667, %c0_668], %875 {strides = array<i32>} : memref<12x16x128xf32, #tpu.memory_space<vmem>>, vector<1x4x128xf32>,
      %876 = vector.extract_strided_slice %857 {offsets = [3, 0, 0], sizes = [1, 4, 128], strides = [1, 1, 1]} : vector<4x4x128xf32> to vector<1x4x128xf32>
      %877 = vector.shape_cast %876 : vector<1x4x128xf32> to vector<4x128xf32>
      %878 = arith.index_cast %arg15 : i32 to index
      %c12 = arith.constant 12 : index
      %c0_669 = arith.constant 0 : index
      %879 = vector.load %arg13[%878, %c12, %c0_669] : memref<12x16x128xf32, #tpu.memory_space<vmem>>, vector<1x4x128xf32>
      %880 = vector.shape_cast %879 : vector<1x4x128xf32> to vector<4x128xf32>
      %881 = vector.shape_cast %877 : vector<4x128xf32> to vector<1x4x128xf32>
      tpu.vector_store %arg13[%878, %c12, %c0_669], %881 {strides = array<i32>} : memref<12x16x128xf32, #tpu.memory_space<vmem>>, vector<1x4x128xf32>,
    }
    %c12_i32_6 = arith.constant 12 : i32
    %c0 = arith.constant 0 : index
    %c0_7 = arith.constant 0 : index
    %c0_8 = arith.constant 0 : index
    %3 = vector.load %arg13[%c0, %c0_7, %c0_8] : memref<12x16x128xf32, #tpu.memory_space<vmem>>, vector<1x16x128xf32>
    %4 = vector.shape_cast %3 : vector<1x16x128xf32> to vector<16x128xf32>
    %c1 = arith.constant 1 : index
    %c0_9 = arith.constant 0 : index
    %c0_10 = arith.constant 0 : index
    %5 = vector.load %arg13[%c1, %c0_9, %c0_10] : memref<12x16x128xf32, #tpu.memory_space<vmem>>, vector<1x16x128xf32>
    %6 = vector.shape_cast %5 : vector<1x16x128xf32> to vector<16x128xf32>
    %c2 = arith.constant 2 : index
    %c0_11 = arith.constant 0 : index
    %c0_12 = arith.constant 0 : index
    %7 = vector.load %arg13[%c2, %c0_11, %c0_12] : memref<12x16x128xf32, #tpu.memory_space<vmem>>, vector<1x16x128xf32>
    %8 = vector.shape_cast %7 : vector<1x16x128xf32> to vector<16x128xf32>
    %c3 = arith.constant 3 : index
    %c0_13 = arith.constant 0 : index
    %c0_14 = arith.constant 0 : index
    %9 = vector.load %arg13[%c3, %c0_13, %c0_14] : memref<12x16x128xf32, #tpu.memory_space<vmem>>, vector<1x16x128xf32>
    %10 = vector.shape_cast %9 : vector<1x16x128xf32> to vector<16x128xf32>
    %c4 = arith.constant 4 : index
    %c0_15 = arith.constant 0 : index
    %c0_16 = arith.constant 0 : index
    %11 = vector.load %arg13[%c4, %c0_15, %c0_16] : memref<12x16x128xf32, #tpu.memory_space<vmem>>, vector<1x16x128xf32>
    %12 = vector.shape_cast %11 : vector<1x16x128xf32> to vector<16x128xf32>
    %c5 = arith.constant 5 : index
    %c0_17 = arith.constant 0 : index
    %c0_18 = arith.constant 0 : index
    %13 = vector.load %arg13[%c5, %c0_17, %c0_18] : memref<12x16x128xf32, #tpu.memory_space<vmem>>, vector<1x16x128xf32>
    %14 = vector.shape_cast %13 : vector<1x16x128xf32> to vector<16x128xf32>
    %c6 = arith.constant 6 : index
    %c0_19 = arith.constant 0 : index
    %c0_20 = arith.constant 0 : index
    %15 = vector.load %arg13[%c6, %c0_19, %c0_20] : memref<12x16x128xf32, #tpu.memory_space<vmem>>, vector<1x16x128xf32>
    %16 = vector.shape_cast %15 : vector<1x16x128xf32> to vector<16x128xf32>
    %c7 = arith.constant 7 : index
    %c0_21 = arith.constant 0 : index
    %c0_22 = arith.constant 0 : index
    %17 = vector.load %arg13[%c7, %c0_21, %c0_22] : memref<12x16x128xf32, #tpu.memory_space<vmem>>, vector<1x16x128xf32>
    %18 = vector.shape_cast %17 : vector<1x16x128xf32> to vector<16x128xf32>
    %c8 = arith.constant 8 : index
    %c0_23 = arith.constant 0 : index
    %c0_24 = arith.constant 0 : index
    %19 = vector.load %arg13[%c8, %c0_23, %c0_24] : memref<12x16x128xf32, #tpu.memory_space<vmem>>, vector<1x16x128xf32>
    %20 = vector.shape_cast %19 : vector<1x16x128xf32> to vector<16x128xf32>
    %c9 = arith.constant 9 : index
    %c0_25 = arith.constant 0 : index
    %c0_26 = arith.constant 0 : index
    %21 = vector.load %arg13[%c9, %c0_25, %c0_26] : memref<12x16x128xf32, #tpu.memory_space<vmem>>, vector<1x16x128xf32>
    %22 = vector.shape_cast %21 : vector<1x16x128xf32> to vector<16x128xf32>
    %c10 = arith.constant 10 : index
    %c0_27 = arith.constant 0 : index
    %c0_28 = arith.constant 0 : index
    %23 = vector.load %arg13[%c10, %c0_27, %c0_28] : memref<12x16x128xf32, #tpu.memory_space<vmem>>, vector<1x16x128xf32>
    %24 = vector.shape_cast %23 : vector<1x16x128xf32> to vector<16x128xf32>
    %c11 = arith.constant 11 : index
    %c0_29 = arith.constant 0 : index
    %c0_30 = arith.constant 0 : index
    %25 = vector.load %arg13[%c11, %c0_29, %c0_30] : memref<12x16x128xf32, #tpu.memory_space<vmem>>, vector<1x16x128xf32>
    %26 = vector.shape_cast %25 : vector<1x16x128xf32> to vector<16x128xf32>
    %27 = tpu.concatenate %4, %6, %8, %10, %12, %14, %16, %18, %20, %22, %24, %26 in 0 : vector<16x128xf32>, vector<16x128xf32>, vector<16x128xf32>, vector<16x128xf32>, vector<16x128xf32>, vector<16x128xf32>, vector<16x128xf32>, vector<16x128xf32>, vector<16x128xf32>, vector<16x128xf32>, vector<16x128xf32>, vector<16x128xf32> -> vector<192x128xf32>
    %c0_31 = arith.constant 0 : index
    %c0_32 = arith.constant 0 : index
    %28 = vector.load %arg8[%c0_31, %c0_32] : memref<10x192xf32, #tpu.memory_space<vmem>>, vector<10x192xf32>
    %cst = arith.constant dense<0.000000e+00> : vector<10x128xf32>
    %29 = tpu.matmul %28, %27, %cst {dimension_numbers = #tpu.dot_dimension_numbers<[1], [0], [0], [1], [0, 0, 1, 1], [], []>} : vector<10x192xf32>, vector<192x128xf32>, vector<10x128xf32> -> vector<10x128xf32>
    %c0_33 = arith.constant 0 : index
    %c0_34 = arith.constant 0 : index
    %30 = vector.load %arg9[%c0_33, %c0_34] : memref<10x1xf32, #tpu.memory_space<vmem>>, vector<10x1xf32>
    %31 = vector.broadcast %30 : vector<10x1xf32> to vector<10x128xf32>
    %32 = arith.addf %29, %31 : vector<10x128xf32>
    %c0_35 = arith.constant 0 : index
    %c0_36 = arith.constant 0 : index
    %33 = vector.load %arg10[%c0_35, %c0_36] : memref<10x128xf32, #tpu.memory_space<vmem>>, vector<10x128xf32>
    tpu.vector_store %arg10[%c0_35, %c0_36], %32 {strides = array<i32>} : memref<10x128xf32, #tpu.memory_space<vmem>>, vector<10x128xf32>,
    return
  }
  func.func @transform_0(%arg0: i32) -> (i32, i32, i32, i32) {
    %c0_i32 = arith.constant 0 : i32
    %c0_i32_0 = arith.constant 0 : i32
    %c0_i32_1 = arith.constant 0 : i32
    %c0_i32_2 = arith.constant 0 : i32
    return %c0_i32, %c0_i32_0, %c0_i32_1, %arg0 : i32, i32, i32, i32
  }
  func.func @transform_1(%arg0: i32) -> i32 {
    %c0_i32 = arith.constant 0 : i32
    %c0_i32_0 = arith.constant 0 : i32
    return %c0_i32 : i32
  }
  func.func @transform_2(%arg0: i32) -> i32 {
    %c0_i32 = arith.constant 0 : i32
    %c0_i32_0 = arith.constant 0 : i32
    return %c0_i32 : i32
  }
  func.func @transform_3(%arg0: i32) -> i32 {
    %c0_i32 = arith.constant 0 : i32
    %c0_i32_0 = arith.constant 0 : i32
    return %c0_i32 : i32
  }
  func.func @transform_4(%arg0: i32) -> i32 {
    %c0_i32 = arith.constant 0 : i32
    %c0_i32_0 = arith.constant 0 : i32
    return %c0_i32 : i32
  }
  func.func @transform_5(%arg0: i32) -> i32 {
    %c0_i32 = arith.constant 0 : i32
    %c0_i32_0 = arith.constant 0 : i32
    return %c0_i32 : i32
  }
  func.func @transform_6(%arg0: i32) -> i32 {
    %c0_i32 = arith.constant 0 : i32
    %c0_i32_0 = arith.constant 0 : i32
    return %c0_i32 : i32
  }
  func.func @transform_7(%arg0: i32) -> (i32, i32) {
    %c0_i32 = arith.constant 0 : i32
    %c0_i32_0 = arith.constant 0 : i32
    %c0_i32_1 = arith.constant 0 : i32
    return %c0_i32, %c0_i32_0 : i32, i32
  }
  func.func @transform_8(%arg0: i32) -> (i32, i32) {
    %c0_i32 = arith.constant 0 : i32
    %c0_i32_0 = arith.constant 0 : i32
    %c0_i32_1 = arith.constant 0 : i32
    return %c0_i32, %c0_i32_0 : i32, i32
  }
  func.func @transform_9(%arg0: i32) -> (i32, i32) {
    %c0_i32 = arith.constant 0 : i32
    %c0_i32_0 = arith.constant 0 : i32
    return %c0_i32, %arg0 : i32, i32
  }
}

</mosaic_0001>

<llo_original>
// kernel: net_forward.1
$region0: #{net_forward.1}
  #allocation0 [shape = 'u32[]', space=smem, size = 0x4, offset = 0x4, fixed_abs, tag = 'smem constant byte address 0x4 - core index']
  #allocation1 [shape = 'u32[144,128]{1,0:T(1,128)}', space=vmem, size = 0x12000, scoped, tag = 'internal scratch']
  #allocation2 [shape = 'f32[5,15,15,128]{3,2,1,0:T(8,128)}', space=vmem, size = 0x96000, scoped, tag = 'scratch operand']
  #allocation3 [shape = 'f32[7,6,6,128]{3,2,1,0:T(8,128)}', space=vmem, size = 0x2a000, scoped, tag = 'scratch operand']
  #allocation4 [shape = 'f32[12,16,128]{2,1,0:T(8,128)}', space=vmem, size = 0x18000, scoped, tag = 'scratch operand']
  #allocation5 [shape = 'f32[30,128]{1,0:T(8,128)}', space=vmem, size = 0x4000, scoped, tag = 'scratch operand']
  %s0 = inlined_call_operand.vmem [shape: f32[3,32,32,128], index: 0, kind: input, shape index: {}]
  %s1 = inlined_call_operand.vmem [shape: f32[135], index: 1, kind: input, shape index: {}]
  %s2 = inlined_call_operand.vmem [shape: f32[5], index: 2, kind: input, shape index: {}]
  %s3 = inlined_call_operand.vmem [shape: f32[315], index: 3, kind: input, shape index: {}]
  %s4 = inlined_call_operand.vmem [shape: f32[7], index: 4, kind: input, shape index: {}]
  %s5 = inlined_call_operand.vmem [shape: f32[756], index: 5, kind: input, shape index: {}]
  %s6 = inlined_call_operand.vmem [shape: f32[12], index: 6, kind: input, shape index: {}]
  %s7 = inlined_call_operand.vmem [shape: f32[10,192], index: 7, kind: input, shape index: {}]
  %s8 = inlined_call_operand.vmem [shape: f32[10,1], index: 8, kind: input, shape index: {}]
  %s9 = inlined_call_operand.vmem [shape: f32[10,128], index: 9, kind: output, shape index: {}]
  %s10 = sld [smem:[#allocation0]]
  $region105: #{net_forward.1} parent=0
    _
  %s12 = ssub.s32 1, %s10
  %s13 = scalar_select 0, %s12, %s10
  $region1: #{net_forward.1} parent=0
    #allocation6 [shape = 'u8[1024]{0}', space=smem, size = 0x400, scoped, tag = 'input window, operand 1, single buffered']
    #allocation7 [shape = 's32[1]{0}', space=sflag, size = 0x4, scoped, tag = 'scoped memory for net_forward.1']
    #allocation8 [shape = 'u8[512]{0}', space=smem, size = 0x200, scoped, tag = 'input window, operand 2, single buffered']
    #allocation9 [shape = 's32[1]{0}', space=sflag, size = 0x4, scoped, tag = 'scoped memory for net_forward.1']
    #allocation10 [shape = 'u8[1536]{0}', space=smem, size = 0x600, scoped, tag = 'input window, operand 3, single buffered']
    #allocation11 [shape = 'u8[512]{0}', space=smem, size = 0x200, scoped, tag = 'input window, operand 4, single buffered']
    #allocation12 [shape = 's32[1]{0}', space=sflag, size = 0x4, scoped, tag = 'scoped memory for net_forward.1']
    #allocation13 [shape = 'u8[3072]{0}', space=smem, size = 0xc00, scoped, tag = 'input window, operand 5, single buffered']
    #allocation14 [shape = 'u8[512]{0}', space=smem, size = 0x200, scoped, tag = 'input window, operand 6, single buffered']
    #allocation15 [shape = 's32[1]{0}', space=sflag, size = 0x4, scoped, tag = 'scoped memory for net_forward.1']
    %14 = vsyncpa [#allocation7], 0
    %15 = vsyncpa [#allocation9], 0
    %16 = vsyncpa [#allocation12], 0
    %17 = vsyncpa [#allocation15], 0
    // Predicated region
    $region2: #{net_forward.1} parent=1 // pred_check
      _
    $region3: #{net_forward.1} parent=1 // pred_check_branch
      %19 = sbr.rel (0) target = $region5
    $region4: #{net_forward.1} parent=1 // pred_region
      _
    $region5: #{net_forward.1} parent=1 // pred_fallthru
      _
    // Predicated region
    $region6: #{net_forward.1} parent=1 // pred_check
      _
    $region7: #{net_forward.1} parent=1 // pred_check_branch
      %21 = sbr.rel (0) target = $region9
    $region8: #{net_forward.1} parent=1 // pred_region
      %s23 = ssub.s32 32, 32
      %24 = vsyncadd [#allocation7], %s23
      %s26 = sshll.u32 %s1, 4
      %s27 = int_to_ptr.vmem [resolvable:$true] %s26
      %29 = dma.vmem_to_smem %s27, 32, [#allocation6], [#allocation7]
    $region9: #{net_forward.1} parent=1 // pred_fallthru
      _
    // Predicated region
    $region10: #{net_forward.1} parent=1 // pred_check
      _
    $region11: #{net_forward.1} parent=1 // pred_check_branch
      %31 = sbr.rel (0) target = $region13
    $region12: #{net_forward.1} parent=1 // pred_region
      %s33 = ssub.s32 16, 16
      %34 = vsyncadd [#allocation9], %s33
      %s36 = sshll.u32 %s2, 4
      %s37 = int_to_ptr.vmem [resolvable:$true] %s36
      %39 = dma.vmem_to_smem %s37, 16, [#allocation8], [#allocation9]
    $region13: #{net_forward.1} parent=1 // pred_fallthru
      _
    // Predicated region
    $region14: #{net_forward.1} parent=1 // pred_check
      _
    $region15: #{net_forward.1} parent=1 // pred_check_branch
      %41 = sbr.rel (0) target = $region17
    $region16: #{net_forward.1} parent=1 // pred_region
      %s43 = ssub.s32 48, 48
      %44 = vsyncadd [#allocation9], %s43
      %s46 = sshll.u32 %s3, 4
      %s47 = int_to_ptr.vmem [resolvable:$true] %s46
      %49 = dma.vmem_to_smem %s47, 48, [#allocation10], [#allocation9]
    $region17: #{net_forward.1} parent=1 // pred_fallthru
      _
    // Predicated region
    $region18: #{net_forward.1} parent=1 // pred_check
      _
    $region19: #{net_forward.1} parent=1 // pred_check_branch
      %51 = sbr.rel (0) target = $region21
    $region20: #{net_forward.1} parent=1 // pred_region
      %s53 = ssub.s32 16, 16
      %54 = vsyncadd [#allocation12], %s53
      %s56 = sshll.u32 %s4, 4
      %s57 = int_to_ptr.vmem [resolvable:$true] %s56
      %59 = dma.vmem_to_smem %s57, 16, [#allocation11], [#allocation12]
    $region21: #{net_forward.1} parent=1 // pred_fallthru
      _
    // Predicated region
    $region22: #{net_forward.1} parent=1 // pred_check
      _
    $region23: #{net_forward.1} parent=1 // pred_check_branch
      %61 = sbr.rel (0) target = $region25
    $region24: #{net_forward.1} parent=1 // pred_region
      %s63 = ssub.s32 96, 96
      %64 = vsyncadd [#allocation12], %s63
      %s66 = sshll.u32 %s5, 4
      %s67 = int_to_ptr.vmem [resolvable:$true] %s66
      %69 = dma.vmem_to_smem %s67, 96, [#allocation13], [#allocation12]
    $region25: #{net_forward.1} parent=1 // pred_fallthru
      _
    // Predicated region
    $region26: #{net_forward.1} parent=1 // pred_check
      _
    $region27: #{net_forward.1} parent=1 // pred_check_branch
      %71 = sbr.rel (0) target = $region29
    $region28: #{net_forward.1} parent=1 // pred_region
      %s73 = ssub.s32 16, 16
      %74 = vsyncadd [#allocation15], %s73
      %s76 = sshll.u32 %s6, 4
      %s77 = int_to_ptr.vmem [resolvable:$true] %s76
      %79 = dma.vmem_to_smem %s77, 16, [#allocation14], [#allocation15]
    $region29: #{net_forward.1} parent=1 // pred_fallthru
      _
    // Predicated region
    $region30: #{net_forward.1} parent=1 // pred_check
      _
    $region31: #{net_forward.1} parent=1 // pred_check_branch
      %81 = sbr.rel (0) target = $region33
    $region32: #{net_forward.1} parent=1 // pred_region
      _
    $region33: #{net_forward.1} parent=1 // pred_fallthru
      _
    // Predicated region
    $region34: #{net_forward.1} parent=1 // pred_check
      _
    $region35: #{net_forward.1} parent=1 // pred_check_branch
      %83 = sbr.rel (0) target = $region37
    $region36: #{net_forward.1} parent=1 // pred_region
      _
    $region37: #{net_forward.1} parent=1 // pred_fallthru
      _
    // Predicated region
    $region38: #{net_forward.1} parent=1 // pred_check
      _
    $region39: #{net_forward.1} parent=1 // pred_check_branch
      %85 = sbr.rel (0) target = $region41
    $region40: #{net_forward.1} parent=1 // pred_region
      %86 = dma.done [#allocation7], 32
    $region41: #{net_forward.1} parent=1 // pred_fallthru
      _
    // Predicated region
    $region42: #{net_forward.1} parent=1 // pred_check
      _
    $region43: #{net_forward.1} parent=1 // pred_check_branch
      %88 = sbr.rel (0) target = $region45
    $region44: #{net_forward.1} parent=1 // pred_region
      %89 = dma.done [#allocation9], 16
    $region45: #{net_forward.1} parent=1 // pred_fallthru
      _
    // Predicated region
    $region46: #{net_forward.1} parent=1 // pred_check
      _
    $region47: #{net_forward.1} parent=1 // pred_check_branch
      %91 = sbr.rel (0) target = $region49
    $region48: #{net_forward.1} parent=1 // pred_region
      %92 = dma.done [#allocation9], 48
    $region49: #{net_forward.1} parent=1 // pred_fallthru
      _
    // Predicated region
    $region50: #{net_forward.1} parent=1 // pred_check
      _
    $region51: #{net_forward.1} parent=1 // pred_check_branch
      %94 = sbr.rel (0) target = $region53
    $region52: #{net_forward.1} parent=1 // pred_region
      %95 = dma.done [#allocation12], 16
    $region53: #{net_forward.1} parent=1 // pred_fallthru
      _
    // Predicated region
    $region54: #{net_forward.1} parent=1 // pred_check
      _
    $region55: #{net_forward.1} parent=1 // pred_check_branch
      %97 = sbr.rel (0) target = $region57
    $region56: #{net_forward.1} parent=1 // pred_region
      %98 = dma.done [#allocation12], 96
    $region57: #{net_forward.1} parent=1 // pred_fallthru
      _
    // Predicated region
    $region58: #{net_forward.1} parent=1 // pred_check
      _
    $region59: #{net_forward.1} parent=1 // pred_check_branch
      %100 = sbr.rel (0) target = $region61
    $region60: #{net_forward.1} parent=1 // pred_region
      %101 = dma.done [#allocation15], 16
    $region61: #{net_forward.1} parent=1 // pred_fallthru
      _
    %102 = sfence
    loop: start=0, step=1, limit=15
    $region62: #{net_forward.1} parent=1 // loop_pre_header
      _
    $region63: #{net_forward.1} parent=1 // loop_header
      %s104 = sphi 0, %s108
      %p105 = scmp.ge.s32.totalorder %s104, 15
    $region64: #{net_forward.1} parent=1 // loop_header_branch
      %107 = sbr.rel (%p105) target = $region68
    $region65: #{net_forward.1} parent=1 // loop_body
      loop: start=0, step=1, limit=5
      $region69: #{net_forward.1} parent=65 // loop_pre_header
        _
      $region70: #{net_forward.1} parent=65 // loop_header
        %s110 = sphi 0, %s114
        %p111 = scmp.ge.s32.totalorder %s110, 5
      $region71: #{net_forward.1} parent=65 // loop_header_branch
        %113 = sbr.rel (%p111) target = $region75
      $region72: #{net_forward.1} parent=65 // loop_body
        %s115 = sld [smem:[#allocation8 + %s110]]
        %v116 = vstv %s115
        %s117 = smul.u32 %s110, 27
        %s118 = sld [smem:[#allocation6 + %s117]]
        %s119 = smul.u32 %s104, 2
        %s120 = smul.u32 %s119, 32
        %s121 = scalar_lea.vmem %s0, %s120
        %v122 = vld [vmem:[%s121] sm:$0xff]
        %v123 = vld [vmem:[%s121 + $0x8] sm:$0xff]
        %v124 = vld [vmem:[%s121 + $0x10] sm:$0xff]
        %v125 = vld [vmem:[%s121 + $0x18] sm:$0x3f]
        %v126 = vstv %s118
        %v127 = vmul.f32 %v122, %v126
        %v128 = vmul.f32 %v123, %v126
        %v129 = vmul.f32 %v124, %v126
        %v130 = vmul.f32 %v125, %v126
        %v131 = vadd.f32 %v116, %v127
        %v132 = vadd.f32 %v116, %v128
        %v133 = vadd.f32 %v116, %v129
        %v134 = vadd.f32 %v116, %v130
        %s135 = sadd.s32 %s119, 1
        %s136 = smul.u32 %s135, 32
        %s137 = scalar_lea.vmem %s0, %s136
        %v138 = vld [vmem:[%s137] sm:$0xff]
        %v139 = vld [vmem:[%s137 + $0x8] sm:$0xff]
        %v140 = vld [vmem:[%s137 + $0x10] sm:$0xff]
        %v141 = vld [vmem:[%s137 + $0x18] sm:$0x3f]
        %v142 = vmul.f32 %v138, %v126
        %v143 = vmul.f32 %v139, %v126
        %v144 = vmul.f32 %v140, %v126
        %v145 = vmul.f32 %v141, %v126
        %v146 = vadd.f32 %v116, %v142
        %v147 = vadd.f32 %v116, %v143
        %v148 = vadd.f32 %v116, %v144
        %v149 = vadd.f32 %v116, %v145
        %s150 = sadd.s32 %s117, 1
        %s151 = sld [smem:[#allocation6 + %s150]]
        %v152 = vld [vmem:[%s121 + $0x1] sm:$0xff]
        %v153 = vld [vmem:[%s121 + $0x9] sm:$0xff]
        %v154 = vld [vmem:[%s121 + $0x11] sm:$0xff]
        %v155 = vld [vmem:[%s121 + $0x19] sm:$0x3f]
        %v156 = vstv %s151
        %v157 = vmul.f32 %v152, %v156
        %v158 = vmul.f32 %v153, %v156
        %v159 = vmul.f32 %v154, %v156
        %v160 = vmul.f32 %v155, %v156
        %v161 = vadd.f32 %v131, %v157
        %v162 = vadd.f32 %v132, %v158
        %v163 = vadd.f32 %v133, %v159
        %v164 = vadd.f32 %v134, %v160
        %v165 = vld [vmem:[%s137 + $0x1] sm:$0xff]
        %v166 = vld [vmem:[%s137 + $0x9] sm:$0xff]
        %v167 = vld [vmem:[%s137 + $0x11] sm:$0xff]
        %v168 = vld [vmem:[%s137 + $0x19] sm:$0x3f]
        %v169 = vmul.f32 %v165, %v156
        %v170 = vmul.f32 %v166, %v156
        %v171 = vmul.f32 %v167, %v156
        %v172 = vmul.f32 %v168, %v156
        %v173 = vadd.f32 %v146, %v169
        %v174 = vadd.f32 %v147, %v170
        %v175 = vadd.f32 %v148, %v171
        %v176 = vadd.f32 %v149, %v172
        %s177 = sadd.s32 %s117, 2
        %s178 = sld [smem:[#allocation6 + %s177]]
        %v179 = vld [vmem:[%s121 + $0x2] sm:$0xff]
        %v180 = vld [vmem:[%s121 + $0xa] sm:$0xff]
        %v181 = vld [vmem:[%s121 + $0x12] sm:$0xff]
        %v182 = vld [vmem:[%s121 + $0x1a] sm:$0x3f]
        %v183 = vstv %s178
        %v184 = vmul.f32 %v179, %v183
        %v185 = vmul.f32 %v180, %v183
        %v186 = vmul.f32 %v181, %v183
        %v187 = vmul.f32 %v182, %v183
        %v188 = vadd.f32 %v161, %v184
        %v189 = vadd.f32 %v162, %v185
        %v190 = vadd.f32 %v163, %v186
        %v191 = vadd.f32 %v164, %v187
        %v192 = vld [vmem:[%s137 + $0x2] sm:$0xff]
        %v193 = vld [vmem:[%s137 + $0xa] sm:$0xff]
        %v194 = vld [vmem:[%s137 + $0x12] sm:$0xff]
        %v195 = vld [vmem:[%s137 + $0x1a] sm:$0x3f]
        %v196 = vmul.f32 %v192, %v183
        %v197 = vmul.f32 %v193, %v183
        %v198 = vmul.f32 %v194, %v183
        %v199 = vmul.f32 %v195, %v183
        %v200 = vadd.f32 %v173, %v196
        %v201 = vadd.f32 %v174, %v197
        %v202 = vadd.f32 %v175, %v198
        %v203 = vadd.f32 %v176, %v199
        %s204 = smul.u32 %s110, 9
        %s205 = sadd.s32 %s204, 1
        %s206 = smul.u32 %s205, 3
        %s207 = sld [smem:[#allocation6 + %s206]]
        %v208 = vstv %s207
        %v209 = vmul.f32 %v138, %v208
        %v210 = vmul.f32 %v139, %v208
        %v211 = vmul.f32 %v140, %v208
        %v212 = vmul.f32 %v141, %v208
        %v213 = vadd.f32 %v188, %v209
        %v214 = vadd.f32 %v189, %v210
        %v215 = vadd.f32 %v190, %v211
        %v216 = vadd.f32 %v191, %v212
        %s217 = sadd.s32 %s119, 2
        %s218 = smul.u32 %s217, 32
        %s219 = scalar_lea.vmem %s0, %s218
        %v220 = vld [vmem:[%s219] sm:$0xff]
        %v221 = vld [vmem:[%s219 + $0x8] sm:$0xff]
        %v222 = vld [vmem:[%s219 + $0x10] sm:$0xff]
        %v223 = vld [vmem:[%s219 + $0x18] sm:$0x3f]
        %v224 = vmul.f32 %v220, %v208
        %v225 = vmul.f32 %v221, %v208
        %v226 = vmul.f32 %v222, %v208
        %v227 = vmul.f32 %v223, %v208
        %v228 = vadd.f32 %v200, %v224
        %v229 = vadd.f32 %v201, %v225
        %v230 = vadd.f32 %v202, %v226
        %v231 = vadd.f32 %v203, %v227
        %s232 = sadd.s32 %s206, 1
        %s233 = sld [smem:[#allocation6 + %s232]]
        %v234 = vstv %s233
        %v235 = vmul.f32 %v165, %v234
        %v236 = vmul.f32 %v166, %v234
        %v237 = vmul.f32 %v167, %v234
        %v238 = vmul.f32 %v168, %v234
        %v239 = vadd.f32 %v213, %v235
        %v240 = vadd.f32 %v214, %v236
        %v241 = vadd.f32 %v215, %v237
        %v242 = vadd.f32 %v216, %v238
        %v243 = vld [vmem:[%s219 + $0x1] sm:$0xff]
        %v244 = vld [vmem:[%s219 + $0x9] sm:$0xff]
        %v245 = vld [vmem:[%s219 + $0x11] sm:$0xff]
        %v246 = vld [vmem:[%s219 + $0x19] sm:$0x3f]
        %v247 = vmul.f32 %v243, %v234
        %v248 = vmul.f32 %v244, %v234
        %v249 = vmul.f32 %v245, %v234
        %v250 = vmul.f32 %v246, %v234
        %v251 = vadd.f32 %v228, %v247
        %v252 = vadd.f32 %v229, %v248
        %v253 = vadd.f32 %v230, %v249
        %v254 = vadd.f32 %v231, %v250
        %s255 = sadd.s32 %s206, 2
        %s256 = sld [smem:[#allocation6 + %s255]]
        %v257 = vstv %s256
        %v258 = vmul.f32 %v192, %v257
        %v259 = vmul.f32 %v193, %v257
        %v260 = vmul.f32 %v194, %v257
        %v261 = vmul.f32 %v195, %v257
        %v262 = vadd.f32 %v239, %v258
        %v263 = vadd.f32 %v240, %v259
        %v264 = vadd.f32 %v241, %v260
        %v265 = vadd.f32 %v242, %v261
        %v266 = vld [vmem:[%s219 + $0x2] sm:$0xff]
        %v267 = vld [vmem:[%s219 + $0xa] sm:$0xff]
        %v268 = vld [vmem:[%s219 + $0x12] sm:$0xff]
        %v269 = vld [vmem:[%s219 + $0x1a] sm:$0x3f]
        %v270 = vmul.f32 %v266, %v257
        %v271 = vmul.f32 %v267, %v257
        %v272 = vmul.f32 %v268, %v257
        %v273 = vmul.f32 %v269, %v257
        %v274 = vadd.f32 %v251, %v270
        %v275 = vadd.f32 %v252, %v271
        %v276 = vadd.f32 %v253, %v272
        %v277 = vadd.f32 %v254, %v273
        %s278 = sadd.s32 %s204, 2
        %s279 = smul.u32 %s278, 3
        %s280 = sld [smem:[#allocation6 + %s279]]
        %v281 = vstv %s280
        %v282 = vmul.f32 %v220, %v281
        %v283 = vmul.f32 %v221, %v281
        %v284 = vmul.f32 %v222, %v281
        %v285 = vmul.f32 %v223, %v281
        %v286 = vadd.f32 %v262, %v282
        %v287 = vadd.f32 %v263, %v283
        %v288 = vadd.f32 %v264, %v284
        %v289 = vadd.f32 %v265, %v285
        %s290 = sadd.s32 %s119, 3
        %s291 = smul.u32 %s290, 32
        %s292 = scalar_lea.vmem %s0, %s291
        %v293 = vld [vmem:[%s292] sm:$0xff]
        %v294 = vld [vmem:[%s292 + $0x8] sm:$0xff]
        %v295 = vld [vmem:[%s292 + $0x10] sm:$0xff]
        %v296 = vld [vmem:[%s292 + $0x18] sm:$0x3f]
        %v297 = vmul.f32 %v293, %v281
        %v298 = vmul.f32 %v294, %v281
        %v299 = vmul.f32 %v295, %v281
        %v300 = vmul.f32 %v296, %v281
        %v301 = vadd.f32 %v274, %v297
        %v302 = vadd.f32 %v275, %v298
        %v303 = vadd.f32 %v276, %v299
        %v304 = vadd.f32 %v277, %v300
        %s305 = sadd.s32 %s279, 1
        %s306 = sld [smem:[#allocation6 + %s305]]
        %v307 = vstv %s306
        %v308 = vmul.f32 %v243, %v307
        %v309 = vmul.f32 %v244, %v307
        %v310 = vmul.f32 %v245, %v307
        %v311 = vmul.f32 %v246, %v307
        %v312 = vadd.f32 %v286, %v308
        %v313 = vadd.f32 %v287, %v309
        %v314 = vadd.f32 %v288, %v310
        %v315 = vadd.f32 %v289, %v311
        %v316 = vld [vmem:[%s292 + $0x1] sm:$0xff]
        %v317 = vld [vmem:[%s292 + $0x9] sm:$0xff]
        %v318 = vld [vmem:[%s292 + $0x11] sm:$0xff]
        %v319 = vld [vmem:[%s292 + $0x19] sm:$0x3f]
        %v320 = vmul.f32 %v316, %v307
        %v321 = vmul.f32 %v317, %v307
        %v322 = vmul.f32 %v318, %v307
        %v323 = vmul.f32 %v319, %v307
        %v324 = vadd.f32 %v301, %v320
        %v325 = vadd.f32 %v302, %v321
        %v326 = vadd.f32 %v303, %v322
        %v327 = vadd.f32 %v304, %v323
        %s328 = sadd.s32 %s279, 2
        %s329 = sld [smem:[#allocation6 + %s328]]
        %v330 = vstv %s329
        %v331 = vmul.f32 %v266, %v330
        %v332 = vmul.f32 %v267, %v330
        %v333 = vmul.f32 %v268, %v330
        %v334 = vmul.f32 %v269, %v330
        %v335 = vadd.f32 %v312, %v331
        %v336 = vadd.f32 %v313, %v332
        %v337 = vadd.f32 %v314, %v333
        %v338 = vadd.f32 %v315, %v334
        %v339 = vld [vmem:[%s292 + $0x2] sm:$0xff]
        %v340 = vld [vmem:[%s292 + $0xa] sm:$0xff]
        %v341 = vld [vmem:[%s292 + $0x12] sm:$0xff]
        %v342 = vld [vmem:[%s292 + $0x1a] sm:$0x3f]
        %v343 = vmul.f32 %v339, %v330
        %v344 = vmul.f32 %v340, %v330
        %v345 = vmul.f32 %v341, %v330
        %v346 = vmul.f32 %v342, %v330
        %v347 = vadd.f32 %v324, %v343
        %v348 = vadd.f32 %v325, %v344
        %v349 = vadd.f32 %v326, %v345
        %v350 = vadd.f32 %v327, %v346
        %s351 = smul.u32 %s110, 3
        %s352 = sadd.s32 %s351, 1
        %s353 = smul.u32 %s352, 9
        %s354 = sld [smem:[#allocation6 + %s353]]
        %s355 = sadd.s32 %s120, 1024
        %s356 = scalar_lea.vmem %s0, %s355
        %v357 = vld [vmem:[%s356] sm:$0xff]
        %v358 = vld [vmem:[%s356 + $0x8] sm:$0xff]
        %v359 = vld [vmem:[%s356 + $0x10] sm:$0xff]
        %v360 = vld [vmem:[%s356 + $0x18] sm:$0x3f]
        %v361 = vstv %s354
        %v362 = vmul.f32 %v357, %v361
        %v363 = vmul.f32 %v358, %v361
        %v364 = vmul.f32 %v359, %v361
        %v365 = vmul.f32 %v360, %v361
        %v366 = vadd.f32 %v335, %v362
        %v367 = vadd.f32 %v336, %v363
        %v368 = vadd.f32 %v337, %v364
        %v369 = vadd.f32 %v338, %v365
        %s370 = sadd.s32 %s136, 1024
        %s371 = scalar_lea.vmem %s0, %s370
        %v372 = vld [vmem:[%s371] sm:$0xff]
        %v373 = vld [vmem:[%s371 + $0x8] sm:$0xff]
        %v374 = vld [vmem:[%s371 + $0x10] sm:$0xff]
        %v375 = vld [vmem:[%s371 + $0x18] sm:$0x3f]
        %v376 = vmul.f32 %v372, %v361
        %v377 = vmul.f32 %v373, %v361
        %v378 = vmul.f32 %v374, %v361
        %v379 = vmul.f32 %v375, %v361
        %v380 = vadd.f32 %v347, %v376
        %v381 = vadd.f32 %v348, %v377
        %v382 = vadd.f32 %v349, %v378
        %v383 = vadd.f32 %v350, %v379
        %s384 = sadd.s32 %s353, 1
        %s385 = sld [smem:[#allocation6 + %s384]]
        %v386 = vld [vmem:[%s356 + $0x1] sm:$0xff]
        %v387 = vld [vmem:[%s356 + $0x9] sm:$0xff]
        %v388 = vld [vmem:[%s356 + $0x11] sm:$0xff]
        %v389 = vld [vmem:[%s356 + $0x19] sm:$0x3f]
        %v390 = vstv %s385
        %v391 = vmul.f32 %v386, %v390
        %v392 = vmul.f32 %v387, %v390
        %v393 = vmul.f32 %v388, %v390
        %v394 = vmul.f32 %v389, %v390
        %v395 = vadd.f32 %v366, %v391
        %v396 = vadd.f32 %v367, %v392
        %v397 = vadd.f32 %v368, %v393
        %v398 = vadd.f32 %v369, %v394
        %v399 = vld [vmem:[%s371 + $0x1] sm:$0xff]
        %v400 = vld [vmem:[%s371 + $0x9] sm:$0xff]
        %v401 = vld [vmem:[%s371 + $0x11] sm:$0xff]
        %v402 = vld [vmem:[%s371 + $0x19] sm:$0x3f]
        %v403 = vmul.f32 %v399, %v390
        %v404 = vmul.f32 %v400, %v390
        %v405 = vmul.f32 %v401, %v390
        %v406 = vmul.f32 %v402, %v390
        %v407 = vadd.f32 %v380, %v403
        %v408 = vadd.f32 %v381, %v404
        %v409 = vadd.f32 %v382, %v405
        %v410 = vadd.f32 %v383, %v406
        %s411 = sadd.s32 %s353, 2
        %s412 = sld [smem:[#allocation6 + %s411]]
        %v413 = vld [vmem:[%s356 + $0x2] sm:$0xff]
        %v414 = vld [vmem:[%s356 + $0xa] sm:$0xff]
        %v415 = vld [vmem:[%s356 + $0x12] sm:$0xff]
        %v416 = vld [vmem:[%s356 + $0x1a] sm:$0x3f]
        %v417 = vstv %s412
        %v418 = vmul.f32 %v413, %v417
        %v419 = vmul.f32 %v414, %v417
        %v420 = vmul.f32 %v415, %v417
        %v421 = vmul.f32 %v416, %v417
        %v422 = vadd.f32 %v395, %v418
        %v423 = vadd.f32 %v396, %v419
        %v424 = vadd.f32 %v397, %v420
        %v425 = vadd.f32 %v398, %v421
        %v426 = vld [vmem:[%s371 + $0x2] sm:$0xff]
        %v427 = vld [vmem:[%s371 + $0xa] sm:$0xff]
        %v428 = vld [vmem:[%s371 + $0x12] sm:$0xff]
        %v429 = vld [vmem:[%s371 + $0x1a] sm:$0x3f]
        %v430 = vmul.f32 %v426, %v417
        %v431 = vmul.f32 %v427, %v417
        %v432 = vmul.f32 %v428, %v417
        %v433 = vmul.f32 %v429, %v417
        %v434 = vadd.f32 %v407, %v430
        %v435 = vadd.f32 %v408, %v431
        %v436 = vadd.f32 %v409, %v432
        %v437 = vadd.f32 %v410, %v433
        %s438 = smul.u32 %s352, 3
        %s439 = sadd.s32 %s438, 1
        %s440 = smul.u32 %s439, 3
        %s441 = sld [smem:[#allocation6 + %s440]]
        %v442 = vstv %s441
        %v443 = vmul.f32 %v372, %v442
        %v444 = vmul.f32 %v373, %v442
        %v445 = vmul.f32 %v374, %v442
        %v446 = vmul.f32 %v375, %v442
        %v447 = vadd.f32 %v422, %v443
        %v448 = vadd.f32 %v423, %v444
        %v449 = vadd.f32 %v424, %v445
        %v450 = vadd.f32 %v425, %v446
        %s451 = sadd.s32 %s218, 1024
        %s452 = scalar_lea.vmem %s0, %s451
        %v453 = vld [vmem:[%s452] sm:$0xff]
        %v454 = vld [vmem:[%s452 + $0x8] sm:$0xff]
        %v455 = vld [vmem:[%s452 + $0x10] sm:$0xff]
        %v456 = vld [vmem:[%s452 + $0x18] sm:$0x3f]
        %v457 = vmul.f32 %v453, %v442
        %v458 = vmul.f32 %v454, %v442
        %v459 = vmul.f32 %v455, %v442
        %v460 = vmul.f32 %v456, %v442
        %v461 = vadd.f32 %v434, %v457
        %v462 = vadd.f32 %v435, %v458
        %v463 = vadd.f32 %v436, %v459
        %v464 = vadd.f32 %v437, %v460
        %s465 = sadd.s32 %s440, 1
        %s466 = sld [smem:[#allocation6 + %s465]]
        %v467 = vstv %s466
        %v468 = vmul.f32 %v399, %v467
        %v469 = vmul.f32 %v400, %v467
        %v470 = vmul.f32 %v401, %v467
        %v471 = vmul.f32 %v402, %v467
        %v472 = vadd.f32 %v447, %v468
        %v473 = vadd.f32 %v448, %v469
        %v474 = vadd.f32 %v449, %v470
        %v475 = vadd.f32 %v450, %v471
        %v476 = vld [vmem:[%s452 + $0x1] sm:$0xff]
        %v477 = vld [vmem:[%s452 + $0x9] sm:$0xff]
        %v478 = vld [vmem:[%s452 + $0x11] sm:$0xff]
        %v479 = vld [vmem:[%s452 + $0x19] sm:$0x3f]
        %v480 = vmul.f32 %v476, %v467
        %v481 = vmul.f32 %v477, %v467
        %v482 = vmul.f32 %v478, %v467
        %v483 = vmul.f32 %v479, %v467
        %v484 = vadd.f32 %v461, %v480
        %v485 = vadd.f32 %v462, %v481
        %v486 = vadd.f32 %v463, %v482
        %v487 = vadd.f32 %v464, %v483
        %s488 = sadd.s32 %s440, 2
        %s489 = sld [smem:[#allocation6 + %s488]]
        %v490 = vstv %s489
        %v491 = vmul.f32 %v426, %v490
        %v492 = vmul.f32 %v427, %v490
        %v493 = vmul.f32 %v428, %v490
        %v494 = vmul.f32 %v429, %v490
        %v495 = vadd.f32 %v472, %v491
        %v496 = vadd.f32 %v473, %v492
        %v497 = vadd.f32 %v474, %v493
        %v498 = vadd.f32 %v475, %v494
        %v499 = vld [vmem:[%s452 + $0x2] sm:$0xff]
        %v500 = vld [vmem:[%s452 + $0xa] sm:$0xff]
        %v501 = vld [vmem:[%s452 + $0x12] sm:$0xff]
        %v502 = vld [vmem:[%s452 + $0x1a] sm:$0x3f]
        %v503 = vmul.f32 %v499, %v490
        %v504 = vmul.f32 %v500, %v490
        %v505 = vmul.f32 %v501, %v490
        %v506 = vmul.f32 %v502, %v490
        %v507 = vadd.f32 %v484, %v503
        %v508 = vadd.f32 %v485, %v504
        %v509 = vadd.f32 %v486, %v505
        %v510 = vadd.f32 %v487, %v506
        %s511 = sadd.s32 %s438, 2
        %s512 = smul.u32 %s511, 3
        %s513 = sld [smem:[#allocation6 + %s512]]
        %v514 = vstv %s513
        %v515 = vmul.f32 %v453, %v514
        %v516 = vmul.f32 %v454, %v514
        %v517 = vmul.f32 %v455, %v514
        %v518 = vmul.f32 %v456, %v514
        %v519 = vadd.f32 %v495, %v515
        %v520 = vadd.f32 %v496, %v516
        %v521 = vadd.f32 %v497, %v517
        %v522 = vadd.f32 %v498, %v518
        %s523 = sadd.s32 %s291, 1024
        %s524 = scalar_lea.vmem %s0, %s523
        %v525 = vld [vmem:[%s524] sm:$0xff]
        %v526 = vld [vmem:[%s524 + $0x8] sm:$0xff]
        %v527 = vld [vmem:[%s524 + $0x10] sm:$0xff]
        %v528 = vld [vmem:[%s524 + $0x18] sm:$0x3f]
        %v529 = vmul.f32 %v525, %v514
        %v530 = vmul.f32 %v526, %v514
        %v531 = vmul.f32 %v527, %v514
        %v532 = vmul.f32 %v528, %v514
        %v533 = vadd.f32 %v507, %v529
        %v534 = vadd.f32 %v508, %v530
        %v535 = vadd.f32 %v509, %v531
        %v536 = vadd.f32 %v510, %v532
        %s537 = sadd.s32 %s512, 1
        %s538 = sld [smem:[#allocation6 + %s537]]
        %v539 = vstv %s538
        %v540 = vmul.f32 %v476, %v539
        %v541 = vmul.f32 %v477, %v539
        %v542 = vmul.f32 %v478, %v539
        %v543 = vmul.f32 %v479, %v539
        %v544 = vadd.f32 %v519, %v540
        %v545 = vadd.f32 %v520, %v541
        %v546 = vadd.f32 %v521, %v542
        %v547 = vadd.f32 %v522, %v543
        %v548 = vld [vmem:[%s524 + $0x1] sm:$0xff]
        %v549 = vld [vmem:[%s524 + $0x9] sm:$0xff]
        %v550 = vld [vmem:[%s524 + $0x11] sm:$0xff]
        %v551 = vld [vmem:[%s524 + $0x19] sm:$0x3f]
        %v552 = vmul.f32 %v548, %v539
        %v553 = vmul.f32 %v549, %v539
        %v554 = vmul.f32 %v550, %v539
        %v555 = vmul.f32 %v551, %v539
        %v556 = vadd.f32 %v533, %v552
        %v557 = vadd.f32 %v534, %v553
        %v558 = vadd.f32 %v535, %v554
        %v559 = vadd.f32 %v536, %v555
        %s560 = sadd.s32 %s512, 2
        %s561 = sld [smem:[#allocation6 + %s560]]
        %v562 = vstv %s561
        %v563 = vmul.f32 %v499, %v562
        %v564 = vmul.f32 %v500, %v562
        %v565 = vmul.f32 %v501, %v562
        %v566 = vmul.f32 %v502, %v562
        %v567 = vadd.f32 %v544, %v563
        %v568 = vadd.f32 %v545, %v564
        %v569 = vadd.f32 %v546, %v565
        %v570 = vadd.f32 %v547, %v566
        %v571 = vld [vmem:[%s524 + $0x2] sm:$0xff]
        %v572 = vld [vmem:[%s524 + $0xa] sm:$0xff]
        %v573 = vld [vmem:[%s524 + $0x12] sm:$0xff]
        %v574 = vld [vmem:[%s524 + $0x1a] sm:$0x3f]
        %v575 = vmul.f32 %v571, %v562
        %v576 = vmul.f32 %v572, %v562
        %v577 = vmul.f32 %v573, %v562
        %v578 = vmul.f32 %v574, %v562
        %v579 = vadd.f32 %v556, %v575
        %v580 = vadd.f32 %v557, %v576
        %v581 = vadd.f32 %v558, %v577
        %v582 = vadd.f32 %v559, %v578
        %s583 = sadd.s32 %s351, 2
        %s584 = smul.u32 %s583, 9
        %s585 = sld [smem:[#allocation6 + %s584]]
        %s586 = sadd.s32 %s120, 2048
        %s587 = scalar_lea.vmem %s0, %s586
        %v588 = vld [vmem:[%s587] sm:$0xff]
        %v589 = vld [vmem:[%s587 + $0x8] sm:$0xff]
        %v590 = vld [vmem:[%s587 + $0x10] sm:$0xff]
        %v591 = vld [vmem:[%s587 + $0x18] sm:$0x3f]
        %v592 = vstv %s585
        %v593 = vmul.f32 %v588, %v592
        %v594 = vmul.f32 %v589, %v592
        %v595 = vmul.f32 %v590, %v592
        %v596 = vmul.f32 %v591, %v592
        %v597 = vadd.f32 %v567, %v593
        %v598 = vadd.f32 %v568, %v594
        %v599 = vadd.f32 %v569, %v595
        %v600 = vadd.f32 %v570, %v596
        %s601 = sadd.s32 %s136, 2048
        %s602 = scalar_lea.vmem %s0, %s601
        %v603 = vld [vmem:[%s602] sm:$0xff]
        %v604 = vld [vmem:[%s602 + $0x8] sm:$0xff]
        %v605 = vld [vmem:[%s602 + $0x10] sm:$0xff]
        %v606 = vld [vmem:[%s602 + $0x18] sm:$0x3f]
        %v607 = vmul.f32 %v603, %v592
        %v608 = vmul.f32 %v604, %v592
        %v609 = vmul.f32 %v605, %v592
        %v610 = vmul.f32 %v606, %v592
        %v611 = vadd.f32 %v579, %v607
        %v612 = vadd.f32 %v580, %v608
        %v613 = vadd.f32 %v581, %v609
        %v614 = vadd.f32 %v582, %v610
        %s615 = sadd.s32 %s584, 1
        %s616 = sld [smem:[#allocation6 + %s615]]
        %v617 = vld [vmem:[%s587 + $0x1] sm:$0xff]
        %v618 = vld [vmem:[%s587 + $0x9] sm:$0xff]
        %v619 = vld [vmem:[%s587 + $0x11] sm:$0xff]
        %v620 = vld [vmem:[%s587 + $0x19] sm:$0x3f]
        %v621 = vstv %s616
        %v622 = vmul.f32 %v617, %v621
        %v623 = vmul.f32 %v618, %v621
        %v624 = vmul.f32 %v619, %v621
        %v625 = vmul.f32 %v620, %v621
        %v626 = vadd.f32 %v597, %v622
        %v627 = vadd.f32 %v598, %v623
        %v628 = vadd.f32 %v599, %v624
        %v629 = vadd.f32 %v600, %v625
        %v630 = vld [vmem:[%s602 + $0x1] sm:$0xff]
        %v631 = vld [vmem:[%s602 + $0x9] sm:$0xff]
        %v632 = vld [vmem:[%s602 + $0x11] sm:$0xff]
        %v633 = vld [vmem:[%s602 + $0x19] sm:$0x3f]
        %v634 = vmul.f32 %v630, %v621
        %v635 = vmul.f32 %v631, %v621
        %v636 = vmul.f32 %v632, %v621
        %v637 = vmul.f32 %v633, %v621
        %v638 = vadd.f32 %v611, %v634
        %v639 = vadd.f32 %v612, %v635
        %v640 = vadd.f32 %v613, %v636
        %v641 = vadd.f32 %v614, %v637
        %s642 = sadd.s32 %s584, 2
        %s643 = sld [smem:[#allocation6 + %s642]]
        %v644 = vld [vmem:[%s587 + $0x2] sm:$0xff]
        %v645 = vld [vmem:[%s587 + $0xa] sm:$0xff]
        %v646 = vld [vmem:[%s587 + $0x12] sm:$0xff]
        %v647 = vld [vmem:[%s587 + $0x1a] sm:$0x3f]
        %v648 = vstv %s643
        %v649 = vmul.f32 %v644, %v648
        %v650 = vmul.f32 %v645, %v648
        %v651 = vmul.f32 %v646, %v648
        %v652 = vmul.f32 %v647, %v648
        %v653 = vadd.f32 %v626, %v649
        %v654 = vadd.f32 %v627, %v650
        %v655 = vadd.f32 %v628, %v651
        %v656 = vadd.f32 %v629, %v652
        %v657 = vld [vmem:[%s602 + $0x2] sm:$0xff]
        %v658 = vld [vmem:[%s602 + $0xa] sm:$0xff]
        %v659 = vld [vmem:[%s602 + $0x12] sm:$0xff]
        %v660 = vld [vmem:[%s602 + $0x1a] sm:$0x3f]
        %v661 = vmul.f32 %v657, %v648
        %v662 = vmul.f32 %v658, %v648
        %v663 = vmul.f32 %v659, %v648
        %v664 = vmul.f32 %v660, %v648
        %v665 = vadd.f32 %v638, %v661
        %v666 = vadd.f32 %v639, %v662
        %v667 = vadd.f32 %v640, %v663
        %v668 = vadd.f32 %v641, %v664
        %s669 = smul.u32 %s583, 3
        %s670 = sadd.s32 %s669, 1
        %s671 = smul.u32 %s670, 3
        %s672 = sld [smem:[#allocation6 + %s671]]
        %v673 = vstv %s672
        %v674 = vmul.f32 %v603, %v673
        %v675 = vmul.f32 %v604, %v673
        %v676 = vmul.f32 %v605, %v673
        %v677 = vmul.f32 %v606, %v673
        %v678 = vadd.f32 %v653, %v674
        %v679 = vadd.f32 %v654, %v675
        %v680 = vadd.f32 %v655, %v676
        %v681 = vadd.f32 %v656, %v677
        %s682 = sadd.s32 %s218, 2048
        %s683 = scalar_lea.vmem %s0, %s682
        %v684 = vld [vmem:[%s683] sm:$0xff]
        %v685 = vld [vmem:[%s683 + $0x8] sm:$0xff]
        %v686 = vld [vmem:[%s683 + $0x10] sm:$0xff]
        %v687 = vld [vmem:[%s683 + $0x18] sm:$0x3f]
        %v688 = vmul.f32 %v684, %v673
        %v689 = vmul.f32 %v685, %v673
        %v690 = vmul.f32 %v686, %v673
        %v691 = vmul.f32 %v687, %v673
        %v692 = vadd.f32 %v665, %v688
        %v693 = vadd.f32 %v666, %v689
        %v694 = vadd.f32 %v667, %v690
        %v695 = vadd.f32 %v668, %v691
        %s696 = sadd.s32 %s671, 1
        %s697 = sld [smem:[#allocation6 + %s696]]
        %v698 = vstv %s697
        %v699 = vmul.f32 %v630, %v698
        %v700 = vmul.f32 %v631, %v698
        %v701 = vmul.f32 %v632, %v698
        %v702 = vmul.f32 %v633, %v698
        %v703 = vadd.f32 %v678, %v699
        %v704 = vadd.f32 %v679, %v700
        %v705 = vadd.f32 %v680, %v701
        %v706 = vadd.f32 %v681, %v702
        %v707 = vld [vmem:[%s683 + $0x1] sm:$0xff]
        %v708 = vld [vmem:[%s683 + $0x9] sm:$0xff]
        %v709 = vld [vmem:[%s683 + $0x11] sm:$0xff]
        %v710 = vld [vmem:[%s683 + $0x19] sm:$0x3f]
        %v711 = vmul.f32 %v707, %v698
        %v712 = vmul.f32 %v708, %v698
        %v713 = vmul.f32 %v709, %v698
        %v714 = vmul.f32 %v710, %v698
        %v715 = vadd.f32 %v692, %v711
        %v716 = vadd.f32 %v693, %v712
        %v717 = vadd.f32 %v694, %v713
        %v718 = vadd.f32 %v695, %v714
        %s719 = sadd.s32 %s671, 2
        %s720 = sld [smem:[#allocation6 + %s719]]
        %v721 = vstv %s720
        %v722 = vmul.f32 %v657, %v721
        %v723 = vmul.f32 %v658, %v721
        %v724 = vmul.f32 %v659, %v721
        %v725 = vmul.f32 %v660, %v721
        %v726 = vadd.f32 %v703, %v722
        %v727 = vadd.f32 %v704, %v723
        %v728 = vadd.f32 %v705, %v724
        %v729 = vadd.f32 %v706, %v725
        %v730 = vld [vmem:[%s683 + $0x2] sm:$0xff]
        %v731 = vld [vmem:[%s683 + $0xa] sm:$0xff]
        %v732 = vld [vmem:[%s683 + $0x12] sm:$0xff]
        %v733 = vld [vmem:[%s683 + $0x1a] sm:$0x3f]
        %v734 = vmul.f32 %v730, %v721
        %v735 = vmul.f32 %v731, %v721
        %v736 = vmul.f32 %v732, %v721
        %v737 = vmul.f32 %v733, %v721
        %v738 = vadd.f32 %v715, %v734
        %v739 = vadd.f32 %v716, %v735
        %v740 = vadd.f32 %v717, %v736
        %v741 = vadd.f32 %v718, %v737
        %s742 = sadd.s32 %s669, 2
        %s743 = smul.u32 %s742, 3
        %s744 = sld [smem:[#allocation6 + %s743]]
        %v745 = vstv %s744
        %v746 = vmul.f32 %v684, %v745
        %v747 = vmul.f32 %v685, %v745
        %v748 = vmul.f32 %v686, %v745
        %v749 = vmul.f32 %v687, %v745
        %v750 = vadd.f32 %v726, %v746
        %v751 = vadd.f32 %v727, %v747
        %v752 = vadd.f32 %v728, %v748
        %v753 = vadd.f32 %v729, %v749
        %s754 = sadd.s32 %s291, 2048
        %s755 = scalar_lea.vmem %s0, %s754
        %v756 = vld [vmem:[%s755] sm:$0xff]
        %v757 = vld [vmem:[%s755 + $0x8] sm:$0xff]
        %v758 = vld [vmem:[%s755 + $0x10] sm:$0xff]
        %v759 = vld [vmem:[%s755 + $0x18] sm:$0x3f]
        %v760 = vmul.f32 %v756, %v745
        %v761 = vmul.f32 %v757, %v745
        %v762 = vmul.f32 %v758, %v745
        %v763 = vmul.f32 %v759, %v745
        %v764 = vadd.f32 %v738, %v760
        %v765 = vadd.f32 %v739, %v761
        %v766 = vadd.f32 %v740, %v762
        %v767 = vadd.f32 %v741, %v763
        %s768 = sadd.s32 %s743, 1
        %s769 = sld [smem:[#allocation6 + %s768]]
        %v770 = vstv %s769
        %v771 = vmul.f32 %v707, %v770
        %v772 = vmul.f32 %v708, %v770
        %v773 = vmul.f32 %v709, %v770
        %v774 = vmul.f32 %v710, %v770
        %v775 = vadd.f32 %v750, %v771
        %v776 = vadd.f32 %v751, %v772
        %v777 = vadd.f32 %v752, %v773
        %v778 = vadd.f32 %v753, %v774
        %v779 = vld [vmem:[%s755 + $0x1] sm:$0xff]
        %v780 = vld [vmem:[%s755 + $0x9] sm:$0xff]
        %v781 = vld [vmem:[%s755 + $0x11] sm:$0xff]
        %v782 = vld [vmem:[%s755 + $0x19] sm:$0x3f]
        %v783 = vmul.f32 %v779, %v770
        %v784 = vmul.f32 %v780, %v770
        %v785 = vmul.f32 %v781, %v770
        %v786 = vmul.f32 %v782, %v770
        %v787 = vadd.f32 %v764, %v783
        %v788 = vadd.f32 %v765, %v784
        %v789 = vadd.f32 %v766, %v785
        %v790 = vadd.f32 %v767, %v786
        %s791 = sadd.s32 %s743, 2
        %s792 = sld [smem:[#allocation6 + %s791]]
        %v793 = vstv %s792
        %v794 = vmul.f32 %v730, %v793
        %v795 = vmul.f32 %v731, %v793
        %v796 = vmul.f32 %v732, %v793
        %v797 = vmul.f32 %v733, %v793
        %v798 = vadd.f32 %v775, %v794
        %v799 = vadd.f32 %v776, %v795
        %v800 = vadd.f32 %v777, %v796
        %v801 = vadd.f32 %v778, %v797
        %v802 = vld [vmem:[%s755 + $0x2] sm:$0xff]
        %v803 = vld [vmem:[%s755 + $0xa] sm:$0xff]
        %v804 = vld [vmem:[%s755 + $0x12] sm:$0xff]
        %v805 = vld [vmem:[%s755 + $0x1a] sm:$0x3f]
        %v806 = vmul.f32 %v802, %v793
        %v807 = vmul.f32 %v803, %v793
        %v808 = vmul.f32 %v804, %v793
        %v809 = vmul.f32 %v805, %v793
        %v810 = vadd.f32 %v787, %v806
        %v811 = vadd.f32 %v788, %v807
        %v812 = vadd.f32 %v789, %v808
        %v813 = vadd.f32 %v790, %v809
        %v814 = vmax.f32 %v798, %v810
        %v815 = vmax.f32 %v799, %v811
        %v816 = vmax.f32 %v800, %v812
        %v817 = vmax.f32 %v801, %v813
        %v818 = vmax.f32 %v814, 0.0
        %v819 = vmax.f32 %v815, 0.0
        %v820 = vmax.f32 %v816, 0.0
        %v821 = vmax.f32 %v817, 0.0
        %822 = vst [vmem:[#allocation5] sm:$0xff] %v818
        %823 = vst [vmem:[#allocation5 + $0x8] sm:$0xff] %v819
        %824 = vst [vmem:[#allocation5 + $0x10] sm:$0xff] %v820
        %825 = vst [vmem:[#allocation5 + $0x18] sm:$0x3f] %v821
        %v826 = vld [vmem:[#allocation5] ss:$2 sm:$0xff]
        %s827 = scalar_lea.vmem [#allocation5], 16
        %v828 = vld [vmem:[%s827] ss:$2 sm:$0x7f]
        %s829 = scalar_lea.vmem [#allocation5], 1
        %v830 = vld [vmem:[%s829] ss:$2 sm:$0xff]
        %s831 = scalar_lea.vmem [#allocation5], 17
        %v832 = vld [vmem:[%s831] ss:$2 sm:$0x7f]
        %v833 = vmax.f32 %v826, %v830
        %v834 = vmax.f32 %v828, %v832
        %s835 = smul.u32 %s104, 16
        %s836 = smul.u32 %s110, 240
        %s837 = sadd.s32 %s835, %s836
        %s838 = scalar_lea.vmem [#allocation2], %s837
        %839 = vst [vmem:[%s838] sm:$0xff] %v833
        %840 = vst [vmem:[%s838 + $0x8] sm:$0x7f] %v834
      $region73: #{net_forward.1} parent=65 // loop_footer
        %s114 = sadd.s32 1, %s110
      $region74: #{net_forward.1} parent=65 // loop_footer_branch
        %109 = sbr.rel target = $region70
      $region75: #{net_forward.1} parent=65 // loop_exit
        _
    $region66: #{net_forward.1} parent=1 // loop_footer
      %s108 = sadd.s32 1, %s104
    $region67: #{net_forward.1} parent=1 // loop_footer_branch
      %103 = sbr.rel target = $region63
    $region68: #{net_forward.1} parent=1 // loop_exit
      _
    loop: start=0, step=1, limit=6
    $region76: #{net_forward.1} parent=1 // loop_pre_header
      _
    $region77: #{net_forward.1} parent=1 // loop_header
      %s842 = sphi 0, %s846
      %p843 = scmp.ge.s32.totalorder %s842, 6
    $region78: #{net_forward.1} parent=1 // loop_header_branch
      %845 = sbr.rel (%p843) target = $region82
    $region79: #{net_forward.1} parent=1 // loop_body
      loop: start=0, step=1, limit=7
      $region83: #{net_forward.1} parent=79 // loop_pre_header
        _
      $region84: #{net_forward.1} parent=79 // loop_header
        %s848 = sphi 0, %s852
        %p849 = scmp.ge.s32.totalorder %s848, 7
      $region85: #{net_forward.1} parent=79 // loop_header_branch
        %851 = sbr.rel (%p849) target = $region89
      $region86: #{net_forward.1} parent=79 // loop_body
        %s853 = sld [smem:[#allocation11 + %s848]]
        %v854 = vstv %s853
        %s855 = smul.u32 %s848, 45
        %s856 = sld [smem:[#allocation10 + %s855]]
        %s857 = smul.u32 %s842, 2
        %s858 = smul.u32 %s857, 16
        %s859 = scalar_lea.vmem [#allocation2], %s858
        %v860 = vld [vmem:[%s859] sm:$0xff]
        %v861 = vld [vmem:[%s859 + $0x8] sm:$0x1f]
        %v862 = vstv %s856
        %v863 = vmul.f32 %v860, %v862
        %v864 = vmul.f32 %v861, %v862
        %v865 = vadd.f32 %v854, %v863
        %v866 = vadd.f32 %v854, %v864
        %s867 = sadd.s32 %s857, 1
        %s868 = smul.u32 %s867, 16
        %s869 = scalar_lea.vmem [#allocation2], %s868
        %v870 = vld [vmem:[%s869] sm:$0xff]
        %v871 = vld [vmem:[%s869 + $0x8] sm:$0x1f]
        %v872 = vmul.f32 %v870, %v862
        %v873 = vmul.f32 %v871, %v862
        %v874 = vadd.f32 %v854, %v872
        %v875 = vadd.f32 %v854, %v873
        %s876 = sadd.s32 %s855, 1
        %s877 = sld [smem:[#allocation10 + %s876]]
        %v878 = vld [vmem:[%s859 + $0x1] sm:$0xff]
        %v879 = vld [vmem:[%s859 + $0x9] sm:$0x1f]
        %v880 = vstv %s877
        %v881 = vmul.f32 %v878, %v880
        %v882 = vmul.f32 %v879, %v880
        %v883 = vadd.f32 %v865, %v881
        %v884 = vadd.f32 %v866, %v882
        %v885 = vld [vmem:[%s869 + $0x1] sm:$0xff]
        %v886 = vld [vmem:[%s869 + $0x9] sm:$0x1f]
        %v887 = vmul.f32 %v885, %v880
        %v888 = vmul.f32 %v886, %v880
        %v889 = vadd.f32 %v874, %v887
        %v890 = vadd.f32 %v875, %v888
        %s891 = sadd.s32 %s855, 2
        %s892 = sld [smem:[#allocation10 + %s891]]
        %v893 = vld [vmem:[%s859 + $0x2] sm:$0xff]
        %v894 = vld [vmem:[%s859 + $0xa] sm:$0x1f]
        %v895 = vstv %s892
        %v896 = vmul.f32 %v893, %v895
        %v897 = vmul.f32 %v894, %v895
        %v898 = vadd.f32 %v883, %v896
        %v899 = vadd.f32 %v884, %v897
        %v900 = vld [vmem:[%s869 + $0x2] sm:$0xff]
        %v901 = vld [vmem:[%s869 + $0xa] sm:$0x1f]
        %v902 = vmul.f32 %v900, %v895
        %v903 = vmul.f32 %v901, %v895
        %v904 = vadd.f32 %v889, %v902
        %v905 = vadd.f32 %v890, %v903
        %s906 = smul.u32 %s848, 15
        %s907 = sadd.s32 %s906, 1
        %s908 = smul.u32 %s907, 3
        %s909 = sld [smem:[#allocation10 + %s908]]
        %v910 = vstv %s909
        %v911 = vmul.f32 %v870, %v910
        %v912 = vmul.f32 %v871, %v910
        %v913 = vadd.f32 %v898, %v911
        %v914 = vadd.f32 %v899, %v912
        %s915 = sadd.s32 %s857, 2
        %s916 = smul.u32 %s915, 16
        %s917 = scalar_lea.vmem [#allocation2], %s916
        %v918 = vld [vmem:[%s917] sm:$0xff]
        %v919 = vld [vmem:[%s917 + $0x8] sm:$0x1f]
        %v920 = vmul.f32 %v918, %v910
        %v921 = vmul.f32 %v919, %v910
        %v922 = vadd.f32 %v904, %v920
        %v923 = vadd.f32 %v905, %v921
        %s924 = sadd.s32 %s908, 1
        %s925 = sld [smem:[#allocation10 + %s924]]
        %v926 = vstv %s925
        %v927 = vmul.f32 %v885, %v926
        %v928 = vmul.f32 %v886, %v926
        %v929 = vadd.f32 %v913, %v927
        %v930 = vadd.f32 %v914, %v928
        %v931 = vld [vmem:[%s917 + $0x1] sm:$0xff]
        %v932 = vld [vmem:[%s917 + $0x9] sm:$0x1f]
        %v933 = vmul.f32 %v931, %v926
        %v934 = vmul.f32 %v932, %v926
        %v935 = vadd.f32 %v922, %v933
        %v936 = vadd.f32 %v923, %v934
        %s937 = sadd.s32 %s908, 2
        %s938 = sld [smem:[#allocation10 + %s937]]
        %v939 = vstv %s938
        %v940 = vmul.f32 %v900, %v939
        %v941 = vmul.f32 %v901, %v939
        %v942 = vadd.f32 %v929, %v940
        %v943 = vadd.f32 %v930, %v941
        %v944 = vld [vmem:[%s917 + $0x2] sm:$0xff]
        %v945 = vld [vmem:[%s917 + $0xa] sm:$0x1f]
        %v946 = vmul.f32 %v944, %v939
        %v947 = vmul.f32 %v945, %v939
        %v948 = vadd.f32 %v935, %v946
        %v949 = vadd.f32 %v936, %v947
        %s950 = sadd.s32 %s906, 2
        %s951 = smul.u32 %s950, 3
        %s952 = sld [smem:[#allocation10 + %s951]]
        %v953 = vstv %s952
        %v954 = vmul.f32 %v918, %v953
        %v955 = vmul.f32 %v919, %v953
        %v956 = vadd.f32 %v942, %v954
        %v957 = vadd.f32 %v943, %v955
        %s958 = sadd.s32 %s857, 3
        %s959 = smul.u32 %s958, 16
        %s960 = scalar_lea.vmem [#allocation2], %s959
        %v961 = vld [vmem:[%s960] sm:$0xff]
        %v962 = vld [vmem:[%s960 + $0x8] sm:$0x1f]
        %v963 = vmul.f32 %v961, %v953
        %v964 = vmul.f32 %v962, %v953
        %v965 = vadd.f32 %v948, %v963
        %v966 = vadd.f32 %v949, %v964
        %s967 = sadd.s32 %s951, 1
        %s968 = sld [smem:[#allocation10 + %s967]]
        %v969 = vstv %s968
        %v970 = vmul.f32 %v931, %v969
        %v971 = vmul.f32 %v932, %v969
        %v972 = vadd.f32 %v956, %v970
        %v973 = vadd.f32 %v957, %v971
        %v974 = vld [vmem:[%s960 + $0x1] sm:$0xff]
        %v975 = vld [vmem:[%s960 + $0x9] sm:$0x1f]
        %v976 = vmul.f32 %v974, %v969
        %v977 = vmul.f32 %v975, %v969
        %v978 = vadd.f32 %v965, %v976
        %v979 = vadd.f32 %v966, %v977
        %s980 = sadd.s32 %s951, 2
        %s981 = sld [smem:[#allocation10 + %s980]]
        %v982 = vstv %s981
        %v983 = vmul.f32 %v944, %v982
        %v984 = vmul.f32 %v945, %v982
        %v985 = vadd.f32 %v972, %v983
        %v986 = vadd.f32 %v973, %v984
        %v987 = vld [vmem:[%s960 + $0x2] sm:$0xff]
        %v988 = vld [vmem:[%s960 + $0xa] sm:$0x1f]
        %v989 = vmul.f32 %v987, %v982
        %v990 = vmul.f32 %v988, %v982
        %v991 = vadd.f32 %v978, %v989
        %v992 = vadd.f32 %v979, %v990
        %s993 = smul.u32 %s848, 5
        %s994 = sadd.s32 %s993, 1
        %s995 = smul.u32 %s994, 9
        %s996 = sld [smem:[#allocation10 + %s995]]
        %s997 = sadd.s32 %s858, 240
        %s998 = scalar_lea.vmem [#allocation2], %s997
        %v999 = vld [vmem:[%s998] sm:$0xff]
        %v1000 = vld [vmem:[%s998 + $0x8] sm:$0x1f]
        %v1001 = vstv %s996
        %v1002 = vmul.f32 %v999, %v1001
        %v1003 = vmul.f32 %v1000, %v1001
        %v1004 = vadd.f32 %v985, %v1002
        %v1005 = vadd.f32 %v986, %v1003
        %s1006 = sadd.s32 %s868, 240
        %s1007 = scalar_lea.vmem [#allocation2], %s1006
        %v1008 = vld [vmem:[%s1007] sm:$0xff]
        %v1009 = vld [vmem:[%s1007 + $0x8] sm:$0x1f]
        %v1010 = vmul.f32 %v1008, %v1001
        %v1011 = vmul.f32 %v1009, %v1001
        %v1012 = vadd.f32 %v991, %v1010
        %v1013 = vadd.f32 %v992, %v1011
        %s1014 = sadd.s32 %s995, 1
        %s1015 = sld [smem:[#allocation10 + %s1014]]
        %v1016 = vld [vmem:[%s998 + $0x1] sm:$0xff]
        %v1017 = vld [vmem:[%s998 + $0x9] sm:$0x1f]
        %v1018 = vstv %s1015
        %v1019 = vmul.f32 %v1016, %v1018
        %v1020 = vmul.f32 %v1017, %v1018
        %v1021 = vadd.f32 %v1004, %v1019
        %v1022 = vadd.f32 %v1005, %v1020
        %v1023 = vld [vmem:[%s1007 + $0x1] sm:$0xff]
        %v1024 = vld [vmem:[%s1007 + $0x9] sm:$0x1f]
        %v1025 = vmul.f32 %v1023, %v1018
        %v1026 = vmul.f32 %v1024, %v1018
        %v1027 = vadd.f32 %v1012, %v1025
        %v1028 = vadd.f32 %v1013, %v1026
        %s1029 = sadd.s32 %s995, 2
        %s1030 = sld [smem:[#allocation10 + %s1029]]
        %v1031 = vld [vmem:[%s998 + $0x2] sm:$0xff]
        %v1032 = vld [vmem:[%s998 + $0xa] sm:$0x1f]
        %v1033 = vstv %s1030
        %v1034 = vmul.f32 %v1031, %v1033
        %v1035 = vmul.f32 %v1032, %v1033
        %v1036 = vadd.f32 %v1021, %v1034
        %v1037 = vadd.f32 %v1022, %v1035
        %v1038 = vld [vmem:[%s1007 + $0x2] sm:$0xff]
        %v1039 = vld [vmem:[%s1007 + $0xa] sm:$0x1f]
        %v1040 = vmul.f32 %v1038, %v1033
        %v1041 = vmul.f32 %v1039, %v1033
        %v1042 = vadd.f32 %v1027, %v1040
        %v1043 = vadd.f32 %v1028, %v1041
        %s1044 = smul.u32 %s994, 3
        %s1045 = sadd.s32 %s1044, 1
        %s1046 = smul.u32 %s1045, 3
        %s1047 = sld [smem:[#allocation10 + %s1046]]
        %v1048 = vstv %s1047
        %v1049 = vmul.f32 %v1008, %v1048
        %v1050 = vmul.f32 %v1009, %v1048
        %v1051 = vadd.f32 %v1036, %v1049
        %v1052 = vadd.f32 %v1037, %v1050
        %s1053 = sadd.s32 %s916, 240
        %s1054 = scalar_lea.vmem [#allocation2], %s1053
        %v1055 = vld [vmem:[%s1054] sm:$0xff]
        %v1056 = vld [vmem:[%s1054 + $0x8] sm:$0x1f]
        %v1057 = vmul.f32 %v1055, %v1048
        %v1058 = vmul.f32 %v1056, %v1048
        %v1059 = vadd.f32 %v1042, %v1057
        %v1060 = vadd.f32 %v1043, %v1058
        %s1061 = sadd.s32 %s1046, 1
        %s1062 = sld [smem:[#allocation10 + %s1061]]
        %v1063 = vstv %s1062
        %v1064 = vmul.f32 %v1023, %v1063
        %v1065 = vmul.f32 %v1024, %v1063
        %v1066 = vadd.f32 %v1051, %v1064
        %v1067 = vadd.f32 %v1052, %v1065
        %v1068 = vld [vmem:[%s1054 + $0x1] sm:$0xff]
        %v1069 = vld [vmem:[%s1054 + $0x9] sm:$0x1f]
        %v1070 = vmul.f32 %v1068, %v1063
        %v1071 = vmul.f32 %v1069, %v1063
        %v1072 = vadd.f32 %v1059, %v1070
        %v1073 = vadd.f32 %v1060, %v1071
        %s1074 = sadd.s32 %s1046, 2
        %s1075 = sld [smem:[#allocation10 + %s1074]]
        %v1076 = vstv %s1075
        %v1077 = vmul.f32 %v1038, %v1076
        %v1078 = vmul.f32 %v1039, %v1076
        %v1079 = vadd.f32 %v1066, %v1077
        %v1080 = vadd.f32 %v1067, %v1078
        %v1081 = vld [vmem:[%s1054 + $0x2] sm:$0xff]
        %v1082 = vld [vmem:[%s1054 + $0xa] sm:$0x1f]
        %v1083 = vmul.f32 %v1081, %v1076
        %v1084 = vmul.f32 %v1082, %v1076
        %v1085 = vadd.f32 %v1072, %v1083
        %v1086 = vadd.f32 %v1073, %v1084
        %s1087 = sadd.s32 %s1044, 2
        %s1088 = smul.u32 %s1087, 3
        %s1089 = sld [smem:[#allocation10 + %s1088]]
        %v1090 = vstv %s1089
        %v1091 = vmul.f32 %v1055, %v1090
        %v1092 = vmul.f32 %v1056, %v1090
        %v1093 = vadd.f32 %v1079, %v1091
        %v1094 = vadd.f32 %v1080, %v1092
        %s1095 = sadd.s32 %s959, 240
        %s1096 = scalar_lea.vmem [#allocation2], %s1095
        %v1097 = vld [vmem:[%s1096] sm:$0xff]
        %v1098 = vld [vmem:[%s1096 + $0x8] sm:$0x1f]
        %v1099 = vmul.f32 %v1097, %v1090
        %v1100 = vmul.f32 %v1098, %v1090
        %v1101 = vadd.f32 %v1085, %v1099
        %v1102 = vadd.f32 %v1086, %v1100
        %s1103 = sadd.s32 %s1088, 1
        %s1104 = sld [smem:[#allocation10 + %s1103]]
        %v1105 = vstv %s1104
        %v1106 = vmul.f32 %v1068, %v1105
        %v1107 = vmul.f32 %v1069, %v1105
        %v1108 = vadd.f32 %v1093, %v1106
        %v1109 = vadd.f32 %v1094, %v1107
        %v1110 = vld [vmem:[%s1096 + $0x1] sm:$0xff]
        %v1111 = vld [vmem:[%s1096 + $0x9] sm:$0x1f]
        %v1112 = vmul.f32 %v1110, %v1105
        %v1113 = vmul.f32 %v1111, %v1105
        %v1114 = vadd.f32 %v1101, %v1112
        %v1115 = vadd.f32 %v1102, %v1113
        %s1116 = sadd.s32 %s1088, 2
        %s1117 = sld [smem:[#allocation10 + %s1116]]
        %v1118 = vstv %s1117
        %v1119 = vmul.f32 %v1081, %v1118
        %v1120 = vmul.f32 %v1082, %v1118
        %v1121 = vadd.f32 %v1108, %v1119
        %v1122 = vadd.f32 %v1109, %v1120
        %v1123 = vld [vmem:[%s1096 + $0x2] sm:$0xff]
        %v1124 = vld [vmem:[%s1096 + $0xa] sm:$0x1f]
        %v1125 = vmul.f32 %v1123, %v1118
        %v1126 = vmul.f32 %v1124, %v1118
        %v1127 = vadd.f32 %v1114, %v1125
        %v1128 = vadd.f32 %v1115, %v1126
        %s1129 = sadd.s32 %s993, 2
        %s1130 = smul.u32 %s1129, 9
        %s1131 = sld [smem:[#allocation10 + %s1130]]
        %s1132 = sadd.s32 %s858, 480
        %s1133 = scalar_lea.vmem [#allocation2], %s1132
        %v1134 = vld [vmem:[%s1133] sm:$0xff]
        %v1135 = vld [vmem:[%s1133 + $0x8] sm:$0x1f]
        %v1136 = vstv %s1131
        %v1137 = vmul.f32 %v1134, %v1136
        %v1138 = vmul.f32 %v1135, %v1136
        %v1139 = vadd.f32 %v1121, %v1137
        %v1140 = vadd.f32 %v1122, %v1138
        %s1141 = sadd.s32 %s868, 480
        %s1142 = scalar_lea.vmem [#allocation2], %s1141
        %v1143 = vld [vmem:[%s1142] sm:$0xff]
        %v1144 = vld [vmem:[%s1142 + $0x8] sm:$0x1f]
        %v1145 = vmul.f32 %v1143, %v1136
        %v1146 = vmul.f32 %v1144, %v1136
        %v1147 = vadd.f32 %v1127, %v1145
        %v1148 = vadd.f32 %v1128, %v1146
        %s1149 = sadd.s32 %s1130, 1
        %s1150 = sld [smem:[#allocation10 + %s1149]]
        %v1151 = vld [vmem:[%s1133 + $0x1] sm:$0xff]
        %v1152 = vld [vmem:[%s1133 + $0x9] sm:$0x1f]
        %v1153 = vstv %s1150
        %v1154 = vmul.f32 %v1151, %v1153
        %v1155 = vmul.f32 %v1152, %v1153
        %v1156 = vadd.f32 %v1139, %v1154
        %v1157 = vadd.f32 %v1140, %v1155
        %v1158 = vld [vmem:[%s1142 + $0x1] sm:$0xff]
        %v1159 = vld [vmem:[%s1142 + $0x9] sm:$0x1f]
        %v1160 = vmul.f32 %v1158, %v1153
        %v1161 = vmul.f32 %v1159, %v1153
        %v1162 = vadd.f32 %v1147, %v1160
        %v1163 = vadd.f32 %v1148, %v1161
        %s1164 = sadd.s32 %s1130, 2
        %s1165 = sld [smem:[#allocation10 + %s1164]]
        %v1166 = vld [vmem:[%s1133 + $0x2] sm:$0xff]
        %v1167 = vld [vmem:[%s1133 + $0xa] sm:$0x1f]
        %v1168 = vstv %s1165
        %v1169 = vmul.f32 %v1166, %v1168
        %v1170 = vmul.f32 %v1167, %v1168
        %v1171 = vadd.f32 %v1156, %v1169
        %v1172 = vadd.f32 %v1157, %v1170
        %v1173 = vld [vmem:[%s1142 + $0x2] sm:$0xff]
        %v1174 = vld [vmem:[%s1142 + $0xa] sm:$0x1f]
        %v1175 = vmul.f32 %v1173, %v1168
        %v1176 = vmul.f32 %v1174, %v1168
        %v1177 = vadd.f32 %v1162, %v1175
        %v1178 = vadd.f32 %v1163, %v1176
        %s1179 = smul.u32 %s1129, 3
        %s1180 = sadd.s32 %s1179, 1
        %s1181 = smul.u32 %s1180, 3
        %s1182 = sld [smem:[#allocation10 + %s1181]]
        %v1183 = vstv %s1182
        %v1184 = vmul.f32 %v1143, %v1183
        %v1185 = vmul.f32 %v1144, %v1183
        %v1186 = vadd.f32 %v1171, %v1184
        %v1187 = vadd.f32 %v1172, %v1185
        %s1188 = sadd.s32 %s916, 480
        %s1189 = scalar_lea.vmem [#allocation2], %s1188
        %v1190 = vld [vmem:[%s1189] sm:$0xff]
        %v1191 = vld [vmem:[%s1189 + $0x8] sm:$0x1f]
        %v1192 = vmul.f32 %v1190, %v1183
        %v1193 = vmul.f32 %v1191, %v1183
        %v1194 = vadd.f32 %v1177, %v1192
        %v1195 = vadd.f32 %v1178, %v1193
        %s1196 = sadd.s32 %s1181, 1
        %s1197 = sld [smem:[#allocation10 + %s1196]]
        %v1198 = vstv %s1197
        %v1199 = vmul.f32 %v1158, %v1198
        %v1200 = vmul.f32 %v1159, %v1198
        %v1201 = vadd.f32 %v1186, %v1199
        %v1202 = vadd.f32 %v1187, %v1200
        %v1203 = vld [vmem:[%s1189 + $0x1] sm:$0xff]
        %v1204 = vld [vmem:[%s1189 + $0x9] sm:$0x1f]
        %v1205 = vmul.f32 %v1203, %v1198
        %v1206 = vmul.f32 %v1204, %v1198
        %v1207 = vadd.f32 %v1194, %v1205
        %v1208 = vadd.f32 %v1195, %v1206
        %s1209 = sadd.s32 %s1181, 2
        %s1210 = sld [smem:[#allocation10 + %s1209]]
        %v1211 = vstv %s1210
        %v1212 = vmul.f32 %v1173, %v1211
        %v1213 = vmul.f32 %v1174, %v1211
        %v1214 = vadd.f32 %v1201, %v1212
        %v1215 = vadd.f32 %v1202, %v1213
        %v1216 = vld [vmem:[%s1189 + $0x2] sm:$0xff]
        %v1217 = vld [vmem:[%s1189 + $0xa] sm:$0x1f]
        %v1218 = vmul.f32 %v1216, %v1211
        %v1219 = vmul.f32 %v1217, %v1211
        %v1220 = vadd.f32 %v1207, %v1218
        %v1221 = vadd.f32 %v1208, %v1219
        %s1222 = sadd.s32 %s1179, 2
        %s1223 = smul.u32 %s1222, 3
        %s1224 = sld [smem:[#allocation10 + %s1223]]
        %v1225 = vstv %s1224
        %v1226 = vmul.f32 %v1190, %v1225
        %v1227 = vmul.f32 %v1191, %v1225
        %v1228 = vadd.f32 %v1214, %v1226
        %v1229 = vadd.f32 %v1215, %v1227
        %s1230 = sadd.s32 %s959, 480
        %s1231 = scalar_lea.vmem [#allocation2], %s1230
        %v1232 = vld [vmem:[%s1231] sm:$0xff]
        %v1233 = vld [vmem:[%s1231 + $0x8] sm:$0x1f]
        %v1234 = vmul.f32 %v1232, %v1225
        %v1235 = vmul.f32 %v1233, %v1225
        %v1236 = vadd.f32 %v1220, %v1234
        %v1237 = vadd.f32 %v1221, %v1235
        %s1238 = sadd.s32 %s1223, 1
        %s1239 = sld [smem:[#allocation10 + %s1238]]
        %v1240 = vstv %s1239
        %v1241 = vmul.f32 %v1203, %v1240
        %v1242 = vmul.f32 %v1204, %v1240
        %v1243 = vadd.f32 %v1228, %v1241
        %v1244 = vadd.f32 %v1229, %v1242
        %v1245 = vld [vmem:[%s1231 + $0x1] sm:$0xff]
        %v1246 = vld [vmem:[%s1231 + $0x9] sm:$0x1f]
        %v1247 = vmul.f32 %v1245, %v1240
        %v1248 = vmul.f32 %v1246, %v1240
        %v1249 = vadd.f32 %v1236, %v1247
        %v1250 = vadd.f32 %v1237, %v1248
        %s1251 = sadd.s32 %s1223, 2
        %s1252 = sld [smem:[#allocation10 + %s1251]]
        %v1253 = vstv %s1252
        %v1254 = vmul.f32 %v1216, %v1253
        %v1255 = vmul.f32 %v1217, %v1253
        %v1256 = vadd.f32 %v1243, %v1254
        %v1257 = vadd.f32 %v1244, %v1255
        %v1258 = vld [vmem:[%s1231 + $0x2] sm:$0xff]
        %v1259 = vld [vmem:[%s1231 + $0xa] sm:$0x1f]
        %v1260 = vmul.f32 %v1258, %v1253
        %v1261 = vmul.f32 %v1259, %v1253
        %v1262 = vadd.f32 %v1249, %v1260
        %v1263 = vadd.f32 %v1250, %v1261
        %s1264 = sadd.s32 %s993, 3
        %s1265 = smul.u32 %s1264, 9
        %s1266 = sld [smem:[#allocation10 + %s1265]]
        %s1267 = sadd.s32 %s858, 720
        %s1268 = scalar_lea.vmem [#allocation2], %s1267
        %v1269 = vld [vmem:[%s1268] sm:$0xff]
        %v1270 = vld [vmem:[%s1268 + $0x8] sm:$0x1f]
        %v1271 = vstv %s1266
        %v1272 = vmul.f32 %v1269, %v1271
        %v1273 = vmul.f32 %v1270, %v1271
        %v1274 = vadd.f32 %v1256, %v1272
        %v1275 = vadd.f32 %v1257, %v1273
        %s1276 = sadd.s32 %s868, 720
        %s1277 = scalar_lea.vmem [#allocation2], %s1276
        %v1278 = vld [vmem:[%s1277] sm:$0xff]
        %v1279 = vld [vmem:[%s1277 + $0x8] sm:$0x1f]
        %v1280 = vmul.f32 %v1278, %v1271
        %v1281 = vmul.f32 %v1279, %v1271
        %v1282 = vadd.f32 %v1262, %v1280
        %v1283 = vadd.f32 %v1263, %v1281
        %s1284 = sadd.s32 %s1265, 1
        %s1285 = sld [smem:[#allocation10 + %s1284]]
        %v1286 = vld [vmem:[%s1268 + $0x1] sm:$0xff]
        %v1287 = vld [vmem:[%s1268 + $0x9] sm:$0x1f]
        %v1288 = vstv %s1285
        %v1289 = vmul.f32 %v1286, %v1288
        %v1290 = vmul.f32 %v1287, %v1288
        %v1291 = vadd.f32 %v1274, %v1289
        %v1292 = vadd.f32 %v1275, %v1290
        %v1293 = vld [vmem:[%s1277 + $0x1] sm:$0xff]
        %v1294 = vld [vmem:[%s1277 + $0x9] sm:$0x1f]
        %v1295 = vmul.f32 %v1293, %v1288
        %v1296 = vmul.f32 %v1294, %v1288
        %v1297 = vadd.f32 %v1282, %v1295
        %v1298 = vadd.f32 %v1283, %v1296
        %s1299 = sadd.s32 %s1265, 2
        %s1300 = sld [smem:[#allocation10 + %s1299]]
        %v1301 = vld [vmem:[%s1268 + $0x2] sm:$0xff]
        %v1302 = vld [vmem:[%s1268 + $0xa] sm:$0x1f]
        %v1303 = vstv %s1300
        %v1304 = vmul.f32 %v1301, %v1303
        %v1305 = vmul.f32 %v1302, %v1303
        %v1306 = vadd.f32 %v1291, %v1304
        %v1307 = vadd.f32 %v1292, %v1305
        %v1308 = vld [vmem:[%s1277 + $0x2] sm:$0xff]
        %v1309 = vld [vmem:[%s1277 + $0xa] sm:$0x1f]
        %v1310 = vmul.f32 %v1308, %v1303
        %v1311 = vmul.f32 %v1309, %v1303
        %v1312 = vadd.f32 %v1297, %v1310
        %v1313 = vadd.f32 %v1298, %v1311
        %s1314 = smul.u32 %s1264, 3
        %s1315 = sadd.s32 %s1314, 1
        %s1316 = smul.u32 %s1315, 3
        %s1317 = sld [smem:[#allocation10 + %s1316]]
        %v1318 = vstv %s1317
        %v1319 = vmul.f32 %v1278, %v1318
        %v1320 = vmul.f32 %v1279, %v1318
        %v1321 = vadd.f32 %v1306, %v1319
        %v1322 = vadd.f32 %v1307, %v1320
        %s1323 = sadd.s32 %s916, 720
        %s1324 = scalar_lea.vmem [#allocation2], %s1323
        %v1325 = vld [vmem:[%s1324] sm:$0xff]
        %v1326 = vld [vmem:[%s1324 + $0x8] sm:$0x1f]
        %v1327 = vmul.f32 %v1325, %v1318
        %v1328 = vmul.f32 %v1326, %v1318
        %v1329 = vadd.f32 %v1312, %v1327
        %v1330 = vadd.f32 %v1313, %v1328
        %s1331 = sadd.s32 %s1316, 1
        %s1332 = sld [smem:[#allocation10 + %s1331]]
        %v1333 = vstv %s1332
        %v1334 = vmul.f32 %v1293, %v1333
        %v1335 = vmul.f32 %v1294, %v1333
        %v1336 = vadd.f32 %v1321, %v1334
        %v1337 = vadd.f32 %v1322, %v1335
        %v1338 = vld [vmem:[%s1324 + $0x1] sm:$0xff]
        %v1339 = vld [vmem:[%s1324 + $0x9] sm:$0x1f]
        %v1340 = vmul.f32 %v1338, %v1333
        %v1341 = vmul.f32 %v1339, %v1333
        %v1342 = vadd.f32 %v1329, %v1340
        %v1343 = vadd.f32 %v1330, %v1341
        %s1344 = sadd.s32 %s1316, 2
        %s1345 = sld [smem:[#allocation10 + %s1344]]
        %v1346 = vstv %s1345
        %v1347 = vmul.f32 %v1308, %v1346
        %v1348 = vmul.f32 %v1309, %v1346
        %v1349 = vadd.f32 %v1336, %v1347
        %v1350 = vadd.f32 %v1337, %v1348
        %v1351 = vld [vmem:[%s1324 + $0x2] sm:$0xff]
        %v1352 = vld [vmem:[%s1324 + $0xa] sm:$0x1f]
        %v1353 = vmul.f32 %v1351, %v1346
        %v1354 = vmul.f32 %v1352, %v1346
        %v1355 = vadd.f32 %v1342, %v1353
        %v1356 = vadd.f32 %v1343, %v1354
        %s1357 = sadd.s32 %s1314, 2
        %s1358 = smul.u32 %s1357, 3
        %s1359 = sld [smem:[#allocation10 + %s1358]]
        %v1360 = vstv %s1359
        %v1361 = vmul.f32 %v1325, %v1360
        %v1362 = vmul.f32 %v1326, %v1360
        %v1363 = vadd.f32 %v1349, %v1361
        %v1364 = vadd.f32 %v1350, %v1362
        %s1365 = sadd.s32 %s959, 720
        %s1366 = scalar_lea.vmem [#allocation2], %s1365
        %v1367 = vld [vmem:[%s1366] sm:$0xff]
        %v1368 = vld [vmem:[%s1366 + $0x8] sm:$0x1f]
        %v1369 = vmul.f32 %v1367, %v1360
        %v1370 = vmul.f32 %v1368, %v1360
        %v1371 = vadd.f32 %v1355, %v1369
        %v1372 = vadd.f32 %v1356, %v1370
        %s1373 = sadd.s32 %s1358, 1
        %s1374 = sld [smem:[#allocation10 + %s1373]]
        %v1375 = vstv %s1374
        %v1376 = vmul.f32 %v1338, %v1375
        %v1377 = vmul.f32 %v1339, %v1375
        %v1378 = vadd.f32 %v1363, %v1376
        %v1379 = vadd.f32 %v1364, %v1377
        %v1380 = vld [vmem:[%s1366 + $0x1] sm:$0xff]
        %v1381 = vld [vmem:[%s1366 + $0x9] sm:$0x1f]
        %v1382 = vmul.f32 %v1380, %v1375
        %v1383 = vmul.f32 %v1381, %v1375
        %v1384 = vadd.f32 %v1371, %v1382
        %v1385 = vadd.f32 %v1372, %v1383
        %s1386 = sadd.s32 %s1358, 2
        %s1387 = sld [smem:[#allocation10 + %s1386]]
        %v1388 = vstv %s1387
        %v1389 = vmul.f32 %v1351, %v1388
        %v1390 = vmul.f32 %v1352, %v1388
        %v1391 = vadd.f32 %v1378, %v1389
        %v1392 = vadd.f32 %v1379, %v1390
        %v1393 = vld [vmem:[%s1366 + $0x2] sm:$0xff]
        %v1394 = vld [vmem:[%s1366 + $0xa] sm:$0x1f]
        %v1395 = vmul.f32 %v1393, %v1388
        %v1396 = vmul.f32 %v1394, %v1388
        %v1397 = vadd.f32 %v1384, %v1395
        %v1398 = vadd.f32 %v1385, %v1396
        %s1399 = sadd.s32 %s993, 4
        %s1400 = smul.u32 %s1399, 9
        %s1401 = sld [smem:[#allocation10 + %s1400]]
        %s1402 = sadd.s32 %s858, 960
        %s1403 = scalar_lea.vmem [#allocation2], %s1402
        %v1404 = vld [vmem:[%s1403] sm:$0xff]
        %v1405 = vld [vmem:[%s1403 + $0x8] sm:$0x1f]
        %v1406 = vstv %s1401
        %v1407 = vmul.f32 %v1404, %v1406
        %v1408 = vmul.f32 %v1405, %v1406
        %v1409 = vadd.f32 %v1391, %v1407
        %v1410 = vadd.f32 %v1392, %v1408
        %s1411 = sadd.s32 %s868, 960
        %s1412 = scalar_lea.vmem [#allocation2], %s1411
        %v1413 = vld [vmem:[%s1412] sm:$0xff]
        %v1414 = vld [vmem:[%s1412 + $0x8] sm:$0x1f]
        %v1415 = vmul.f32 %v1413, %v1406
        %v1416 = vmul.f32 %v1414, %v1406
        %v1417 = vadd.f32 %v1397, %v1415
        %v1418 = vadd.f32 %v1398, %v1416
        %s1419 = sadd.s32 %s1400, 1
        %s1420 = sld [smem:[#allocation10 + %s1419]]
        %v1421 = vld [vmem:[%s1403 + $0x1] sm:$0xff]
        %v1422 = vld [vmem:[%s1403 + $0x9] sm:$0x1f]
        %v1423 = vstv %s1420
        %v1424 = vmul.f32 %v1421, %v1423
        %v1425 = vmul.f32 %v1422, %v1423
        %v1426 = vadd.f32 %v1409, %v1424
        %v1427 = vadd.f32 %v1410, %v1425
        %v1428 = vld [vmem:[%s1412 + $0x1] sm:$0xff]
        %v1429 = vld [vmem:[%s1412 + $0x9] sm:$0x1f]
        %v1430 = vmul.f32 %v1428, %v1423
        %v1431 = vmul.f32 %v1429, %v1423
        %v1432 = vadd.f32 %v1417, %v1430
        %v1433 = vadd.f32 %v1418, %v1431
        %s1434 = sadd.s32 %s1400, 2
        %s1435 = sld [smem:[#allocation10 + %s1434]]
        %v1436 = vld [vmem:[%s1403 + $0x2] sm:$0xff]
        %v1437 = vld [vmem:[%s1403 + $0xa] sm:$0x1f]
        %v1438 = vstv %s1435
        %v1439 = vmul.f32 %v1436, %v1438
        %v1440 = vmul.f32 %v1437, %v1438
        %v1441 = vadd.f32 %v1426, %v1439
        %v1442 = vadd.f32 %v1427, %v1440
        %v1443 = vld [vmem:[%s1412 + $0x2] sm:$0xff]
        %v1444 = vld [vmem:[%s1412 + $0xa] sm:$0x1f]
        %v1445 = vmul.f32 %v1443, %v1438
        %v1446 = vmul.f32 %v1444, %v1438
        %v1447 = vadd.f32 %v1432, %v1445
        %v1448 = vadd.f32 %v1433, %v1446
        %s1449 = smul.u32 %s1399, 3
        %s1450 = sadd.s32 %s1449, 1
        %s1451 = smul.u32 %s1450, 3
        %s1452 = sld [smem:[#allocation10 + %s1451]]
        %v1453 = vstv %s1452
        %v1454 = vmul.f32 %v1413, %v1453
        %v1455 = vmul.f32 %v1414, %v1453
        %v1456 = vadd.f32 %v1441, %v1454
        %v1457 = vadd.f32 %v1442, %v1455
        %s1458 = sadd.s32 %s916, 960
        %s1459 = scalar_lea.vmem [#allocation2], %s1458
        %v1460 = vld [vmem:[%s1459] sm:$0xff]
        %v1461 = vld [vmem:[%s1459 + $0x8] sm:$0x1f]
        %v1462 = vmul.f32 %v1460, %v1453
        %v1463 = vmul.f32 %v1461, %v1453
        %v1464 = vadd.f32 %v1447, %v1462
        %v1465 = vadd.f32 %v1448, %v1463
        %s1466 = sadd.s32 %s1451, 1
        %s1467 = sld [smem:[#allocation10 + %s1466]]
        %v1468 = vstv %s1467
        %v1469 = vmul.f32 %v1428, %v1468
        %v1470 = vmul.f32 %v1429, %v1468
        %v1471 = vadd.f32 %v1456, %v1469
        %v1472 = vadd.f32 %v1457, %v1470
        %v1473 = vld [vmem:[%s1459 + $0x1] sm:$0xff]
        %v1474 = vld [vmem:[%s1459 + $0x9] sm:$0x1f]
        %v1475 = vmul.f32 %v1473, %v1468
        %v1476 = vmul.f32 %v1474, %v1468
        %v1477 = vadd.f32 %v1464, %v1475
        %v1478 = vadd.f32 %v1465, %v1476
        %s1479 = sadd.s32 %s1451, 2
        %s1480 = sld [smem:[#allocation10 + %s1479]]
        %v1481 = vstv %s1480
        %v1482 = vmul.f32 %v1443, %v1481
        %v1483 = vmul.f32 %v1444, %v1481
        %v1484 = vadd.f32 %v1471, %v1482
        %v1485 = vadd.f32 %v1472, %v1483
        %v1486 = vld [vmem:[%s1459 + $0x2] sm:$0xff]
        %v1487 = vld [vmem:[%s1459 + $0xa] sm:$0x1f]
        %v1488 = vmul.f32 %v1486, %v1481
        %v1489 = vmul.f32 %v1487, %v1481
        %v1490 = vadd.f32 %v1477, %v1488
        %v1491 = vadd.f32 %v1478, %v1489
        %s1492 = sadd.s32 %s1449, 2
        %s1493 = smul.u32 %s1492, 3
        %s1494 = sld [smem:[#allocation10 + %s1493]]
        %v1495 = vstv %s1494
        %v1496 = vmul.f32 %v1460, %v1495
        %v1497 = vmul.f32 %v1461, %v1495
        %v1498 = vadd.f32 %v1484, %v1496
        %v1499 = vadd.f32 %v1485, %v1497
        %s1500 = sadd.s32 %s959, 960
        %s1501 = scalar_lea.vmem [#allocation2], %s1500
        %v1502 = vld [vmem:[%s1501] sm:$0xff]
        %v1503 = vld [vmem:[%s1501 + $0x8] sm:$0x1f]
        %v1504 = vmul.f32 %v1502, %v1495
        %v1505 = vmul.f32 %v1503, %v1495
        %v1506 = vadd.f32 %v1490, %v1504
        %v1507 = vadd.f32 %v1491, %v1505
        %s1508 = sadd.s32 %s1493, 1
        %s1509 = sld [smem:[#allocation10 + %s1508]]
        %v1510 = vstv %s1509
        %v1511 = vmul.f32 %v1473, %v1510
        %v1512 = vmul.f32 %v1474, %v1510
        %v1513 = vadd.f32 %v1498, %v1511
        %v1514 = vadd.f32 %v1499, %v1512
        %v1515 = vld [vmem:[%s1501 + $0x1] sm:$0xff]
        %v1516 = vld [vmem:[%s1501 + $0x9] sm:$0x1f]
        %v1517 = vmul.f32 %v1515, %v1510
        %v1518 = vmul.f32 %v1516, %v1510
        %v1519 = vadd.f32 %v1506, %v1517
        %v1520 = vadd.f32 %v1507, %v1518
        %s1521 = sadd.s32 %s1493, 2
        %s1522 = sld [smem:[#allocation10 + %s1521]]
        %v1523 = vstv %s1522
        %v1524 = vmul.f32 %v1486, %v1523
        %v1525 = vmul.f32 %v1487, %v1523
        %v1526 = vadd.f32 %v1513, %v1524
        %v1527 = vadd.f32 %v1514, %v1525
        %v1528 = vld [vmem:[%s1501 + $0x2] sm:$0xff]
        %v1529 = vld [vmem:[%s1501 + $0xa] sm:$0x1f]
        %v1530 = vmul.f32 %v1528, %v1523
        %v1531 = vmul.f32 %v1529, %v1523
        %v1532 = vadd.f32 %v1519, %v1530
        %v1533 = vadd.f32 %v1520, %v1531
        %v1534 = vmax.f32 %v1526, %v1532
        %v1535 = vmax.f32 %v1527, %v1533
        %v1536 = vmax.f32 %v1534, 0.0
        %v1537 = vmax.f32 %v1535, 0.0
        %1538 = vst [vmem:[#allocation5] sm:$0xff] %v1536
        %1539 = vst [vmem:[#allocation5 + $0x8] sm:$0x1f] %v1537
        %v1540 = vld [vmem:[#allocation5] ss:$2 sm:$0x3f]
        %s1541 = scalar_lea.vmem [#allocation5], 1
        %v1542 = vld [vmem:[%s1541] ss:$2 sm:$0x3f]
        %v1543 = vmax.f32 %v1540, %v1542
        %s1544 = smul.u32 %s842, 8
        %s1545 = smul.u32 %s848, 48
        %s1546 = sadd.s32 %s1544, %s1545
        %s1547 = scalar_lea.vmem [#allocation3], %s1546
        %1548 = vst [vmem:[%s1547] sm:$0x3f] %v1543
      $region87: #{net_forward.1} parent=79 // loop_footer
        %s852 = sadd.s32 1, %s848
      $region88: #{net_forward.1} parent=79 // loop_footer_branch
        %847 = sbr.rel target = $region84
      $region89: #{net_forward.1} parent=79 // loop_exit
        _
    $region80: #{net_forward.1} parent=1 // loop_footer
      %s846 = sadd.s32 1, %s842
    $region81: #{net_forward.1} parent=1 // loop_footer_branch
      %841 = sbr.rel target = $region77
    $region82: #{net_forward.1} parent=1 // loop_exit
      _
    loop: start=0, step=1, limit=12
    $region90: #{net_forward.1} parent=1 // loop_pre_header
      _
    $region91: #{net_forward.1} parent=1 // loop_header
      %s1550 = sphi 0, %s1554
      %p1551 = scmp.ge.s32.totalorder %s1550, 12
    $region92: #{net_forward.1} parent=1 // loop_header_branch
      %1553 = sbr.rel (%p1551) target = $region96
    $region93: #{net_forward.1} parent=1 // loop_body
      %s1555 = sld [smem:[#allocation14 + %s1550]]
      %v1556 = vstv %s1555
      %s1557 = smul.u32 %s1550, 63
      %s1558 = sld [smem:[#allocation13 + %s1557]]
      %v1559 = vld [vmem:[#allocation3] sm:$0xf]
      %v1560 = vld [vmem:[#allocation3 + $0x8] sm:$0xf]
      %v1561 = vld [vmem:[#allocation3 + $0x10] sm:$0xf]
      %v1562 = vld [vmem:[#allocation3 + $0x18] sm:$0xf]
      %v1563 = vstv %s1558
      %v1564 = vmul.f32 %v1559, %v1563
      %v1565 = vmul.f32 %v1560, %v1563
      %v1566 = vmul.f32 %v1561, %v1563
      %v1567 = vmul.f32 %v1562, %v1563
      %v1568 = vadd.f32 %v1556, %v1564
      %v1569 = vadd.f32 %v1556, %v1565
      %v1570 = vadd.f32 %v1556, %v1566
      %v1571 = vadd.f32 %v1556, %v1567
      %s1572 = sadd.s32 %s1557, 1
      %s1573 = sld [smem:[#allocation13 + %s1572]]
      %v1574 = vld [vmem:[#allocation3 + $0x1] sm:$0xf]
      %v1575 = vld [vmem:[#allocation3 + $0x9] sm:$0xf]
      %v1576 = vld [vmem:[#allocation3 + $0x11] sm:$0xf]
      %v1577 = vld [vmem:[#allocation3 + $0x19] sm:$0xf]
      %v1578 = vstv %s1573
      %v1579 = vmul.f32 %v1574, %v1578
      %v1580 = vmul.f32 %v1575, %v1578
      %v1581 = vmul.f32 %v1576, %v1578
      %v1582 = vmul.f32 %v1577, %v1578
      %v1583 = vadd.f32 %v1568, %v1579
      %v1584 = vadd.f32 %v1569, %v1580
      %v1585 = vadd.f32 %v1570, %v1581
      %v1586 = vadd.f32 %v1571, %v1582
      %s1587 = sadd.s32 %s1557, 2
      %s1588 = sld [smem:[#allocation13 + %s1587]]
      %v1589 = vld [vmem:[#allocation3 + $0x2] sm:$0xf]
      %v1590 = vld [vmem:[#allocation3 + $0xa] sm:$0xf]
      %v1591 = vld [vmem:[#allocation3 + $0x12] sm:$0xf]
      %v1592 = vld [vmem:[#allocation3 + $0x1a] sm:$0xf]
      %v1593 = vstv %s1588
      %v1594 = vmul.f32 %v1589, %v1593
      %v1595 = vmul.f32 %v1590, %v1593
      %v1596 = vmul.f32 %v1591, %v1593
      %v1597 = vmul.f32 %v1592, %v1593
      %v1598 = vadd.f32 %v1583, %v1594
      %v1599 = vadd.f32 %v1584, %v1595
      %v1600 = vadd.f32 %v1585, %v1596
      %v1601 = vadd.f32 %v1586, %v1597
      %s1602 = smul.u32 %s1550, 21
      %s1603 = sadd.s32 %s1602, 1
      %s1604 = smul.u32 %s1603, 3
      %s1605 = sld [smem:[#allocation13 + %s1604]]
      %s1606 = scalar_lea.vmem [#allocation3], 8
      %v1607 = vld [vmem:[%s1606] sm:$0xf]
      %v1608 = vld [vmem:[%s1606 + $0x8] sm:$0xf]
      %v1609 = vld [vmem:[%s1606 + $0x10] sm:$0xf]
      %v1610 = vld [vmem:[%s1606 + $0x18] sm:$0xf]
      %v1611 = vstv %s1605
      %v1612 = vmul.f32 %v1607, %v1611
      %v1613 = vmul.f32 %v1608, %v1611
      %v1614 = vmul.f32 %v1609, %v1611
      %v1615 = vmul.f32 %v1610, %v1611
      %v1616 = vadd.f32 %v1598, %v1612
      %v1617 = vadd.f32 %v1599, %v1613
      %v1618 = vadd.f32 %v1600, %v1614
      %v1619 = vadd.f32 %v1601, %v1615
      %s1620 = sadd.s32 %s1604, 1
      %s1621 = sld [smem:[#allocation13 + %s1620]]
      %v1622 = vld [vmem:[%s1606 + $0x1] sm:$0xf]
      %v1623 = vld [vmem:[%s1606 + $0x9] sm:$0xf]
      %v1624 = vld [vmem:[%s1606 + $0x11] sm:$0xf]
      %v1625 = vld [vmem:[%s1606 + $0x19] sm:$0xf]
      %v1626 = vstv %s1621
      %v1627 = vmul.f32 %v1622, %v1626
      %v1628 = vmul.f32 %v1623, %v1626
      %v1629 = vmul.f32 %v1624, %v1626
      %v1630 = vmul.f32 %v1625, %v1626
      %v1631 = vadd.f32 %v1616, %v1627
      %v1632 = vadd.f32 %v1617, %v1628
      %v1633 = vadd.f32 %v1618, %v1629
      %v1634 = vadd.f32 %v1619, %v1630
      %s1635 = sadd.s32 %s1604, 2
      %s1636 = sld [smem:[#allocation13 + %s1635]]
      %v1637 = vld [vmem:[%s1606 + $0x2] sm:$0xf]
      %v1638 = vld [vmem:[%s1606 + $0xa] sm:$0xf]
      %v1639 = vld [vmem:[%s1606 + $0x12] sm:$0xf]
      %v1640 = vld [vmem:[%s1606 + $0x1a] sm:$0xf]
      %v1641 = vstv %s1636
      %v1642 = vmul.f32 %v1637, %v1641
      %v1643 = vmul.f32 %v1638, %v1641
      %v1644 = vmul.f32 %v1639, %v1641
      %v1645 = vmul.f32 %v1640, %v1641
      %v1646 = vadd.f32 %v1631, %v1642
      %v1647 = vadd.f32 %v1632, %v1643
      %v1648 = vadd.f32 %v1633, %v1644
      %v1649 = vadd.f32 %v1634, %v1645
      %s1650 = sadd.s32 %s1602, 2
      %s1651 = smul.u32 %s1650, 3
      %s1652 = sld [smem:[#allocation13 + %s1651]]
      %s1653 = scalar_lea.vmem [#allocation3], 16
      %v1654 = vld [vmem:[%s1653] sm:$0xf]
      %v1655 = vld [vmem:[%s1653 + $0x8] sm:$0xf]
      %v1656 = vld [vmem:[%s1653 + $0x10] sm:$0xf]
      %v1657 = vld [vmem:[%s1653 + $0x18] sm:$0xf]
      %v1658 = vstv %s1652
      %v1659 = vmul.f32 %v1654, %v1658
      %v1660 = vmul.f32 %v1655, %v1658
      %v1661 = vmul.f32 %v1656, %v1658
      %v1662 = vmul.f32 %v1657, %v1658
      %v1663 = vadd.f32 %v1646, %v1659
      %v1664 = vadd.f32 %v1647, %v1660
      %v1665 = vadd.f32 %v1648, %v1661
      %v1666 = vadd.f32 %v1649, %v1662
      %s1667 = sadd.s32 %s1651, 1
      %s1668 = sld [smem:[#allocation13 + %s1667]]
      %v1669 = vld [vmem:[%s1653 + $0x1] sm:$0xf]
      %v1670 = vld [vmem:[%s1653 + $0x9] sm:$0xf]
      %v1671 = vld [vmem:[%s1653 + $0x11] sm:$0xf]
      %v1672 = vld [vmem:[%s1653 + $0x19] sm:$0xf]
      %v1673 = vstv %s1668
      %v1674 = vmul.f32 %v1669, %v1673
      %v1675 = vmul.f32 %v1670, %v1673
      %v1676 = vmul.f32 %v1671, %v1673
      %v1677 = vmul.f32 %v1672, %v1673
      %v1678 = vadd.f32 %v1663, %v1674
      %v1679 = vadd.f32 %v1664, %v1675
      %v1680 = vadd.f32 %v1665, %v1676
      %v1681 = vadd.f32 %v1666, %v1677
      %s1682 = sadd.s32 %s1651, 2
      %s1683 = sld [smem:[#allocation13 + %s1682]]
      %v1684 = vld [vmem:[%s1653 + $0x2] sm:$0xf]
      %v1685 = vld [vmem:[%s1653 + $0xa] sm:$0xf]
      %v1686 = vld [vmem:[%s1653 + $0x12] sm:$0xf]
      %v1687 = vld [vmem:[%s1653 + $0x1a] sm:$0xf]
      %v1688 = vstv %s1683
      %v1689 = vmul.f32 %v1684, %v1688
      %v1690 = vmul.f32 %v1685, %v1688
      %v1691 = vmul.f32 %v1686, %v1688
      %v1692 = vmul.f32 %v1687, %v1688
      %v1693 = vadd.f32 %v1678, %v1689
      %v1694 = vadd.f32 %v1679, %v1690
      %v1695 = vadd.f32 %v1680, %v1691
      %v1696 = vadd.f32 %v1681, %v1692
      %s1697 = smul.u32 %s1550, 7
      %s1698 = sadd.s32 %s1697, 1
      %s1699 = smul.u32 %s1698, 9
      %s1700 = sld [smem:[#allocation13 + %s1699]]
      %s1701 = scalar_lea.vmem [#allocation3], 48
      %v1702 = vld [vmem:[%s1701] sm:$0xf]
      %v1703 = vld [vmem:[%s1701 + $0x8] sm:$0xf]
      %v1704 = vld [vmem:[%s1701 + $0x10] sm:$0xf]
      %v1705 = vld [vmem:[%s1701 + $0x18] sm:$0xf]
      %v1706 = vstv %s1700
      %v1707 = vmul.f32 %v1702, %v1706
      %v1708 = vmul.f32 %v1703, %v1706
      %v1709 = vmul.f32 %v1704, %v1706
      %v1710 = vmul.f32 %v1705, %v1706
      %v1711 = vadd.f32 %v1693, %v1707
      %v1712 = vadd.f32 %v1694, %v1708
      %v1713 = vadd.f32 %v1695, %v1709
      %v1714 = vadd.f32 %v1696, %v1710
      %s1715 = sadd.s32 %s1699, 1
      %s1716 = sld [smem:[#allocation13 + %s1715]]
      %v1717 = vld [vmem:[%s1701 + $0x1] sm:$0xf]
      %v1718 = vld [vmem:[%s1701 + $0x9] sm:$0xf]
      %v1719 = vld [vmem:[%s1701 + $0x11] sm:$0xf]
      %v1720 = vld [vmem:[%s1701 + $0x19] sm:$0xf]
      %v1721 = vstv %s1716
      %v1722 = vmul.f32 %v1717, %v1721
      %v1723 = vmul.f32 %v1718, %v1721
      %v1724 = vmul.f32 %v1719, %v1721
      %v1725 = vmul.f32 %v1720, %v1721
      %v1726 = vadd.f32 %v1711, %v1722
      %v1727 = vadd.f32 %v1712, %v1723
      %v1728 = vadd.f32 %v1713, %v1724
      %v1729 = vadd.f32 %v1714, %v1725
      %s1730 = sadd.s32 %s1699, 2
      %s1731 = sld [smem:[#allocation13 + %s1730]]
      %v1732 = vld [vmem:[%s1701 + $0x2] sm:$0xf]
      %v1733 = vld [vmem:[%s1701 + $0xa] sm:$0xf]
      %v1734 = vld [vmem:[%s1701 + $0x12] sm:$0xf]
      %v1735 = vld [vmem:[%s1701 + $0x1a] sm:$0xf]
      %v1736 = vstv %s1731
      %v1737 = vmul.f32 %v1732, %v1736
      %v1738 = vmul.f32 %v1733, %v1736
      %v1739 = vmul.f32 %v1734, %v1736
      %v1740 = vmul.f32 %v1735, %v1736
      %v1741 = vadd.f32 %v1726, %v1737
      %v1742 = vadd.f32 %v1727, %v1738
      %v1743 = vadd.f32 %v1728, %v1739
      %v1744 = vadd.f32 %v1729, %v1740
      %s1745 = smul.u32 %s1698, 3
      %s1746 = sadd.s32 %s1745, 1
      %s1747 = smul.u32 %s1746, 3
      %s1748 = sld [smem:[#allocation13 + %s1747]]
      %s1749 = scalar_lea.vmem [#allocation3], 56
      %v1750 = vld [vmem:[%s1749] sm:$0xf]
      %v1751 = vld [vmem:[%s1749 + $0x8] sm:$0xf]
      %v1752 = vld [vmem:[%s1749 + $0x10] sm:$0xf]
      %v1753 = vld [vmem:[%s1749 + $0x18] sm:$0xf]
      %v1754 = vstv %s1748
      %v1755 = vmul.f32 %v1750, %v1754
      %v1756 = vmul.f32 %v1751, %v1754
      %v1757 = vmul.f32 %v1752, %v1754
      %v1758 = vmul.f32 %v1753, %v1754
      %v1759 = vadd.f32 %v1741, %v1755
      %v1760 = vadd.f32 %v1742, %v1756
      %v1761 = vadd.f32 %v1743, %v1757
      %v1762 = vadd.f32 %v1744, %v1758
      %s1763 = sadd.s32 %s1747, 1
      %s1764 = sld [smem:[#allocation13 + %s1763]]
      %v1765 = vld [vmem:[%s1749 + $0x1] sm:$0xf]
      %v1766 = vld [vmem:[%s1749 + $0x9] sm:$0xf]
      %v1767 = vld [vmem:[%s1749 + $0x11] sm:$0xf]
      %v1768 = vld [vmem:[%s1749 + $0x19] sm:$0xf]
      %v1769 = vstv %s1764
      %v1770 = vmul.f32 %v1765, %v1769
      %v1771 = vmul.f32 %v1766, %v1769
      %v1772 = vmul.f32 %v1767, %v1769
      %v1773 = vmul.f32 %v1768, %v1769
      %v1774 = vadd.f32 %v1759, %v1770
      %v1775 = vadd.f32 %v1760, %v1771
      %v1776 = vadd.f32 %v1761, %v1772
      %v1777 = vadd.f32 %v1762, %v1773
      %s1778 = sadd.s32 %s1747, 2
      %s1779 = sld [smem:[#allocation13 + %s1778]]
      %v1780 = vld [vmem:[%s1749 + $0x2] sm:$0xf]
      %v1781 = vld [vmem:[%s1749 + $0xa] sm:$0xf]
      %v1782 = vld [vmem:[%s1749 + $0x12] sm:$0xf]
      %v1783 = vld [vmem:[%s1749 + $0x1a] sm:$0xf]
      %v1784 = vstv %s1779
      %v1785 = vmul.f32 %v1780, %v1784
      %v1786 = vmul.f32 %v1781, %v1784
      %v1787 = vmul.f32 %v1782, %v1784
      %v1788 = vmul.f32 %v1783, %v1784
      %v1789 = vadd.f32 %v1774, %v1785
      %v1790 = vadd.f32 %v1775, %v1786
      %v1791 = vadd.f32 %v1776, %v1787
      %v1792 = vadd.f32 %v1777, %v1788
      %s1793 = sadd.s32 %s1745, 2
      %s1794 = smul.u32 %s1793, 3
      %s1795 = sld [smem:[#allocation13 + %s1794]]
      %s1796 = scalar_lea.vmem [#allocation3], 64
      %v1797 = vld [vmem:[%s1796] sm:$0xf]
      %v1798 = vld [vmem:[%s1796 + $0x8] sm:$0xf]
      %v1799 = vld [vmem:[%s1796 + $0x10] sm:$0xf]
      %v1800 = vld [vmem:[%s1796 + $0x18] sm:$0xf]
      %v1801 = vstv %s1795
      %v1802 = vmul.f32 %v1797, %v1801
      %v1803 = vmul.f32 %v1798, %v1801
      %v1804 = vmul.f32 %v1799, %v1801
      %v1805 = vmul.f32 %v1800, %v1801
      %v1806 = vadd.f32 %v1789, %v1802
      %v1807 = vadd.f32 %v1790, %v1803
      %v1808 = vadd.f32 %v1791, %v1804
      %v1809 = vadd.f32 %v1792, %v1805
      %s1810 = sadd.s32 %s1794, 1
      %s1811 = sld [smem:[#allocation13 + %s1810]]
      %v1812 = vld [vmem:[%s1796 + $0x1] sm:$0xf]
      %v1813 = vld [vmem:[%s1796 + $0x9] sm:$0xf]
      %v1814 = vld [vmem:[%s1796 + $0x11] sm:$0xf]
      %v1815 = vld [vmem:[%s1796 + $0x19] sm:$0xf]
      %v1816 = vstv %s1811
      %v1817 = vmul.f32 %v1812, %v1816
      %v1818 = vmul.f32 %v1813, %v1816
      %v1819 = vmul.f32 %v1814, %v1816
      %v1820 = vmul.f32 %v1815, %v1816
      %v1821 = vadd.f32 %v1806, %v1817
      %v1822 = vadd.f32 %v1807, %v1818
      %v1823 = vadd.f32 %v1808, %v1819
      %v1824 = vadd.f32 %v1809, %v1820
      %s1825 = sadd.s32 %s1794, 2
      %s1826 = sld [smem:[#allocation13 + %s1825]]
      %v1827 = vld [vmem:[%s1796 + $0x2] sm:$0xf]
      %v1828 = vld [vmem:[%s1796 + $0xa] sm:$0xf]
      %v1829 = vld [vmem:[%s1796 + $0x12] sm:$0xf]
      %v1830 = vld [vmem:[%s1796 + $0x1a] sm:$0xf]
      %v1831 = vstv %s1826
      %v1832 = vmul.f32 %v1827, %v1831
      %v1833 = vmul.f32 %v1828, %v1831
      %v1834 = vmul.f32 %v1829, %v1831
      %v1835 = vmul.f32 %v1830, %v1831
      %v1836 = vadd.f32 %v1821, %v1832
      %v1837 = vadd.f32 %v1822, %v1833
      %v1838 = vadd.f32 %v1823, %v1834
      %v1839 = vadd.f32 %v1824, %v1835
      %s1840 = sadd.s32 %s1697, 2
      %s1841 = smul.u32 %s1840, 9
      %s1842 = sld [smem:[#allocation13 + %s1841]]
      %s1843 = scalar_lea.vmem [#allocation3], 96
      %v1844 = vld [vmem:[%s1843] sm:$0xf]
      %v1845 = vld [vmem:[%s1843 + $0x8] sm:$0xf]
      %v1846 = vld [vmem:[%s1843 + $0x10] sm:$0xf]
      %v1847 = vld [vmem:[%s1843 + $0x18] sm:$0xf]
      %v1848 = vstv %s1842
      %v1849 = vmul.f32 %v1844, %v1848
      %v1850 = vmul.f32 %v1845, %v1848
      %v1851 = vmul.f32 %v1846, %v1848
      %v1852 = vmul.f32 %v1847, %v1848
      %v1853 = vadd.f32 %v1836, %v1849
      %v1854 = vadd.f32 %v1837, %v1850
      %v1855 = vadd.f32 %v1838, %v1851
      %v1856 = vadd.f32 %v1839, %v1852
      %s1857 = sadd.s32 %s1841, 1
      %s1858 = sld [smem:[#allocation13 + %s1857]]
      %v1859 = vld [vmem:[%s1843 + $0x1] sm:$0xf]
      %v1860 = vld [vmem:[%s1843 + $0x9] sm:$0xf]
      %v1861 = vld [vmem:[%s1843 + $0x11] sm:$0xf]
      %v1862 = vld [vmem:[%s1843 + $0x19] sm:$0xf]
      %v1863 = vstv %s1858
      %v1864 = vmul.f32 %v1859, %v1863
      %v1865 = vmul.f32 %v1860, %v1863
      %v1866 = vmul.f32 %v1861, %v1863
      %v1867 = vmul.f32 %v1862, %v1863
      %v1868 = vadd.f32 %v1853, %v1864
      %v1869 = vadd.f32 %v1854, %v1865
      %v1870 = vadd.f32 %v1855, %v1866
      %v1871 = vadd.f32 %v1856, %v1867
      %s1872 = sadd.s32 %s1841, 2
      %s1873 = sld [smem:[#allocation13 + %s1872]]
      %v1874 = vld [vmem:[%s1843 + $0x2] sm:$0xf]
      %v1875 = vld [vmem:[%s1843 + $0xa] sm:$0xf]
      %v1876 = vld [vmem:[%s1843 + $0x12] sm:$0xf]
      %v1877 = vld [vmem:[%s1843 + $0x1a] sm:$0xf]
      %v1878 = vstv %s1873
      %v1879 = vmul.f32 %v1874, %v1878
      %v1880 = vmul.f32 %v1875, %v1878
      %v1881 = vmul.f32 %v1876, %v1878
      %v1882 = vmul.f32 %v1877, %v1878
      %v1883 = vadd.f32 %v1868, %v1879
      %v1884 = vadd.f32 %v1869, %v1880
      %v1885 = vadd.f32 %v1870, %v1881
      %v1886 = vadd.f32 %v1871, %v1882
      %s1887 = smul.u32 %s1840, 3
      %s1888 = sadd.s32 %s1887, 1
      %s1889 = smul.u32 %s1888, 3
      %s1890 = sld [smem:[#allocation13 + %s1889]]
      %s1891 = scalar_lea.vmem [#allocation3], 104
      %v1892 = vld [vmem:[%s1891] sm:$0xf]
      %v1893 = vld [vmem:[%s1891 + $0x8] sm:$0xf]
      %v1894 = vld [vmem:[%s1891 + $0x10] sm:$0xf]
      %v1895 = vld [vmem:[%s1891 + $0x18] sm:$0xf]
      %v1896 = vstv %s1890
      %v1897 = vmul.f32 %v1892, %v1896
      %v1898 = vmul.f32 %v1893, %v1896
      %v1899 = vmul.f32 %v1894, %v1896
      %v1900 = vmul.f32 %v1895, %v1896
      %v1901 = vadd.f32 %v1883, %v1897
      %v1902 = vadd.f32 %v1884, %v1898
      %v1903 = vadd.f32 %v1885, %v1899
      %v1904 = vadd.f32 %v1886, %v1900
      %s1905 = sadd.s32 %s1889, 1
      %s1906 = sld [smem:[#allocation13 + %s1905]]
      %v1907 = vld [vmem:[%s1891 + $0x1] sm:$0xf]
      %v1908 = vld [vmem:[%s1891 + $0x9] sm:$0xf]
      %v1909 = vld [vmem:[%s1891 + $0x11] sm:$0xf]
      %v1910 = vld [vmem:[%s1891 + $0x19] sm:$0xf]
      %v1911 = vstv %s1906
      %v1912 = vmul.f32 %v1907, %v1911
      %v1913 = vmul.f32 %v1908, %v1911
      %v1914 = vmul.f32 %v1909, %v1911
      %v1915 = vmul.f32 %v1910, %v1911
      %v1916 = vadd.f32 %v1901, %v1912
      %v1917 = vadd.f32 %v1902, %v1913
      %v1918 = vadd.f32 %v1903, %v1914
      %v1919 = vadd.f32 %v1904, %v1915
      %s1920 = sadd.s32 %s1889, 2
      %s1921 = sld [smem:[#allocation13 + %s1920]]
      %v1922 = vld [vmem:[%s1891 + $0x2] sm:$0xf]
      %v1923 = vld [vmem:[%s1891 + $0xa] sm:$0xf]
      %v1924 = vld [vmem:[%s1891 + $0x12] sm:$0xf]
      %v1925 = vld [vmem:[%s1891 + $0x1a] sm:$0xf]
      %v1926 = vstv %s1921
      %v1927 = vmul.f32 %v1922, %v1926
      %v1928 = vmul.f32 %v1923, %v1926
      %v1929 = vmul.f32 %v1924, %v1926
      %v1930 = vmul.f32 %v1925, %v1926
      %v1931 = vadd.f32 %v1916, %v1927
      %v1932 = vadd.f32 %v1917, %v1928
      %v1933 = vadd.f32 %v1918, %v1929
      %v1934 = vadd.f32 %v1919, %v1930
      %s1935 = sadd.s32 %s1887, 2
      %s1936 = smul.u32 %s1935, 3
      %s1937 = sld [smem:[#allocation13 + %s1936]]
      %s1938 = scalar_lea.vmem [#allocation3], 112
      %v1939 = vld [vmem:[%s1938] sm:$0xf]
      %v1940 = vld [vmem:[%s1938 + $0x8] sm:$0xf]
      %v1941 = vld [vmem:[%s1938 + $0x10] sm:$0xf]
      %v1942 = vld [vmem:[%s1938 + $0x18] sm:$0xf]
      %v1943 = vstv %s1937
      %v1944 = vmul.f32 %v1939, %v1943
      %v1945 = vmul.f32 %v1940, %v1943
      %v1946 = vmul.f32 %v1941, %v1943
      %v1947 = vmul.f32 %v1942, %v1943
      %v1948 = vadd.f32 %v1931, %v1944
      %v1949 = vadd.f32 %v1932, %v1945
      %v1950 = vadd.f32 %v1933, %v1946
      %v1951 = vadd.f32 %v1934, %v1947
      %s1952 = sadd.s32 %s1936, 1
      %s1953 = sld [smem:[#allocation13 + %s1952]]
      %v1954 = vld [vmem:[%s1938 + $0x1] sm:$0xf]
      %v1955 = vld [vmem:[%s1938 + $0x9] sm:$0xf]
      %v1956 = vld [vmem:[%s1938 + $0x11] sm:$0xf]
      %v1957 = vld [vmem:[%s1938 + $0x19] sm:$0xf]
      %v1958 = vstv %s1953
      %v1959 = vmul.f32 %v1954, %v1958
      %v1960 = vmul.f32 %v1955, %v1958
      %v1961 = vmul.f32 %v1956, %v1958
      %v1962 = vmul.f32 %v1957, %v1958
      %v1963 = vadd.f32 %v1948, %v1959
      %v1964 = vadd.f32 %v1949, %v1960
      %v1965 = vadd.f32 %v1950, %v1961
      %v1966 = vadd.f32 %v1951, %v1962
      %s1967 = sadd.s32 %s1936, 2
      %s1968 = sld [smem:[#allocation13 + %s1967]]
      %v1969 = vld [vmem:[%s1938 + $0x2] sm:$0xf]
      %v1970 = vld [vmem:[%s1938 + $0xa] sm:$0xf]
      %v1971 = vld [vmem:[%s1938 + $0x12] sm:$0xf]
      %v1972 = vld [vmem:[%s1938 + $0x1a] sm:$0xf]
      %v1973 = vstv %s1968
      %v1974 = vmul.f32 %v1969, %v1973
      %v1975 = vmul.f32 %v1970, %v1973
      %v1976 = vmul.f32 %v1971, %v1973
      %v1977 = vmul.f32 %v1972, %v1973
      %v1978 = vadd.f32 %v1963, %v1974
      %v1979 = vadd.f32 %v1964, %v1975
      %v1980 = vadd.f32 %v1965, %v1976
      %v1981 = vadd.f32 %v1966, %v1977
      %s1982 = sadd.s32 %s1697, 3
      %s1983 = smul.u32 %s1982, 9
      %s1984 = sld [smem:[#allocation13 + %s1983]]
      %s1985 = scalar_lea.vmem [#allocation3], 144
      %v1986 = vld [vmem:[%s1985] sm:$0xf]
      %v1987 = vld [vmem:[%s1985 + $0x8] sm:$0xf]
      %v1988 = vld [vmem:[%s1985 + $0x10] sm:$0xf]
      %v1989 = vld [vmem:[%s1985 + $0x18] sm:$0xf]
      %v1990 = vstv %s1984
      %v1991 = vmul.f32 %v1986, %v1990
      %v1992 = vmul.f32 %v1987, %v1990
      %v1993 = vmul.f32 %v1988, %v1990
      %v1994 = vmul.f32 %v1989, %v1990
      %v1995 = vadd.f32 %v1978, %v1991
      %v1996 = vadd.f32 %v1979, %v1992
      %v1997 = vadd.f32 %v1980, %v1993
      %v1998 = vadd.f32 %v1981, %v1994
      %s1999 = sadd.s32 %s1983, 1
      %s2000 = sld [smem:[#allocation13 + %s1999]]
      %v2001 = vld [vmem:[%s1985 + $0x1] sm:$0xf]
      %v2002 = vld [vmem:[%s1985 + $0x9] sm:$0xf]
      %v2003 = vld [vmem:[%s1985 + $0x11] sm:$0xf]
      %v2004 = vld [vmem:[%s1985 + $0x19] sm:$0xf]
      %v2005 = vstv %s2000
      %v2006 = vmul.f32 %v2001, %v2005
      %v2007 = vmul.f32 %v2002, %v2005
      %v2008 = vmul.f32 %v2003, %v2005
      %v2009 = vmul.f32 %v2004, %v2005
      %v2010 = vadd.f32 %v1995, %v2006
      %v2011 = vadd.f32 %v1996, %v2007
      %v2012 = vadd.f32 %v1997, %v2008
      %v2013 = vadd.f32 %v1998, %v2009
      %s2014 = sadd.s32 %s1983, 2
      %s2015 = sld [smem:[#allocation13 + %s2014]]
      %v2016 = vld [vmem:[%s1985 + $0x2] sm:$0xf]
      %v2017 = vld [vmem:[%s1985 + $0xa] sm:$0xf]
      %v2018 = vld [vmem:[%s1985 + $0x12] sm:$0xf]
      %v2019 = vld [vmem:[%s1985 + $0x1a] sm:$0xf]
      %v2020 = vstv %s2015
      %v2021 = vmul.f32 %v2016, %v2020
      %v2022 = vmul.f32 %v2017, %v2020
      %v2023 = vmul.f32 %v2018, %v2020
      %v2024 = vmul.f32 %v2019, %v2020
      %v2025 = vadd.f32 %v2010, %v2021
      %v2026 = vadd.f32 %v2011, %v2022
      %v2027 = vadd.f32 %v2012, %v2023
      %v2028 = vadd.f32 %v2013, %v2024
      %s2029 = smul.u32 %s1982, 3
      %s2030 = sadd.s32 %s2029, 1
      %s2031 = smul.u32 %s2030, 3
      %s2032 = sld [smem:[#allocation13 + %s2031]]
      %s2033 = scalar_lea.vmem [#allocation3], 152
      %v2034 = vld [vmem:[%s2033] sm:$0xf]
      %v2035 = vld [vmem:[%s2033 + $0x8] sm:$0xf]
      %v2036 = vld [vmem:[%s2033 + $0x10] sm:$0xf]
      %v2037 = vld [vmem:[%s2033 + $0x18] sm:$0xf]
      %v2038 = vstv %s2032
      %v2039 = vmul.f32 %v2034, %v2038
      %v2040 = vmul.f32 %v2035, %v2038
      %v2041 = vmul.f32 %v2036, %v2038
      %v2042 = vmul.f32 %v2037, %v2038
      %v2043 = vadd.f32 %v2025, %v2039
      %v2044 = vadd.f32 %v2026, %v2040
      %v2045 = vadd.f32 %v2027, %v2041
      %v2046 = vadd.f32 %v2028, %v2042
      %s2047 = sadd.s32 %s2031, 1
      %s2048 = sld [smem:[#allocation13 + %s2047]]
      %v2049 = vld [vmem:[%s2033 + $0x1] sm:$0xf]
      %v2050 = vld [vmem:[%s2033 + $0x9] sm:$0xf]
      %v2051 = vld [vmem:[%s2033 + $0x11] sm:$0xf]
      %v2052 = vld [vmem:[%s2033 + $0x19] sm:$0xf]
      %v2053 = vstv %s2048
      %v2054 = vmul.f32 %v2049, %v2053
      %v2055 = vmul.f32 %v2050, %v2053
      %v2056 = vmul.f32 %v2051, %v2053
      %v2057 = vmul.f32 %v2052, %v2053
      %v2058 = vadd.f32 %v2043, %v2054
      %v2059 = vadd.f32 %v2044, %v2055
      %v2060 = vadd.f32 %v2045, %v2056
      %v2061 = vadd.f32 %v2046, %v2057
      %s2062 = sadd.s32 %s2031, 2
      %s2063 = sld [smem:[#allocation13 + %s2062]]
      %v2064 = vld [vmem:[%s2033 + $0x2] sm:$0xf]
      %v2065 = vld [vmem:[%s2033 + $0xa] sm:$0xf]
      %v2066 = vld [vmem:[%s2033 + $0x12] sm:$0xf]
      %v2067 = vld [vmem:[%s2033 + $0x1a] sm:$0xf]
      %v2068 = vstv %s2063
      %v2069 = vmul.f32 %v2064, %v2068
      %v2070 = vmul.f32 %v2065, %v2068
      %v2071 = vmul.f32 %v2066, %v2068
      %v2072 = vmul.f32 %v2067, %v2068
      %v2073 = vadd.f32 %v2058, %v2069
      %v2074 = vadd.f32 %v2059, %v2070
      %v2075 = vadd.f32 %v2060, %v2071
      %v2076 = vadd.f32 %v2061, %v2072
      %s2077 = sadd.s32 %s2029, 2
      %s2078 = smul.u32 %s2077, 3
      %s2079 = sld [smem:[#allocation13 + %s2078]]
      %s2080 = scalar_lea.vmem [#allocation3], 160
      %v2081 = vld [vmem:[%s2080] sm:$0xf]
      %v2082 = vld [vmem:[%s2080 + $0x8] sm:$0xf]
      %v2083 = vld [vmem:[%s2080 + $0x10] sm:$0xf]
      %v2084 = vld [vmem:[%s2080 + $0x18] sm:$0xf]
      %v2085 = vstv %s2079
      %v2086 = vmul.f32 %v2081, %v2085
      %v2087 = vmul.f32 %v2082, %v2085
      %v2088 = vmul.f32 %v2083, %v2085
      %v2089 = vmul.f32 %v2084, %v2085
      %v2090 = vadd.f32 %v2073, %v2086
      %v2091 = vadd.f32 %v2074, %v2087
      %v2092 = vadd.f32 %v2075, %v2088
      %v2093 = vadd.f32 %v2076, %v2089
      %s2094 = sadd.s32 %s2078, 1
      %s2095 = sld [smem:[#allocation13 + %s2094]]
      %v2096 = vld [vmem:[%s2080 + $0x1] sm:$0xf]
      %v2097 = vld [vmem:[%s2080 + $0x9] sm:$0xf]
      %v2098 = vld [vmem:[%s2080 + $0x11] sm:$0xf]
      %v2099 = vld [vmem:[%s2080 + $0x19] sm:$0xf]
      %v2100 = vstv %s2095
      %v2101 = vmul.f32 %v2096, %v2100
      %v2102 = vmul.f32 %v2097, %v2100
      %v2103 = vmul.f32 %v2098, %v2100
      %v2104 = vmul.f32 %v2099, %v2100
      %v2105 = vadd.f32 %v2090, %v2101
      %v2106 = vadd.f32 %v2091, %v2102
      %v2107 = vadd.f32 %v2092, %v2103
      %v2108 = vadd.f32 %v2093, %v2104
      %s2109 = sadd.s32 %s2078, 2
      %s2110 = sld [smem:[#allocation13 + %s2109]]
      %v2111 = vld [vmem:[%s2080 + $0x2] sm:$0xf]
      %v2112 = vld [vmem:[%s2080 + $0xa] sm:$0xf]
      %v2113 = vld [vmem:[%s2080 + $0x12] sm:$0xf]
      %v2114 = vld [vmem:[%s2080 + $0x1a] sm:$0xf]
      %v2115 = vstv %s2110
      %v2116 = vmul.f32 %v2111, %v2115
      %v2117 = vmul.f32 %v2112, %v2115
      %v2118 = vmul.f32 %v2113, %v2115
      %v2119 = vmul.f32 %v2114, %v2115
      %v2120 = vadd.f32 %v2105, %v2116
      %v2121 = vadd.f32 %v2106, %v2117
      %v2122 = vadd.f32 %v2107, %v2118
      %v2123 = vadd.f32 %v2108, %v2119
      %s2124 = sadd.s32 %s1697, 4
      %s2125 = smul.u32 %s2124, 9
      %s2126 = sld [smem:[#allocation13 + %s2125]]
      %s2127 = scalar_lea.vmem [#allocation3], 192
      %v2128 = vld [vmem:[%s2127] sm:$0xf]
      %v2129 = vld [vmem:[%s2127 + $0x8] sm:$0xf]
      %v2130 = vld [vmem:[%s2127 + $0x10] sm:$0xf]
      %v2131 = vld [vmem:[%s2127 + $0x18] sm:$0xf]
      %v2132 = vstv %s2126
      %v2133 = vmul.f32 %v2128, %v2132
      %v2134 = vmul.f32 %v2129, %v2132
      %v2135 = vmul.f32 %v2130, %v2132
      %v2136 = vmul.f32 %v2131, %v2132
      %v2137 = vadd.f32 %v2120, %v2133
      %v2138 = vadd.f32 %v2121, %v2134
      %v2139 = vadd.f32 %v2122, %v2135
      %v2140 = vadd.f32 %v2123, %v2136
      %s2141 = sadd.s32 %s2125, 1
      %s2142 = sld [smem:[#allocation13 + %s2141]]
      %v2143 = vld [vmem:[%s2127 + $0x1] sm:$0xf]
      %v2144 = vld [vmem:[%s2127 + $0x9] sm:$0xf]
      %v2145 = vld [vmem:[%s2127 + $0x11] sm:$0xf]
      %v2146 = vld [vmem:[%s2127 + $0x19] sm:$0xf]
      %v2147 = vstv %s2142
      %v2148 = vmul.f32 %v2143, %v2147
      %v2149 = vmul.f32 %v2144, %v2147
      %v2150 = vmul.f32 %v2145, %v2147
      %v2151 = vmul.f32 %v2146, %v2147
      %v2152 = vadd.f32 %v2137, %v2148
      %v2153 = vadd.f32 %v2138, %v2149
      %v2154 = vadd.f32 %v2139, %v2150
      %v2155 = vadd.f32 %v2140, %v2151
      %s2156 = sadd.s32 %s2125, 2
      %s2157 = sld [smem:[#allocation13 + %s2156]]
      %v2158 = vld [vmem:[%s2127 + $0x2] sm:$0xf]
      %v2159 = vld [vmem:[%s2127 + $0xa] sm:$0xf]
      %v2160 = vld [vmem:[%s2127 + $0x12] sm:$0xf]
      %v2161 = vld [vmem:[%s2127 + $0x1a] sm:$0xf]
      %v2162 = vstv %s2157
      %v2163 = vmul.f32 %v2158, %v2162
      %v2164 = vmul.f32 %v2159, %v2162
      %v2165 = vmul.f32 %v2160, %v2162
      %v2166 = vmul.f32 %v2161, %v2162
      %v2167 = vadd.f32 %v2152, %v2163
      %v2168 = vadd.f32 %v2153, %v2164
      %v2169 = vadd.f32 %v2154, %v2165
      %v2170 = vadd.f32 %v2155, %v2166
      %s2171 = smul.u32 %s2124, 3
      %s2172 = sadd.s32 %s2171, 1
      %s2173 = smul.u32 %s2172, 3
      %s2174 = sld [smem:[#allocation13 + %s2173]]
      %s2175 = scalar_lea.vmem [#allocation3], 200
      %v2176 = vld [vmem:[%s2175] sm:$0xf]
      %v2177 = vld [vmem:[%s2175 + $0x8] sm:$0xf]
      %v2178 = vld [vmem:[%s2175 + $0x10] sm:$0xf]
      %v2179 = vld [vmem:[%s2175 + $0x18] sm:$0xf]
      %v2180 = vstv %s2174
      %v2181 = vmul.f32 %v2176, %v2180
      %v2182 = vmul.f32 %v2177, %v2180
      %v2183 = vmul.f32 %v2178, %v2180
      %v2184 = vmul.f32 %v2179, %v2180
      %v2185 = vadd.f32 %v2167, %v2181
      %v2186 = vadd.f32 %v2168, %v2182
      %v2187 = vadd.f32 %v2169, %v2183
      %v2188 = vadd.f32 %v2170, %v2184
      %s2189 = sadd.s32 %s2173, 1
      %s2190 = sld [smem:[#allocation13 + %s2189]]
      %v2191 = vld [vmem:[%s2175 + $0x1] sm:$0xf]
      %v2192 = vld [vmem:[%s2175 + $0x9] sm:$0xf]
      %v2193 = vld [vmem:[%s2175 + $0x11] sm:$0xf]
      %v2194 = vld [vmem:[%s2175 + $0x19] sm:$0xf]
      %v2195 = vstv %s2190
      %v2196 = vmul.f32 %v2191, %v2195
      %v2197 = vmul.f32 %v2192, %v2195
      %v2198 = vmul.f32 %v2193, %v2195
      %v2199 = vmul.f32 %v2194, %v2195
      %v2200 = vadd.f32 %v2185, %v2196
      %v2201 = vadd.f32 %v2186, %v2197
      %v2202 = vadd.f32 %v2187, %v2198
      %v2203 = vadd.f32 %v2188, %v2199
      %s2204 = sadd.s32 %s2173, 2
      %s2205 = sld [smem:[#allocation13 + %s2204]]
      %v2206 = vld [vmem:[%s2175 + $0x2] sm:$0xf]
      %v2207 = vld [vmem:[%s2175 + $0xa] sm:$0xf]
      %v2208 = vld [vmem:[%s2175 + $0x12] sm:$0xf]
      %v2209 = vld [vmem:[%s2175 + $0x1a] sm:$0xf]
      %v2210 = vstv %s2205
      %v2211 = vmul.f32 %v2206, %v2210
      %v2212 = vmul.f32 %v2207, %v2210
      %v2213 = vmul.f32 %v2208, %v2210
      %v2214 = vmul.f32 %v2209, %v2210
      %v2215 = vadd.f32 %v2200, %v2211
      %v2216 = vadd.f32 %v2201, %v2212
      %v2217 = vadd.f32 %v2202, %v2213
      %v2218 = vadd.f32 %v2203, %v2214
      %s2219 = sadd.s32 %s2171, 2
      %s2220 = smul.u32 %s2219, 3
      %s2221 = sld [smem:[#allocation13 + %s2220]]
      %s2222 = scalar_lea.vmem [#allocation3], 208
      %v2223 = vld [vmem:[%s2222] sm:$0xf]
      %v2224 = vld [vmem:[%s2222 + $0x8] sm:$0xf]
      %v2225 = vld [vmem:[%s2222 + $0x10] sm:$0xf]
      %v2226 = vld [vmem:[%s2222 + $0x18] sm:$0xf]
      %v2227 = vstv %s2221
      %v2228 = vmul.f32 %v2223, %v2227
      %v2229 = vmul.f32 %v2224, %v2227
      %v2230 = vmul.f32 %v2225, %v2227
      %v2231 = vmul.f32 %v2226, %v2227
      %v2232 = vadd.f32 %v2215, %v2228
      %v2233 = vadd.f32 %v2216, %v2229
      %v2234 = vadd.f32 %v2217, %v2230
      %v2235 = vadd.f32 %v2218, %v2231
      %s2236 = sadd.s32 %s2220, 1
      %s2237 = sld [smem:[#allocation13 + %s2236]]
      %v2238 = vld [vmem:[%s2222 + $0x1] sm:$0xf]
      %v2239 = vld [vmem:[%s2222 + $0x9] sm:$0xf]
      %v2240 = vld [vmem:[%s2222 + $0x11] sm:$0xf]
      %v2241 = vld [vmem:[%s2222 + $0x19] sm:$0xf]
      %v2242 = vstv %s2237
      %v2243 = vmul.f32 %v2238, %v2242
      %v2244 = vmul.f32 %v2239, %v2242
      %v2245 = vmul.f32 %v2240, %v2242
      %v2246 = vmul.f32 %v2241, %v2242
      %v2247 = vadd.f32 %v2232, %v2243
      %v2248 = vadd.f32 %v2233, %v2244
      %v2249 = vadd.f32 %v2234, %v2245
      %v2250 = vadd.f32 %v2235, %v2246
      %s2251 = sadd.s32 %s2220, 2
      %s2252 = sld [smem:[#allocation13 + %s2251]]
      %v2253 = vld [vmem:[%s2222 + $0x2] sm:$0xf]
      %v2254 = vld [vmem:[%s2222 + $0xa] sm:$0xf]
      %v2255 = vld [vmem:[%s2222 + $0x12] sm:$0xf]
      %v2256 = vld [vmem:[%s2222 + $0x1a] sm:$0xf]
      %v2257 = vstv %s2252
      %v2258 = vmul.f32 %v2253, %v2257
      %v2259 = vmul.f32 %v2254, %v2257
      %v2260 = vmul.f32 %v2255, %v2257
      %v2261 = vmul.f32 %v2256, %v2257
      %v2262 = vadd.f32 %v2247, %v2258
      %v2263 = vadd.f32 %v2248, %v2259
      %v2264 = vadd.f32 %v2249, %v2260
      %v2265 = vadd.f32 %v2250, %v2261
      %s2266 = sadd.s32 %s1697, 5
      %s2267 = smul.u32 %s2266, 9
      %s2268 = sld [smem:[#allocation13 + %s2267]]
      %s2269 = scalar_lea.vmem [#allocation3], 240
      %v2270 = vld [vmem:[%s2269] sm:$0xf]
      %v2271 = vld [vmem:[%s2269 + $0x8] sm:$0xf]
      %v2272 = vld [vmem:[%s2269 + $0x10] sm:$0xf]
      %v2273 = vld [vmem:[%s2269 + $0x18] sm:$0xf]
      %v2274 = vstv %s2268
      %v2275 = vmul.f32 %v2270, %v2274
      %v2276 = vmul.f32 %v2271, %v2274
      %v2277 = vmul.f32 %v2272, %v2274
      %v2278 = vmul.f32 %v2273, %v2274
      %v2279 = vadd.f32 %v2262, %v2275
      %v2280 = vadd.f32 %v2263, %v2276
      %v2281 = vadd.f32 %v2264, %v2277
      %v2282 = vadd.f32 %v2265, %v2278
      %s2283 = sadd.s32 %s2267, 1
      %s2284 = sld [smem:[#allocation13 + %s2283]]
      %v2285 = vld [vmem:[%s2269 + $0x1] sm:$0xf]
      %v2286 = vld [vmem:[%s2269 + $0x9] sm:$0xf]
      %v2287 = vld [vmem:[%s2269 + $0x11] sm:$0xf]
      %v2288 = vld [vmem:[%s2269 + $0x19] sm:$0xf]
      %v2289 = vstv %s2284
      %v2290 = vmul.f32 %v2285, %v2289
      %v2291 = vmul.f32 %v2286, %v2289
      %v2292 = vmul.f32 %v2287, %v2289
      %v2293 = vmul.f32 %v2288, %v2289
      %v2294 = vadd.f32 %v2279, %v2290
      %v2295 = vadd.f32 %v2280, %v2291
      %v2296 = vadd.f32 %v2281, %v2292
      %v2297 = vadd.f32 %v2282, %v2293
      %s2298 = sadd.s32 %s2267, 2
      %s2299 = sld [smem:[#allocation13 + %s2298]]
      %v2300 = vld [vmem:[%s2269 + $0x2] sm:$0xf]
      %v2301 = vld [vmem:[%s2269 + $0xa] sm:$0xf]
      %v2302 = vld [vmem:[%s2269 + $0x12] sm:$0xf]
      %v2303 = vld [vmem:[%s2269 + $0x1a] sm:$0xf]
      %v2304 = vstv %s2299
      %v2305 = vmul.f32 %v2300, %v2304
      %v2306 = vmul.f32 %v2301, %v2304
      %v2307 = vmul.f32 %v2302, %v2304
      %v2308 = vmul.f32 %v2303, %v2304
      %v2309 = vadd.f32 %v2294, %v2305
      %v2310 = vadd.f32 %v2295, %v2306
      %v2311 = vadd.f32 %v2296, %v2307
      %v2312 = vadd.f32 %v2297, %v2308
      %s2313 = smul.u32 %s2266, 3
      %s2314 = sadd.s32 %s2313, 1
      %s2315 = smul.u32 %s2314, 3
      %s2316 = sld [smem:[#allocation13 + %s2315]]
      %s2317 = scalar_lea.vmem [#allocation3], 248
      %v2318 = vld [vmem:[%s2317] sm:$0xf]
      %v2319 = vld [vmem:[%s2317 + $0x8] sm:$0xf]
      %v2320 = vld [vmem:[%s2317 + $0x10] sm:$0xf]
      %v2321 = vld [vmem:[%s2317 + $0x18] sm:$0xf]
      %v2322 = vstv %s2316
      %v2323 = vmul.f32 %v2318, %v2322
      %v2324 = vmul.f32 %v2319, %v2322
      %v2325 = vmul.f32 %v2320, %v2322
      %v2326 = vmul.f32 %v2321, %v2322
      %v2327 = vadd.f32 %v2309, %v2323
      %v2328 = vadd.f32 %v2310, %v2324
      %v2329 = vadd.f32 %v2311, %v2325
      %v2330 = vadd.f32 %v2312, %v2326
      %s2331 = sadd.s32 %s2315, 1
      %s2332 = sld [smem:[#allocation13 + %s2331]]
      %v2333 = vld [vmem:[%s2317 + $0x1] sm:$0xf]
      %v2334 = vld [vmem:[%s2317 + $0x9] sm:$0xf]
      %v2335 = vld [vmem:[%s2317 + $0x11] sm:$0xf]
      %v2336 = vld [vmem:[%s2317 + $0x19] sm:$0xf]
      %v2337 = vstv %s2332
      %v2338 = vmul.f32 %v2333, %v2337
      %v2339 = vmul.f32 %v2334, %v2337
      %v2340 = vmul.f32 %v2335, %v2337
      %v2341 = vmul.f32 %v2336, %v2337
      %v2342 = vadd.f32 %v2327, %v2338
      %v2343 = vadd.f32 %v2328, %v2339
      %v2344 = vadd.f32 %v2329, %v2340
      %v2345 = vadd.f32 %v2330, %v2341
      %s2346 = sadd.s32 %s2315, 2
      %s2347 = sld [smem:[#allocation13 + %s2346]]
      %v2348 = vld [vmem:[%s2317 + $0x2] sm:$0xf]
      %v2349 = vld [vmem:[%s2317 + $0xa] sm:$0xf]
      %v2350 = vld [vmem:[%s2317 + $0x12] sm:$0xf]
      %v2351 = vld [vmem:[%s2317 + $0x1a] sm:$0xf]
      %v2352 = vstv %s2347
      %v2353 = vmul.f32 %v2348, %v2352
      %v2354 = vmul.f32 %v2349, %v2352
      %v2355 = vmul.f32 %v2350, %v2352
      %v2356 = vmul.f32 %v2351, %v2352
      %v2357 = vadd.f32 %v2342, %v2353
      %v2358 = vadd.f32 %v2343, %v2354
      %v2359 = vadd.f32 %v2344, %v2355
      %v2360 = vadd.f32 %v2345, %v2356
      %s2361 = sadd.s32 %s2313, 2
      %s2362 = smul.u32 %s2361, 3
      %s2363 = sld [smem:[#allocation13 + %s2362]]
      %s2364 = scalar_lea.vmem [#allocation3], 256
      %v2365 = vld [vmem:[%s2364] sm:$0xf]
      %v2366 = vld [vmem:[%s2364 + $0x8] sm:$0xf]
      %v2367 = vld [vmem:[%s2364 + $0x10] sm:$0xf]
      %v2368 = vld [vmem:[%s2364 + $0x18] sm:$0xf]
      %v2369 = vstv %s2363
      %v2370 = vmul.f32 %v2365, %v2369
      %v2371 = vmul.f32 %v2366, %v2369
      %v2372 = vmul.f32 %v2367, %v2369
      %v2373 = vmul.f32 %v2368, %v2369
      %v2374 = vadd.f32 %v2357, %v2370
      %v2375 = vadd.f32 %v2358, %v2371
      %v2376 = vadd.f32 %v2359, %v2372
      %v2377 = vadd.f32 %v2360, %v2373
      %s2378 = sadd.s32 %s2362, 1
      %s2379 = sld [smem:[#allocation13 + %s2378]]
      %v2380 = vld [vmem:[%s2364 + $0x1] sm:$0xf]
      %v2381 = vld [vmem:[%s2364 + $0x9] sm:$0xf]
      %v2382 = vld [vmem:[%s2364 + $0x11] sm:$0xf]
      %v2383 = vld [vmem:[%s2364 + $0x19] sm:$0xf]
      %v2384 = vstv %s2379
      %v2385 = vmul.f32 %v2380, %v2384
      %v2386 = vmul.f32 %v2381, %v2384
      %v2387 = vmul.f32 %v2382, %v2384
      %v2388 = vmul.f32 %v2383, %v2384
      %v2389 = vadd.f32 %v2374, %v2385
      %v2390 = vadd.f32 %v2375, %v2386
      %v2391 = vadd.f32 %v2376, %v2387
      %v2392 = vadd.f32 %v2377, %v2388
      %s2393 = sadd.s32 %s2362, 2
      %s2394 = sld [smem:[#allocation13 + %s2393]]
      %v2395 = vld [vmem:[%s2364 + $0x2] sm:$0xf]
      %v2396 = vld [vmem:[%s2364 + $0xa] sm:$0xf]
      %v2397 = vld [vmem:[%s2364 + $0x12] sm:$0xf]
      %v2398 = vld [vmem:[%s2364 + $0x1a] sm:$0xf]
      %v2399 = vstv %s2394
      %v2400 = vmul.f32 %v2395, %v2399
      %v2401 = vmul.f32 %v2396, %v2399
      %v2402 = vmul.f32 %v2397, %v2399
      %v2403 = vmul.f32 %v2398, %v2399
      %v2404 = vadd.f32 %v2389, %v2400
      %v2405 = vadd.f32 %v2390, %v2401
      %v2406 = vadd.f32 %v2391, %v2402
      %v2407 = vadd.f32 %v2392, %v2403
      %s2408 = sadd.s32 %s1697, 6
      %s2409 = smul.u32 %s2408, 9
      %s2410 = sld [smem:[#allocation13 + %s2409]]
      %s2411 = scalar_lea.vmem [#allocation3], 288
      %v2412 = vld [vmem:[%s2411] sm:$0xf]
      %v2413 = vld [vmem:[%s2411 + $0x8] sm:$0xf]
      %v2414 = vld [vmem:[%s2411 + $0x10] sm:$0xf]
      %v2415 = vld [vmem:[%s2411 + $0x18] sm:$0xf]
      %v2416 = vstv %s2410
      %v2417 = vmul.f32 %v2412, %v2416
      %v2418 = vmul.f32 %v2413, %v2416
      %v2419 = vmul.f32 %v2414, %v2416
      %v2420 = vmul.f32 %v2415, %v2416
      %v2421 = vadd.f32 %v2404, %v2417
      %v2422 = vadd.f32 %v2405, %v2418
      %v2423 = vadd.f32 %v2406, %v2419
      %v2424 = vadd.f32 %v2407, %v2420
      %s2425 = sadd.s32 %s2409, 1
      %s2426 = sld [smem:[#allocation13 + %s2425]]
      %v2427 = vld [vmem:[%s2411 + $0x1] sm:$0xf]
      %v2428 = vld [vmem:[%s2411 + $0x9] sm:$0xf]
      %v2429 = vld [vmem:[%s2411 + $0x11] sm:$0xf]
      %v2430 = vld [vmem:[%s2411 + $0x19] sm:$0xf]
      %v2431 = vstv %s2426
      %v2432 = vmul.f32 %v2427, %v2431
      %v2433 = vmul.f32 %v2428, %v2431
      %v2434 = vmul.f32 %v2429, %v2431
      %v2435 = vmul.f32 %v2430, %v2431
      %v2436 = vadd.f32 %v2421, %v2432
      %v2437 = vadd.f32 %v2422, %v2433
      %v2438 = vadd.f32 %v2423, %v2434
      %v2439 = vadd.f32 %v2424, %v2435
      %s2440 = sadd.s32 %s2409, 2
      %s2441 = sld [smem:[#allocation13 + %s2440]]
      %v2442 = vld [vmem:[%s2411 + $0x2] sm:$0xf]
      %v2443 = vld [vmem:[%s2411 + $0xa] sm:$0xf]
      %v2444 = vld [vmem:[%s2411 + $0x12] sm:$0xf]
      %v2445 = vld [vmem:[%s2411 + $0x1a] sm:$0xf]
      %v2446 = vstv %s2441
      %v2447 = vmul.f32 %v2442, %v2446
      %v2448 = vmul.f32 %v2443, %v2446
      %v2449 = vmul.f32 %v2444, %v2446
      %v2450 = vmul.f32 %v2445, %v2446
      %v2451 = vadd.f32 %v2436, %v2447
      %v2452 = vadd.f32 %v2437, %v2448
      %v2453 = vadd.f32 %v2438, %v2449
      %v2454 = vadd.f32 %v2439, %v2450
      %s2455 = smul.u32 %s2408, 3
      %s2456 = sadd.s32 %s2455, 1
      %s2457 = smul.u32 %s2456, 3
      %s2458 = sld [smem:[#allocation13 + %s2457]]
      %s2459 = scalar_lea.vmem [#allocation3], 296
      %v2460 = vld [vmem:[%s2459] sm:$0xf]
      %v2461 = vld [vmem:[%s2459 + $0x8] sm:$0xf]
      %v2462 = vld [vmem:[%s2459 + $0x10] sm:$0xf]
      %v2463 = vld [vmem:[%s2459 + $0x18] sm:$0xf]
      %v2464 = vstv %s2458
      %v2465 = vmul.f32 %v2460, %v2464
      %v2466 = vmul.f32 %v2461, %v2464
      %v2467 = vmul.f32 %v2462, %v2464
      %v2468 = vmul.f32 %v2463, %v2464
      %v2469 = vadd.f32 %v2451, %v2465
      %v2470 = vadd.f32 %v2452, %v2466
      %v2471 = vadd.f32 %v2453, %v2467
      %v2472 = vadd.f32 %v2454, %v2468
      %s2473 = sadd.s32 %s2457, 1
      %s2474 = sld [smem:[#allocation13 + %s2473]]
      %v2475 = vld [vmem:[%s2459 + $0x1] sm:$0xf]
      %v2476 = vld [vmem:[%s2459 + $0x9] sm:$0xf]
      %v2477 = vld [vmem:[%s2459 + $0x11] sm:$0xf]
      %v2478 = vld [vmem:[%s2459 + $0x19] sm:$0xf]
      %v2479 = vstv %s2474
      %v2480 = vmul.f32 %v2475, %v2479
      %v2481 = vmul.f32 %v2476, %v2479
      %v2482 = vmul.f32 %v2477, %v2479
      %v2483 = vmul.f32 %v2478, %v2479
      %v2484 = vadd.f32 %v2469, %v2480
      %v2485 = vadd.f32 %v2470, %v2481
      %v2486 = vadd.f32 %v2471, %v2482
      %v2487 = vadd.f32 %v2472, %v2483
      %s2488 = sadd.s32 %s2457, 2
      %s2489 = sld [smem:[#allocation13 + %s2488]]
      %v2490 = vld [vmem:[%s2459 + $0x2] sm:$0xf]
      %v2491 = vld [vmem:[%s2459 + $0xa] sm:$0xf]
      %v2492 = vld [vmem:[%s2459 + $0x12] sm:$0xf]
      %v2493 = vld [vmem:[%s2459 + $0x1a] sm:$0xf]
      %v2494 = vstv %s2489
      %v2495 = vmul.f32 %v2490, %v2494
      %v2496 = vmul.f32 %v2491, %v2494
      %v2497 = vmul.f32 %v2492, %v2494
      %v2498 = vmul.f32 %v2493, %v2494
      %v2499 = vadd.f32 %v2484, %v2495
      %v2500 = vadd.f32 %v2485, %v2496
      %v2501 = vadd.f32 %v2486, %v2497
      %v2502 = vadd.f32 %v2487, %v2498
      %s2503 = sadd.s32 %s2455, 2
      %s2504 = smul.u32 %s2503, 3
      %s2505 = sld [smem:[#allocation13 + %s2504]]
      %s2506 = scalar_lea.vmem [#allocation3], 304
      %v2507 = vld [vmem:[%s2506] sm:$0xf]
      %v2508 = vld [vmem:[%s2506 + $0x8] sm:$0xf]
      %v2509 = vld [vmem:[%s2506 + $0x10] sm:$0xf]
      %v2510 = vld [vmem:[%s2506 + $0x18] sm:$0xf]
      %v2511 = vstv %s2505
      %v2512 = vmul.f32 %v2507, %v2511
      %v2513 = vmul.f32 %v2508, %v2511
      %v2514 = vmul.f32 %v2509, %v2511
      %v2515 = vmul.f32 %v2510, %v2511
      %v2516 = vadd.f32 %v2499, %v2512
      %v2517 = vadd.f32 %v2500, %v2513
      %v2518 = vadd.f32 %v2501, %v2514
      %v2519 = vadd.f32 %v2502, %v2515
      %s2520 = sadd.s32 %s2504, 1
      %s2521 = sld [smem:[#allocation13 + %s2520]]
      %v2522 = vld [vmem:[%s2506 + $0x1] sm:$0xf]
      %v2523 = vld [vmem:[%s2506 + $0x9] sm:$0xf]
      %v2524 = vld [vmem:[%s2506 + $0x11] sm:$0xf]
      %v2525 = vld [vmem:[%s2506 + $0x19] sm:$0xf]
      %v2526 = vstv %s2521
      %v2527 = vmul.f32 %v2522, %v2526
      %v2528 = vmul.f32 %v2523, %v2526
      %v2529 = vmul.f32 %v2524, %v2526
      %v2530 = vmul.f32 %v2525, %v2526
      %v2531 = vadd.f32 %v2516, %v2527
      %v2532 = vadd.f32 %v2517, %v2528
      %v2533 = vadd.f32 %v2518, %v2529
      %v2534 = vadd.f32 %v2519, %v2530
      %s2535 = sadd.s32 %s2504, 2
      %s2536 = sld [smem:[#allocation13 + %s2535]]
      %v2537 = vld [vmem:[%s2506 + $0x2] sm:$0xf]
      %v2538 = vld [vmem:[%s2506 + $0xa] sm:$0xf]
      %v2539 = vld [vmem:[%s2506 + $0x12] sm:$0xf]
      %v2540 = vld [vmem:[%s2506 + $0x1a] sm:$0xf]
      %v2541 = vstv %s2536
      %v2542 = vmul.f32 %v2537, %v2541
      %v2543 = vmul.f32 %v2538, %v2541
      %v2544 = vmul.f32 %v2539, %v2541
      %v2545 = vmul.f32 %v2540, %v2541
      %v2546 = vadd.f32 %v2531, %v2542
      %v2547 = vadd.f32 %v2532, %v2543
      %v2548 = vadd.f32 %v2533, %v2544
      %v2549 = vadd.f32 %v2534, %v2545
      %v2550 = vmax.f32 %v2546, 0.0
      %v2551 = vmax.f32 %v2547, 0.0
      %v2552 = vmax.f32 %v2548, 0.0
      %v2553 = vmax.f32 %v2549, 0.0
      %s2554 = smul.u32 %s1550, 16
      %s2555 = scalar_lea.vmem [#allocation4], %s2554
      %2556 = vst [vmem:[%s2555] sm:$0xf] %v2550
      %2557 = vst [vmem:[%s2555 + $0x4] sm:$0xf] %v2551
      %2558 = vst [vmem:[%s2555 + $0x8] sm:$0xf] %v2552
      %2559 = vst [vmem:[%s2555 + $0xc] sm:$0xf] %v2553
    $region94: #{net_forward.1} parent=1 // loop_footer
      %s1554 = sadd.s32 1, %s1550
    $region95: #{net_forward.1} parent=1 // loop_footer_branch
      %1549 = sbr.rel target = $region91
    $region96: #{net_forward.1} parent=1 // loop_exit
      _
    %v2560 = vld [vmem:[#allocation4] sm:$0xff]
    %v2561 = vld [vmem:[#allocation4 + $0x8] sm:$0xff]
    %s2562 = scalar_lea.vmem [#allocation4], 16
    %v2563 = vld [vmem:[%s2562] sm:$0xff]
    %v2564 = vld [vmem:[%s2562 + $0x8] sm:$0xff]
    %s2565 = scalar_lea.vmem [#allocation4], 32
    %v2566 = vld [vmem:[%s2565] sm:$0xff]
    %v2567 = vld [vmem:[%s2565 + $0x8] sm:$0xff]
    %s2568 = scalar_lea.vmem [#allocation4], 48
    %v2569 = vld [vmem:[%s2568] sm:$0xff]
    %v2570 = vld [vmem:[%s2568 + $0x8] sm:$0xff]
    %s2571 = scalar_lea.vmem [#allocation4], 64
    %v2572 = vld [vmem:[%s2571] sm:$0xff]
    %v2573 = vld [vmem:[%s2571 + $0x8] sm:$0xff]
    %s2574 = scalar_lea.vmem [#allocation4], 80
    %v2575 = vld [vmem:[%s2574] sm:$0xff]
    %v2576 = vld [vmem:[%s2574 + $0x8] sm:$0xff]
    %s2577 = scalar_lea.vmem [#allocation4], 96
    %v2578 = vld [vmem:[%s2577] sm:$0xff]
    %v2579 = vld [vmem:[%s2577 + $0x8] sm:$0xff]
    %s2580 = scalar_lea.vmem [#allocation4], 112
    %v2581 = vld [vmem:[%s2580] sm:$0xff]
    %v2582 = vld [vmem:[%s2580 + $0x8] sm:$0xff]
    %s2583 = scalar_lea.vmem [#allocation4], 128
    %v2584 = vld [vmem:[%s2583] sm:$0xff]
    %v2585 = vld [vmem:[%s2583 + $0x8] sm:$0xff]
    %s2586 = scalar_lea.vmem [#allocation4], 144
    %v2587 = vld [vmem:[%s2586] sm:$0xff]
    %v2588 = vld [vmem:[%s2586 + $0x8] sm:$0xff]
    %s2589 = scalar_lea.vmem [#allocation4], 160
    %v2590 = vld [vmem:[%s2589] sm:$0xff]
    %v2591 = vld [vmem:[%s2589 + $0x8] sm:$0xff]
    %s2592 = scalar_lea.vmem [#allocation4], 176
    %v2593 = vld [vmem:[%s2592] sm:$0xff]
    %v2594 = vld [vmem:[%s2592 + $0x8] sm:$0xff]
    %v2595 = vld [vmem:[%s7] sm:$0xff]
    %v2596 = vld [vmem:[%s7 + $0x8] sm:$0xff]
    %v2597 = vld [vmem:[%s7 + $0x10] sm:$0x3]
    %v2598 = vld [vmem:[%s7 + $0x18] sm:$0x3]
    %v2599 = vld [vmem:[%s8] sm:$0xff]
    %v2600 = vld [vmem:[%s8 + $0x8] sm:$0x3]
    %2602 = vset.pattern.permute.xlu0 0
    %2603 = vperm.xlu0 %2602, %v2599
    %v2604 = vpop.permute.xlu0 %2603
    %2607 = vset.pattern.permute.xlu0 0
    %2608 = vperm.xlu0 %2607, %v2600
    %v2609 = vpop.permute.xlu0 %2608
    %vm2611 = vcmask 523264
    %v2613 = vsel %vm2611, %v2596, 0
    %v2616 = vsel %vm2611, %v2598, 0
    %2618 = vmatprep.subr.mxu0 0.0
    %2619 = vmatpush1.msra.mxu0 %v2582
    %2620 = vmatprep.subr.mxu0 0.0
    %2621 = vmatpush1.msra.mxu0 %v2581
    %2622 = vmatprep.subr.mxu0 0.0
    %2623 = vmatpush1.msra.mxu0 %v2579
    %2624 = vmatprep.subr.mxu0 0.0
    %2625 = vmatpush1.msra.mxu0 %v2578
    %2626 = vmatprep.subr.mxu0 0.0
    %2627 = vmatpush1.msra.mxu0 %v2576
    %2628 = vmatprep.subr.mxu0 0.0
    %2629 = vmatpush1.msra.mxu0 %v2575
    %2630 = vmatprep.subr.mxu0 0.0
    %2631 = vmatpush1.msra.mxu0 %v2573
    %2632 = vmatprep.subr.mxu0 0.0
    %2633 = vmatpush1.msra.mxu0 %v2572
    %2634 = vmatprep.subr.mxu0 0.0
    %2635 = vmatpush1.msra.mxu0 %v2570
    %2636 = vmatprep.subr.mxu0 0.0
    %2637 = vmatpush1.msra.mxu0 %v2569
    %2638 = vmatprep.subr.mxu0 0.0
    %2639 = vmatpush1.msra.mxu0 %v2567
    %2640 = vmatprep.subr.mxu0 0.0
    %2641 = vmatpush1.msra.mxu0 %v2566
    %2642 = vmatprep.subr.mxu0 0.0
    %2643 = vmatpush1.msra.mxu0 %v2564
    %2644 = vmatprep.subr.mxu0 0.0
    %2645 = vmatpush1.msra.mxu0 %v2563
    %2646 = vmatprep.subr.mxu0 0.0
    %2647 = vmatpush1.msra.mxu0 %v2561
    %2648 = vmatprep.subr.mxu0 0.0
    %2649 = vmatpush1.msra.mxu0 %v2560
    %2650 = vmatprep.subr.mxu0 0.0
    %2651 = vmatpush2.msra.mxu0 0.0
    %2652 = vmatprep.subr.mxu0 0.0
    %2653 = vmatpush2.msra.mxu0 0.0
    %2654 = vmatprep.subr.mxu0 0.0
    %2655 = vmatpush2.msra.mxu0 0.0
    %2656 = vmatprep.subr.mxu0 0.0
    %2657 = vmatpush2.msra.mxu0 0.0
    %2658 = vmatprep.subr.mxu0 0.0
    %2659 = vmatpush2.msra.mxu0 0.0
    %2660 = vmatprep.subr.mxu0 0.0
    %2661 = vmatpush2.msra.mxu0 0.0
    %2662 = vmatprep.subr.mxu0 0.0
    %2663 = vmatpush2.msra.mxu0 0.0
    %2664 = vmatprep.subr.mxu0 0.0
    %2665 = vmatpush2.msra.mxu0 0.0
    %2666 = vmatprep.subr.mxu0 0.0
    %2667 = vmatpush2.msra.mxu0 %v2594
    %2668 = vmatprep.subr.mxu0 0.0
    %2669 = vmatpush2.msra.mxu0 %v2593
    %2670 = vmatprep.subr.mxu0 0.0
    %2671 = vmatpush2.msra.mxu0 %v2591
    %2672 = vmatprep.subr.mxu0 0.0
    %2673 = vmatpush2.msra.mxu0 %v2590
    %2674 = vmatprep.subr.mxu0 0.0
    %2675 = vmatpush2.msra.mxu0 %v2588
    %2676 = vmatprep.subr.mxu0 0.0
    %2677 = vmatpush2.msra.mxu0 %v2587
    %2678 = vmatprep.subr.mxu0 0.0
    %2679 = vmatpush2.msra.mxu0 %v2585
    %2680 = vmatprep.subr.mxu0 0.0
    %2681 = vmatpush2.msra.mxu0 %v2584
    %2682 = vmatprep.mubr.f32.mxu0 %v2613
    %2683 = vmatmul.mubr.f32.gmra.mxu0 %v2595
    %v2684 = vpop.f32.mrf.mxu0
    %v2685 = vadd.f32 %v2604, %v2684
    %v2686 = vpop.f32.mrf.mxu0
    %2687 = vmatprep.mubr.f32.mxu0 %v2616
    %2688 = vmatmul.mubr.f32.gmra.mxu0 %v2597
    %v2689 = vpop.f32.mrf.mxu0
    %v2690 = vadd.f32 %v2609, %v2689
    %v2691 = vpop.f32.mrf.mxu0
    %2692 = vdwg.mxu0
    %2693 = vst [vmem:[%s9] sm:$0xff] %v2685
    %2694 = vst [vmem:[%s9 + $0x8] sm:$0x3] %v2690
    // Predicated region
    $region97: #{net_forward.1} parent=1 // pred_check
      _
    $region98: #{net_forward.1} parent=1 // pred_check_branch
      %2696 = sbr.rel (0) target = $region100
    $region99: #{net_forward.1} parent=1 // pred_region
      _
    $region100: #{net_forward.1} parent=1 // pred_fallthru
      _
    // Predicated region
    $region101: #{net_forward.1} parent=1 // pred_check
      _
    $region102: #{net_forward.1} parent=1 // pred_check_branch
      %2698 = sbr.rel (0) target = $region104
    $region103: #{net_forward.1} parent=1 // pred_region
      _
    $region104: #{net_forward.1} parent=1 // pred_fallthru
      _
    %2699 = vsyncpa [#allocation7], 1
    %2700 = vsyncpa [#allocation9], 1
    %2701 = vsyncpa [#allocation12], 1
    %2702 = vsyncpa [#allocation15], 1

</llo_original>
